<compile_context>
chip_gen: v6e
topology: v6e:2x2x1
jax: 0.10.0
libtpu: 0.0.40
codegen_flags: <defaults>
</compile_context>

<pallas_src>
import jax
import jax.numpy as jnp
import numpy as np
from jax.experimental import pallas as pl
from jax.experimental.pallas import tpu as pltpu


def _reverb_kernel(xprev_ref, xcur_ref, wprev_ref, wcur_ref, o_ref):
    """out_tile = xcur @ W_cur + xprev_tail @ W_prev  (both on the MXU)."""
    j = pl.program_id(1)

    acc = jnp.dot(
        xcur_ref[...], wcur_ref[...],
        precision=jax.lax.Precision.HIGHEST,
        preferred_element_type=jnp.float32,
    )
    # Causal start: the first time tile has no left context -> zero it.
    prev = xprev_ref[...] * (j > 0).astype(jnp.float32)
    acc = acc + jnp.dot(
        prev, wprev_ref[...],
        precision=jax.lax.Precision.HIGHEST,
        preferred_element_type=jnp.float32,
    )
    o_ref[...] = acc.astype(o_ref.dtype)


def convol_reverb_pallas(x, ir_param, wet_param, length, *, tn=512, tb=256):
    """Pallas implementation of ConvolReverb.forward.

    x:         (B, T, 1) float32, T >= length
    ir_param:  (length, 1) float32   (the nn.Parameter `ir`)
    wet_param: () float32            (the nn.Parameter `wet`)
    returns:   (B, T) float32        (same as the PyTorch forward)
    """
    B, T, _ = x.shape
    assert T >= length, "signal must be at least as long as the IR"

    # ---- faithful parameter processing (glue, plain JAX) ----
    ir = ir_param * jax.nn.sigmoid(wet_param)          # (length, 1)
    ir = ir.at[:, 0].set(1.0)                          # torch: ir[:, 0] = 1
    taps = ir[:, 0].astype(jnp.float32)                # (length,)

    # ---- tile geometry ----
    pw = 128 * pl.cdiv(max(length - 1, 1), 128)        # prev-context width (lanes)
    tn = pl.cdiv(max(int(tn), pw), pw) * pw            # time tile, multiple of pw
    t128 = pl.cdiv(T, 128) * 128
    if tn > t128:                                      # small-signal clamp
        tn = max(pw, pl.cdiv(t128, pw) * pw)
    T_pad = pl.cdiv(T, tn) * tn

    b8 = pl.cdiv(B, 8) * 8
    tb = min(pl.cdiv(max(int(tb), 8), 8) * 8, b8)      # batch tile (sublane dense)
    b_pad = pl.cdiv(b8, tb) * tb

    x2d = x[..., 0].astype(jnp.float32)
    x2d = jnp.pad(x2d, ((0, b_pad - B), (0, T_pad - T)))   # (b_pad, T_pad)

    # ---- banded-Toeplitz weights (built once in the wrapper; resident in VMEM) ----
    t_out = jnp.arange(tn)
    d_cur = t_out[None, :] - jnp.arange(tn)[:, None]        # tap index = t - p
    w_cur = jnp.where(
        (d_cur >= 0) & (d_cur < length),
        taps[jnp.clip(d_cur, 0, length - 1)], 0.0,
    ).astype(jnp.float32)                                   # (tn, tn)
    d_prev = t_out[None, :] + pw - jnp.arange(pw)[:, None]  # tap index for prev tail
    w_prev = jnp.where(
        (d_prev >= 0) & (d_prev < length),
        taps[jnp.clip(d_prev, 0, length - 1)], 0.0,
    ).astype(jnp.float32)                                   # (pw, tn)

    r = tn // pw
    grid = (b_pad // tb, T_pad // tn)

    out = pl.pallas_call(
        _reverb_kernel,
        out_shape=jax.ShapeDtypeStruct((b_pad, T_pad), jnp.float32),
        grid_spec=pltpu.PrefetchScalarGridSpec(
            num_scalar_prefetch=0,
            grid=grid,
            in_specs=[
                # pw-lane tail of the previous time tile (same HBM array as
                # xcur; only pw/tn of the stream is re-read).
                pl.BlockSpec((tb, pw),
                             lambda bi, j: (bi, jnp.maximum(j * r - 1, 0))),
                # current time tile
                pl.BlockSpec((tb, tn), lambda bi, j: (bi, j)),
                # resident banded-Toeplitz weights (constant block index ->
                # fetched once, no re-DMA across grid steps)
                pl.BlockSpec((pw, tn), lambda bi, j: (0, 0)),
                pl.BlockSpec((tn, tn), lambda bi, j: (0, 0)),
            ],
            out_specs=pl.BlockSpec((tb, tn), lambda bi, j: (bi, j)),
        ),
        compiler_params=pltpu.CompilerParams(
            dimension_semantics=("parallel", "parallel"),
        ),
    )(x2d, x2d, w_prev, w_cur)

    return out[:B, :T]


def reference_fft(x, ir_param, wet_param, length):
    """Plain-JAX transcription of the PyTorch forward (for verification)."""
    T = x.shape[1]
    ir = ir_param * jax.nn.sigmoid(wet_param)
    ir = ir.at[:, 0].set(1.0)
    ir = jnp.pad(ir, ((0, T - length), (0, 0)))
    xs = x[..., 0]
    xs = jnp.pad(xs, ((0, 0), (0, T)))
    irs = jnp.pad(ir[:, 0], (T, 0))
    y = jnp.fft.irfft(jnp.fft.rfft(xs) * jnp.fft.rfft(irs))
    return y[..., y.shape[-1] // 2:]


if __name__ == "__main__":
    key = jax.random.PRNGKey(0)

    # Module config: ConvolReverb(sampling_rate=8, length=2, init_wet=0.5)
    sampling_rate, length_s, init_wet = 8, 2, 0.5
    length = sampling_rate * length_s            # self.length = 16 taps
    B, T = 2, 1024                               # >1 time tile at tn=512

    k_ir, k_x = jax.random.split(key)
    # Deterministic parameter init mirroring __init__:
    ir_param = (jax.random.uniform(k_ir, (length, 1)) * 2.0 - 1.0).astype(
        jnp.float32
    )
    wet_param = jnp.float32(init_wet)
    x = jax.random.normal(k_x, (B, T, 1), dtype=jnp.float32)

    out = convol_reverb_pallas(x, ir_param, wet_param, length)
    out = jax.block_until_ready(out)

    ref = reference_fft(x, ir_param, wet_param, length)
    np.testing.assert_allclose(
        np.asarray(out), np.asarray(ref), rtol=1e-4, atol=1e-4
    )
    print("KERNEL_OK")
</pallas_src>

<mosaic_0001>
module attributes {stable_mosaic.version = 11 : i64} {
  func.func @_reverb_kernel(%arg0: i32, %arg1: i32, %arg2: memref<8x128xf32, #tpu.memory_space<vmem>>, %arg3: memref<8x512xf32, #tpu.memory_space<vmem>>, %arg4: memref<128x512xf32, #tpu.memory_space<vmem>>, %arg5: memref<512x512xf32, #tpu.memory_space<vmem>>, %arg6: memref<8x512xf32, #tpu.memory_space<vmem>>) attributes {dimension_semantics = [#tpu.dimension_semantics<parallel>, #tpu.dimension_semantics<parallel>], iteration_bounds = array<i64: 1, 2>, scalar_prefetch = 0 : i64, scratch_operands = 0 : i64, tpu.core_type = #tpu.core_type<tc>, window_params = [{transform_indices = @transform_0, window_bounds = array<i64: 8, 128>}, {transform_indices = @transform_1, window_bounds = array<i64: 8, 512>}, {pipeline_mode = #tpu.pipeline_mode<synchronous>, transform_indices = @transform_2, window_bounds = array<i64: 128, 512>}, {pipeline_mode = #tpu.pipeline_mode<synchronous>, transform_indices = @transform_3, window_bounds = array<i64: 512, 512>}, {transform_indices = @transform_4, window_bounds = array<i64: 8, 512>}]} {
    %c0 = arith.constant 0 : index
    %c0_0 = arith.constant 0 : index
    %0 = vector.load %arg3[%c0, %c0_0] : memref<8x512xf32, #tpu.memory_space<vmem>>, vector<8x512xf32>
    %c0_1 = arith.constant 0 : index
    %c0_2 = arith.constant 0 : index
    %1 = vector.load %arg5[%c0_1, %c0_2] : memref<512x512xf32, #tpu.memory_space<vmem>>, vector<512x512xf32>
    %cst = arith.constant dense<0.000000e+00> : vector<8x512xf32>
    %2 = tpu.matmul %0, %1, %cst {dimension_numbers = #tpu.dot_dimension_numbers<[1], [0], [0], [1], [0, 0, 1, 1], [], []>, precision = #tpu.contract_precision<fp32>} : vector<8x512xf32>, vector<512x512xf32>, vector<8x512xf32> -> vector<8x512xf32>
    %c0_3 = arith.constant 0 : index
    %c0_4 = arith.constant 0 : index
    %3 = vector.load %arg2[%c0_3, %c0_4] : memref<8x128xf32, #tpu.memory_space<vmem>>, vector<8x128xf32>
    %c0_i32 = arith.constant 0 : i32
    %4 = arith.cmpi sgt, %arg1, %c0_i32 : i32
    %5 = arith.extui %4 : i1 to i32
    %6 = arith.sitofp %5 : i32 to f32
    %7 = vector.broadcast %6 : f32 to vector<8x128xf32>
    %8 = arith.mulf %3, %7 : vector<8x128xf32>
    %c0_5 = arith.constant 0 : index
    %c0_6 = arith.constant 0 : index
    %9 = vector.load %arg4[%c0_5, %c0_6] : memref<128x512xf32, #tpu.memory_space<vmem>>, vector<128x512xf32>
    %cst_7 = arith.constant dense<0.000000e+00> : vector<8x512xf32>
    %10 = tpu.matmul %8, %9, %cst_7 {dimension_numbers = #tpu.dot_dimension_numbers<[1], [0], [0], [1], [0, 0, 1, 1], [], []>, precision = #tpu.contract_precision<fp32>} : vector<8x128xf32>, vector<128x512xf32>, vector<8x512xf32> -> vector<8x512xf32>
    %11 = arith.addf %2, %10 : vector<8x512xf32>
    %c0_8 = arith.constant 0 : index
    %c0_9 = arith.constant 0 : index
    %12 = vector.load %arg6[%c0_8, %c0_9] : memref<8x512xf32, #tpu.memory_space<vmem>>, vector<8x512xf32>
    tpu.vector_store %arg6[%c0_8, %c0_9], %11 {strides = array<i32>} : memref<8x512xf32, #tpu.memory_space<vmem>>, vector<8x512xf32>,
    return
  }
  func.func @transform_0(%arg0: i32, %arg1: i32) -> (i32, i32) {
    %c4_i32 = arith.constant 4 : i32
    %0 = arith.muli %arg1, %c4_i32 : i32
    %c1_i32 = arith.constant 1 : i32
    %1 = arith.subi %0, %c1_i32 : i32
    %c0_i32 = arith.constant 0 : i32
    %2 = arith.maxsi %1, %c0_i32 : i32
    %c0_i32_0 = arith.constant 0 : i32
    return %arg0, %2 : i32, i32
  }
  func.func @transform_1(%arg0: i32, %arg1: i32) -> (i32, i32) {
    %c0_i32 = arith.constant 0 : i32
    return %arg0, %arg1 : i32, i32
  }
  func.func @transform_2(%arg0: i32, %arg1: i32) -> (i32, i32) {
    %c0_i32 = arith.constant 0 : i32
    %c0_i32_0 = arith.constant 0 : i32
    %c0_i32_1 = arith.constant 0 : i32
    return %c0_i32, %c0_i32_0 : i32, i32
  }
  func.func @transform_3(%arg0: i32, %arg1: i32) -> (i32, i32) {
    %c0_i32 = arith.constant 0 : i32
    %c0_i32_0 = arith.constant 0 : i32
    %c0_i32_1 = arith.constant 0 : i32
    return %c0_i32, %c0_i32_0 : i32, i32
  }
  func.func @transform_4(%arg0: i32, %arg1: i32) -> (i32, i32) {
    %c0_i32 = arith.constant 0 : i32
    return %arg0, %arg1 : i32, i32
  }
}

</mosaic_0001>

<llo_original>
// kernel: tpu_custom_call.1
$region0: #{tpu_custom_call.1}
  #allocation0 [shape = 'u32[]', space=smem, size = 0x4, offset = 0x4, fixed_abs, tag = 'smem constant byte address 0x4 - core index']
  #allocation1 [shape = 'u32[144,128]{1,0:T(1,128)}', space=vmem, size = 0x12000, scoped, tag = 'internal scratch']
  %s0 = inlined_call_operand.hbm [shape: f32[8,1024], index: 0, kind: input, shape index: {}]
  %s1 = inlined_call_operand.hbm [shape: f32[8,1024], index: 1, kind: input, shape index: {}]
  %s2 = inlined_call_operand.hbm [shape: f32[128,512], index: 2, kind: input, shape index: {}]
  %s3 = inlined_call_operand.hbm [shape: f32[512,512], index: 3, kind: input, shape index: {}]
  %s4 = inlined_call_operand.hbm [shape: f32[8,1024], index: 4, kind: output, shape index: {}]
  %s5 = sld [smem:[#allocation0]]
  $region65: #{tpu_custom_call.1} parent=0
    _
  %s7 = ssub.s32 1, %s5
  %s8 = scalar_select 0, %s7, %s5
  $region1: #{tpu_custom_call.1} parent=0
    #allocation2 [shape = 'u8[8192]{0}', space=vmem, size = 0x2000, scoped, tag = 'input window, operand 0']
    #allocation3 [shape = 's32[2]{0}', space=sflag, size = 0x8, scoped, tag = 'scoped memory for tpu_custom_call.1']
    #allocation4 [shape = 's32[2]{0}', space=sflag, size = 0x8, scoped, tag = 'scoped memory for tpu_custom_call.1']
    #allocation5 [shape = 'u8[32768]{0}', space=vmem, size = 0x8000, scoped, tag = 'input window, operand 1']
    #allocation6 [shape = 's32[2]{0}', space=sflag, size = 0x8, scoped, tag = 'scoped memory for tpu_custom_call.1']
    #allocation7 [shape = 'u8[262144]{0}', space=vmem, size = 0x40000, scoped, tag = 'input window, operand 2, single buffered']
    #allocation8 [shape = 'u8[1048576]{0}', space=vmem, size = 0x100000, scoped, tag = 'input window, operand 3, single buffered']
    #allocation9 [shape = 's32[1]{0}', space=sflag, size = 0x4, scoped, tag = 'scoped memory for tpu_custom_call.1']
    #allocation10 [shape = 'u8[32768]{0}', space=vmem, size = 0x8000, scoped, tag = 'output window, operand 0']
    %9 = vsyncpa [#allocation3], 0
    %s10 = scalar_lea.sflag [#allocation3], 1
    %11 = vsyncpa %s10, 0
    %12 = vsyncpa [#allocation6], 0
    %s13 = scalar_lea.sflag [#allocation6], 1
    %14 = vsyncpa %s13, 0
    %15 = vsyncpa [#allocation9], 0
    %16 = vsyncpa [#allocation4], 0
    %s17 = scalar_lea.sflag [#allocation4], 1
    %18 = vsyncpa %s17, 0
    loop: start=0, step=1, limit=4
    $region2: #{tpu_custom_call.1} parent=1 // loop_pre_header
      _
    $region3: #{tpu_custom_call.1} parent=1 // loop_header
      %s20 = sphi 0, %s24
      %p21 = scmp.ge.s32.totalorder %s20, 4
      %s27 = sphi 0, %s39
      %s28 = sphi 0, %s35
      %s29 = sphi 0, %s27
      %s30 = sphi 0, %s28
      %s31 = sphi 0, %s29
      %s32 = sphi 0, %s30
      %s52 = sphi 0, %s54
      %s55 = sphi 0, %s52
      %s56 = sphi 0, %s55
      %s72 = sphi 0, %s56
      %s80 = sphi 0, %s82
      %s83 = sphi 0, %s80
      %s84 = sphi 0, %s83
      %s100 = sphi 0, %s84
      %s104 = sphi 0, %s104
      %s106 = sphi 0, %s104
      %s107 = sphi 0, %s106
      %s121 = sphi 0, %s107
      %s125 = sphi 0, %s125
      %s127 = sphi 0, %s125
      %s128 = sphi 0, %s127
      %s142 = sphi 0, %s128
      %s150 = sphi 0, %s152
      %s153 = sphi 0, %s150
      %s154 = sphi 0, %s153
      %s170 = sphi 0, %s154
    $region4: #{tpu_custom_call.1} parent=1 // loop_header_branch
      %23 = sbr.rel (%p21) target = $region8
    $region5: #{tpu_custom_call.1} parent=1 // loop_body
      %s25 = ssub.s32 %s20, 1
      %s26 = ssub.s32 %s20, 2
      %s33 = sadd.s32 1, %s28
      %p34 = scmp.ge.s32.totalorder %s33, 2
      %s35 = scalar_select %p34, 0, %s33
      %s36 = sadd.s32 1, %s27
      %s37 = scalar_select %p34, %s36, %s27
      %p38 = scmp.ge.s32.totalorder %s37, 1
      %s39 = scalar_select %p38, 0, %s37
      %s40 = smul.u32 %s28, 4
      %s41 = ssub.s32 %s40, 1
      %p42 = scmp.gt.s32.totalorder %s41, 0
      %s43 = scalar_select %p42, %s41, 0
      %s44 = smul.u32 %s35, 4
      %s45 = ssub.s32 %s44, 1
      %p46 = scmp.gt.s32.totalorder %s45, 0
      %s47 = scalar_select %p46, %s45, 0
      %s48 = ssub.s32 %s27, %s39
      %s49 = ssub.s32 %s43, %s47
      %s50 = sor.u32 %s48, %s49
      %p51 = scmp.eq.s32.totalorder %s50, 0
      %s53 = sadd.s32 %s52, 1
      %s54 = scalar_select %p51, %s52, %s53
      %p57 = pneg %p51
      %p58 = scmp.eq.s32.totalorder %s20, 1
      %p59 = por %p57, %p58
      %p60 = scmp.ne.s32.totalorder %s52, %s55
      %p61 = scmp.eq.s32.totalorder %s20, 0
      %p62 = por %p60, %p61
      %p63 = scmp.ne.s32.totalorder %s52, %s55
      %p64 = scmp.eq.s32.totalorder %s25, 1
      %p65 = por %p63, %p64
      %p66 = scmp.ne.s32.totalorder %s55, %s56
      %p67 = scmp.eq.s32.totalorder %s25, 0
      %p68 = por %p66, %p67
      %p69 = scmp.ne.s32.totalorder %s55, %s56
      %p70 = scmp.eq.s32.totalorder %s26, 1
      %p71 = por %p69, %p70
      %p73 = scmp.ne.s32.totalorder %s56, %s72
      %p74 = scmp.eq.s32.totalorder %s26, 0
      %p75 = por %p73, %p74
      %s76 = ssub.s32 %s27, %s39
      %s77 = ssub.s32 %s28, %s35
      %s78 = sor.u32 %s76, %s77
      %p79 = scmp.eq.s32.totalorder %s78, 0
      %s81 = sadd.s32 %s80, 1
      %s82 = scalar_select %p79, %s80, %s81
      %p85 = pneg %p79
      %p86 = scmp.eq.s32.totalorder %s20, 1
      %p87 = por %p85, %p86
      %p88 = scmp.ne.s32.totalorder %s80, %s83
      %p89 = scmp.eq.s32.totalorder %s20, 0
      %p90 = por %p88, %p89
      %p91 = scmp.ne.s32.totalorder %s80, %s83
      %p92 = scmp.eq.s32.totalorder %s25, 1
      %p93 = por %p91, %p92
      %p94 = scmp.ne.s32.totalorder %s83, %s84
      %p95 = scmp.eq.s32.totalorder %s25, 0
      %p96 = por %p94, %p95
      %p97 = scmp.ne.s32.totalorder %s83, %s84
      %p98 = scmp.eq.s32.totalorder %s26, 1
      %p99 = por %p97, %p98
      %p101 = scmp.ne.s32.totalorder %s84, %s100
      %p102 = scmp.eq.s32.totalorder %s26, 0
      %p103 = por %p101, %p102
      %s105 = sadd.s32 %s104, 1
      %p108 = scmp.eq.s32.totalorder %s20, 1
      %p109 = scmp.ne.s32.totalorder %s104, %s106
      %p110 = scmp.eq.s32.totalorder %s20, 0
      %p111 = por %p109, %p110
      %p112 = scmp.ne.s32.totalorder %s104, %s106
      %p113 = scmp.eq.s32.totalorder %s25, 1
      %p114 = por %p112, %p113
      %p115 = scmp.ne.s32.totalorder %s106, %s107
      %p116 = scmp.eq.s32.totalorder %s25, 0
      %p117 = por %p115, %p116
      %p118 = scmp.ne.s32.totalorder %s106, %s107
      %p119 = scmp.eq.s32.totalorder %s26, 1
      %p120 = por %p118, %p119
      %p122 = scmp.ne.s32.totalorder %s107, %s121
      %p123 = scmp.eq.s32.totalorder %s26, 0
      %p124 = por %p122, %p123
      %s126 = sadd.s32 %s125, 1
      %p129 = scmp.eq.s32.totalorder %s20, 1
      %p130 = scmp.ne.s32.totalorder %s125, %s127
      %p131 = scmp.eq.s32.totalorder %s20, 0
      %p132 = por %p130, %p131
      %p133 = scmp.ne.s32.totalorder %s125, %s127
      %p134 = scmp.eq.s32.totalorder %s25, 1
      %p135 = por %p133, %p134
      %p136 = scmp.ne.s32.totalorder %s127, %s128
      %p137 = scmp.eq.s32.totalorder %s25, 0
      %p138 = por %p136, %p137
      %p139 = scmp.ne.s32.totalorder %s127, %s128
      %p140 = scmp.eq.s32.totalorder %s26, 1
      %p141 = por %p139, %p140
      %p143 = scmp.ne.s32.totalorder %s128, %s142
      %p144 = scmp.eq.s32.totalorder %s26, 0
      %p145 = por %p143, %p144
      %s146 = ssub.s32 %s27, %s39
      %s147 = ssub.s32 %s28, %s35
      %s148 = sor.u32 %s146, %s147
      %p149 = scmp.eq.s32.totalorder %s148, 0
      %s151 = sadd.s32 %s150, 1
      %s152 = scalar_select %p149, %s150, %s151
      %p155 = pneg %p149
      %p156 = scmp.eq.s32.totalorder %s20, 1
      %p157 = por %p155, %p156
      %p158 = scmp.ne.s32.totalorder %s150, %s153
      %p159 = scmp.eq.s32.totalorder %s20, 0
      %p160 = por %p158, %p159
      %p161 = scmp.ne.s32.totalorder %s150, %s153
      %p162 = scmp.eq.s32.totalorder %s25, 1
      %p163 = por %p161, %p162
      %p164 = scmp.ne.s32.totalorder %s153, %s154
      %p165 = scmp.eq.s32.totalorder %s25, 0
      %p166 = por %p164, %p165
      %p167 = scmp.ne.s32.totalorder %s153, %s154
      %p168 = scmp.eq.s32.totalorder %s26, 1
      %p169 = por %p167, %p168
      %p171 = scmp.ne.s32.totalorder %s154, %s170
      %p172 = scmp.eq.s32.totalorder %s26, 0
      %p173 = por %p171, %p172
      %p174 = scmp.le.s32.totalorder 1, %s20
      %p175 = scmp.lt.s32.totalorder %s20, 3
      %p176 = pnand %p174, %p175
      %p177 = pneg %p176
      // Predicated region
      $region9: #{tpu_custom_call.1} parent=5 // pred_check
        _
      $region10: #{tpu_custom_call.1} parent=5 // pred_check_branch
        %179 = sbr.rel (%p176) target = $region12
      $region11: #{tpu_custom_call.1} parent=5 // pred_region
        %s180 = ssub.s32 %s20, 1
        // Predicated region
        $region13: #{tpu_custom_call.1} parent=11 // pred_check
          %p181 = pneg %p117
        $region14: #{tpu_custom_call.1} parent=11 // pred_check_branch
          %183 = sbr.rel (%p181) target = $region16
        $region15: #{tpu_custom_call.1} parent=11 // pred_region
          %s185 = ssub.s32 8192, 8192
          %186 = vsyncadd [#allocation6], %s185
          %s187 = sshll.u32 [#allocation7], 4
          %s188 = int_to_ptr.vmem [resolvable:$true] %s187
          %193 = dma.hbm_to_vmem [thread:$0]  %s2, 8192, %s188, [#allocation6], 512, 512, 32
        $region16: #{tpu_custom_call.1} parent=11 // pred_fallthru
          _
        // Predicated region
        $region17: #{tpu_custom_call.1} parent=11 // pred_check
          %p194 = pneg %p138
        $region18: #{tpu_custom_call.1} parent=11 // pred_check_branch
          %196 = sbr.rel (%p194) target = $region20
        $region19: #{tpu_custom_call.1} parent=11 // pred_region
          %s198 = ssub.s32 32768, 32768
          %199 = vsyncadd [#allocation9], %s198
          %s200 = sshll.u32 [#allocation8], 4
          %s201 = int_to_ptr.vmem [resolvable:$true] %s200
          %206 = dma.hbm_to_vmem [thread:$0]  %s3, 32768, %s201, [#allocation9], 512, 512, 32
        $region20: #{tpu_custom_call.1} parent=11 // pred_fallthru
          _
      $region12: #{tpu_custom_call.1} parent=5 // pred_fallthru
        _
      %p207 = scmp.lt.s32.totalorder %s20, 2
      // Predicated region
      $region21: #{tpu_custom_call.1} parent=5 // pred_check
        %p208 = pneg %p207
      $region22: #{tpu_custom_call.1} parent=5 // pred_check_branch
        %210 = sbr.rel (%p208) target = $region24
      $region23: #{tpu_custom_call.1} parent=5 // pred_region
        // Predicated region
        $region25: #{tpu_custom_call.1} parent=23 // pred_check
          %p211 = pneg %p62
        $region26: #{tpu_custom_call.1} parent=23 // pred_check_branch
          %213 = sbr.rel (%p211) target = $region28
        $region27: #{tpu_custom_call.1} parent=23 // pred_region
          %s214 = sand.u32 %s52, 1
          %s215 = scalar_lea.sflag [#allocation3], %s214
          %s216 = sand.u32 %s52, 1
          %s217 = smul.addr %s216, 8
          %s218 = scalar_lea.vmem [#allocation2], %s217
          %s219 = smul.u32 %s28, 4
          %s220 = ssub.s32 %s219, 1
          %p221 = scmp.gt.s32.totalorder %s220, 0
          %s222 = scalar_select %p221, %s220, 0
          %s224 = ssub.s32 128, 128
          %225 = vsyncadd %s215, %s224
          %s226 = smul.addr %s27, 8
          %s227 = sadd.s32 %s222, %s226
          %s228 = smul.addr %s227, 128
          %s229 = scalar_lea.hbm %s0, %s228
          %s231 = sshll.u32 %s218, 4
          %s232 = int_to_ptr.vmem [resolvable:$true] %s231
          %234 = dma.hbm_to_vmem [thread:$0]  %s229, 128, %s232, %s215
        $region28: #{tpu_custom_call.1} parent=23 // pred_fallthru
          _
        // Predicated region
        $region29: #{tpu_custom_call.1} parent=23 // pred_check
          %p235 = pneg %p90
        $region30: #{tpu_custom_call.1} parent=23 // pred_check_branch
          %237 = sbr.rel (%p235) target = $region32
        $region31: #{tpu_custom_call.1} parent=23 // pred_region
          %s238 = sand.u32 %s20, 1
          %s239 = scalar_lea.sflag [#allocation6], %s238
          %s240 = sand.u32 %s80, 1
          %s241 = smul.addr %s240, 32
          %s242 = scalar_lea.vmem [#allocation5], %s241
          %s243 = smul.u32 4, %s28
          %s245 = ssub.s32 512, 512
          %246 = vsyncadd %s239, %s245
          %s247 = smul.addr %s27, 8
          %s248 = sadd.s32 %s243, %s247
          %s249 = smul.addr %s248, 128
          %s250 = scalar_lea.hbm %s1, %s249
          %s252 = sshll.u32 %s242, 4
          %s253 = int_to_ptr.vmem [resolvable:$true] %s252
          %255 = dma.hbm_to_vmem [thread:$0]  %s250, 512, %s253, %s239
        $region32: #{tpu_custom_call.1} parent=23 // pred_fallthru
          _
      $region24: #{tpu_custom_call.1} parent=5 // pred_fallthru
        _
      %p256 = scmp.le.s32.totalorder 1, %s20
      %p257 = scmp.lt.s32.totalorder %s20, 3
      %p258 = pnand %p256, %p257
      %p259 = pneg %p258
      // Predicated region
      $region33: #{tpu_custom_call.1} parent=5 // pred_check
        _
      $region34: #{tpu_custom_call.1} parent=5 // pred_check_branch
        %261 = sbr.rel (%p258) target = $region36
      $region35: #{tpu_custom_call.1} parent=5 // pred_region
        %s262 = ssub.s32 %s20, 1
        %s263 = sand.u32 %s55, 1
        %s264 = scalar_lea.sflag [#allocation3], %s263
        %s265 = sand.u32 %s55, 1
        %s266 = smul.addr %s265, 8
        %s267 = scalar_lea.vmem [#allocation2], %s266
        // Predicated region
        $region37: #{tpu_custom_call.1} parent=35 // pred_check
          %p268 = pneg %p68
        $region38: #{tpu_custom_call.1} parent=35 // pred_check_branch
          %270 = sbr.rel (%p268) target = $region40
        $region39: #{tpu_custom_call.1} parent=35 // pred_region
          %271 = dma.done %s264, 128
        $region40: #{tpu_custom_call.1} parent=35 // pred_fallthru
          _
        %s272 = sand.u32 %s25, 1
        %s273 = scalar_lea.sflag [#allocation6], %s272
        %s274 = sand.u32 %s83, 1
        %s275 = smul.addr %s274, 32
        %s276 = scalar_lea.vmem [#allocation5], %s275
        // Predicated region
        $region41: #{tpu_custom_call.1} parent=35 // pred_check
          %p277 = pneg %p96
        $region42: #{tpu_custom_call.1} parent=35 // pred_check_branch
          %279 = sbr.rel (%p277) target = $region44
        $region43: #{tpu_custom_call.1} parent=35 // pred_region
          %280 = dma.done %s273, 512
        $region44: #{tpu_custom_call.1} parent=35 // pred_fallthru
          _
        // Predicated region
        $region45: #{tpu_custom_call.1} parent=35 // pred_check
          %p281 = pneg %p117
        $region46: #{tpu_custom_call.1} parent=35 // pred_check_branch
          %283 = sbr.rel (%p281) target = $region48
        $region47: #{tpu_custom_call.1} parent=35 // pred_region
          %284 = dma.done [#allocation6], 8192
        $region48: #{tpu_custom_call.1} parent=35 // pred_fallthru
          _
        // Predicated region
        $region49: #{tpu_custom_call.1} parent=35 // pred_check
          %p285 = pneg %p138
        $region50: #{tpu_custom_call.1} parent=35 // pred_check_branch
          %287 = sbr.rel (%p285) target = $region52
        $region51: #{tpu_custom_call.1} parent=35 // pred_region
          %288 = dma.done [#allocation9], 32768
        $region52: #{tpu_custom_call.1} parent=35 // pred_fallthru
          _
        %s289 = sand.u32 %s55, 1
        %s290 = scalar_lea.sflag [#allocation3], %s289
        %s291 = sand.u32 %s55, 1
        %s292 = smul.addr %s291, 8
        %s293 = scalar_lea.vmem [#allocation2], %s292
        %p294 = pneg %p68
        %p295 = pneg %p65
        %s296 = sand.u32 %s25, 1
        %s297 = scalar_lea.sflag [#allocation6], %s296
        %s298 = sand.u32 %s83, 1
        %s299 = smul.addr %s298, 32
        %s300 = scalar_lea.vmem [#allocation5], %s299
        %p301 = pneg %p96
        %p302 = pneg %p93
        %p303 = pneg %p117
        %p304 = pneg %p114
        %p305 = pneg %p138
        %p306 = pneg %p135
        %p307 = pneg %p166
        %p308 = pneg %p163
        %s309 = sand.u32 %s153, 1
        %s310 = scalar_lea.sflag [#allocation4], %s309
        %s311 = sand.u32 %s153, 1
        %s312 = smul.addr %s311, 32
        %s313 = scalar_lea.vmem [#allocation10], %s312
        %s314 = smul.u32 %s30, 4
        %s315 = ssub.s32 %s314, 1
        %p316 = scmp.gt.s32.totalorder %s315, 0
        %s317 = scalar_select %p316, %s315, 0
        %s318 = smul.u32 4, %s30
        %s319 = smul.u32 4, %s30
        %v320 = vld [vmem:[%s276] sm:$0xff]
        %v321 = vld [vmem:[%s276 + $0x8] sm:$0xff]
        %v322 = vld [vmem:[%s276 + $0x10] sm:$0xff]
        %v323 = vld [vmem:[%s276 + $0x18] sm:$0xff]
        %v324 = vld [vmem:[#allocation8] sm:$0xff]
        %v325 = vld [vmem:[#allocation8 + $0x8] sm:$0xff]
        %v326 = vld [vmem:[#allocation8 + $0x10] sm:$0xff]
        %v327 = vld [vmem:[#allocation8 + $0x18] sm:$0xff]
        %v328 = vld [vmem:[#allocation8 + $0x20] sm:$0xff]
        %v329 = vld [vmem:[#allocation8 + $0x28] sm:$0xff]
        %v330 = vld [vmem:[#allocation8 + $0x30] sm:$0xff]
        %v331 = vld [vmem:[#allocation8 + $0x38] sm:$0xff]
        %v332 = vld [vmem:[#allocation8 + $0x40] sm:$0xff]
        %v333 = vld [vmem:[#allocation8 + $0x48] sm:$0xff]
        %v334 = vld [vmem:[#allocation8 + $0x50] sm:$0xff]
        %v335 = vld [vmem:[#allocation8 + $0x58] sm:$0xff]
        %v336 = vld [vmem:[#allocation8 + $0x60] sm:$0xff]
        %v337 = vld [vmem:[#allocation8 + $0x68] sm:$0xff]
        %v338 = vld [vmem:[#allocation8 + $0x70] sm:$0xff]
        %v339 = vld [vmem:[#allocation8 + $0x78] sm:$0xff]
        %v340 = vld [vmem:[#allocation8 + $0x80] sm:$0xff]
        %v341 = vld [vmem:[#allocation8 + $0x88] sm:$0xff]
        %v342 = vld [vmem:[#allocation8 + $0x90] sm:$0xff]
        %v343 = vld [vmem:[#allocation8 + $0x98] sm:$0xff]
        %v344 = vld [vmem:[#allocation8 + $0xa0] sm:$0xff]
        %v345 = vld [vmem:[#allocation8 + $0xa8] sm:$0xff]
        %v346 = vld [vmem:[#allocation8 + $0xb0] sm:$0xff]
        %v347 = vld [vmem:[#allocation8 + $0xb8] sm:$0xff]
        %v348 = vld [vmem:[#allocation8 + $0xc0] sm:$0xff]
        %v349 = vld [vmem:[#allocation8 + $0xc8] sm:$0xff]
        %v350 = vld [vmem:[#allocation8 + $0xd0] sm:$0xff]
        %v351 = vld [vmem:[#allocation8 + $0xd8] sm:$0xff]
        %v352 = vld [vmem:[#allocation8 + $0xe0] sm:$0xff]
        %v353 = vld [vmem:[#allocation8 + $0xe8] sm:$0xff]
        %v354 = vld [vmem:[#allocation8 + $0xf0] sm:$0xff]
        %v355 = vld [vmem:[#allocation8 + $0xf8] sm:$0xff]
        %v356 = vld [vmem:[#allocation8 + $0x100] sm:$0xff]
        %v357 = vld [vmem:[#allocation8 + $0x108] sm:$0xff]
        %v358 = vld [vmem:[#allocation8 + $0x110] sm:$0xff]
        %v359 = vld [vmem:[#allocation8 + $0x118] sm:$0xff]
        %v360 = vld [vmem:[#allocation8 + $0x120] sm:$0xff]
        %v361 = vld [vmem:[#allocation8 + $0x128] sm:$0xff]
        %v362 = vld [vmem:[#allocation8 + $0x130] sm:$0xff]
        %v363 = vld [vmem:[#allocation8 + $0x138] sm:$0xff]
        %v364 = vld [vmem:[#allocation8 + $0x140] sm:$0xff]
        %v365 = vld [vmem:[#allocation8 + $0x148] sm:$0xff]
        %v366 = vld [vmem:[#allocation8 + $0x150] sm:$0xff]
        %v367 = vld [vmem:[#allocation8 + $0x158] sm:$0xff]
        %v368 = vld [vmem:[#allocation8 + $0x160] sm:$0xff]
        %v369 = vld [vmem:[#allocation8 + $0x168] sm:$0xff]
        %v370 = vld [vmem:[#allocation8 + $0x170] sm:$0xff]
        %v371 = vld [vmem:[#allocation8 + $0x178] sm:$0xff]
        %v372 = vld [vmem:[#allocation8 + $0x180] sm:$0xff]
        %v373 = vld [vmem:[#allocation8 + $0x188] sm:$0xff]
        %v374 = vld [vmem:[#allocation8 + $0x190] sm:$0xff]
        %v375 = vld [vmem:[#allocation8 + $0x198] sm:$0xff]
        %v376 = vld [vmem:[#allocation8 + $0x1a0] sm:$0xff]
        %v377 = vld [vmem:[#allocation8 + $0x1a8] sm:$0xff]
        %v378 = vld [vmem:[#allocation8 + $0x1b0] sm:$0xff]
        %v379 = vld [vmem:[#allocation8 + $0x1b8] sm:$0xff]
        %v380 = vld [vmem:[#allocation8 + $0x1c0] sm:$0xff]
        %v381 = vld [vmem:[#allocation8 + $0x1c8] sm:$0xff]
        %v382 = vld [vmem:[#allocation8 + $0x1d0] sm:$0xff]
        %v383 = vld [vmem:[#allocation8 + $0x1d8] sm:$0xff]
        %v384 = vld [vmem:[#allocation8 + $0x1e0] sm:$0xff]
        %v385 = vld [vmem:[#allocation8 + $0x1e8] sm:$0xff]
        %v386 = vld [vmem:[#allocation8 + $0x1f0] sm:$0xff]
        %v387 = vld [vmem:[#allocation8 + $0x1f8] sm:$0xff]
        %v388 = vld [vmem:[#allocation8 + $0x200] sm:$0xff]
        %v389 = vld [vmem:[#allocation8 + $0x208] sm:$0xff]
        %v390 = vld [vmem:[#allocation8 + $0x210] sm:$0xff]
        %v391 = vld [vmem:[#allocation8 + $0x218] sm:$0xff]
        %v392 = vld [vmem:[#allocation8 + $0x220] sm:$0xff]
        %v393 = vld [vmem:[#allocation8 + $0x228] sm:$0xff]
        %v394 = vld [vmem:[#allocation8 + $0x230] sm:$0xff]
        %v395 = vld [vmem:[#allocation8 + $0x238] sm:$0xff]
        %v396 = vld [vmem:[#allocation8 + $0x240] sm:$0xff]
        %v397 = vld [vmem:[#allocation8 + $0x248] sm:$0xff]
        %v398 = vld [vmem:[#allocation8 + $0x250] sm:$0xff]
        %v399 = vld [vmem:[#allocation8 + $0x258] sm:$0xff]
        %v400 = vld [vmem:[#allocation8 + $0x260] sm:$0xff]
        %v401 = vld [vmem:[#allocation8 + $0x268] sm:$0xff]
        %v402 = vld [vmem:[#allocation8 + $0x270] sm:$0xff]
        %v403 = vld [vmem:[#allocation8 + $0x278] sm:$0xff]
        %v404 = vld [vmem:[#allocation8 + $0x280] sm:$0xff]
        %v405 = vld [vmem:[#allocation8 + $0x288] sm:$0xff]
        %v406 = vld [vmem:[#allocation8 + $0x290] sm:$0xff]
        %v407 = vld [vmem:[#allocation8 + $0x298] sm:$0xff]
        %v408 = vld [vmem:[#allocation8 + $0x2a0] sm:$0xff]
        %v409 = vld [vmem:[#allocation8 + $0x2a8] sm:$0xff]
        %v410 = vld [vmem:[#allocation8 + $0x2b0] sm:$0xff]
        %v411 = vld [vmem:[#allocation8 + $0x2b8] sm:$0xff]
        %v412 = vld [vmem:[#allocation8 + $0x2c0] sm:$0xff]
        %v413 = vld [vmem:[#allocation8 + $0x2c8] sm:$0xff]
        %v414 = vld [vmem:[#allocation8 + $0x2d0] sm:$0xff]
        %v415 = vld [vmem:[#allocation8 + $0x2d8] sm:$0xff]
        %v416 = vld [vmem:[#allocation8 + $0x2e0] sm:$0xff]
        %v417 = vld [vmem:[#allocation8 + $0x2e8] sm:$0xff]
        %v418 = vld [vmem:[#allocation8 + $0x2f0] sm:$0xff]
        %v419 = vld [vmem:[#allocation8 + $0x2f8] sm:$0xff]
        %v420 = vld [vmem:[#allocation8 + $0x300] sm:$0xff]
        %v421 = vld [vmem:[#allocation8 + $0x308] sm:$0xff]
        %v422 = vld [vmem:[#allocation8 + $0x310] sm:$0xff]
        %v423 = vld [vmem:[#allocation8 + $0x318] sm:$0xff]
        %v424 = vld [vmem:[#allocation8 + $0x320] sm:$0xff]
        %v425 = vld [vmem:[#allocation8 + $0x328] sm:$0xff]
        %v426 = vld [vmem:[#allocation8 + $0x330] sm:$0xff]
        %v427 = vld [vmem:[#allocation8 + $0x338] sm:$0xff]
        %v428 = vld [vmem:[#allocation8 + $0x340] sm:$0xff]
        %v429 = vld [vmem:[#allocation8 + $0x348] sm:$0xff]
        %v430 = vld [vmem:[#allocation8 + $0x350] sm:$0xff]
        %v431 = vld [vmem:[#allocation8 + $0x358] sm:$0xff]
        %v432 = vld [vmem:[#allocation8 + $0x360] sm:$0xff]
        %v433 = vld [vmem:[#allocation8 + $0x368] sm:$0xff]
        %v434 = vld [vmem:[#allocation8 + $0x370] sm:$0xff]
        %v435 = vld [vmem:[#allocation8 + $0x378] sm:$0xff]
        %v436 = vld [vmem:[#allocation8 + $0x380] sm:$0xff]
        %v437 = vld [vmem:[#allocation8 + $0x388] sm:$0xff]
        %v438 = vld [vmem:[#allocation8 + $0x390] sm:$0xff]
        %v439 = vld [vmem:[#allocation8 + $0x398] sm:$0xff]
        %v440 = vld [vmem:[#allocation8 + $0x3a0] sm:$0xff]
        %v441 = vld [vmem:[#allocation8 + $0x3a8] sm:$0xff]
        %v442 = vld [vmem:[#allocation8 + $0x3b0] sm:$0xff]
        %v443 = vld [vmem:[#allocation8 + $0x3b8] sm:$0xff]
        %v444 = vld [vmem:[#allocation8 + $0x3c0] sm:$0xff]
        %v445 = vld [vmem:[#allocation8 + $0x3c8] sm:$0xff]
        %v446 = vld [vmem:[#allocation8 + $0x3d0] sm:$0xff]
        %v447 = vld [vmem:[#allocation8 + $0x3d8] sm:$0xff]
        %v448 = vld [vmem:[#allocation8 + $0x3e0] sm:$0xff]
        %v449 = vld [vmem:[#allocation8 + $0x3e8] sm:$0xff]
        %v450 = vld [vmem:[#allocation8 + $0x3f0] sm:$0xff]
        %v451 = vld [vmem:[#allocation8 + $0x3f8] sm:$0xff]
        %v452 = vld [vmem:[#allocation8 + $0x400] sm:$0xff]
        %v453 = vld [vmem:[#allocation8 + $0x408] sm:$0xff]
        %v454 = vld [vmem:[#allocation8 + $0x410] sm:$0xff]
        %v455 = vld [vmem:[#allocation8 + $0x418] sm:$0xff]
        %v456 = vld [vmem:[#allocation8 + $0x420] sm:$0xff]
        %v457 = vld [vmem:[#allocation8 + $0x428] sm:$0xff]
        %v458 = vld [vmem:[#allocation8 + $0x430] sm:$0xff]
        %v459 = vld [vmem:[#allocation8 + $0x438] sm:$0xff]
        %v460 = vld [vmem:[#allocation8 + $0x440] sm:$0xff]
        %v461 = vld [vmem:[#allocation8 + $0x448] sm:$0xff]
        %v462 = vld [vmem:[#allocation8 + $0x450] sm:$0xff]
        %v463 = vld [vmem:[#allocation8 + $0x458] sm:$0xff]
        %v464 = vld [vmem:[#allocation8 + $0x460] sm:$0xff]
        %v465 = vld [vmem:[#allocation8 + $0x468] sm:$0xff]
        %v466 = vld [vmem:[#allocation8 + $0x470] sm:$0xff]
        %v467 = vld [vmem:[#allocation8 + $0x478] sm:$0xff]
        %v468 = vld [vmem:[#allocation8 + $0x480] sm:$0xff]
        %v469 = vld [vmem:[#allocation8 + $0x488] sm:$0xff]
        %v470 = vld [vmem:[#allocation8 + $0x490] sm:$0xff]
        %v471 = vld [vmem:[#allocation8 + $0x498] sm:$0xff]
        %v472 = vld [vmem:[#allocation8 + $0x4a0] sm:$0xff]
        %v473 = vld [vmem:[#allocation8 + $0x4a8] sm:$0xff]
        %v474 = vld [vmem:[#allocation8 + $0x4b0] sm:$0xff]
        %v475 = vld [vmem:[#allocation8 + $0x4b8] sm:$0xff]
        %v476 = vld [vmem:[#allocation8 + $0x4c0] sm:$0xff]
        %v477 = vld [vmem:[#allocation8 + $0x4c8] sm:$0xff]
        %v478 = vld [vmem:[#allocation8 + $0x4d0] sm:$0xff]
        %v479 = vld [vmem:[#allocation8 + $0x4d8] sm:$0xff]
        %v480 = vld [vmem:[#allocation8 + $0x4e0] sm:$0xff]
        %v481 = vld [vmem:[#allocation8 + $0x4e8] sm:$0xff]
        %v482 = vld [vmem:[#allocation8 + $0x4f0] sm:$0xff]
        %v483 = vld [vmem:[#allocation8 + $0x4f8] sm:$0xff]
        %v484 = vld [vmem:[#allocation8 + $0x500] sm:$0xff]
        %v485 = vld [vmem:[#allocation8 + $0x508] sm:$0xff]
        %v486 = vld [vmem:[#allocation8 + $0x510] sm:$0xff]
        %v487 = vld [vmem:[#allocation8 + $0x518] sm:$0xff]
        %v488 = vld [vmem:[#allocation8 + $0x520] sm:$0xff]
        %v489 = vld [vmem:[#allocation8 + $0x528] sm:$0xff]
        %v490 = vld [vmem:[#allocation8 + $0x530] sm:$0xff]
        %v491 = vld [vmem:[#allocation8 + $0x538] sm:$0xff]
        %v492 = vld [vmem:[#allocation8 + $0x540] sm:$0xff]
        %v493 = vld [vmem:[#allocation8 + $0x548] sm:$0xff]
        %v494 = vld [vmem:[#allocation8 + $0x550] sm:$0xff]
        %v495 = vld [vmem:[#allocation8 + $0x558] sm:$0xff]
        %v496 = vld [vmem:[#allocation8 + $0x560] sm:$0xff]
        %v497 = vld [vmem:[#allocation8 + $0x568] sm:$0xff]
        %v498 = vld [vmem:[#allocation8 + $0x570] sm:$0xff]
        %v499 = vld [vmem:[#allocation8 + $0x578] sm:$0xff]
        %v500 = vld [vmem:[#allocation8 + $0x580] sm:$0xff]
        %v501 = vld [vmem:[#allocation8 + $0x588] sm:$0xff]
        %v502 = vld [vmem:[#allocation8 + $0x590] sm:$0xff]
        %v503 = vld [vmem:[#allocation8 + $0x598] sm:$0xff]
        %v504 = vld [vmem:[#allocation8 + $0x5a0] sm:$0xff]
        %v505 = vld [vmem:[#allocation8 + $0x5a8] sm:$0xff]
        %v506 = vld [vmem:[#allocation8 + $0x5b0] sm:$0xff]
        %v507 = vld [vmem:[#allocation8 + $0x5b8] sm:$0xff]
        %v508 = vld [vmem:[#allocation8 + $0x5c0] sm:$0xff]
        %v509 = vld [vmem:[#allocation8 + $0x5c8] sm:$0xff]
        %v510 = vld [vmem:[#allocation8 + $0x5d0] sm:$0xff]
        %v511 = vld [vmem:[#allocation8 + $0x5d8] sm:$0xff]
        %v512 = vld [vmem:[#allocation8 + $0x5e0] sm:$0xff]
        %v513 = vld [vmem:[#allocation8 + $0x5e8] sm:$0xff]
        %v514 = vld [vmem:[#allocation8 + $0x5f0] sm:$0xff]
        %v515 = vld [vmem:[#allocation8 + $0x5f8] sm:$0xff]
        %v516 = vld [vmem:[#allocation8 + $0x600] sm:$0xff]
        %v517 = vld [vmem:[#allocation8 + $0x608] sm:$0xff]
        %v518 = vld [vmem:[#allocation8 + $0x610] sm:$0xff]
        %v519 = vld [vmem:[#allocation8 + $0x618] sm:$0xff]
        %v520 = vld [vmem:[#allocation8 + $0x620] sm:$0xff]
        %v521 = vld [vmem:[#allocation8 + $0x628] sm:$0xff]
        %v522 = vld [vmem:[#allocation8 + $0x630] sm:$0xff]
        %v523 = vld [vmem:[#allocation8 + $0x638] sm:$0xff]
        %v524 = vld [vmem:[#allocation8 + $0x640] sm:$0xff]
        %v525 = vld [vmem:[#allocation8 + $0x648] sm:$0xff]
        %v526 = vld [vmem:[#allocation8 + $0x650] sm:$0xff]
        %v527 = vld [vmem:[#allocation8 + $0x658] sm:$0xff]
        %v528 = vld [vmem:[#allocation8 + $0x660] sm:$0xff]
        %v529 = vld [vmem:[#allocation8 + $0x668] sm:$0xff]
        %v530 = vld [vmem:[#allocation8 + $0x670] sm:$0xff]
        %v531 = vld [vmem:[#allocation8 + $0x678] sm:$0xff]
        %v532 = vld [vmem:[#allocation8 + $0x680] sm:$0xff]
        %v533 = vld [vmem:[#allocation8 + $0x688] sm:$0xff]
        %v534 = vld [vmem:[#allocation8 + $0x690] sm:$0xff]
        %v535 = vld [vmem:[#allocation8 + $0x698] sm:$0xff]
        %v536 = vld [vmem:[#allocation8 + $0x6a0] sm:$0xff]
        %v537 = vld [vmem:[#allocation8 + $0x6a8] sm:$0xff]
        %v538 = vld [vmem:[#allocation8 + $0x6b0] sm:$0xff]
        %v539 = vld [vmem:[#allocation8 + $0x6b8] sm:$0xff]
        %v540 = vld [vmem:[#allocation8 + $0x6c0] sm:$0xff]
        %v541 = vld [vmem:[#allocation8 + $0x6c8] sm:$0xff]
        %v542 = vld [vmem:[#allocation8 + $0x6d0] sm:$0xff]
        %v543 = vld [vmem:[#allocation8 + $0x6d8] sm:$0xff]
        %v544 = vld [vmem:[#allocation8 + $0x6e0] sm:$0xff]
        %v545 = vld [vmem:[#allocation8 + $0x6e8] sm:$0xff]
        %v546 = vld [vmem:[#allocation8 + $0x6f0] sm:$0xff]
        %v547 = vld [vmem:[#allocation8 + $0x6f8] sm:$0xff]
        %v548 = vld [vmem:[#allocation8 + $0x700] sm:$0xff]
        %v549 = vld [vmem:[#allocation8 + $0x708] sm:$0xff]
        %v550 = vld [vmem:[#allocation8 + $0x710] sm:$0xff]
        %v551 = vld [vmem:[#allocation8 + $0x718] sm:$0xff]
        %v552 = vld [vmem:[#allocation8 + $0x720] sm:$0xff]
        %v553 = vld [vmem:[#allocation8 + $0x728] sm:$0xff]
        %v554 = vld [vmem:[#allocation8 + $0x730] sm:$0xff]
        %v555 = vld [vmem:[#allocation8 + $0x738] sm:$0xff]
        %v556 = vld [vmem:[#allocation8 + $0x740] sm:$0xff]
        %v557 = vld [vmem:[#allocation8 + $0x748] sm:$0xff]
        %v558 = vld [vmem:[#allocation8 + $0x750] sm:$0xff]
        %v559 = vld [vmem:[#allocation8 + $0x758] sm:$0xff]
        %v560 = vld [vmem:[#allocation8 + $0x760] sm:$0xff]
        %v561 = vld [vmem:[#allocation8 + $0x768] sm:$0xff]
        %v562 = vld [vmem:[#allocation8 + $0x770] sm:$0xff]
        %v563 = vld [vmem:[#allocation8 + $0x778] sm:$0xff]
        %v564 = vld [vmem:[#allocation8 + $0x780] sm:$0xff]
        %v565 = vld [vmem:[#allocation8 + $0x788] sm:$0xff]
        %v566 = vld [vmem:[#allocation8 + $0x790] sm:$0xff]
        %v567 = vld [vmem:[#allocation8 + $0x798] sm:$0xff]
        %v568 = vld [vmem:[#allocation8 + $0x7a0] sm:$0xff]
        %v569 = vld [vmem:[#allocation8 + $0x7a8] sm:$0xff]
        %v570 = vld [vmem:[#allocation8 + $0x7b0] sm:$0xff]
        %v571 = vld [vmem:[#allocation8 + $0x7b8] sm:$0xff]
        %v572 = vld [vmem:[#allocation8 + $0x7c0] sm:$0xff]
        %v573 = vld [vmem:[#allocation8 + $0x7c8] sm:$0xff]
        %v574 = vld [vmem:[#allocation8 + $0x7d0] sm:$0xff]
        %v575 = vld [vmem:[#allocation8 + $0x7d8] sm:$0xff]
        %v576 = vld [vmem:[#allocation8 + $0x7e0] sm:$0xff]
        %v577 = vld [vmem:[#allocation8 + $0x7e8] sm:$0xff]
        %v578 = vld [vmem:[#allocation8 + $0x7f0] sm:$0xff]
        %v579 = vld [vmem:[#allocation8 + $0x7f8] sm:$0xff]
        %v580 = vld [vmem:[%s267] sm:$0xff]
        %p581 = scmp.gt.s32.totalorder %s30, 0
        %s582 = scalar_select %p581, 1, 0
        %s583 = scvt.s32.f32 %s582
        %v584 = vstv %s583
        %v585 = vmul.f32 %v580, %v584
        %v586 = vld [vmem:[#allocation7] sm:$0xff]
        %v587 = vld [vmem:[#allocation7 + $0x8] sm:$0xff]
        %v588 = vld [vmem:[#allocation7 + $0x10] sm:$0xff]
        %v589 = vld [vmem:[#allocation7 + $0x18] sm:$0xff]
        %v590 = vld [vmem:[#allocation7 + $0x20] sm:$0xff]
        %v591 = vld [vmem:[#allocation7 + $0x28] sm:$0xff]
        %v592 = vld [vmem:[#allocation7 + $0x30] sm:$0xff]
        %v593 = vld [vmem:[#allocation7 + $0x38] sm:$0xff]
        %v594 = vld [vmem:[#allocation7 + $0x40] sm:$0xff]
        %v595 = vld [vmem:[#allocation7 + $0x48] sm:$0xff]
        %v596 = vld [vmem:[#allocation7 + $0x50] sm:$0xff]
        %v597 = vld [vmem:[#allocation7 + $0x58] sm:$0xff]
        %v598 = vld [vmem:[#allocation7 + $0x60] sm:$0xff]
        %v599 = vld [vmem:[#allocation7 + $0x68] sm:$0xff]
        %v600 = vld [vmem:[#allocation7 + $0x70] sm:$0xff]
        %v601 = vld [vmem:[#allocation7 + $0x78] sm:$0xff]
        %v602 = vld [vmem:[#allocation7 + $0x80] sm:$0xff]
        %v603 = vld [vmem:[#allocation7 + $0x88] sm:$0xff]
        %v604 = vld [vmem:[#allocation7 + $0x90] sm:$0xff]
        %v605 = vld [vmem:[#allocation7 + $0x98] sm:$0xff]
        %v606 = vld [vmem:[#allocation7 + $0xa0] sm:$0xff]
        %v607 = vld [vmem:[#allocation7 + $0xa8] sm:$0xff]
        %v608 = vld [vmem:[#allocation7 + $0xb0] sm:$0xff]
        %v609 = vld [vmem:[#allocation7 + $0xb8] sm:$0xff]
        %v610 = vld [vmem:[#allocation7 + $0xc0] sm:$0xff]
        %v611 = vld [vmem:[#allocation7 + $0xc8] sm:$0xff]
        %v612 = vld [vmem:[#allocation7 + $0xd0] sm:$0xff]
        %v613 = vld [vmem:[#allocation7 + $0xd8] sm:$0xff]
        %v614 = vld [vmem:[#allocation7 + $0xe0] sm:$0xff]
        %v615 = vld [vmem:[#allocation7 + $0xe8] sm:$0xff]
        %v616 = vld [vmem:[#allocation7 + $0xf0] sm:$0xff]
        %v617 = vld [vmem:[#allocation7 + $0xf8] sm:$0xff]
        %v618 = vld [vmem:[#allocation7 + $0x100] sm:$0xff]
        %v619 = vld [vmem:[#allocation7 + $0x108] sm:$0xff]
        %v620 = vld [vmem:[#allocation7 + $0x110] sm:$0xff]
        %v621 = vld [vmem:[#allocation7 + $0x118] sm:$0xff]
        %v622 = vld [vmem:[#allocation7 + $0x120] sm:$0xff]
        %v623 = vld [vmem:[#allocation7 + $0x128] sm:$0xff]
        %v624 = vld [vmem:[#allocation7 + $0x130] sm:$0xff]
        %v625 = vld [vmem:[#allocation7 + $0x138] sm:$0xff]
        %v626 = vld [vmem:[#allocation7 + $0x140] sm:$0xff]
        %v627 = vld [vmem:[#allocation7 + $0x148] sm:$0xff]
        %v628 = vld [vmem:[#allocation7 + $0x150] sm:$0xff]
        %v629 = vld [vmem:[#allocation7 + $0x158] sm:$0xff]
        %v630 = vld [vmem:[#allocation7 + $0x160] sm:$0xff]
        %v631 = vld [vmem:[#allocation7 + $0x168] sm:$0xff]
        %v632 = vld [vmem:[#allocation7 + $0x170] sm:$0xff]
        %v633 = vld [vmem:[#allocation7 + $0x178] sm:$0xff]
        %v634 = vld [vmem:[#allocation7 + $0x180] sm:$0xff]
        %v635 = vld [vmem:[#allocation7 + $0x188] sm:$0xff]
        %v636 = vld [vmem:[#allocation7 + $0x190] sm:$0xff]
        %v637 = vld [vmem:[#allocation7 + $0x198] sm:$0xff]
        %v638 = vld [vmem:[#allocation7 + $0x1a0] sm:$0xff]
        %v639 = vld [vmem:[#allocation7 + $0x1a8] sm:$0xff]
        %v640 = vld [vmem:[#allocation7 + $0x1b0] sm:$0xff]
        %v641 = vld [vmem:[#allocation7 + $0x1b8] sm:$0xff]
        %v642 = vld [vmem:[#allocation7 + $0x1c0] sm:$0xff]
        %v643 = vld [vmem:[#allocation7 + $0x1c8] sm:$0xff]
        %v644 = vld [vmem:[#allocation7 + $0x1d0] sm:$0xff]
        %v645 = vld [vmem:[#allocation7 + $0x1d8] sm:$0xff]
        %v646 = vld [vmem:[#allocation7 + $0x1e0] sm:$0xff]
        %v647 = vld [vmem:[#allocation7 + $0x1e8] sm:$0xff]
        %v648 = vld [vmem:[#allocation7 + $0x1f0] sm:$0xff]
        %v649 = vld [vmem:[#allocation7 + $0x1f8] sm:$0xff]
        %v650 = vand.u32 %v647, 4294901760
        %651 = vmatprep.subr.mxu0 %v650
        %v652 = vand.u32 %v646, 4294901760
        %653 = vmatpush1.msra.mxu0 %v652
        %v654 = vand.u32 %v643, 4294901760
        %655 = vmatprep.subr.mxu0 %v654
        %v656 = vand.u32 %v642, 4294901760
        %657 = vmatpush1.msra.mxu0 %v656
        %v658 = vand.u32 %v639, 4294901760
        %659 = vmatprep.subr.mxu0 %v658
        %v660 = vand.u32 %v638, 4294901760
        %661 = vmatpush1.msra.mxu0 %v660
        %v662 = vand.u32 %v635, 4294901760
        %663 = vmatprep.subr.mxu0 %v662
        %v664 = vand.u32 %v634, 4294901760
        %665 = vmatpush1.msra.mxu0 %v664
        %v666 = vand.u32 %v631, 4294901760
        %667 = vmatprep.subr.mxu0 %v666
        %v668 = vand.u32 %v630, 4294901760
        %669 = vmatpush1.msra.mxu0 %v668
        %v670 = vand.u32 %v627, 4294901760
        %671 = vmatprep.subr.mxu0 %v670
        %v672 = vand.u32 %v626, 4294901760
        %673 = vmatpush1.msra.mxu0 %v672
        %v674 = vand.u32 %v623, 4294901760
        %675 = vmatprep.subr.mxu0 %v674
        %v676 = vand.u32 %v622, 4294901760
        %677 = vmatpush1.msra.mxu0 %v676
        %v678 = vand.u32 %v619, 4294901760
        %679 = vmatprep.subr.mxu0 %v678
        %v680 = vand.u32 %v618, 4294901760
        %681 = vmatpush1.msra.mxu0 %v680
        %v682 = vand.u32 %v615, 4294901760
        %683 = vmatprep.subr.mxu0 %v682
        %v684 = vand.u32 %v614, 4294901760
        %685 = vmatpush1.msra.mxu0 %v684
        %v686 = vand.u32 %v611, 4294901760
        %687 = vmatprep.subr.mxu0 %v686
        %v688 = vand.u32 %v610, 4294901760
        %689 = vmatpush1.msra.mxu0 %v688
        %v690 = vand.u32 %v607, 4294901760
        %691 = vmatprep.subr.mxu0 %v690
        %v692 = vand.u32 %v606, 4294901760
        %693 = vmatpush1.msra.mxu0 %v692
        %v694 = vand.u32 %v603, 4294901760
        %695 = vmatprep.subr.mxu0 %v694
        %v696 = vand.u32 %v602, 4294901760
        %697 = vmatpush1.msra.mxu0 %v696
        %v698 = vand.u32 %v599, 4294901760
        %699 = vmatprep.subr.mxu0 %v698
        %v700 = vand.u32 %v598, 4294901760
        %701 = vmatpush1.msra.mxu0 %v700
        %v702 = vand.u32 %v595, 4294901760
        %703 = vmatprep.subr.mxu0 %v702
        %v704 = vand.u32 %v594, 4294901760
        %705 = vmatpush1.msra.mxu0 %v704
        %v706 = vand.u32 %v591, 4294901760
        %707 = vmatprep.subr.mxu0 %v706
        %v708 = vand.u32 %v590, 4294901760
        %709 = vmatpush1.msra.mxu0 %v708
        %v710 = vand.u32 %v587, 4294901760
        %711 = vmatprep.subr.mxu0 %v710
        %v712 = vand.u32 %v586, 4294901760
        %713 = vmatpush1.msra.mxu0 %v712
        %714 = vmatprep.subr.mxu0 0.0
        %715 = vmatpush2.msra.mxu0 0.0
        %716 = vmatprep.subr.mxu0 0.0
        %717 = vmatpush2.msra.mxu0 0.0
        %718 = vmatprep.subr.mxu0 0.0
        %719 = vmatpush2.msra.mxu0 0.0
        %720 = vmatprep.subr.mxu0 0.0
        %721 = vmatpush2.msra.mxu0 0.0
        %722 = vmatprep.subr.mxu0 0.0
        %723 = vmatpush2.msra.mxu0 0.0
        %724 = vmatprep.subr.mxu0 0.0
        %725 = vmatpush2.msra.mxu0 0.0
        %726 = vmatprep.subr.mxu0 0.0
        %727 = vmatpush2.msra.mxu0 0.0
        %728 = vmatprep.subr.mxu0 0.0
        %729 = vmatpush2.msra.mxu0 0.0
        %730 = vmatprep.subr.mxu0 0.0
        %731 = vmatpush2.msra.mxu0 0.0
        %732 = vmatprep.subr.mxu0 0.0
        %733 = vmatpush2.msra.mxu0 0.0
        %734 = vmatprep.subr.mxu0 0.0
        %735 = vmatpush2.msra.mxu0 0.0
        %736 = vmatprep.subr.mxu0 0.0
        %737 = vmatpush2.msra.mxu0 0.0
        %738 = vmatprep.subr.mxu0 0.0
        %739 = vmatpush2.msra.mxu0 0.0
        %740 = vmatprep.subr.mxu0 0.0
        %741 = vmatpush2.msra.mxu0 0.0
        %742 = vmatprep.subr.mxu0 0.0
        %743 = vmatpush2.msra.mxu0 0.0
        %744 = vmatprep.subr.mxu0 0.0
        %745 = vmatpush2.msra.mxu0 0.0
        %746 = vmatprep.mubr.f32.mxu0 0.0
        %v747 = vand.u32 %v585, 4294901760
        %v748 = vsub.f32 %v585, %v747
        %v749 = vand.u32 %v748, 4294901760
        %v750 = vsub.f32 %v748, %v749
        %v751 = vand.u32 %v750, 4294901760
        %752 = vmatmul.mubr.f32.gmra.mxu0 %v751
        %v753 = vpop.f32.mrf.mxu0
        %v754 = vadd.f32 0.0, %v753
        %v755 = vpop.f32.mrf.mxu0
        %v756 = vadd.f32 0.0, %v755
        %757 = vdwg.mxu0
        %v758 = vand.u32 %v647, 4294901760
        %v759 = vsub.f32 %v647, %v758
        %v760 = vand.u32 %v759, 4294901760
        %v761 = vsub.f32 %v759, %v760
        %v762 = vand.u32 %v761, 4294901760
        %763 = vmatprep.subr.mxu0 %v762
        %v764 = vand.u32 %v646, 4294901760
        %v765 = vsub.f32 %v646, %v764
        %v766 = vand.u32 %v765, 4294901760
        %v767 = vsub.f32 %v765, %v766
        %v768 = vand.u32 %v767, 4294901760
        %769 = vmatpush1.msra.mxu0 %v768
        %v770 = vand.u32 %v643, 4294901760
        %v771 = vsub.f32 %v643, %v770
        %v772 = vand.u32 %v771, 4294901760
        %v773 = vsub.f32 %v771, %v772
        %v774 = vand.u32 %v773, 4294901760
        %775 = vmatprep.subr.mxu0 %v774
        %v776 = vand.u32 %v642, 4294901760
        %v777 = vsub.f32 %v642, %v776
        %v778 = vand.u32 %v777, 4294901760
        %v779 = vsub.f32 %v777, %v778
        %v780 = vand.u32 %v779, 4294901760
        %781 = vmatpush1.msra.mxu0 %v780
        %v782 = vand.u32 %v639, 4294901760
        %v783 = vsub.f32 %v639, %v782
        %v784 = vand.u32 %v783, 4294901760
        %v785 = vsub.f32 %v783, %v784
        %v786 = vand.u32 %v785, 4294901760
        %787 = vmatprep.subr.mxu0 %v786
        %v788 = vand.u32 %v638, 4294901760
        %v789 = vsub.f32 %v638, %v788
        %v790 = vand.u32 %v789, 4294901760
        %v791 = vsub.f32 %v789, %v790
        %v792 = vand.u32 %v791, 4294901760
        %793 = vmatpush1.msra.mxu0 %v792
        %v794 = vand.u32 %v635, 4294901760
        %v795 = vsub.f32 %v635, %v794
        %v796 = vand.u32 %v795, 4294901760
        %v797 = vsub.f32 %v795, %v796
        %v798 = vand.u32 %v797, 4294901760
        %799 = vmatprep.subr.mxu0 %v798
        %v800 = vand.u32 %v634, 4294901760
        %v801 = vsub.f32 %v634, %v800
        %v802 = vand.u32 %v801, 4294901760
        %v803 = vsub.f32 %v801, %v802
        %v804 = vand.u32 %v803, 4294901760
        %805 = vmatpush1.msra.mxu0 %v804
        %v806 = vand.u32 %v631, 4294901760
        %v807 = vsub.f32 %v631, %v806
        %v808 = vand.u32 %v807, 4294901760
        %v809 = vsub.f32 %v807, %v808
        %v810 = vand.u32 %v809, 4294901760
        %811 = vmatprep.subr.mxu0 %v810
        %v812 = vand.u32 %v630, 4294901760
        %v813 = vsub.f32 %v630, %v812
        %v814 = vand.u32 %v813, 4294901760
        %v815 = vsub.f32 %v813, %v814
        %v816 = vand.u32 %v815, 4294901760
        %817 = vmatpush1.msra.mxu0 %v816
        %v818 = vand.u32 %v627, 4294901760
        %v819 = vsub.f32 %v627, %v818
        %v820 = vand.u32 %v819, 4294901760
        %v821 = vsub.f32 %v819, %v820
        %v822 = vand.u32 %v821, 4294901760
        %823 = vmatprep.subr.mxu0 %v822
        %v824 = vand.u32 %v626, 4294901760
        %v825 = vsub.f32 %v626, %v824
        %v826 = vand.u32 %v825, 4294901760
        %v827 = vsub.f32 %v825, %v826
        %v828 = vand.u32 %v827, 4294901760
        %829 = vmatpush1.msra.mxu0 %v828
        %v830 = vand.u32 %v623, 4294901760
        %v831 = vsub.f32 %v623, %v830
        %v832 = vand.u32 %v831, 4294901760
        %v833 = vsub.f32 %v831, %v832
        %v834 = vand.u32 %v833, 4294901760
        %835 = vmatprep.subr.mxu0 %v834
        %v836 = vand.u32 %v622, 4294901760
        %v837 = vsub.f32 %v622, %v836
        %v838 = vand.u32 %v837, 4294901760
        %v839 = vsub.f32 %v837, %v838
        %v840 = vand.u32 %v839, 4294901760
        %841 = vmatpush1.msra.mxu0 %v840
        %v842 = vand.u32 %v619, 4294901760
        %v843 = vsub.f32 %v619, %v842
        %v844 = vand.u32 %v843, 4294901760
        %v845 = vsub.f32 %v843, %v844
        %v846 = vand.u32 %v845, 4294901760
        %847 = vmatprep.subr.mxu0 %v846
        %v848 = vand.u32 %v618, 4294901760
        %v849 = vsub.f32 %v618, %v848
        %v850 = vand.u32 %v849, 4294901760
        %v851 = vsub.f32 %v849, %v850
        %v852 = vand.u32 %v851, 4294901760
        %853 = vmatpush1.msra.mxu0 %v852
        %v854 = vand.u32 %v615, 4294901760
        %v855 = vsub.f32 %v615, %v854
        %v856 = vand.u32 %v855, 4294901760
        %v857 = vsub.f32 %v855, %v856
        %v858 = vand.u32 %v857, 4294901760
        %859 = vmatprep.subr.mxu0 %v858
        %v860 = vand.u32 %v614, 4294901760
        %v861 = vsub.f32 %v614, %v860
        %v862 = vand.u32 %v861, 4294901760
        %v863 = vsub.f32 %v861, %v862
        %v864 = vand.u32 %v863, 4294901760
        %865 = vmatpush1.msra.mxu0 %v864
        %v866 = vand.u32 %v611, 4294901760
        %v867 = vsub.f32 %v611, %v866
        %v868 = vand.u32 %v867, 4294901760
        %v869 = vsub.f32 %v867, %v868
        %v870 = vand.u32 %v869, 4294901760
        %871 = vmatprep.subr.mxu0 %v870
        %v872 = vand.u32 %v610, 4294901760
        %v873 = vsub.f32 %v610, %v872
        %v874 = vand.u32 %v873, 4294901760
        %v875 = vsub.f32 %v873, %v874
        %v876 = vand.u32 %v875, 4294901760
        %877 = vmatpush1.msra.mxu0 %v876
        %v878 = vand.u32 %v607, 4294901760
        %v879 = vsub.f32 %v607, %v878
        %v880 = vand.u32 %v879, 4294901760
        %v881 = vsub.f32 %v879, %v880
        %v882 = vand.u32 %v881, 4294901760
        %883 = vmatprep.subr.mxu0 %v882
        %v884 = vand.u32 %v606, 4294901760
        %v885 = vsub.f32 %v606, %v884
        %v886 = vand.u32 %v885, 4294901760
        %v887 = vsub.f32 %v885, %v886
        %v888 = vand.u32 %v887, 4294901760
        %889 = vmatpush1.msra.mxu0 %v888
        %v890 = vand.u32 %v603, 4294901760
        %v891 = vsub.f32 %v603, %v890
        %v892 = vand.u32 %v891, 4294901760
        %v893 = vsub.f32 %v891, %v892
        %v894 = vand.u32 %v893, 4294901760
        %895 = vmatprep.subr.mxu0 %v894
        %v896 = vand.u32 %v602, 4294901760
        %v897 = vsub.f32 %v602, %v896
        %v898 = vand.u32 %v897, 4294901760
        %v899 = vsub.f32 %v897, %v898
        %v900 = vand.u32 %v899, 4294901760
        %901 = vmatpush1.msra.mxu0 %v900
        %v902 = vand.u32 %v599, 4294901760
        %v903 = vsub.f32 %v599, %v902
        %v904 = vand.u32 %v903, 4294901760
        %v905 = vsub.f32 %v903, %v904
        %v906 = vand.u32 %v905, 4294901760
        %907 = vmatprep.subr.mxu0 %v906
        %v908 = vand.u32 %v598, 4294901760
        %v909 = vsub.f32 %v598, %v908
        %v910 = vand.u32 %v909, 4294901760
        %v911 = vsub.f32 %v909, %v910
        %v912 = vand.u32 %v911, 4294901760
        %913 = vmatpush1.msra.mxu0 %v912
        %v914 = vand.u32 %v595, 4294901760
        %v915 = vsub.f32 %v595, %v914
        %v916 = vand.u32 %v915, 4294901760
        %v917 = vsub.f32 %v915, %v916
        %v918 = vand.u32 %v917, 4294901760
        %919 = vmatprep.subr.mxu0 %v918
        %v920 = vand.u32 %v594, 4294901760
        %v921 = vsub.f32 %v594, %v920
        %v922 = vand.u32 %v921, 4294901760
        %v923 = vsub.f32 %v921, %v922
        %v924 = vand.u32 %v923, 4294901760
        %925 = vmatpush1.msra.mxu0 %v924
        %v926 = vand.u32 %v591, 4294901760
        %v927 = vsub.f32 %v591, %v926
        %v928 = vand.u32 %v927, 4294901760
        %v929 = vsub.f32 %v927, %v928
        %v930 = vand.u32 %v929, 4294901760
        %931 = vmatprep.subr.mxu0 %v930
        %v932 = vand.u32 %v590, 4294901760
        %v933 = vsub.f32 %v590, %v932
        %v934 = vand.u32 %v933, 4294901760
        %v935 = vsub.f32 %v933, %v934
        %v936 = vand.u32 %v935, 4294901760
        %937 = vmatpush1.msra.mxu0 %v936
        %v938 = vand.u32 %v587, 4294901760
        %v939 = vsub.f32 %v587, %v938
        %v940 = vand.u32 %v939, 4294901760
        %v941 = vsub.f32 %v939, %v940
        %v942 = vand.u32 %v941, 4294901760
        %943 = vmatprep.subr.mxu0 %v942
        %v944 = vand.u32 %v586, 4294901760
        %v945 = vsub.f32 %v586, %v944
        %v946 = vand.u32 %v945, 4294901760
        %v947 = vsub.f32 %v945, %v946
        %v948 = vand.u32 %v947, 4294901760
        %949 = vmatpush1.msra.mxu0 %v948
        %950 = vmatprep.subr.mxu0 0.0
        %951 = vmatpush2.msra.mxu0 0.0
        %952 = vmatprep.subr.mxu0 0.0
        %953 = vmatpush2.msra.mxu0 0.0
        %954 = vmatprep.subr.mxu0 0.0
        %955 = vmatpush2.msra.mxu0 0.0
        %956 = vmatprep.subr.mxu0 0.0
        %957 = vmatpush2.msra.mxu0 0.0
        %958 = vmatprep.subr.mxu0 0.0
        %959 = vmatpush2.msra.mxu0 0.0
        %960 = vmatprep.subr.mxu0 0.0
        %961 = vmatpush2.msra.mxu0 0.0
        %962 = vmatprep.subr.mxu0 0.0
        %963 = vmatpush2.msra.mxu0 0.0
        %964 = vmatprep.subr.mxu0 0.0
        %965 = vmatpush2.msra.mxu0 0.0
        %966 = vmatprep.subr.mxu0 0.0
        %967 = vmatpush2.msra.mxu0 0.0
        %968 = vmatprep.subr.mxu0 0.0
        %969 = vmatpush2.msra.mxu0 0.0
        %970 = vmatprep.subr.mxu0 0.0
        %971 = vmatpush2.msra.mxu0 0.0
        %972 = vmatprep.subr.mxu0 0.0
        %973 = vmatpush2.msra.mxu0 0.0
        %974 = vmatprep.subr.mxu0 0.0
        %975 = vmatpush2.msra.mxu0 0.0
        %976 = vmatprep.subr.mxu0 0.0
        %977 = vmatpush2.msra.mxu0 0.0
        %978 = vmatprep.subr.mxu0 0.0
        %979 = vmatpush2.msra.mxu0 0.0
        %980 = vmatprep.subr.mxu0 0.0
        %981 = vmatpush2.msra.mxu0 0.0
        %982 = vmatprep.mubr.f32.mxu0 0.0
        %v983 = vand.u32 %v585, 4294901760
        %984 = vmatmul.mubr.f32.gmra.mxu0 %v983
        %v985 = vpop.f32.mrf.mxu0
        %v986 = vadd.f32 %v754, %v985
        %v987 = vpop.f32.mrf.mxu0
        %v988 = vadd.f32 %v756, %v987
        %989 = vdwg.mxu0
        %v990 = vand.u32 %v647, 4294901760
        %v991 = vsub.f32 %v647, %v990
        %992 = vmatprep.subr.mxu0 %v991
        %v993 = vand.u32 %v646, 4294901760
        %v994 = vsub.f32 %v646, %v993
        %995 = vmatpush1.msra.mxu0 %v994
        %v996 = vand.u32 %v643, 4294901760
        %v997 = vsub.f32 %v643, %v996
        %998 = vmatprep.subr.mxu0 %v997
        %v999 = vand.u32 %v642, 4294901760
        %v1000 = vsub.f32 %v642, %v999
        %1001 = vmatpush1.msra.mxu0 %v1000
        %v1002 = vand.u32 %v639, 4294901760
        %v1003 = vsub.f32 %v639, %v1002
        %1004 = vmatprep.subr.mxu0 %v1003
        %v1005 = vand.u32 %v638, 4294901760
        %v1006 = vsub.f32 %v638, %v1005
        %1007 = vmatpush1.msra.mxu0 %v1006
        %v1008 = vand.u32 %v635, 4294901760
        %v1009 = vsub.f32 %v635, %v1008
        %1010 = vmatprep.subr.mxu0 %v1009
        %v1011 = vand.u32 %v634, 4294901760
        %v1012 = vsub.f32 %v634, %v1011
        %1013 = vmatpush1.msra.mxu0 %v1012
        %v1014 = vand.u32 %v631, 4294901760
        %v1015 = vsub.f32 %v631, %v1014
        %1016 = vmatprep.subr.mxu0 %v1015
        %v1017 = vand.u32 %v630, 4294901760
        %v1018 = vsub.f32 %v630, %v1017
        %1019 = vmatpush1.msra.mxu0 %v1018
        %v1020 = vand.u32 %v627, 4294901760
        %v1021 = vsub.f32 %v627, %v1020
        %1022 = vmatprep.subr.mxu0 %v1021
        %v1023 = vand.u32 %v626, 4294901760
        %v1024 = vsub.f32 %v626, %v1023
        %1025 = vmatpush1.msra.mxu0 %v1024
        %v1026 = vand.u32 %v623, 4294901760
        %v1027 = vsub.f32 %v623, %v1026
        %1028 = vmatprep.subr.mxu0 %v1027
        %v1029 = vand.u32 %v622, 4294901760
        %v1030 = vsub.f32 %v622, %v1029
        %1031 = vmatpush1.msra.mxu0 %v1030
        %v1032 = vand.u32 %v619, 4294901760
        %v1033 = vsub.f32 %v619, %v1032
        %1034 = vmatprep.subr.mxu0 %v1033
        %v1035 = vand.u32 %v618, 4294901760
        %v1036 = vsub.f32 %v618, %v1035
        %1037 = vmatpush1.msra.mxu0 %v1036
        %v1038 = vand.u32 %v615, 4294901760
        %v1039 = vsub.f32 %v615, %v1038
        %1040 = vmatprep.subr.mxu0 %v1039
        %v1041 = vand.u32 %v614, 4294901760
        %v1042 = vsub.f32 %v614, %v1041
        %1043 = vmatpush1.msra.mxu0 %v1042
        %v1044 = vand.u32 %v611, 4294901760
        %v1045 = vsub.f32 %v611, %v1044
        %1046 = vmatprep.subr.mxu0 %v1045
        %v1047 = vand.u32 %v610, 4294901760
        %v1048 = vsub.f32 %v610, %v1047
        %1049 = vmatpush1.msra.mxu0 %v1048
        %v1050 = vand.u32 %v607, 4294901760
        %v1051 = vsub.f32 %v607, %v1050
        %1052 = vmatprep.subr.mxu0 %v1051
        %v1053 = vand.u32 %v606, 4294901760
        %v1054 = vsub.f32 %v606, %v1053
        %1055 = vmatpush1.msra.mxu0 %v1054
        %v1056 = vand.u32 %v603, 4294901760
        %v1057 = vsub.f32 %v603, %v1056
        %1058 = vmatprep.subr.mxu0 %v1057
        %v1059 = vand.u32 %v602, 4294901760
        %v1060 = vsub.f32 %v602, %v1059
        %1061 = vmatpush1.msra.mxu0 %v1060
        %v1062 = vand.u32 %v599, 4294901760
        %v1063 = vsub.f32 %v599, %v1062
        %1064 = vmatprep.subr.mxu0 %v1063
        %v1065 = vand.u32 %v598, 4294901760
        %v1066 = vsub.f32 %v598, %v1065
        %1067 = vmatpush1.msra.mxu0 %v1066
        %v1068 = vand.u32 %v595, 4294901760
        %v1069 = vsub.f32 %v595, %v1068
        %1070 = vmatprep.subr.mxu0 %v1069
        %v1071 = vand.u32 %v594, 4294901760
        %v1072 = vsub.f32 %v594, %v1071
        %1073 = vmatpush1.msra.mxu0 %v1072
        %v1074 = vand.u32 %v591, 4294901760
        %v1075 = vsub.f32 %v591, %v1074
        %1076 = vmatprep.subr.mxu0 %v1075
        %v1077 = vand.u32 %v590, 4294901760
        %v1078 = vsub.f32 %v590, %v1077
        %1079 = vmatpush1.msra.mxu0 %v1078
        %v1080 = vand.u32 %v587, 4294901760
        %v1081 = vsub.f32 %v587, %v1080
        %1082 = vmatprep.subr.mxu0 %v1081
        %v1083 = vand.u32 %v586, 4294901760
        %v1084 = vsub.f32 %v586, %v1083
        %1085 = vmatpush1.msra.mxu0 %v1084
        %1086 = vmatprep.subr.mxu0 0.0
        %1087 = vmatpush2.msra.mxu0 0.0
        %1088 = vmatprep.subr.mxu0 0.0
        %1089 = vmatpush2.msra.mxu0 0.0
        %1090 = vmatprep.subr.mxu0 0.0
        %1091 = vmatpush2.msra.mxu0 0.0
        %1092 = vmatprep.subr.mxu0 0.0
        %1093 = vmatpush2.msra.mxu0 0.0
        %1094 = vmatprep.subr.mxu0 0.0
        %1095 = vmatpush2.msra.mxu0 0.0
        %1096 = vmatprep.subr.mxu0 0.0
        %1097 = vmatpush2.msra.mxu0 0.0
        %1098 = vmatprep.subr.mxu0 0.0
        %1099 = vmatpush2.msra.mxu0 0.0
        %1100 = vmatprep.subr.mxu0 0.0
        %1101 = vmatpush2.msra.mxu0 0.0
        %1102 = vmatprep.subr.mxu0 0.0
        %1103 = vmatpush2.msra.mxu0 0.0
        %1104 = vmatprep.subr.mxu0 0.0
        %1105 = vmatpush2.msra.mxu0 0.0
        %1106 = vmatprep.subr.mxu0 0.0
        %1107 = vmatpush2.msra.mxu0 0.0
        %1108 = vmatprep.subr.mxu0 0.0
        %1109 = vmatpush2.msra.mxu0 0.0
        %1110 = vmatprep.subr.mxu0 0.0
        %1111 = vmatpush2.msra.mxu0 0.0
        %1112 = vmatprep.subr.mxu0 0.0
        %1113 = vmatpush2.msra.mxu0 0.0
        %1114 = vmatprep.subr.mxu0 0.0
        %1115 = vmatpush2.msra.mxu0 0.0
        %1116 = vmatprep.subr.mxu0 0.0
        %1117 = vmatpush2.msra.mxu0 0.0
        %1118 = vmatprep.mubr.f32.mxu0 0.0
        %v1119 = vand.u32 %v585, 4294901760
        %v1120 = vsub.f32 %v585, %v1119
        %1121 = vmatmul.mubr.f32.gmra.mxu0 %v1120
        %v1122 = vpop.f32.mrf.mxu0
        %v1123 = vadd.f32 %v986, %v1122
        %v1124 = vpop.f32.mrf.mxu0
        %v1125 = vadd.f32 %v988, %v1124
        %1126 = vdwg.mxu0
        %v1127 = vand.u32 %v647, 4294901760
        %1128 = vmatprep.subr.mxu0 %v1127
        %v1129 = vand.u32 %v646, 4294901760
        %1130 = vmatpush1.msra.mxu0 %v1129
        %v1131 = vand.u32 %v643, 4294901760
        %1132 = vmatprep.subr.mxu0 %v1131
        %v1133 = vand.u32 %v642, 4294901760
        %1134 = vmatpush1.msra.mxu0 %v1133
        %v1135 = vand.u32 %v639, 4294901760
        %1136 = vmatprep.subr.mxu0 %v1135
        %v1137 = vand.u32 %v638, 4294901760
        %1138 = vmatpush1.msra.mxu0 %v1137
        %v1139 = vand.u32 %v635, 4294901760
        %1140 = vmatprep.subr.mxu0 %v1139
        %v1141 = vand.u32 %v634, 4294901760
        %1142 = vmatpush1.msra.mxu0 %v1141
        %v1143 = vand.u32 %v631, 4294901760
        %1144 = vmatprep.subr.mxu0 %v1143
        %v1145 = vand.u32 %v630, 4294901760
        %1146 = vmatpush1.msra.mxu0 %v1145
        %v1147 = vand.u32 %v627, 4294901760
        %1148 = vmatprep.subr.mxu0 %v1147
        %v1149 = vand.u32 %v626, 4294901760
        %1150 = vmatpush1.msra.mxu0 %v1149
        %v1151 = vand.u32 %v623, 4294901760
        %1152 = vmatprep.subr.mxu0 %v1151
        %v1153 = vand.u32 %v622, 4294901760
        %1154 = vmatpush1.msra.mxu0 %v1153
        %v1155 = vand.u32 %v619, 4294901760
        %1156 = vmatprep.subr.mxu0 %v1155
        %v1157 = vand.u32 %v618, 4294901760
        %1158 = vmatpush1.msra.mxu0 %v1157
        %v1159 = vand.u32 %v615, 4294901760
        %1160 = vmatprep.subr.mxu0 %v1159
        %v1161 = vand.u32 %v614, 4294901760
        %1162 = vmatpush1.msra.mxu0 %v1161
        %v1163 = vand.u32 %v611, 4294901760
        %1164 = vmatprep.subr.mxu0 %v1163
        %v1165 = vand.u32 %v610, 4294901760
        %1166 = vmatpush1.msra.mxu0 %v1165
        %v1167 = vand.u32 %v607, 4294901760
        %1168 = vmatprep.subr.mxu0 %v1167
        %v1169 = vand.u32 %v606, 4294901760
        %1170 = vmatpush1.msra.mxu0 %v1169
        %v1171 = vand.u32 %v603, 4294901760
        %1172 = vmatprep.subr.mxu0 %v1171
        %v1173 = vand.u32 %v602, 4294901760
        %1174 = vmatpush1.msra.mxu0 %v1173
        %v1175 = vand.u32 %v599, 4294901760
        %1176 = vmatprep.subr.mxu0 %v1175
        %v1177 = vand.u32 %v598, 4294901760
        %1178 = vmatpush1.msra.mxu0 %v1177
        %v1179 = vand.u32 %v595, 4294901760
        %1180 = vmatprep.subr.mxu0 %v1179
        %v1181 = vand.u32 %v594, 4294901760
        %1182 = vmatpush1.msra.mxu0 %v1181
        %v1183 = vand.u32 %v591, 4294901760
        %1184 = vmatprep.subr.mxu0 %v1183
        %v1185 = vand.u32 %v590, 4294901760
        %1186 = vmatpush1.msra.mxu0 %v1185
        %v1187 = vand.u32 %v587, 4294901760
        %1188 = vmatprep.subr.mxu0 %v1187
        %v1189 = vand.u32 %v586, 4294901760
        %1190 = vmatpush1.msra.mxu0 %v1189
        %1191 = vmatprep.subr.mxu0 0.0
        %1192 = vmatpush2.msra.mxu0 0.0
        %1193 = vmatprep.subr.mxu0 0.0
        %1194 = vmatpush2.msra.mxu0 0.0
        %1195 = vmatprep.subr.mxu0 0.0
        %1196 = vmatpush2.msra.mxu0 0.0
        %1197 = vmatprep.subr.mxu0 0.0
        %1198 = vmatpush2.msra.mxu0 0.0
        %1199 = vmatprep.subr.mxu0 0.0
        %1200 = vmatpush2.msra.mxu0 0.0
        %1201 = vmatprep.subr.mxu0 0.0
        %1202 = vmatpush2.msra.mxu0 0.0
        %1203 = vmatprep.subr.mxu0 0.0
        %1204 = vmatpush2.msra.mxu0 0.0
        %1205 = vmatprep.subr.mxu0 0.0
        %1206 = vmatpush2.msra.mxu0 0.0
        %1207 = vmatprep.subr.mxu0 0.0
        %1208 = vmatpush2.msra.mxu0 0.0
        %1209 = vmatprep.subr.mxu0 0.0
        %1210 = vmatpush2.msra.mxu0 0.0
        %1211 = vmatprep.subr.mxu0 0.0
        %1212 = vmatpush2.msra.mxu0 0.0
        %1213 = vmatprep.subr.mxu0 0.0
        %1214 = vmatpush2.msra.mxu0 0.0
        %1215 = vmatprep.subr.mxu0 0.0
        %1216 = vmatpush2.msra.mxu0 0.0
        %1217 = vmatprep.subr.mxu0 0.0
        %1218 = vmatpush2.msra.mxu0 0.0
        %1219 = vmatprep.subr.mxu0 0.0
        %1220 = vmatpush2.msra.mxu0 0.0
        %1221 = vmatprep.subr.mxu0 0.0
        %1222 = vmatpush2.msra.mxu0 0.0
        %1223 = vmatprep.mubr.f32.mxu0 0.0
        %v1224 = vand.u32 %v585, 4294901760
        %v1225 = vsub.f32 %v585, %v1224
        %v1226 = vand.u32 %v1225, 4294901760
        %1227 = vmatmul.mubr.f32.gmra.mxu0 %v1226
        %v1228 = vpop.f32.mrf.mxu0
        %v1229 = vadd.f32 %v1123, %v1228
        %v1230 = vpop.f32.mrf.mxu0
        %v1231 = vadd.f32 %v1125, %v1230
        %1232 = vdwg.mxu0
        %v1233 = vand.u32 %v647, 4294901760
        %v1234 = vsub.f32 %v647, %v1233
        %v1235 = vand.u32 %v1234, 4294901760
        %1236 = vmatprep.subr.mxu0 %v1235
        %v1237 = vand.u32 %v646, 4294901760
        %v1238 = vsub.f32 %v646, %v1237
        %v1239 = vand.u32 %v1238, 4294901760
        %1240 = vmatpush1.msra.mxu0 %v1239
        %v1241 = vand.u32 %v643, 4294901760
        %v1242 = vsub.f32 %v643, %v1241
        %v1243 = vand.u32 %v1242, 4294901760
        %1244 = vmatprep.subr.mxu0 %v1243
        %v1245 = vand.u32 %v642, 4294901760
        %v1246 = vsub.f32 %v642, %v1245
        %v1247 = vand.u32 %v1246, 4294901760
        %1248 = vmatpush1.msra.mxu0 %v1247
        %v1249 = vand.u32 %v639, 4294901760
        %v1250 = vsub.f32 %v639, %v1249
        %v1251 = vand.u32 %v1250, 4294901760
        %1252 = vmatprep.subr.mxu0 %v1251
        %v1253 = vand.u32 %v638, 4294901760
        %v1254 = vsub.f32 %v638, %v1253
        %v1255 = vand.u32 %v1254, 4294901760
        %1256 = vmatpush1.msra.mxu0 %v1255
        %v1257 = vand.u32 %v635, 4294901760
        %v1258 = vsub.f32 %v635, %v1257
        %v1259 = vand.u32 %v1258, 4294901760
        %1260 = vmatprep.subr.mxu0 %v1259
        %v1261 = vand.u32 %v634, 4294901760
        %v1262 = vsub.f32 %v634, %v1261
        %v1263 = vand.u32 %v1262, 4294901760
        %1264 = vmatpush1.msra.mxu0 %v1263
        %v1265 = vand.u32 %v631, 4294901760
        %v1266 = vsub.f32 %v631, %v1265
        %v1267 = vand.u32 %v1266, 4294901760
        %1268 = vmatprep.subr.mxu0 %v1267
        %v1269 = vand.u32 %v630, 4294901760
        %v1270 = vsub.f32 %v630, %v1269
        %v1271 = vand.u32 %v1270, 4294901760
        %1272 = vmatpush1.msra.mxu0 %v1271
        %v1273 = vand.u32 %v627, 4294901760
        %v1274 = vsub.f32 %v627, %v1273
        %v1275 = vand.u32 %v1274, 4294901760
        %1276 = vmatprep.subr.mxu0 %v1275
        %v1277 = vand.u32 %v626, 4294901760
        %v1278 = vsub.f32 %v626, %v1277
        %v1279 = vand.u32 %v1278, 4294901760
        %1280 = vmatpush1.msra.mxu0 %v1279
        %v1281 = vand.u32 %v623, 4294901760
        %v1282 = vsub.f32 %v623, %v1281
        %v1283 = vand.u32 %v1282, 4294901760
        %1284 = vmatprep.subr.mxu0 %v1283
        %v1285 = vand.u32 %v622, 4294901760
        %v1286 = vsub.f32 %v622, %v1285
        %v1287 = vand.u32 %v1286, 4294901760
        %1288 = vmatpush1.msra.mxu0 %v1287
        %v1289 = vand.u32 %v619, 4294901760
        %v1290 = vsub.f32 %v619, %v1289
        %v1291 = vand.u32 %v1290, 4294901760
        %1292 = vmatprep.subr.mxu0 %v1291
        %v1293 = vand.u32 %v618, 4294901760
        %v1294 = vsub.f32 %v618, %v1293
        %v1295 = vand.u32 %v1294, 4294901760
        %1296 = vmatpush1.msra.mxu0 %v1295
        %v1297 = vand.u32 %v615, 4294901760
        %v1298 = vsub.f32 %v615, %v1297
        %v1299 = vand.u32 %v1298, 4294901760
        %1300 = vmatprep.subr.mxu0 %v1299
        %v1301 = vand.u32 %v614, 4294901760
        %v1302 = vsub.f32 %v614, %v1301
        %v1303 = vand.u32 %v1302, 4294901760
        %1304 = vmatpush1.msra.mxu0 %v1303
        %v1305 = vand.u32 %v611, 4294901760
        %v1306 = vsub.f32 %v611, %v1305
        %v1307 = vand.u32 %v1306, 4294901760
        %1308 = vmatprep.subr.mxu0 %v1307
        %v1309 = vand.u32 %v610, 4294901760
        %v1310 = vsub.f32 %v610, %v1309
        %v1311 = vand.u32 %v1310, 4294901760
        %1312 = vmatpush1.msra.mxu0 %v1311
        %v1313 = vand.u32 %v607, 4294901760
        %v1314 = vsub.f32 %v607, %v1313
        %v1315 = vand.u32 %v1314, 4294901760
        %1316 = vmatprep.subr.mxu0 %v1315
        %v1317 = vand.u32 %v606, 4294901760
        %v1318 = vsub.f32 %v606, %v1317
        %v1319 = vand.u32 %v1318, 4294901760
        %1320 = vmatpush1.msra.mxu0 %v1319
        %v1321 = vand.u32 %v603, 4294901760
        %v1322 = vsub.f32 %v603, %v1321
        %v1323 = vand.u32 %v1322, 4294901760
        %1324 = vmatprep.subr.mxu0 %v1323
        %v1325 = vand.u32 %v602, 4294901760
        %v1326 = vsub.f32 %v602, %v1325
        %v1327 = vand.u32 %v1326, 4294901760
        %1328 = vmatpush1.msra.mxu0 %v1327
        %v1329 = vand.u32 %v599, 4294901760
        %v1330 = vsub.f32 %v599, %v1329
        %v1331 = vand.u32 %v1330, 4294901760
        %1332 = vmatprep.subr.mxu0 %v1331
        %v1333 = vand.u32 %v598, 4294901760
        %v1334 = vsub.f32 %v598, %v1333
        %v1335 = vand.u32 %v1334, 4294901760
        %1336 = vmatpush1.msra.mxu0 %v1335
        %v1337 = vand.u32 %v595, 4294901760
        %v1338 = vsub.f32 %v595, %v1337
        %v1339 = vand.u32 %v1338, 4294901760
        %1340 = vmatprep.subr.mxu0 %v1339
        %v1341 = vand.u32 %v594, 4294901760
        %v1342 = vsub.f32 %v594, %v1341
        %v1343 = vand.u32 %v1342, 4294901760
        %1344 = vmatpush1.msra.mxu0 %v1343
        %v1345 = vand.u32 %v591, 4294901760
        %v1346 = vsub.f32 %v591, %v1345
        %v1347 = vand.u32 %v1346, 4294901760
        %1348 = vmatprep.subr.mxu0 %v1347
        %v1349 = vand.u32 %v590, 4294901760
        %v1350 = vsub.f32 %v590, %v1349
        %v1351 = vand.u32 %v1350, 4294901760
        %1352 = vmatpush1.msra.mxu0 %v1351
        %v1353 = vand.u32 %v587, 4294901760
        %v1354 = vsub.f32 %v587, %v1353
        %v1355 = vand.u32 %v1354, 4294901760
        %1356 = vmatprep.subr.mxu0 %v1355
        %v1357 = vand.u32 %v586, 4294901760
        %v1358 = vsub.f32 %v586, %v1357
        %v1359 = vand.u32 %v1358, 4294901760
        %1360 = vmatpush1.msra.mxu0 %v1359
        %1361 = vmatprep.subr.mxu0 0.0
        %1362 = vmatpush2.msra.mxu0 0.0
        %1363 = vmatprep.subr.mxu0 0.0
        %1364 = vmatpush2.msra.mxu0 0.0
        %1365 = vmatprep.subr.mxu0 0.0
        %1366 = vmatpush2.msra.mxu0 0.0
        %1367 = vmatprep.subr.mxu0 0.0
        %1368 = vmatpush2.msra.mxu0 0.0
        %1369 = vmatprep.subr.mxu0 0.0
        %1370 = vmatpush2.msra.mxu0 0.0
        %1371 = vmatprep.subr.mxu0 0.0
        %1372 = vmatpush2.msra.mxu0 0.0
        %1373 = vmatprep.subr.mxu0 0.0
        %1374 = vmatpush2.msra.mxu0 0.0
        %1375 = vmatprep.subr.mxu0 0.0
        %1376 = vmatpush2.msra.mxu0 0.0
        %1377 = vmatprep.subr.mxu0 0.0
        %1378 = vmatpush2.msra.mxu0 0.0
        %1379 = vmatprep.subr.mxu0 0.0
        %1380 = vmatpush2.msra.mxu0 0.0
        %1381 = vmatprep.subr.mxu0 0.0
        %1382 = vmatpush2.msra.mxu0 0.0
        %1383 = vmatprep.subr.mxu0 0.0
        %1384 = vmatpush2.msra.mxu0 0.0
        %1385 = vmatprep.subr.mxu0 0.0
        %1386 = vmatpush2.msra.mxu0 0.0
        %1387 = vmatprep.subr.mxu0 0.0
        %1388 = vmatpush2.msra.mxu0 0.0
        %1389 = vmatprep.subr.mxu0 0.0
        %1390 = vmatpush2.msra.mxu0 0.0
        %1391 = vmatprep.subr.mxu0 0.0
        %1392 = vmatpush2.msra.mxu0 0.0
        %1393 = vmatprep.mubr.f32.mxu0 0.0
        %v1394 = vand.u32 %v585, 4294901760
        %1395 = vmatmul.mubr.f32.gmra.mxu0 %v1394
        %v1396 = vpop.f32.mrf.mxu0
        %v1397 = vadd.f32 %v1229, %v1396
        %v1398 = vpop.f32.mrf.mxu0
        %v1399 = vadd.f32 %v1231, %v1398
        %1400 = vdwg.mxu0
        %v1401 = vand.u32 %v647, 4294901760
        %1402 = vmatprep.subr.mxu0 %v1401
        %v1403 = vand.u32 %v646, 4294901760
        %1404 = vmatpush1.msra.mxu0 %v1403
        %v1405 = vand.u32 %v643, 4294901760
        %1406 = vmatprep.subr.mxu0 %v1405
        %v1407 = vand.u32 %v642, 4294901760
        %1408 = vmatpush1.msra.mxu0 %v1407
        %v1409 = vand.u32 %v639, 4294901760
        %1410 = vmatprep.subr.mxu0 %v1409
        %v1411 = vand.u32 %v638, 4294901760
        %1412 = vmatpush1.msra.mxu0 %v1411
        %v1413 = vand.u32 %v635, 4294901760
        %1414 = vmatprep.subr.mxu0 %v1413
        %v1415 = vand.u32 %v634, 4294901760
        %1416 = vmatpush1.msra.mxu0 %v1415
        %v1417 = vand.u32 %v631, 4294901760
        %1418 = vmatprep.subr.mxu0 %v1417
        %v1419 = vand.u32 %v630, 4294901760
        %1420 = vmatpush1.msra.mxu0 %v1419
        %v1421 = vand.u32 %v627, 4294901760
        %1422 = vmatprep.subr.mxu0 %v1421
        %v1423 = vand.u32 %v626, 4294901760
        %1424 = vmatpush1.msra.mxu0 %v1423
        %v1425 = vand.u32 %v623, 4294901760
        %1426 = vmatprep.subr.mxu0 %v1425
        %v1427 = vand.u32 %v622, 4294901760
        %1428 = vmatpush1.msra.mxu0 %v1427
        %v1429 = vand.u32 %v619, 4294901760
        %1430 = vmatprep.subr.mxu0 %v1429
        %v1431 = vand.u32 %v618, 4294901760
        %1432 = vmatpush1.msra.mxu0 %v1431
        %v1433 = vand.u32 %v615, 4294901760
        %1434 = vmatprep.subr.mxu0 %v1433
        %v1435 = vand.u32 %v614, 4294901760
        %1436 = vmatpush1.msra.mxu0 %v1435
        %v1437 = vand.u32 %v611, 4294901760
        %1438 = vmatprep.subr.mxu0 %v1437
        %v1439 = vand.u32 %v610, 4294901760
        %1440 = vmatpush1.msra.mxu0 %v1439
        %v1441 = vand.u32 %v607, 4294901760
        %1442 = vmatprep.subr.mxu0 %v1441
        %v1443 = vand.u32 %v606, 4294901760
        %1444 = vmatpush1.msra.mxu0 %v1443
        %v1445 = vand.u32 %v603, 4294901760
        %1446 = vmatprep.subr.mxu0 %v1445
        %v1447 = vand.u32 %v602, 4294901760
        %1448 = vmatpush1.msra.mxu0 %v1447
        %v1449 = vand.u32 %v599, 4294901760
        %1450 = vmatprep.subr.mxu0 %v1449
        %v1451 = vand.u32 %v598, 4294901760
        %1452 = vmatpush1.msra.mxu0 %v1451
        %v1453 = vand.u32 %v595, 4294901760
        %1454 = vmatprep.subr.mxu0 %v1453
        %v1455 = vand.u32 %v594, 4294901760
        %1456 = vmatpush1.msra.mxu0 %v1455
        %v1457 = vand.u32 %v591, 4294901760
        %1458 = vmatprep.subr.mxu0 %v1457
        %v1459 = vand.u32 %v590, 4294901760
        %1460 = vmatpush1.msra.mxu0 %v1459
        %v1461 = vand.u32 %v587, 4294901760
        %1462 = vmatprep.subr.mxu0 %v1461
        %v1463 = vand.u32 %v586, 4294901760
        %1464 = vmatpush1.msra.mxu0 %v1463
        %1465 = vmatprep.subr.mxu0 0.0
        %1466 = vmatpush2.msra.mxu0 0.0
        %1467 = vmatprep.subr.mxu0 0.0
        %1468 = vmatpush2.msra.mxu0 0.0
        %1469 = vmatprep.subr.mxu0 0.0
        %1470 = vmatpush2.msra.mxu0 0.0
        %1471 = vmatprep.subr.mxu0 0.0
        %1472 = vmatpush2.msra.mxu0 0.0
        %1473 = vmatprep.subr.mxu0 0.0
        %1474 = vmatpush2.msra.mxu0 0.0
        %1475 = vmatprep.subr.mxu0 0.0
        %1476 = vmatpush2.msra.mxu0 0.0
        %1477 = vmatprep.subr.mxu0 0.0
        %1478 = vmatpush2.msra.mxu0 0.0
        %1479 = vmatprep.subr.mxu0 0.0
        %1480 = vmatpush2.msra.mxu0 0.0
        %1481 = vmatprep.subr.mxu0 0.0
        %1482 = vmatpush2.msra.mxu0 0.0
        %1483 = vmatprep.subr.mxu0 0.0
        %1484 = vmatpush2.msra.mxu0 0.0
        %1485 = vmatprep.subr.mxu0 0.0
        %1486 = vmatpush2.msra.mxu0 0.0
        %1487 = vmatprep.subr.mxu0 0.0
        %1488 = vmatpush2.msra.mxu0 0.0
        %1489 = vmatprep.subr.mxu0 0.0
        %1490 = vmatpush2.msra.mxu0 0.0
        %1491 = vmatprep.subr.mxu0 0.0
        %1492 = vmatpush2.msra.mxu0 0.0
        %1493 = vmatprep.subr.mxu0 0.0
        %1494 = vmatpush2.msra.mxu0 0.0
        %1495 = vmatprep.subr.mxu0 0.0
        %1496 = vmatpush2.msra.mxu0 0.0
        %1497 = vmatprep.mubr.f32.mxu0 0.0
        %v1498 = vand.u32 %v585, 4294901760
        %1499 = vmatmul.mubr.f32.gmra.mxu0 %v1498
        %v1500 = vpop.f32.mrf.mxu0
        %v1501 = vadd.f32 %v1397, %v1500
        %v1502 = vpop.f32.mrf.mxu0
        %v1503 = vadd.f32 %v1399, %v1502
        %1504 = vdwg.mxu0
        %v1505 = vand.u32 %v649, 4294901760
        %1506 = vmatprep.subr.mxu0 %v1505
        %v1507 = vand.u32 %v648, 4294901760
        %1508 = vmatpush1.msra.mxu0 %v1507
        %v1509 = vand.u32 %v645, 4294901760
        %1510 = vmatprep.subr.mxu0 %v1509
        %v1511 = vand.u32 %v644, 4294901760
        %1512 = vmatpush1.msra.mxu0 %v1511
        %v1513 = vand.u32 %v641, 4294901760
        %1514 = vmatprep.subr.mxu0 %v1513
        %v1515 = vand.u32 %v640, 4294901760
        %1516 = vmatpush1.msra.mxu0 %v1515
        %v1517 = vand.u32 %v637, 4294901760
        %1518 = vmatprep.subr.mxu0 %v1517
        %v1519 = vand.u32 %v636, 4294901760
        %1520 = vmatpush1.msra.mxu0 %v1519
        %v1521 = vand.u32 %v633, 4294901760
        %1522 = vmatprep.subr.mxu0 %v1521
        %v1523 = vand.u32 %v632, 4294901760
        %1524 = vmatpush1.msra.mxu0 %v1523
        %v1525 = vand.u32 %v629, 4294901760
        %1526 = vmatprep.subr.mxu0 %v1525
        %v1527 = vand.u32 %v628, 4294901760
        %1528 = vmatpush1.msra.mxu0 %v1527
        %v1529 = vand.u32 %v625, 4294901760
        %1530 = vmatprep.subr.mxu0 %v1529
        %v1531 = vand.u32 %v624, 4294901760
        %1532 = vmatpush1.msra.mxu0 %v1531
        %v1533 = vand.u32 %v621, 4294901760
        %1534 = vmatprep.subr.mxu0 %v1533
        %v1535 = vand.u32 %v620, 4294901760
        %1536 = vmatpush1.msra.mxu0 %v1535
        %v1537 = vand.u32 %v617, 4294901760
        %1538 = vmatprep.subr.mxu0 %v1537
        %v1539 = vand.u32 %v616, 4294901760
        %1540 = vmatpush1.msra.mxu0 %v1539
        %v1541 = vand.u32 %v613, 4294901760
        %1542 = vmatprep.subr.mxu0 %v1541
        %v1543 = vand.u32 %v612, 4294901760
        %1544 = vmatpush1.msra.mxu0 %v1543
        %v1545 = vand.u32 %v609, 4294901760
        %1546 = vmatprep.subr.mxu0 %v1545
        %v1547 = vand.u32 %v608, 4294901760
        %1548 = vmatpush1.msra.mxu0 %v1547
        %v1549 = vand.u32 %v605, 4294901760
        %1550 = vmatprep.subr.mxu0 %v1549
        %v1551 = vand.u32 %v604, 4294901760
        %1552 = vmatpush1.msra.mxu0 %v1551
        %v1553 = vand.u32 %v601, 4294901760
        %1554 = vmatprep.subr.mxu0 %v1553
        %v1555 = vand.u32 %v600, 4294901760
        %1556 = vmatpush1.msra.mxu0 %v1555
        %v1557 = vand.u32 %v597, 4294901760
        %1558 = vmatprep.subr.mxu0 %v1557
        %v1559 = vand.u32 %v596, 4294901760
        %1560 = vmatpush1.msra.mxu0 %v1559
        %v1561 = vand.u32 %v593, 4294901760
        %1562 = vmatprep.subr.mxu0 %v1561
        %v1563 = vand.u32 %v592, 4294901760
        %1564 = vmatpush1.msra.mxu0 %v1563
        %v1565 = vand.u32 %v589, 4294901760
        %1566 = vmatprep.subr.mxu0 %v1565
        %v1567 = vand.u32 %v588, 4294901760
        %1568 = vmatpush1.msra.mxu0 %v1567
        %1569 = vmatprep.subr.mxu0 0.0
        %1570 = vmatpush2.msra.mxu0 0.0
        %1571 = vmatprep.subr.mxu0 0.0
        %1572 = vmatpush2.msra.mxu0 0.0
        %1573 = vmatprep.subr.mxu0 0.0
        %1574 = vmatpush2.msra.mxu0 0.0
        %1575 = vmatprep.subr.mxu0 0.0
        %1576 = vmatpush2.msra.mxu0 0.0
        %1577 = vmatprep.subr.mxu0 0.0
        %1578 = vmatpush2.msra.mxu0 0.0
        %1579 = vmatprep.subr.mxu0 0.0
        %1580 = vmatpush2.msra.mxu0 0.0
        %1581 = vmatprep.subr.mxu0 0.0
        %1582 = vmatpush2.msra.mxu0 0.0
        %1583 = vmatprep.subr.mxu0 0.0
        %1584 = vmatpush2.msra.mxu0 0.0
        %1585 = vmatprep.subr.mxu0 0.0
        %1586 = vmatpush2.msra.mxu0 0.0
        %1587 = vmatprep.subr.mxu0 0.0
        %1588 = vmatpush2.msra.mxu0 0.0
        %1589 = vmatprep.subr.mxu0 0.0
        %1590 = vmatpush2.msra.mxu0 0.0
        %1591 = vmatprep.subr.mxu0 0.0
        %1592 = vmatpush2.msra.mxu0 0.0
        %1593 = vmatprep.subr.mxu0 0.0
        %1594 = vmatpush2.msra.mxu0 0.0
        %1595 = vmatprep.subr.mxu0 0.0
        %1596 = vmatpush2.msra.mxu0 0.0
        %1597 = vmatprep.subr.mxu0 0.0
        %1598 = vmatpush2.msra.mxu0 0.0
        %1599 = vmatprep.subr.mxu0 0.0
        %1600 = vmatpush2.msra.mxu0 0.0
        %1601 = vmatprep.mubr.f32.mxu0 0.0
        %v1602 = vand.u32 %v585, 4294901760
        %v1603 = vsub.f32 %v585, %v1602
        %v1604 = vand.u32 %v1603, 4294901760
        %v1605 = vsub.f32 %v1603, %v1604
        %v1606 = vand.u32 %v1605, 4294901760
        %1607 = vmatmul.mubr.f32.gmra.mxu0 %v1606
        %v1608 = vpop.f32.mrf.mxu0
        %v1609 = vadd.f32 0.0, %v1608
        %v1610 = vpop.f32.mrf.mxu0
        %v1611 = vadd.f32 0.0, %v1610
        %1612 = vdwg.mxu0
        %v1613 = vand.u32 %v649, 4294901760
        %v1614 = vsub.f32 %v649, %v1613
        %v1615 = vand.u32 %v1614, 4294901760
        %v1616 = vsub.f32 %v1614, %v1615
        %v1617 = vand.u32 %v1616, 4294901760
        %1618 = vmatprep.subr.mxu0 %v1617
        %v1619 = vand.u32 %v648, 4294901760
        %v1620 = vsub.f32 %v648, %v1619
        %v1621 = vand.u32 %v1620, 4294901760
        %v1622 = vsub.f32 %v1620, %v1621
        %v1623 = vand.u32 %v1622, 4294901760
        %1624 = vmatpush1.msra.mxu0 %v1623
        %v1625 = vand.u32 %v645, 4294901760
        %v1626 = vsub.f32 %v645, %v1625
        %v1627 = vand.u32 %v1626, 4294901760
        %v1628 = vsub.f32 %v1626, %v1627
        %v1629 = vand.u32 %v1628, 4294901760
        %1630 = vmatprep.subr.mxu0 %v1629
        %v1631 = vand.u32 %v644, 4294901760
        %v1632 = vsub.f32 %v644, %v1631
        %v1633 = vand.u32 %v1632, 4294901760
        %v1634 = vsub.f32 %v1632, %v1633
        %v1635 = vand.u32 %v1634, 4294901760
        %1636 = vmatpush1.msra.mxu0 %v1635
        %v1637 = vand.u32 %v641, 4294901760
        %v1638 = vsub.f32 %v641, %v1637
        %v1639 = vand.u32 %v1638, 4294901760
        %v1640 = vsub.f32 %v1638, %v1639
        %v1641 = vand.u32 %v1640, 4294901760
        %1642 = vmatprep.subr.mxu0 %v1641
        %v1643 = vand.u32 %v640, 4294901760
        %v1644 = vsub.f32 %v640, %v1643
        %v1645 = vand.u32 %v1644, 4294901760
        %v1646 = vsub.f32 %v1644, %v1645
        %v1647 = vand.u32 %v1646, 4294901760
        %1648 = vmatpush1.msra.mxu0 %v1647
        %v1649 = vand.u32 %v637, 4294901760
        %v1650 = vsub.f32 %v637, %v1649
        %v1651 = vand.u32 %v1650, 4294901760
        %v1652 = vsub.f32 %v1650, %v1651
        %v1653 = vand.u32 %v1652, 4294901760
        %1654 = vmatprep.subr.mxu0 %v1653
        %v1655 = vand.u32 %v636, 4294901760
        %v1656 = vsub.f32 %v636, %v1655
        %v1657 = vand.u32 %v1656, 4294901760
        %v1658 = vsub.f32 %v1656, %v1657
        %v1659 = vand.u32 %v1658, 4294901760
        %1660 = vmatpush1.msra.mxu0 %v1659
        %v1661 = vand.u32 %v633, 4294901760
        %v1662 = vsub.f32 %v633, %v1661
        %v1663 = vand.u32 %v1662, 4294901760
        %v1664 = vsub.f32 %v1662, %v1663
        %v1665 = vand.u32 %v1664, 4294901760
        %1666 = vmatprep.subr.mxu0 %v1665
        %v1667 = vand.u32 %v632, 4294901760
        %v1668 = vsub.f32 %v632, %v1667
        %v1669 = vand.u32 %v1668, 4294901760
        %v1670 = vsub.f32 %v1668, %v1669
        %v1671 = vand.u32 %v1670, 4294901760
        %1672 = vmatpush1.msra.mxu0 %v1671
        %v1673 = vand.u32 %v629, 4294901760
        %v1674 = vsub.f32 %v629, %v1673
        %v1675 = vand.u32 %v1674, 4294901760
        %v1676 = vsub.f32 %v1674, %v1675
        %v1677 = vand.u32 %v1676, 4294901760
        %1678 = vmatprep.subr.mxu0 %v1677
        %v1679 = vand.u32 %v628, 4294901760
        %v1680 = vsub.f32 %v628, %v1679
        %v1681 = vand.u32 %v1680, 4294901760
        %v1682 = vsub.f32 %v1680, %v1681
        %v1683 = vand.u32 %v1682, 4294901760
        %1684 = vmatpush1.msra.mxu0 %v1683
        %v1685 = vand.u32 %v625, 4294901760
        %v1686 = vsub.f32 %v625, %v1685
        %v1687 = vand.u32 %v1686, 4294901760
        %v1688 = vsub.f32 %v1686, %v1687
        %v1689 = vand.u32 %v1688, 4294901760
        %1690 = vmatprep.subr.mxu0 %v1689
        %v1691 = vand.u32 %v624, 4294901760
        %v1692 = vsub.f32 %v624, %v1691
        %v1693 = vand.u32 %v1692, 4294901760
        %v1694 = vsub.f32 %v1692, %v1693
        %v1695 = vand.u32 %v1694, 4294901760
        %1696 = vmatpush1.msra.mxu0 %v1695
        %v1697 = vand.u32 %v621, 4294901760
        %v1698 = vsub.f32 %v621, %v1697
        %v1699 = vand.u32 %v1698, 4294901760
        %v1700 = vsub.f32 %v1698, %v1699
        %v1701 = vand.u32 %v1700, 4294901760
        %1702 = vmatprep.subr.mxu0 %v1701
        %v1703 = vand.u32 %v620, 4294901760
        %v1704 = vsub.f32 %v620, %v1703
        %v1705 = vand.u32 %v1704, 4294901760
        %v1706 = vsub.f32 %v1704, %v1705
        %v1707 = vand.u32 %v1706, 4294901760
        %1708 = vmatpush1.msra.mxu0 %v1707
        %v1709 = vand.u32 %v617, 4294901760
        %v1710 = vsub.f32 %v617, %v1709
        %v1711 = vand.u32 %v1710, 4294901760
        %v1712 = vsub.f32 %v1710, %v1711
        %v1713 = vand.u32 %v1712, 4294901760
        %1714 = vmatprep.subr.mxu0 %v1713
        %v1715 = vand.u32 %v616, 4294901760
        %v1716 = vsub.f32 %v616, %v1715
        %v1717 = vand.u32 %v1716, 4294901760
        %v1718 = vsub.f32 %v1716, %v1717
        %v1719 = vand.u32 %v1718, 4294901760
        %1720 = vmatpush1.msra.mxu0 %v1719
        %v1721 = vand.u32 %v613, 4294901760
        %v1722 = vsub.f32 %v613, %v1721
        %v1723 = vand.u32 %v1722, 4294901760
        %v1724 = vsub.f32 %v1722, %v1723
        %v1725 = vand.u32 %v1724, 4294901760
        %1726 = vmatprep.subr.mxu0 %v1725
        %v1727 = vand.u32 %v612, 4294901760
        %v1728 = vsub.f32 %v612, %v1727
        %v1729 = vand.u32 %v1728, 4294901760
        %v1730 = vsub.f32 %v1728, %v1729
        %v1731 = vand.u32 %v1730, 4294901760
        %1732 = vmatpush1.msra.mxu0 %v1731
        %v1733 = vand.u32 %v609, 4294901760
        %v1734 = vsub.f32 %v609, %v1733
        %v1735 = vand.u32 %v1734, 4294901760
        %v1736 = vsub.f32 %v1734, %v1735
        %v1737 = vand.u32 %v1736, 4294901760
        %1738 = vmatprep.subr.mxu0 %v1737
        %v1739 = vand.u32 %v608, 4294901760
        %v1740 = vsub.f32 %v608, %v1739
        %v1741 = vand.u32 %v1740, 4294901760
        %v1742 = vsub.f32 %v1740, %v1741
        %v1743 = vand.u32 %v1742, 4294901760
        %1744 = vmatpush1.msra.mxu0 %v1743
        %v1745 = vand.u32 %v605, 4294901760
        %v1746 = vsub.f32 %v605, %v1745
        %v1747 = vand.u32 %v1746, 4294901760
        %v1748 = vsub.f32 %v1746, %v1747
        %v1749 = vand.u32 %v1748, 4294901760
        %1750 = vmatprep.subr.mxu0 %v1749
        %v1751 = vand.u32 %v604, 4294901760
        %v1752 = vsub.f32 %v604, %v1751
        %v1753 = vand.u32 %v1752, 4294901760
        %v1754 = vsub.f32 %v1752, %v1753
        %v1755 = vand.u32 %v1754, 4294901760
        %1756 = vmatpush1.msra.mxu0 %v1755
        %v1757 = vand.u32 %v601, 4294901760
        %v1758 = vsub.f32 %v601, %v1757
        %v1759 = vand.u32 %v1758, 4294901760
        %v1760 = vsub.f32 %v1758, %v1759
        %v1761 = vand.u32 %v1760, 4294901760
        %1762 = vmatprep.subr.mxu0 %v1761
        %v1763 = vand.u32 %v600, 4294901760
        %v1764 = vsub.f32 %v600, %v1763
        %v1765 = vand.u32 %v1764, 4294901760
        %v1766 = vsub.f32 %v1764, %v1765
        %v1767 = vand.u32 %v1766, 4294901760
        %1768 = vmatpush1.msra.mxu0 %v1767
        %v1769 = vand.u32 %v597, 4294901760
        %v1770 = vsub.f32 %v597, %v1769
        %v1771 = vand.u32 %v1770, 4294901760
        %v1772 = vsub.f32 %v1770, %v1771
        %v1773 = vand.u32 %v1772, 4294901760
        %1774 = vmatprep.subr.mxu0 %v1773
        %v1775 = vand.u32 %v596, 4294901760
        %v1776 = vsub.f32 %v596, %v1775
        %v1777 = vand.u32 %v1776, 4294901760
        %v1778 = vsub.f32 %v1776, %v1777
        %v1779 = vand.u32 %v1778, 4294901760
        %1780 = vmatpush1.msra.mxu0 %v1779
        %v1781 = vand.u32 %v593, 4294901760
        %v1782 = vsub.f32 %v593, %v1781
        %v1783 = vand.u32 %v1782, 4294901760
        %v1784 = vsub.f32 %v1782, %v1783
        %v1785 = vand.u32 %v1784, 4294901760
        %1786 = vmatprep.subr.mxu0 %v1785
        %v1787 = vand.u32 %v592, 4294901760
        %v1788 = vsub.f32 %v592, %v1787
        %v1789 = vand.u32 %v1788, 4294901760
        %v1790 = vsub.f32 %v1788, %v1789
        %v1791 = vand.u32 %v1790, 4294901760
        %1792 = vmatpush1.msra.mxu0 %v1791
        %v1793 = vand.u32 %v589, 4294901760
        %v1794 = vsub.f32 %v589, %v1793
        %v1795 = vand.u32 %v1794, 4294901760
        %v1796 = vsub.f32 %v1794, %v1795
        %v1797 = vand.u32 %v1796, 4294901760
        %1798 = vmatprep.subr.mxu0 %v1797
        %v1799 = vand.u32 %v588, 4294901760
        %v1800 = vsub.f32 %v588, %v1799
        %v1801 = vand.u32 %v1800, 4294901760
        %v1802 = vsub.f32 %v1800, %v1801
        %v1803 = vand.u32 %v1802, 4294901760
        %1804 = vmatpush1.msra.mxu0 %v1803
        %1805 = vmatprep.subr.mxu0 0.0
        %1806 = vmatpush2.msra.mxu0 0.0
        %1807 = vmatprep.subr.mxu0 0.0
        %1808 = vmatpush2.msra.mxu0 0.0
        %1809 = vmatprep.subr.mxu0 0.0
        %1810 = vmatpush2.msra.mxu0 0.0
        %1811 = vmatprep.subr.mxu0 0.0
        %1812 = vmatpush2.msra.mxu0 0.0
        %1813 = vmatprep.subr.mxu0 0.0
        %1814 = vmatpush2.msra.mxu0 0.0
        %1815 = vmatprep.subr.mxu0 0.0
        %1816 = vmatpush2.msra.mxu0 0.0
        %1817 = vmatprep.subr.mxu0 0.0
        %1818 = vmatpush2.msra.mxu0 0.0
        %1819 = vmatprep.subr.mxu0 0.0
        %1820 = vmatpush2.msra.mxu0 0.0
        %1821 = vmatprep.subr.mxu0 0.0
        %1822 = vmatpush2.msra.mxu0 0.0
        %1823 = vmatprep.subr.mxu0 0.0
        %1824 = vmatpush2.msra.mxu0 0.0
        %1825 = vmatprep.subr.mxu0 0.0
        %1826 = vmatpush2.msra.mxu0 0.0
        %1827 = vmatprep.subr.mxu0 0.0
        %1828 = vmatpush2.msra.mxu0 0.0
        %1829 = vmatprep.subr.mxu0 0.0
        %1830 = vmatpush2.msra.mxu0 0.0
        %1831 = vmatprep.subr.mxu0 0.0
        %1832 = vmatpush2.msra.mxu0 0.0
        %1833 = vmatprep.subr.mxu0 0.0
        %1834 = vmatpush2.msra.mxu0 0.0
        %1835 = vmatprep.subr.mxu0 0.0
        %1836 = vmatpush2.msra.mxu0 0.0
        %1837 = vmatprep.mubr.f32.mxu0 0.0
        %v1838 = vand.u32 %v585, 4294901760
        %1839 = vmatmul.mubr.f32.gmra.mxu0 %v1838
        %v1840 = vpop.f32.mrf.mxu0
        %v1841 = vadd.f32 %v1609, %v1840
        %v1842 = vpop.f32.mrf.mxu0
        %v1843 = vadd.f32 %v1611, %v1842
        %1844 = vdwg.mxu0
        %v1845 = vand.u32 %v649, 4294901760
        %v1846 = vsub.f32 %v649, %v1845
        %1847 = vmatprep.subr.mxu0 %v1846
        %v1848 = vand.u32 %v648, 4294901760
        %v1849 = vsub.f32 %v648, %v1848
        %1850 = vmatpush1.msra.mxu0 %v1849
        %v1851 = vand.u32 %v645, 4294901760
        %v1852 = vsub.f32 %v645, %v1851
        %1853 = vmatprep.subr.mxu0 %v1852
        %v1854 = vand.u32 %v644, 4294901760
        %v1855 = vsub.f32 %v644, %v1854
        %1856 = vmatpush1.msra.mxu0 %v1855
        %v1857 = vand.u32 %v641, 4294901760
        %v1858 = vsub.f32 %v641, %v1857
        %1859 = vmatprep.subr.mxu0 %v1858
        %v1860 = vand.u32 %v640, 4294901760
        %v1861 = vsub.f32 %v640, %v1860
        %1862 = vmatpush1.msra.mxu0 %v1861
        %v1863 = vand.u32 %v637, 4294901760
        %v1864 = vsub.f32 %v637, %v1863
        %1865 = vmatprep.subr.mxu0 %v1864
        %v1866 = vand.u32 %v636, 4294901760
        %v1867 = vsub.f32 %v636, %v1866
        %1868 = vmatpush1.msra.mxu0 %v1867
        %v1869 = vand.u32 %v633, 4294901760
        %v1870 = vsub.f32 %v633, %v1869
        %1871 = vmatprep.subr.mxu0 %v1870
        %v1872 = vand.u32 %v632, 4294901760
        %v1873 = vsub.f32 %v632, %v1872
        %1874 = vmatpush1.msra.mxu0 %v1873
        %v1875 = vand.u32 %v629, 4294901760
        %v1876 = vsub.f32 %v629, %v1875
        %1877 = vmatprep.subr.mxu0 %v1876
        %v1878 = vand.u32 %v628, 4294901760
        %v1879 = vsub.f32 %v628, %v1878
        %1880 = vmatpush1.msra.mxu0 %v1879
        %v1881 = vand.u32 %v625, 4294901760
        %v1882 = vsub.f32 %v625, %v1881
        %1883 = vmatprep.subr.mxu0 %v1882
        %v1884 = vand.u32 %v624, 4294901760
        %v1885 = vsub.f32 %v624, %v1884
        %1886 = vmatpush1.msra.mxu0 %v1885
        %v1887 = vand.u32 %v621, 4294901760
        %v1888 = vsub.f32 %v621, %v1887
        %1889 = vmatprep.subr.mxu0 %v1888
        %v1890 = vand.u32 %v620, 4294901760
        %v1891 = vsub.f32 %v620, %v1890
        %1892 = vmatpush1.msra.mxu0 %v1891
        %v1893 = vand.u32 %v617, 4294901760
        %v1894 = vsub.f32 %v617, %v1893
        %1895 = vmatprep.subr.mxu0 %v1894
        %v1896 = vand.u32 %v616, 4294901760
        %v1897 = vsub.f32 %v616, %v1896
        %1898 = vmatpush1.msra.mxu0 %v1897
        %v1899 = vand.u32 %v613, 4294901760
        %v1900 = vsub.f32 %v613, %v1899
        %1901 = vmatprep.subr.mxu0 %v1900
        %v1902 = vand.u32 %v612, 4294901760
        %v1903 = vsub.f32 %v612, %v1902
        %1904 = vmatpush1.msra.mxu0 %v1903
        %v1905 = vand.u32 %v609, 4294901760
        %v1906 = vsub.f32 %v609, %v1905
        %1907 = vmatprep.subr.mxu0 %v1906
        %v1908 = vand.u32 %v608, 4294901760
        %v1909 = vsub.f32 %v608, %v1908
        %1910 = vmatpush1.msra.mxu0 %v1909
        %v1911 = vand.u32 %v605, 4294901760
        %v1912 = vsub.f32 %v605, %v1911
        %1913 = vmatprep.subr.mxu0 %v1912
        %v1914 = vand.u32 %v604, 4294901760
        %v1915 = vsub.f32 %v604, %v1914
        %1916 = vmatpush1.msra.mxu0 %v1915
        %v1917 = vand.u32 %v601, 4294901760
        %v1918 = vsub.f32 %v601, %v1917
        %1919 = vmatprep.subr.mxu0 %v1918
        %v1920 = vand.u32 %v600, 4294901760
        %v1921 = vsub.f32 %v600, %v1920
        %1922 = vmatpush1.msra.mxu0 %v1921
        %v1923 = vand.u32 %v597, 4294901760
        %v1924 = vsub.f32 %v597, %v1923
        %1925 = vmatprep.subr.mxu0 %v1924
        %v1926 = vand.u32 %v596, 4294901760
        %v1927 = vsub.f32 %v596, %v1926
        %1928 = vmatpush1.msra.mxu0 %v1927
        %v1929 = vand.u32 %v593, 4294901760
        %v1930 = vsub.f32 %v593, %v1929
        %1931 = vmatprep.subr.mxu0 %v1930
        %v1932 = vand.u32 %v592, 4294901760
        %v1933 = vsub.f32 %v592, %v1932
        %1934 = vmatpush1.msra.mxu0 %v1933
        %v1935 = vand.u32 %v589, 4294901760
        %v1936 = vsub.f32 %v589, %v1935
        %1937 = vmatprep.subr.mxu0 %v1936
        %v1938 = vand.u32 %v588, 4294901760
        %v1939 = vsub.f32 %v588, %v1938
        %1940 = vmatpush1.msra.mxu0 %v1939
        %1941 = vmatprep.subr.mxu0 0.0
        %1942 = vmatpush2.msra.mxu0 0.0
        %1943 = vmatprep.subr.mxu0 0.0
        %1944 = vmatpush2.msra.mxu0 0.0
        %1945 = vmatprep.subr.mxu0 0.0
        %1946 = vmatpush2.msra.mxu0 0.0
        %1947 = vmatprep.subr.mxu0 0.0
        %1948 = vmatpush2.msra.mxu0 0.0
        %1949 = vmatprep.subr.mxu0 0.0
        %1950 = vmatpush2.msra.mxu0 0.0
        %1951 = vmatprep.subr.mxu0 0.0
        %1952 = vmatpush2.msra.mxu0 0.0
        %1953 = vmatprep.subr.mxu0 0.0
        %1954 = vmatpush2.msra.mxu0 0.0
        %1955 = vmatprep.subr.mxu0 0.0
        %1956 = vmatpush2.msra.mxu0 0.0
        %1957 = vmatprep.subr.mxu0 0.0
        %1958 = vmatpush2.msra.mxu0 0.0
        %1959 = vmatprep.subr.mxu0 0.0
        %1960 = vmatpush2.msra.mxu0 0.0
        %1961 = vmatprep.subr.mxu0 0.0
        %1962 = vmatpush2.msra.mxu0 0.0
        %1963 = vmatprep.subr.mxu0 0.0
        %1964 = vmatpush2.msra.mxu0 0.0
        %1965 = vmatprep.subr.mxu0 0.0
        %1966 = vmatpush2.msra.mxu0 0.0
        %1967 = vmatprep.subr.mxu0 0.0
        %1968 = vmatpush2.msra.mxu0 0.0
        %1969 = vmatprep.subr.mxu0 0.0
        %1970 = vmatpush2.msra.mxu0 0.0
        %1971 = vmatprep.subr.mxu0 0.0
        %1972 = vmatpush2.msra.mxu0 0.0
        %1973 = vmatprep.mubr.f32.mxu0 0.0
        %v1974 = vand.u32 %v585, 4294901760
        %v1975 = vsub.f32 %v585, %v1974
        %1976 = vmatmul.mubr.f32.gmra.mxu0 %v1975
        %v1977 = vpop.f32.mrf.mxu0
        %v1978 = vadd.f32 %v1841, %v1977
        %v1979 = vpop.f32.mrf.mxu0
        %v1980 = vadd.f32 %v1843, %v1979
        %1981 = vdwg.mxu0
        %v1982 = vand.u32 %v649, 4294901760
        %1983 = vmatprep.subr.mxu0 %v1982
        %v1984 = vand.u32 %v648, 4294901760
        %1985 = vmatpush1.msra.mxu0 %v1984
        %v1986 = vand.u32 %v645, 4294901760
        %1987 = vmatprep.subr.mxu0 %v1986
        %v1988 = vand.u32 %v644, 4294901760
        %1989 = vmatpush1.msra.mxu0 %v1988
        %v1990 = vand.u32 %v641, 4294901760
        %1991 = vmatprep.subr.mxu0 %v1990
        %v1992 = vand.u32 %v640, 4294901760
        %1993 = vmatpush1.msra.mxu0 %v1992
        %v1994 = vand.u32 %v637, 4294901760
        %1995 = vmatprep.subr.mxu0 %v1994
        %v1996 = vand.u32 %v636, 4294901760
        %1997 = vmatpush1.msra.mxu0 %v1996
        %v1998 = vand.u32 %v633, 4294901760
        %1999 = vmatprep.subr.mxu0 %v1998
        %v2000 = vand.u32 %v632, 4294901760
        %2001 = vmatpush1.msra.mxu0 %v2000
        %v2002 = vand.u32 %v629, 4294901760
        %2003 = vmatprep.subr.mxu0 %v2002
        %v2004 = vand.u32 %v628, 4294901760
        %2005 = vmatpush1.msra.mxu0 %v2004
        %v2006 = vand.u32 %v625, 4294901760
        %2007 = vmatprep.subr.mxu0 %v2006
        %v2008 = vand.u32 %v624, 4294901760
        %2009 = vmatpush1.msra.mxu0 %v2008
        %v2010 = vand.u32 %v621, 4294901760
        %2011 = vmatprep.subr.mxu0 %v2010
        %v2012 = vand.u32 %v620, 4294901760
        %2013 = vmatpush1.msra.mxu0 %v2012
        %v2014 = vand.u32 %v617, 4294901760
        %2015 = vmatprep.subr.mxu0 %v2014
        %v2016 = vand.u32 %v616, 4294901760
        %2017 = vmatpush1.msra.mxu0 %v2016
        %v2018 = vand.u32 %v613, 4294901760
        %2019 = vmatprep.subr.mxu0 %v2018
        %v2020 = vand.u32 %v612, 4294901760
        %2021 = vmatpush1.msra.mxu0 %v2020
        %v2022 = vand.u32 %v609, 4294901760
        %2023 = vmatprep.subr.mxu0 %v2022
        %v2024 = vand.u32 %v608, 4294901760
        %2025 = vmatpush1.msra.mxu0 %v2024
        %v2026 = vand.u32 %v605, 4294901760
        %2027 = vmatprep.subr.mxu0 %v2026
        %v2028 = vand.u32 %v604, 4294901760
        %2029 = vmatpush1.msra.mxu0 %v2028
        %v2030 = vand.u32 %v601, 4294901760
        %2031 = vmatprep.subr.mxu0 %v2030
        %v2032 = vand.u32 %v600, 4294901760
        %2033 = vmatpush1.msra.mxu0 %v2032
        %v2034 = vand.u32 %v597, 4294901760
        %2035 = vmatprep.subr.mxu0 %v2034
        %v2036 = vand.u32 %v596, 4294901760
        %2037 = vmatpush1.msra.mxu0 %v2036
        %v2038 = vand.u32 %v593, 4294901760
        %2039 = vmatprep.subr.mxu0 %v2038
        %v2040 = vand.u32 %v592, 4294901760
        %2041 = vmatpush1.msra.mxu0 %v2040
        %v2042 = vand.u32 %v589, 4294901760
        %2043 = vmatprep.subr.mxu0 %v2042
        %v2044 = vand.u32 %v588, 4294901760
        %2045 = vmatpush1.msra.mxu0 %v2044
        %2046 = vmatprep.subr.mxu0 0.0
        %2047 = vmatpush2.msra.mxu0 0.0
        %2048 = vmatprep.subr.mxu0 0.0
        %2049 = vmatpush2.msra.mxu0 0.0
        %2050 = vmatprep.subr.mxu0 0.0
        %2051 = vmatpush2.msra.mxu0 0.0
        %2052 = vmatprep.subr.mxu0 0.0
        %2053 = vmatpush2.msra.mxu0 0.0
        %2054 = vmatprep.subr.mxu0 0.0
        %2055 = vmatpush2.msra.mxu0 0.0
        %2056 = vmatprep.subr.mxu0 0.0
        %2057 = vmatpush2.msra.mxu0 0.0
        %2058 = vmatprep.subr.mxu0 0.0
        %2059 = vmatpush2.msra.mxu0 0.0
        %2060 = vmatprep.subr.mxu0 0.0
        %2061 = vmatpush2.msra.mxu0 0.0
        %2062 = vmatprep.subr.mxu0 0.0
        %2063 = vmatpush2.msra.mxu0 0.0
        %2064 = vmatprep.subr.mxu0 0.0
        %2065 = vmatpush2.msra.mxu0 0.0
        %2066 = vmatprep.subr.mxu0 0.0
        %2067 = vmatpush2.msra.mxu0 0.0
        %2068 = vmatprep.subr.mxu0 0.0
        %2069 = vmatpush2.msra.mxu0 0.0
        %2070 = vmatprep.subr.mxu0 0.0
        %2071 = vmatpush2.msra.mxu0 0.0
        %2072 = vmatprep.subr.mxu0 0.0
        %2073 = vmatpush2.msra.mxu0 0.0
        %2074 = vmatprep.subr.mxu0 0.0
        %2075 = vmatpush2.msra.mxu0 0.0
        %2076 = vmatprep.subr.mxu0 0.0
        %2077 = vmatpush2.msra.mxu0 0.0
        %2078 = vmatprep.mubr.f32.mxu0 0.0
        %v2079 = vand.u32 %v585, 4294901760
        %v2080 = vsub.f32 %v585, %v2079
        %v2081 = vand.u32 %v2080, 4294901760
        %2082 = vmatmul.mubr.f32.gmra.mxu0 %v2081
        %v2083 = vpop.f32.mrf.mxu0
        %v2084 = vadd.f32 %v1978, %v2083
        %v2085 = vpop.f32.mrf.mxu0
        %v2086 = vadd.f32 %v1980, %v2085
        %2087 = vdwg.mxu0
        %v2088 = vand.u32 %v649, 4294901760
        %v2089 = vsub.f32 %v649, %v2088
        %v2090 = vand.u32 %v2089, 4294901760
        %2091 = vmatprep.subr.mxu0 %v2090
        %v2092 = vand.u32 %v648, 4294901760
        %v2093 = vsub.f32 %v648, %v2092
        %v2094 = vand.u32 %v2093, 4294901760
        %2095 = vmatpush1.msra.mxu0 %v2094
        %v2096 = vand.u32 %v645, 4294901760
        %v2097 = vsub.f32 %v645, %v2096
        %v2098 = vand.u32 %v2097, 4294901760
        %2099 = vmatprep.subr.mxu0 %v2098
        %v2100 = vand.u32 %v644, 4294901760
        %v2101 = vsub.f32 %v644, %v2100
        %v2102 = vand.u32 %v2101, 4294901760
        %2103 = vmatpush1.msra.mxu0 %v2102
        %v2104 = vand.u32 %v641, 4294901760
        %v2105 = vsub.f32 %v641, %v2104
        %v2106 = vand.u32 %v2105, 4294901760
        %2107 = vmatprep.subr.mxu0 %v2106
        %v2108 = vand.u32 %v640, 4294901760
        %v2109 = vsub.f32 %v640, %v2108
        %v2110 = vand.u32 %v2109, 4294901760
        %2111 = vmatpush1.msra.mxu0 %v2110
        %v2112 = vand.u32 %v637, 4294901760
        %v2113 = vsub.f32 %v637, %v2112
        %v2114 = vand.u32 %v2113, 4294901760
        %2115 = vmatprep.subr.mxu0 %v2114
        %v2116 = vand.u32 %v636, 4294901760
        %v2117 = vsub.f32 %v636, %v2116
        %v2118 = vand.u32 %v2117, 4294901760
        %2119 = vmatpush1.msra.mxu0 %v2118
        %v2120 = vand.u32 %v633, 4294901760
        %v2121 = vsub.f32 %v633, %v2120
        %v2122 = vand.u32 %v2121, 4294901760
        %2123 = vmatprep.subr.mxu0 %v2122
        %v2124 = vand.u32 %v632, 4294901760
        %v2125 = vsub.f32 %v632, %v2124
        %v2126 = vand.u32 %v2125, 4294901760
        %2127 = vmatpush1.msra.mxu0 %v2126
        %v2128 = vand.u32 %v629, 4294901760
        %v2129 = vsub.f32 %v629, %v2128
        %v2130 = vand.u32 %v2129, 4294901760
        %2131 = vmatprep.subr.mxu0 %v2130
        %v2132 = vand.u32 %v628, 4294901760
        %v2133 = vsub.f32 %v628, %v2132
        %v2134 = vand.u32 %v2133, 4294901760
        %2135 = vmatpush1.msra.mxu0 %v2134
        %v2136 = vand.u32 %v625, 4294901760
        %v2137 = vsub.f32 %v625, %v2136
        %v2138 = vand.u32 %v2137, 4294901760
        %2139 = vmatprep.subr.mxu0 %v2138
        %v2140 = vand.u32 %v624, 4294901760
        %v2141 = vsub.f32 %v624, %v2140
        %v2142 = vand.u32 %v2141, 4294901760
        %2143 = vmatpush1.msra.mxu0 %v2142
        %v2144 = vand.u32 %v621, 4294901760
        %v2145 = vsub.f32 %v621, %v2144
        %v2146 = vand.u32 %v2145, 4294901760
        %2147 = vmatprep.subr.mxu0 %v2146
        %v2148 = vand.u32 %v620, 4294901760
        %v2149 = vsub.f32 %v620, %v2148
        %v2150 = vand.u32 %v2149, 4294901760
        %2151 = vmatpush1.msra.mxu0 %v2150
        %v2152 = vand.u32 %v617, 4294901760
        %v2153 = vsub.f32 %v617, %v2152
        %v2154 = vand.u32 %v2153, 4294901760
        %2155 = vmatprep.subr.mxu0 %v2154
        %v2156 = vand.u32 %v616, 4294901760
        %v2157 = vsub.f32 %v616, %v2156
        %v2158 = vand.u32 %v2157, 4294901760
        %2159 = vmatpush1.msra.mxu0 %v2158
        %v2160 = vand.u32 %v613, 4294901760
        %v2161 = vsub.f32 %v613, %v2160
        %v2162 = vand.u32 %v2161, 4294901760
        %2163 = vmatprep.subr.mxu0 %v2162
        %v2164 = vand.u32 %v612, 4294901760
        %v2165 = vsub.f32 %v612, %v2164
        %v2166 = vand.u32 %v2165, 4294901760
        %2167 = vmatpush1.msra.mxu0 %v2166
        %v2168 = vand.u32 %v609, 4294901760
        %v2169 = vsub.f32 %v609, %v2168
        %v2170 = vand.u32 %v2169, 4294901760
        %2171 = vmatprep.subr.mxu0 %v2170
        %v2172 = vand.u32 %v608, 4294901760
        %v2173 = vsub.f32 %v608, %v2172
        %v2174 = vand.u32 %v2173, 4294901760
        %2175 = vmatpush1.msra.mxu0 %v2174
        %v2176 = vand.u32 %v605, 4294901760
        %v2177 = vsub.f32 %v605, %v2176
        %v2178 = vand.u32 %v2177, 4294901760
        %2179 = vmatprep.subr.mxu0 %v2178
        %v2180 = vand.u32 %v604, 4294901760
        %v2181 = vsub.f32 %v604, %v2180
        %v2182 = vand.u32 %v2181, 4294901760
        %2183 = vmatpush1.msra.mxu0 %v2182
        %v2184 = vand.u32 %v601, 4294901760
        %v2185 = vsub.f32 %v601, %v2184
        %v2186 = vand.u32 %v2185, 4294901760
        %2187 = vmatprep.subr.mxu0 %v2186
        %v2188 = vand.u32 %v600, 4294901760
        %v2189 = vsub.f32 %v600, %v2188
        %v2190 = vand.u32 %v2189, 4294901760
        %2191 = vmatpush1.msra.mxu0 %v2190
        %v2192 = vand.u32 %v597, 4294901760
        %v2193 = vsub.f32 %v597, %v2192
        %v2194 = vand.u32 %v2193, 4294901760
        %2195 = vmatprep.subr.mxu0 %v2194
        %v2196 = vand.u32 %v596, 4294901760
        %v2197 = vsub.f32 %v596, %v2196
        %v2198 = vand.u32 %v2197, 4294901760
        %2199 = vmatpush1.msra.mxu0 %v2198
        %v2200 = vand.u32 %v593, 4294901760
        %v2201 = vsub.f32 %v593, %v2200
        %v2202 = vand.u32 %v2201, 4294901760
        %2203 = vmatprep.subr.mxu0 %v2202
        %v2204 = vand.u32 %v592, 4294901760
        %v2205 = vsub.f32 %v592, %v2204
        %v2206 = vand.u32 %v2205, 4294901760
        %2207 = vmatpush1.msra.mxu0 %v2206
        %v2208 = vand.u32 %v589, 4294901760
        %v2209 = vsub.f32 %v589, %v2208
        %v2210 = vand.u32 %v2209, 4294901760
        %2211 = vmatprep.subr.mxu0 %v2210
        %v2212 = vand.u32 %v588, 4294901760
        %v2213 = vsub.f32 %v588, %v2212
        %v2214 = vand.u32 %v2213, 4294901760
        %2215 = vmatpush1.msra.mxu0 %v2214
        %2216 = vmatprep.subr.mxu0 0.0
        %2217 = vmatpush2.msra.mxu0 0.0
        %2218 = vmatprep.subr.mxu0 0.0
        %2219 = vmatpush2.msra.mxu0 0.0
        %2220 = vmatprep.subr.mxu0 0.0
        %2221 = vmatpush2.msra.mxu0 0.0
        %2222 = vmatprep.subr.mxu0 0.0
        %2223 = vmatpush2.msra.mxu0 0.0
        %2224 = vmatprep.subr.mxu0 0.0
        %2225 = vmatpush2.msra.mxu0 0.0
        %2226 = vmatprep.subr.mxu0 0.0
        %2227 = vmatpush2.msra.mxu0 0.0
        %2228 = vmatprep.subr.mxu0 0.0
        %2229 = vmatpush2.msra.mxu0 0.0
        %2230 = vmatprep.subr.mxu0 0.0
        %2231 = vmatpush2.msra.mxu0 0.0
        %2232 = vmatprep.subr.mxu0 0.0
        %2233 = vmatpush2.msra.mxu0 0.0
        %2234 = vmatprep.subr.mxu0 0.0
        %2235 = vmatpush2.msra.mxu0 0.0
        %2236 = vmatprep.subr.mxu0 0.0
        %2237 = vmatpush2.msra.mxu0 0.0
        %2238 = vmatprep.subr.mxu0 0.0
        %2239 = vmatpush2.msra.mxu0 0.0
        %2240 = vmatprep.subr.mxu0 0.0
        %2241 = vmatpush2.msra.mxu0 0.0
        %2242 = vmatprep.subr.mxu0 0.0
        %2243 = vmatpush2.msra.mxu0 0.0
        %2244 = vmatprep.subr.mxu0 0.0
        %2245 = vmatpush2.msra.mxu0 0.0
        %2246 = vmatprep.subr.mxu0 0.0
        %2247 = vmatpush2.msra.mxu0 0.0
        %2248 = vmatprep.mubr.f32.mxu0 0.0
        %v2249 = vand.u32 %v585, 4294901760
        %2250 = vmatmul.mubr.f32.gmra.mxu0 %v2249
        %v2251 = vpop.f32.mrf.mxu0
        %v2252 = vadd.f32 %v2084, %v2251
        %v2253 = vpop.f32.mrf.mxu0
        %v2254 = vadd.f32 %v2086, %v2253
        %2255 = vdwg.mxu0
        %v2256 = vand.u32 %v649, 4294901760
        %2257 = vmatprep.subr.mxu0 %v2256
        %v2258 = vand.u32 %v648, 4294901760
        %2259 = vmatpush1.msra.mxu0 %v2258
        %v2260 = vand.u32 %v645, 4294901760
        %2261 = vmatprep.subr.mxu0 %v2260
        %v2262 = vand.u32 %v644, 4294901760
        %2263 = vmatpush1.msra.mxu0 %v2262
        %v2264 = vand.u32 %v641, 4294901760
        %2265 = vmatprep.subr.mxu0 %v2264
        %v2266 = vand.u32 %v640, 4294901760
        %2267 = vmatpush1.msra.mxu0 %v2266
        %v2268 = vand.u32 %v637, 4294901760
        %2269 = vmatprep.subr.mxu0 %v2268
        %v2270 = vand.u32 %v636, 4294901760
        %2271 = vmatpush1.msra.mxu0 %v2270
        %v2272 = vand.u32 %v633, 4294901760
        %2273 = vmatprep.subr.mxu0 %v2272
        %v2274 = vand.u32 %v632, 4294901760
        %2275 = vmatpush1.msra.mxu0 %v2274
        %v2276 = vand.u32 %v629, 4294901760
        %2277 = vmatprep.subr.mxu0 %v2276
        %v2278 = vand.u32 %v628, 4294901760
        %2279 = vmatpush1.msra.mxu0 %v2278
        %v2280 = vand.u32 %v625, 4294901760
        %2281 = vmatprep.subr.mxu0 %v2280
        %v2282 = vand.u32 %v624, 4294901760
        %2283 = vmatpush1.msra.mxu0 %v2282
        %v2284 = vand.u32 %v621, 4294901760
        %2285 = vmatprep.subr.mxu0 %v2284
        %v2286 = vand.u32 %v620, 4294901760
        %2287 = vmatpush1.msra.mxu0 %v2286
        %v2288 = vand.u32 %v617, 4294901760
        %2289 = vmatprep.subr.mxu0 %v2288
        %v2290 = vand.u32 %v616, 4294901760
        %2291 = vmatpush1.msra.mxu0 %v2290
        %v2292 = vand.u32 %v613, 4294901760
        %2293 = vmatprep.subr.mxu0 %v2292
        %v2294 = vand.u32 %v612, 4294901760
        %2295 = vmatpush1.msra.mxu0 %v2294
        %v2296 = vand.u32 %v609, 4294901760
        %2297 = vmatprep.subr.mxu0 %v2296
        %v2298 = vand.u32 %v608, 4294901760
        %2299 = vmatpush1.msra.mxu0 %v2298
        %v2300 = vand.u32 %v605, 4294901760
        %2301 = vmatprep.subr.mxu0 %v2300
        %v2302 = vand.u32 %v604, 4294901760
        %2303 = vmatpush1.msra.mxu0 %v2302
        %v2304 = vand.u32 %v601, 4294901760
        %2305 = vmatprep.subr.mxu0 %v2304
        %v2306 = vand.u32 %v600, 4294901760
        %2307 = vmatpush1.msra.mxu0 %v2306
        %v2308 = vand.u32 %v597, 4294901760
        %2309 = vmatprep.subr.mxu0 %v2308
        %v2310 = vand.u32 %v596, 4294901760
        %2311 = vmatpush1.msra.mxu0 %v2310
        %v2312 = vand.u32 %v593, 4294901760
        %2313 = vmatprep.subr.mxu0 %v2312
        %v2314 = vand.u32 %v592, 4294901760
        %2315 = vmatpush1.msra.mxu0 %v2314
        %v2316 = vand.u32 %v589, 4294901760
        %2317 = vmatprep.subr.mxu0 %v2316
        %v2318 = vand.u32 %v588, 4294901760
        %2319 = vmatpush1.msra.mxu0 %v2318
        %2320 = vmatprep.subr.mxu0 0.0
        %2321 = vmatpush2.msra.mxu0 0.0
        %2322 = vmatprep.subr.mxu0 0.0
        %2323 = vmatpush2.msra.mxu0 0.0
        %2324 = vmatprep.subr.mxu0 0.0
        %2325 = vmatpush2.msra.mxu0 0.0
        %2326 = vmatprep.subr.mxu0 0.0
        %2327 = vmatpush2.msra.mxu0 0.0
        %2328 = vmatprep.subr.mxu0 0.0
        %2329 = vmatpush2.msra.mxu0 0.0
        %2330 = vmatprep.subr.mxu0 0.0
        %2331 = vmatpush2.msra.mxu0 0.0
        %2332 = vmatprep.subr.mxu0 0.0
        %2333 = vmatpush2.msra.mxu0 0.0
        %2334 = vmatprep.subr.mxu0 0.0
        %2335 = vmatpush2.msra.mxu0 0.0
        %2336 = vmatprep.subr.mxu0 0.0
        %2337 = vmatpush2.msra.mxu0 0.0
        %2338 = vmatprep.subr.mxu0 0.0
        %2339 = vmatpush2.msra.mxu0 0.0
        %2340 = vmatprep.subr.mxu0 0.0
        %2341 = vmatpush2.msra.mxu0 0.0
        %2342 = vmatprep.subr.mxu0 0.0
        %2343 = vmatpush2.msra.mxu0 0.0
        %2344 = vmatprep.subr.mxu0 0.0
        %2345 = vmatpush2.msra.mxu0 0.0
        %2346 = vmatprep.subr.mxu0 0.0
        %2347 = vmatpush2.msra.mxu0 0.0
        %2348 = vmatprep.subr.mxu0 0.0
        %2349 = vmatpush2.msra.mxu0 0.0
        %2350 = vmatprep.subr.mxu0 0.0
        %2351 = vmatpush2.msra.mxu0 0.0
        %2352 = vmatprep.mubr.f32.mxu0 0.0
        %v2353 = vand.u32 %v585, 4294901760
        %2354 = vmatmul.mubr.f32.gmra.mxu0 %v2353
        %v2355 = vpop.f32.mrf.mxu0
        %v2356 = vadd.f32 %v2252, %v2355
        %v2357 = vpop.f32.mrf.mxu0
        %v2358 = vadd.f32 %v2254, %v2357
        %2359 = vdwg.mxu0
        %v2360 = vand.u32 %v385, 4294901760
        %2361 = vmatprep.subr.mxu0 %v2360
        %v2362 = vand.u32 %v384, 4294901760
        %2363 = vmatpush1.msra.mxu0 %v2362
        %v2364 = vand.u32 %v381, 4294901760
        %2365 = vmatprep.subr.mxu0 %v2364
        %v2366 = vand.u32 %v380, 4294901760
        %2367 = vmatpush1.msra.mxu0 %v2366
        %v2368 = vand.u32 %v377, 4294901760
        %2369 = vmatprep.subr.mxu0 %v2368
        %v2370 = vand.u32 %v376, 4294901760
        %2371 = vmatpush1.msra.mxu0 %v2370
        %v2372 = vand.u32 %v373, 4294901760
        %2373 = vmatprep.subr.mxu0 %v2372
        %v2374 = vand.u32 %v372, 4294901760
        %2375 = vmatpush1.msra.mxu0 %v2374
        %v2376 = vand.u32 %v369, 4294901760
        %2377 = vmatprep.subr.mxu0 %v2376
        %v2378 = vand.u32 %v368, 4294901760
        %2379 = vmatpush1.msra.mxu0 %v2378
        %v2380 = vand.u32 %v365, 4294901760
        %2381 = vmatprep.subr.mxu0 %v2380
        %v2382 = vand.u32 %v364, 4294901760
        %2383 = vmatpush1.msra.mxu0 %v2382
        %v2384 = vand.u32 %v361, 4294901760
        %2385 = vmatprep.subr.mxu0 %v2384
        %v2386 = vand.u32 %v360, 4294901760
        %2387 = vmatpush1.msra.mxu0 %v2386
        %v2388 = vand.u32 %v357, 4294901760
        %2389 = vmatprep.subr.mxu0 %v2388
        %v2390 = vand.u32 %v356, 4294901760
        %2391 = vmatpush1.msra.mxu0 %v2390
        %v2392 = vand.u32 %v353, 4294901760
        %2393 = vmatprep.subr.mxu0 %v2392
        %v2394 = vand.u32 %v352, 4294901760
        %2395 = vmatpush1.msra.mxu0 %v2394
        %v2396 = vand.u32 %v349, 4294901760
        %2397 = vmatprep.subr.mxu0 %v2396
        %v2398 = vand.u32 %v348, 4294901760
        %2399 = vmatpush1.msra.mxu0 %v2398
        %v2400 = vand.u32 %v345, 4294901760
        %2401 = vmatprep.subr.mxu0 %v2400
        %v2402 = vand.u32 %v344, 4294901760
        %2403 = vmatpush1.msra.mxu0 %v2402
        %v2404 = vand.u32 %v341, 4294901760
        %2405 = vmatprep.subr.mxu0 %v2404
        %v2406 = vand.u32 %v340, 4294901760
        %2407 = vmatpush1.msra.mxu0 %v2406
        %v2408 = vand.u32 %v337, 4294901760
        %2409 = vmatprep.subr.mxu0 %v2408
        %v2410 = vand.u32 %v336, 4294901760
        %2411 = vmatpush1.msra.mxu0 %v2410
        %v2412 = vand.u32 %v333, 4294901760
        %2413 = vmatprep.subr.mxu0 %v2412
        %v2414 = vand.u32 %v332, 4294901760
        %2415 = vmatpush1.msra.mxu0 %v2414
        %v2416 = vand.u32 %v329, 4294901760
        %2417 = vmatprep.subr.mxu0 %v2416
        %v2418 = vand.u32 %v328, 4294901760
        %2419 = vmatpush1.msra.mxu0 %v2418
        %v2420 = vand.u32 %v325, 4294901760
        %2421 = vmatprep.subr.mxu0 %v2420
        %v2422 = vand.u32 %v324, 4294901760
        %2423 = vmatpush1.msra.mxu0 %v2422
        %v2424 = vand.u32 %v449, 4294901760
        %2425 = vmatprep.subr.mxu0 %v2424
        %v2426 = vand.u32 %v448, 4294901760
        %2427 = vmatpush2.msra.mxu0 %v2426
        %v2428 = vand.u32 %v445, 4294901760
        %2429 = vmatprep.subr.mxu0 %v2428
        %v2430 = vand.u32 %v444, 4294901760
        %2431 = vmatpush2.msra.mxu0 %v2430
        %v2432 = vand.u32 %v441, 4294901760
        %2433 = vmatprep.subr.mxu0 %v2432
        %v2434 = vand.u32 %v440, 4294901760
        %2435 = vmatpush2.msra.mxu0 %v2434
        %v2436 = vand.u32 %v437, 4294901760
        %2437 = vmatprep.subr.mxu0 %v2436
        %v2438 = vand.u32 %v436, 4294901760
        %2439 = vmatpush2.msra.mxu0 %v2438
        %v2440 = vand.u32 %v433, 4294901760
        %2441 = vmatprep.subr.mxu0 %v2440
        %v2442 = vand.u32 %v432, 4294901760
        %2443 = vmatpush2.msra.mxu0 %v2442
        %v2444 = vand.u32 %v429, 4294901760
        %2445 = vmatprep.subr.mxu0 %v2444
        %v2446 = vand.u32 %v428, 4294901760
        %2447 = vmatpush2.msra.mxu0 %v2446
        %v2448 = vand.u32 %v425, 4294901760
        %2449 = vmatprep.subr.mxu0 %v2448
        %v2450 = vand.u32 %v424, 4294901760
        %2451 = vmatpush2.msra.mxu0 %v2450
        %v2452 = vand.u32 %v421, 4294901760
        %2453 = vmatprep.subr.mxu0 %v2452
        %v2454 = vand.u32 %v420, 4294901760
        %2455 = vmatpush2.msra.mxu0 %v2454
        %v2456 = vand.u32 %v417, 4294901760
        %2457 = vmatprep.subr.mxu0 %v2456
        %v2458 = vand.u32 %v416, 4294901760
        %2459 = vmatpush2.msra.mxu0 %v2458
        %v2460 = vand.u32 %v413, 4294901760
        %2461 = vmatprep.subr.mxu0 %v2460
        %v2462 = vand.u32 %v412, 4294901760
        %2463 = vmatpush2.msra.mxu0 %v2462
        %v2464 = vand.u32 %v409, 4294901760
        %2465 = vmatprep.subr.mxu0 %v2464
        %v2466 = vand.u32 %v408, 4294901760
        %2467 = vmatpush2.msra.mxu0 %v2466
        %v2468 = vand.u32 %v405, 4294901760
        %2469 = vmatprep.subr.mxu0 %v2468
        %v2470 = vand.u32 %v404, 4294901760
        %2471 = vmatpush2.msra.mxu0 %v2470
        %v2472 = vand.u32 %v401, 4294901760
        %2473 = vmatprep.subr.mxu0 %v2472
        %v2474 = vand.u32 %v400, 4294901760
        %2475 = vmatpush2.msra.mxu0 %v2474
        %v2476 = vand.u32 %v397, 4294901760
        %2477 = vmatprep.subr.mxu0 %v2476
        %v2478 = vand.u32 %v396, 4294901760
        %2479 = vmatpush2.msra.mxu0 %v2478
        %v2480 = vand.u32 %v393, 4294901760
        %2481 = vmatprep.subr.mxu0 %v2480
        %v2482 = vand.u32 %v392, 4294901760
        %2483 = vmatpush2.msra.mxu0 %v2482
        %v2484 = vand.u32 %v389, 4294901760
        %2485 = vmatprep.subr.mxu0 %v2484
        %v2486 = vand.u32 %v388, 4294901760
        %2487 = vmatpush2.msra.mxu0 %v2486
        %v2488 = vand.u32 %v321, 4294901760
        %v2489 = vsub.f32 %v321, %v2488
        %v2490 = vand.u32 %v2489, 4294901760
        %v2491 = vsub.f32 %v2489, %v2490
        %v2492 = vand.u32 %v2491, 4294901760
        %2493 = vmatprep.mubr.f32.mxu0 %v2492
        %v2494 = vand.u32 %v320, 4294901760
        %v2495 = vsub.f32 %v320, %v2494
        %v2496 = vand.u32 %v2495, 4294901760
        %v2497 = vsub.f32 %v2495, %v2496
        %v2498 = vand.u32 %v2497, 4294901760
        %2499 = vmatmul.mubr.f32.gmra.mxu0 %v2498
        %v2500 = vpop.f32.mrf.mxu0
        %v2501 = vadd.f32 %v1501, %v2500
        %v2502 = vpop.f32.mrf.mxu0
        %v2503 = vadd.f32 %v1503, %v2502
        %2504 = vdwg.mxu0
        %v2505 = vand.u32 %v385, 4294901760
        %v2506 = vsub.f32 %v385, %v2505
        %v2507 = vand.u32 %v2506, 4294901760
        %v2508 = vsub.f32 %v2506, %v2507
        %v2509 = vand.u32 %v2508, 4294901760
        %2510 = vmatprep.subr.mxu0 %v2509
        %v2511 = vand.u32 %v384, 4294901760
        %v2512 = vsub.f32 %v384, %v2511
        %v2513 = vand.u32 %v2512, 4294901760
        %v2514 = vsub.f32 %v2512, %v2513
        %v2515 = vand.u32 %v2514, 4294901760
        %2516 = vmatpush1.msra.mxu0 %v2515
        %v2517 = vand.u32 %v381, 4294901760
        %v2518 = vsub.f32 %v381, %v2517
        %v2519 = vand.u32 %v2518, 4294901760
        %v2520 = vsub.f32 %v2518, %v2519
        %v2521 = vand.u32 %v2520, 4294901760
        %2522 = vmatprep.subr.mxu0 %v2521
        %v2523 = vand.u32 %v380, 4294901760
        %v2524 = vsub.f32 %v380, %v2523
        %v2525 = vand.u32 %v2524, 4294901760
        %v2526 = vsub.f32 %v2524, %v2525
        %v2527 = vand.u32 %v2526, 4294901760
        %2528 = vmatpush1.msra.mxu0 %v2527
        %v2529 = vand.u32 %v377, 4294901760
        %v2530 = vsub.f32 %v377, %v2529
        %v2531 = vand.u32 %v2530, 4294901760
        %v2532 = vsub.f32 %v2530, %v2531
        %v2533 = vand.u32 %v2532, 4294901760
        %2534 = vmatprep.subr.mxu0 %v2533
        %v2535 = vand.u32 %v376, 4294901760
        %v2536 = vsub.f32 %v376, %v2535
        %v2537 = vand.u32 %v2536, 4294901760
        %v2538 = vsub.f32 %v2536, %v2537
        %v2539 = vand.u32 %v2538, 4294901760
        %2540 = vmatpush1.msra.mxu0 %v2539
        %v2541 = vand.u32 %v373, 4294901760
        %v2542 = vsub.f32 %v373, %v2541
        %v2543 = vand.u32 %v2542, 4294901760
        %v2544 = vsub.f32 %v2542, %v2543
        %v2545 = vand.u32 %v2544, 4294901760
        %2546 = vmatprep.subr.mxu0 %v2545
        %v2547 = vand.u32 %v372, 4294901760
        %v2548 = vsub.f32 %v372, %v2547
        %v2549 = vand.u32 %v2548, 4294901760
        %v2550 = vsub.f32 %v2548, %v2549
        %v2551 = vand.u32 %v2550, 4294901760
        %2552 = vmatpush1.msra.mxu0 %v2551
        %v2553 = vand.u32 %v369, 4294901760
        %v2554 = vsub.f32 %v369, %v2553
        %v2555 = vand.u32 %v2554, 4294901760
        %v2556 = vsub.f32 %v2554, %v2555
        %v2557 = vand.u32 %v2556, 4294901760
        %2558 = vmatprep.subr.mxu0 %v2557
        %v2559 = vand.u32 %v368, 4294901760
        %v2560 = vsub.f32 %v368, %v2559
        %v2561 = vand.u32 %v2560, 4294901760
        %v2562 = vsub.f32 %v2560, %v2561
        %v2563 = vand.u32 %v2562, 4294901760
        %2564 = vmatpush1.msra.mxu0 %v2563
        %v2565 = vand.u32 %v365, 4294901760
        %v2566 = vsub.f32 %v365, %v2565
        %v2567 = vand.u32 %v2566, 4294901760
        %v2568 = vsub.f32 %v2566, %v2567
        %v2569 = vand.u32 %v2568, 4294901760
        %2570 = vmatprep.subr.mxu0 %v2569
        %v2571 = vand.u32 %v364, 4294901760
        %v2572 = vsub.f32 %v364, %v2571
        %v2573 = vand.u32 %v2572, 4294901760
        %v2574 = vsub.f32 %v2572, %v2573
        %v2575 = vand.u32 %v2574, 4294901760
        %2576 = vmatpush1.msra.mxu0 %v2575
        %v2577 = vand.u32 %v361, 4294901760
        %v2578 = vsub.f32 %v361, %v2577
        %v2579 = vand.u32 %v2578, 4294901760
        %v2580 = vsub.f32 %v2578, %v2579
        %v2581 = vand.u32 %v2580, 4294901760
        %2582 = vmatprep.subr.mxu0 %v2581
        %v2583 = vand.u32 %v360, 4294901760
        %v2584 = vsub.f32 %v360, %v2583
        %v2585 = vand.u32 %v2584, 4294901760
        %v2586 = vsub.f32 %v2584, %v2585
        %v2587 = vand.u32 %v2586, 4294901760
        %2588 = vmatpush1.msra.mxu0 %v2587
        %v2589 = vand.u32 %v357, 4294901760
        %v2590 = vsub.f32 %v357, %v2589
        %v2591 = vand.u32 %v2590, 4294901760
        %v2592 = vsub.f32 %v2590, %v2591
        %v2593 = vand.u32 %v2592, 4294901760
        %2594 = vmatprep.subr.mxu0 %v2593
        %v2595 = vand.u32 %v356, 4294901760
        %v2596 = vsub.f32 %v356, %v2595
        %v2597 = vand.u32 %v2596, 4294901760
        %v2598 = vsub.f32 %v2596, %v2597
        %v2599 = vand.u32 %v2598, 4294901760
        %2600 = vmatpush1.msra.mxu0 %v2599
        %v2601 = vand.u32 %v353, 4294901760
        %v2602 = vsub.f32 %v353, %v2601
        %v2603 = vand.u32 %v2602, 4294901760
        %v2604 = vsub.f32 %v2602, %v2603
        %v2605 = vand.u32 %v2604, 4294901760
        %2606 = vmatprep.subr.mxu0 %v2605
        %v2607 = vand.u32 %v352, 4294901760
        %v2608 = vsub.f32 %v352, %v2607
        %v2609 = vand.u32 %v2608, 4294901760
        %v2610 = vsub.f32 %v2608, %v2609
        %v2611 = vand.u32 %v2610, 4294901760
        %2612 = vmatpush1.msra.mxu0 %v2611
        %v2613 = vand.u32 %v349, 4294901760
        %v2614 = vsub.f32 %v349, %v2613
        %v2615 = vand.u32 %v2614, 4294901760
        %v2616 = vsub.f32 %v2614, %v2615
        %v2617 = vand.u32 %v2616, 4294901760
        %2618 = vmatprep.subr.mxu0 %v2617
        %v2619 = vand.u32 %v348, 4294901760
        %v2620 = vsub.f32 %v348, %v2619
        %v2621 = vand.u32 %v2620, 4294901760
        %v2622 = vsub.f32 %v2620, %v2621
        %v2623 = vand.u32 %v2622, 4294901760
        %2624 = vmatpush1.msra.mxu0 %v2623
        %v2625 = vand.u32 %v345, 4294901760
        %v2626 = vsub.f32 %v345, %v2625
        %v2627 = vand.u32 %v2626, 4294901760
        %v2628 = vsub.f32 %v2626, %v2627
        %v2629 = vand.u32 %v2628, 4294901760
        %2630 = vmatprep.subr.mxu0 %v2629
        %v2631 = vand.u32 %v344, 4294901760
        %v2632 = vsub.f32 %v344, %v2631
        %v2633 = vand.u32 %v2632, 4294901760
        %v2634 = vsub.f32 %v2632, %v2633
        %v2635 = vand.u32 %v2634, 4294901760
        %2636 = vmatpush1.msra.mxu0 %v2635
        %v2637 = vand.u32 %v341, 4294901760
        %v2638 = vsub.f32 %v341, %v2637
        %v2639 = vand.u32 %v2638, 4294901760
        %v2640 = vsub.f32 %v2638, %v2639
        %v2641 = vand.u32 %v2640, 4294901760
        %2642 = vmatprep.subr.mxu0 %v2641
        %v2643 = vand.u32 %v340, 4294901760
        %v2644 = vsub.f32 %v340, %v2643
        %v2645 = vand.u32 %v2644, 4294901760
        %v2646 = vsub.f32 %v2644, %v2645
        %v2647 = vand.u32 %v2646, 4294901760
        %2648 = vmatpush1.msra.mxu0 %v2647
        %v2649 = vand.u32 %v337, 4294901760
        %v2650 = vsub.f32 %v337, %v2649
        %v2651 = vand.u32 %v2650, 4294901760
        %v2652 = vsub.f32 %v2650, %v2651
        %v2653 = vand.u32 %v2652, 4294901760
        %2654 = vmatprep.subr.mxu0 %v2653
        %v2655 = vand.u32 %v336, 4294901760
        %v2656 = vsub.f32 %v336, %v2655
        %v2657 = vand.u32 %v2656, 4294901760
        %v2658 = vsub.f32 %v2656, %v2657
        %v2659 = vand.u32 %v2658, 4294901760
        %2660 = vmatpush1.msra.mxu0 %v2659
        %v2661 = vand.u32 %v333, 4294901760
        %v2662 = vsub.f32 %v333, %v2661
        %v2663 = vand.u32 %v2662, 4294901760
        %v2664 = vsub.f32 %v2662, %v2663
        %v2665 = vand.u32 %v2664, 4294901760
        %2666 = vmatprep.subr.mxu0 %v2665
        %v2667 = vand.u32 %v332, 4294901760
        %v2668 = vsub.f32 %v332, %v2667
        %v2669 = vand.u32 %v2668, 4294901760
        %v2670 = vsub.f32 %v2668, %v2669
        %v2671 = vand.u32 %v2670, 4294901760
        %2672 = vmatpush1.msra.mxu0 %v2671
        %v2673 = vand.u32 %v329, 4294901760
        %v2674 = vsub.f32 %v329, %v2673
        %v2675 = vand.u32 %v2674, 4294901760
        %v2676 = vsub.f32 %v2674, %v2675
        %v2677 = vand.u32 %v2676, 4294901760
        %2678 = vmatprep.subr.mxu0 %v2677
        %v2679 = vand.u32 %v328, 4294901760
        %v2680 = vsub.f32 %v328, %v2679
        %v2681 = vand.u32 %v2680, 4294901760
        %v2682 = vsub.f32 %v2680, %v2681
        %v2683 = vand.u32 %v2682, 4294901760
        %2684 = vmatpush1.msra.mxu0 %v2683
        %v2685 = vand.u32 %v325, 4294901760
        %v2686 = vsub.f32 %v325, %v2685
        %v2687 = vand.u32 %v2686, 4294901760
        %v2688 = vsub.f32 %v2686, %v2687
        %v2689 = vand.u32 %v2688, 4294901760
        %2690 = vmatprep.subr.mxu0 %v2689
        %v2691 = vand.u32 %v324, 4294901760
        %v2692 = vsub.f32 %v324, %v2691
        %v2693 = vand.u32 %v2692, 4294901760
        %v2694 = vsub.f32 %v2692, %v2693
        %v2695 = vand.u32 %v2694, 4294901760
        %2696 = vmatpush1.msra.mxu0 %v2695
        %v2697 = vand.u32 %v449, 4294901760
        %v2698 = vsub.f32 %v449, %v2697
        %v2699 = vand.u32 %v2698, 4294901760
        %v2700 = vsub.f32 %v2698, %v2699
        %v2701 = vand.u32 %v2700, 4294901760
        %2702 = vmatprep.subr.mxu0 %v2701
        %v2703 = vand.u32 %v448, 4294901760
        %v2704 = vsub.f32 %v448, %v2703
        %v2705 = vand.u32 %v2704, 4294901760
        %v2706 = vsub.f32 %v2704, %v2705
        %v2707 = vand.u32 %v2706, 4294901760
        %2708 = vmatpush2.msra.mxu0 %v2707
        %v2709 = vand.u32 %v445, 4294901760
        %v2710 = vsub.f32 %v445, %v2709
        %v2711 = vand.u32 %v2710, 4294901760
        %v2712 = vsub.f32 %v2710, %v2711
        %v2713 = vand.u32 %v2712, 4294901760
        %2714 = vmatprep.subr.mxu0 %v2713
        %v2715 = vand.u32 %v444, 4294901760
        %v2716 = vsub.f32 %v444, %v2715
        %v2717 = vand.u32 %v2716, 4294901760
        %v2718 = vsub.f32 %v2716, %v2717
        %v2719 = vand.u32 %v2718, 4294901760
        %2720 = vmatpush2.msra.mxu0 %v2719
        %v2721 = vand.u32 %v441, 4294901760
        %v2722 = vsub.f32 %v441, %v2721
        %v2723 = vand.u32 %v2722, 4294901760
        %v2724 = vsub.f32 %v2722, %v2723
        %v2725 = vand.u32 %v2724, 4294901760
        %2726 = vmatprep.subr.mxu0 %v2725
        %v2727 = vand.u32 %v440, 4294901760
        %v2728 = vsub.f32 %v440, %v2727
        %v2729 = vand.u32 %v2728, 4294901760
        %v2730 = vsub.f32 %v2728, %v2729
        %v2731 = vand.u32 %v2730, 4294901760
        %2732 = vmatpush2.msra.mxu0 %v2731
        %v2733 = vand.u32 %v437, 4294901760
        %v2734 = vsub.f32 %v437, %v2733
        %v2735 = vand.u32 %v2734, 4294901760
        %v2736 = vsub.f32 %v2734, %v2735
        %v2737 = vand.u32 %v2736, 4294901760
        %2738 = vmatprep.subr.mxu0 %v2737
        %v2739 = vand.u32 %v436, 4294901760
        %v2740 = vsub.f32 %v436, %v2739
        %v2741 = vand.u32 %v2740, 4294901760
        %v2742 = vsub.f32 %v2740, %v2741
        %v2743 = vand.u32 %v2742, 4294901760
        %2744 = vmatpush2.msra.mxu0 %v2743
        %v2745 = vand.u32 %v433, 4294901760
        %v2746 = vsub.f32 %v433, %v2745
        %v2747 = vand.u32 %v2746, 4294901760
        %v2748 = vsub.f32 %v2746, %v2747
        %v2749 = vand.u32 %v2748, 4294901760
        %2750 = vmatprep.subr.mxu0 %v2749
        %v2751 = vand.u32 %v432, 4294901760
        %v2752 = vsub.f32 %v432, %v2751
        %v2753 = vand.u32 %v2752, 4294901760
        %v2754 = vsub.f32 %v2752, %v2753
        %v2755 = vand.u32 %v2754, 4294901760
        %2756 = vmatpush2.msra.mxu0 %v2755
        %v2757 = vand.u32 %v429, 4294901760
        %v2758 = vsub.f32 %v429, %v2757
        %v2759 = vand.u32 %v2758, 4294901760
        %v2760 = vsub.f32 %v2758, %v2759
        %v2761 = vand.u32 %v2760, 4294901760
        %2762 = vmatprep.subr.mxu0 %v2761
        %v2763 = vand.u32 %v428, 4294901760
        %v2764 = vsub.f32 %v428, %v2763
        %v2765 = vand.u32 %v2764, 4294901760
        %v2766 = vsub.f32 %v2764, %v2765
        %v2767 = vand.u32 %v2766, 4294901760
        %2768 = vmatpush2.msra.mxu0 %v2767
        %v2769 = vand.u32 %v425, 4294901760
        %v2770 = vsub.f32 %v425, %v2769
        %v2771 = vand.u32 %v2770, 4294901760
        %v2772 = vsub.f32 %v2770, %v2771
        %v2773 = vand.u32 %v2772, 4294901760
        %2774 = vmatprep.subr.mxu0 %v2773
        %v2775 = vand.u32 %v424, 4294901760
        %v2776 = vsub.f32 %v424, %v2775
        %v2777 = vand.u32 %v2776, 4294901760
        %v2778 = vsub.f32 %v2776, %v2777
        %v2779 = vand.u32 %v2778, 4294901760
        %2780 = vmatpush2.msra.mxu0 %v2779
        %v2781 = vand.u32 %v421, 4294901760
        %v2782 = vsub.f32 %v421, %v2781
        %v2783 = vand.u32 %v2782, 4294901760
        %v2784 = vsub.f32 %v2782, %v2783
        %v2785 = vand.u32 %v2784, 4294901760
        %2786 = vmatprep.subr.mxu0 %v2785
        %v2787 = vand.u32 %v420, 4294901760
        %v2788 = vsub.f32 %v420, %v2787
        %v2789 = vand.u32 %v2788, 4294901760
        %v2790 = vsub.f32 %v2788, %v2789
        %v2791 = vand.u32 %v2790, 4294901760
        %2792 = vmatpush2.msra.mxu0 %v2791
        %v2793 = vand.u32 %v417, 4294901760
        %v2794 = vsub.f32 %v417, %v2793
        %v2795 = vand.u32 %v2794, 4294901760
        %v2796 = vsub.f32 %v2794, %v2795
        %v2797 = vand.u32 %v2796, 4294901760
        %2798 = vmatprep.subr.mxu0 %v2797
        %v2799 = vand.u32 %v416, 4294901760
        %v2800 = vsub.f32 %v416, %v2799
        %v2801 = vand.u32 %v2800, 4294901760
        %v2802 = vsub.f32 %v2800, %v2801
        %v2803 = vand.u32 %v2802, 4294901760
        %2804 = vmatpush2.msra.mxu0 %v2803
        %v2805 = vand.u32 %v413, 4294901760
        %v2806 = vsub.f32 %v413, %v2805
        %v2807 = vand.u32 %v2806, 4294901760
        %v2808 = vsub.f32 %v2806, %v2807
        %v2809 = vand.u32 %v2808, 4294901760
        %2810 = vmatprep.subr.mxu0 %v2809
        %v2811 = vand.u32 %v412, 4294901760
        %v2812 = vsub.f32 %v412, %v2811
        %v2813 = vand.u32 %v2812, 4294901760
        %v2814 = vsub.f32 %v2812, %v2813
        %v2815 = vand.u32 %v2814, 4294901760
        %2816 = vmatpush2.msra.mxu0 %v2815
        %v2817 = vand.u32 %v409, 4294901760
        %v2818 = vsub.f32 %v409, %v2817
        %v2819 = vand.u32 %v2818, 4294901760
        %v2820 = vsub.f32 %v2818, %v2819
        %v2821 = vand.u32 %v2820, 4294901760
        %2822 = vmatprep.subr.mxu0 %v2821
        %v2823 = vand.u32 %v408, 4294901760
        %v2824 = vsub.f32 %v408, %v2823
        %v2825 = vand.u32 %v2824, 4294901760
        %v2826 = vsub.f32 %v2824, %v2825
        %v2827 = vand.u32 %v2826, 4294901760
        %2828 = vmatpush2.msra.mxu0 %v2827
        %v2829 = vand.u32 %v405, 4294901760
        %v2830 = vsub.f32 %v405, %v2829
        %v2831 = vand.u32 %v2830, 4294901760
        %v2832 = vsub.f32 %v2830, %v2831
        %v2833 = vand.u32 %v2832, 4294901760
        %2834 = vmatprep.subr.mxu0 %v2833
        %v2835 = vand.u32 %v404, 4294901760
        %v2836 = vsub.f32 %v404, %v2835
        %v2837 = vand.u32 %v2836, 4294901760
        %v2838 = vsub.f32 %v2836, %v2837
        %v2839 = vand.u32 %v2838, 4294901760
        %2840 = vmatpush2.msra.mxu0 %v2839
        %v2841 = vand.u32 %v401, 4294901760
        %v2842 = vsub.f32 %v401, %v2841
        %v2843 = vand.u32 %v2842, 4294901760
        %v2844 = vsub.f32 %v2842, %v2843
        %v2845 = vand.u32 %v2844, 4294901760
        %2846 = vmatprep.subr.mxu0 %v2845
        %v2847 = vand.u32 %v400, 4294901760
        %v2848 = vsub.f32 %v400, %v2847
        %v2849 = vand.u32 %v2848, 4294901760
        %v2850 = vsub.f32 %v2848, %v2849
        %v2851 = vand.u32 %v2850, 4294901760
        %2852 = vmatpush2.msra.mxu0 %v2851
        %v2853 = vand.u32 %v397, 4294901760
        %v2854 = vsub.f32 %v397, %v2853
        %v2855 = vand.u32 %v2854, 4294901760
        %v2856 = vsub.f32 %v2854, %v2855
        %v2857 = vand.u32 %v2856, 4294901760
        %2858 = vmatprep.subr.mxu0 %v2857
        %v2859 = vand.u32 %v396, 4294901760
        %v2860 = vsub.f32 %v396, %v2859
        %v2861 = vand.u32 %v2860, 4294901760
        %v2862 = vsub.f32 %v2860, %v2861
        %v2863 = vand.u32 %v2862, 4294901760
        %2864 = vmatpush2.msra.mxu0 %v2863
        %v2865 = vand.u32 %v393, 4294901760
        %v2866 = vsub.f32 %v393, %v2865
        %v2867 = vand.u32 %v2866, 4294901760
        %v2868 = vsub.f32 %v2866, %v2867
        %v2869 = vand.u32 %v2868, 4294901760
        %2870 = vmatprep.subr.mxu0 %v2869
        %v2871 = vand.u32 %v392, 4294901760
        %v2872 = vsub.f32 %v392, %v2871
        %v2873 = vand.u32 %v2872, 4294901760
        %v2874 = vsub.f32 %v2872, %v2873
        %v2875 = vand.u32 %v2874, 4294901760
        %2876 = vmatpush2.msra.mxu0 %v2875
        %v2877 = vand.u32 %v389, 4294901760
        %v2878 = vsub.f32 %v389, %v2877
        %v2879 = vand.u32 %v2878, 4294901760
        %v2880 = vsub.f32 %v2878, %v2879
        %v2881 = vand.u32 %v2880, 4294901760
        %2882 = vmatprep.subr.mxu0 %v2881
        %v2883 = vand.u32 %v388, 4294901760
        %v2884 = vsub.f32 %v388, %v2883
        %v2885 = vand.u32 %v2884, 4294901760
        %v2886 = vsub.f32 %v2884, %v2885
        %v2887 = vand.u32 %v2886, 4294901760
        %2888 = vmatpush2.msra.mxu0 %v2887
        %v2889 = vand.u32 %v321, 4294901760
        %2890 = vmatprep.mubr.f32.mxu0 %v2889
        %v2891 = vand.u32 %v320, 4294901760
        %2892 = vmatmul.mubr.f32.gmra.mxu0 %v2891
        %v2893 = vpop.f32.mrf.mxu0
        %v2894 = vadd.f32 %v2501, %v2893
        %v2895 = vpop.f32.mrf.mxu0
        %v2896 = vadd.f32 %v2503, %v2895
        %2897 = vdwg.mxu0
        %v2898 = vand.u32 %v385, 4294901760
        %v2899 = vsub.f32 %v385, %v2898
        %2900 = vmatprep.subr.mxu0 %v2899
        %v2901 = vand.u32 %v384, 4294901760
        %v2902 = vsub.f32 %v384, %v2901
        %2903 = vmatpush1.msra.mxu0 %v2902
        %v2904 = vand.u32 %v381, 4294901760
        %v2905 = vsub.f32 %v381, %v2904
        %2906 = vmatprep.subr.mxu0 %v2905
        %v2907 = vand.u32 %v380, 4294901760
        %v2908 = vsub.f32 %v380, %v2907
        %2909 = vmatpush1.msra.mxu0 %v2908
        %v2910 = vand.u32 %v377, 4294901760
        %v2911 = vsub.f32 %v377, %v2910
        %2912 = vmatprep.subr.mxu0 %v2911
        %v2913 = vand.u32 %v376, 4294901760
        %v2914 = vsub.f32 %v376, %v2913
        %2915 = vmatpush1.msra.mxu0 %v2914
        %v2916 = vand.u32 %v373, 4294901760
        %v2917 = vsub.f32 %v373, %v2916
        %2918 = vmatprep.subr.mxu0 %v2917
        %v2919 = vand.u32 %v372, 4294901760
        %v2920 = vsub.f32 %v372, %v2919
        %2921 = vmatpush1.msra.mxu0 %v2920
        %v2922 = vand.u32 %v369, 4294901760
        %v2923 = vsub.f32 %v369, %v2922
        %2924 = vmatprep.subr.mxu0 %v2923
        %v2925 = vand.u32 %v368, 4294901760
        %v2926 = vsub.f32 %v368, %v2925
        %2927 = vmatpush1.msra.mxu0 %v2926
        %v2928 = vand.u32 %v365, 4294901760
        %v2929 = vsub.f32 %v365, %v2928
        %2930 = vmatprep.subr.mxu0 %v2929
        %v2931 = vand.u32 %v364, 4294901760
        %v2932 = vsub.f32 %v364, %v2931
        %2933 = vmatpush1.msra.mxu0 %v2932
        %v2934 = vand.u32 %v361, 4294901760
        %v2935 = vsub.f32 %v361, %v2934
        %2936 = vmatprep.subr.mxu0 %v2935
        %v2937 = vand.u32 %v360, 4294901760
        %v2938 = vsub.f32 %v360, %v2937
        %2939 = vmatpush1.msra.mxu0 %v2938
        %v2940 = vand.u32 %v357, 4294901760
        %v2941 = vsub.f32 %v357, %v2940
        %2942 = vmatprep.subr.mxu0 %v2941
        %v2943 = vand.u32 %v356, 4294901760
        %v2944 = vsub.f32 %v356, %v2943
        %2945 = vmatpush1.msra.mxu0 %v2944
        %v2946 = vand.u32 %v353, 4294901760
        %v2947 = vsub.f32 %v353, %v2946
        %2948 = vmatprep.subr.mxu0 %v2947
        %v2949 = vand.u32 %v352, 4294901760
        %v2950 = vsub.f32 %v352, %v2949
        %2951 = vmatpush1.msra.mxu0 %v2950
        %v2952 = vand.u32 %v349, 4294901760
        %v2953 = vsub.f32 %v349, %v2952
        %2954 = vmatprep.subr.mxu0 %v2953
        %v2955 = vand.u32 %v348, 4294901760
        %v2956 = vsub.f32 %v348, %v2955
        %2957 = vmatpush1.msra.mxu0 %v2956
        %v2958 = vand.u32 %v345, 4294901760
        %v2959 = vsub.f32 %v345, %v2958
        %2960 = vmatprep.subr.mxu0 %v2959
        %v2961 = vand.u32 %v344, 4294901760
        %v2962 = vsub.f32 %v344, %v2961
        %2963 = vmatpush1.msra.mxu0 %v2962
        %v2964 = vand.u32 %v341, 4294901760
        %v2965 = vsub.f32 %v341, %v2964
        %2966 = vmatprep.subr.mxu0 %v2965
        %v2967 = vand.u32 %v340, 4294901760
        %v2968 = vsub.f32 %v340, %v2967
        %2969 = vmatpush1.msra.mxu0 %v2968
        %v2970 = vand.u32 %v337, 4294901760
        %v2971 = vsub.f32 %v337, %v2970
        %2972 = vmatprep.subr.mxu0 %v2971
        %v2973 = vand.u32 %v336, 4294901760
        %v2974 = vsub.f32 %v336, %v2973
        %2975 = vmatpush1.msra.mxu0 %v2974
        %v2976 = vand.u32 %v333, 4294901760
        %v2977 = vsub.f32 %v333, %v2976
        %2978 = vmatprep.subr.mxu0 %v2977
        %v2979 = vand.u32 %v332, 4294901760
        %v2980 = vsub.f32 %v332, %v2979
        %2981 = vmatpush1.msra.mxu0 %v2980
        %v2982 = vand.u32 %v329, 4294901760
        %v2983 = vsub.f32 %v329, %v2982
        %2984 = vmatprep.subr.mxu0 %v2983
        %v2985 = vand.u32 %v328, 4294901760
        %v2986 = vsub.f32 %v328, %v2985
        %2987 = vmatpush1.msra.mxu0 %v2986
        %v2988 = vand.u32 %v325, 4294901760
        %v2989 = vsub.f32 %v325, %v2988
        %2990 = vmatprep.subr.mxu0 %v2989
        %v2991 = vand.u32 %v324, 4294901760
        %v2992 = vsub.f32 %v324, %v2991
        %2993 = vmatpush1.msra.mxu0 %v2992
        %v2994 = vand.u32 %v449, 4294901760
        %v2995 = vsub.f32 %v449, %v2994
        %2996 = vmatprep.subr.mxu0 %v2995
        %v2997 = vand.u32 %v448, 4294901760
        %v2998 = vsub.f32 %v448, %v2997
        %2999 = vmatpush2.msra.mxu0 %v2998
        %v3000 = vand.u32 %v445, 4294901760
        %v3001 = vsub.f32 %v445, %v3000
        %3002 = vmatprep.subr.mxu0 %v3001
        %v3003 = vand.u32 %v444, 4294901760
        %v3004 = vsub.f32 %v444, %v3003
        %3005 = vmatpush2.msra.mxu0 %v3004
        %v3006 = vand.u32 %v441, 4294901760
        %v3007 = vsub.f32 %v441, %v3006
        %3008 = vmatprep.subr.mxu0 %v3007
        %v3009 = vand.u32 %v440, 4294901760
        %v3010 = vsub.f32 %v440, %v3009
        %3011 = vmatpush2.msra.mxu0 %v3010
        %v3012 = vand.u32 %v437, 4294901760
        %v3013 = vsub.f32 %v437, %v3012
        %3014 = vmatprep.subr.mxu0 %v3013
        %v3015 = vand.u32 %v436, 4294901760
        %v3016 = vsub.f32 %v436, %v3015
        %3017 = vmatpush2.msra.mxu0 %v3016
        %v3018 = vand.u32 %v433, 4294901760
        %v3019 = vsub.f32 %v433, %v3018
        %3020 = vmatprep.subr.mxu0 %v3019
        %v3021 = vand.u32 %v432, 4294901760
        %v3022 = vsub.f32 %v432, %v3021
        %3023 = vmatpush2.msra.mxu0 %v3022
        %v3024 = vand.u32 %v429, 4294901760
        %v3025 = vsub.f32 %v429, %v3024
        %3026 = vmatprep.subr.mxu0 %v3025
        %v3027 = vand.u32 %v428, 4294901760
        %v3028 = vsub.f32 %v428, %v3027
        %3029 = vmatpush2.msra.mxu0 %v3028
        %v3030 = vand.u32 %v425, 4294901760
        %v3031 = vsub.f32 %v425, %v3030
        %3032 = vmatprep.subr.mxu0 %v3031
        %v3033 = vand.u32 %v424, 4294901760
        %v3034 = vsub.f32 %v424, %v3033
        %3035 = vmatpush2.msra.mxu0 %v3034
        %v3036 = vand.u32 %v421, 4294901760
        %v3037 = vsub.f32 %v421, %v3036
        %3038 = vmatprep.subr.mxu0 %v3037
        %v3039 = vand.u32 %v420, 4294901760
        %v3040 = vsub.f32 %v420, %v3039
        %3041 = vmatpush2.msra.mxu0 %v3040
        %v3042 = vand.u32 %v417, 4294901760
        %v3043 = vsub.f32 %v417, %v3042
        %3044 = vmatprep.subr.mxu0 %v3043
        %v3045 = vand.u32 %v416, 4294901760
        %v3046 = vsub.f32 %v416, %v3045
        %3047 = vmatpush2.msra.mxu0 %v3046
        %v3048 = vand.u32 %v413, 4294901760
        %v3049 = vsub.f32 %v413, %v3048
        %3050 = vmatprep.subr.mxu0 %v3049
        %v3051 = vand.u32 %v412, 4294901760
        %v3052 = vsub.f32 %v412, %v3051
        %3053 = vmatpush2.msra.mxu0 %v3052
        %v3054 = vand.u32 %v409, 4294901760
        %v3055 = vsub.f32 %v409, %v3054
        %3056 = vmatprep.subr.mxu0 %v3055
        %v3057 = vand.u32 %v408, 4294901760
        %v3058 = vsub.f32 %v408, %v3057
        %3059 = vmatpush2.msra.mxu0 %v3058
        %v3060 = vand.u32 %v405, 4294901760
        %v3061 = vsub.f32 %v405, %v3060
        %3062 = vmatprep.subr.mxu0 %v3061
        %v3063 = vand.u32 %v404, 4294901760
        %v3064 = vsub.f32 %v404, %v3063
        %3065 = vmatpush2.msra.mxu0 %v3064
        %v3066 = vand.u32 %v401, 4294901760
        %v3067 = vsub.f32 %v401, %v3066
        %3068 = vmatprep.subr.mxu0 %v3067
        %v3069 = vand.u32 %v400, 4294901760
        %v3070 = vsub.f32 %v400, %v3069
        %3071 = vmatpush2.msra.mxu0 %v3070
        %v3072 = vand.u32 %v397, 4294901760
        %v3073 = vsub.f32 %v397, %v3072
        %3074 = vmatprep.subr.mxu0 %v3073
        %v3075 = vand.u32 %v396, 4294901760
        %v3076 = vsub.f32 %v396, %v3075
        %3077 = vmatpush2.msra.mxu0 %v3076
        %v3078 = vand.u32 %v393, 4294901760
        %v3079 = vsub.f32 %v393, %v3078
        %3080 = vmatprep.subr.mxu0 %v3079
        %v3081 = vand.u32 %v392, 4294901760
        %v3082 = vsub.f32 %v392, %v3081
        %3083 = vmatpush2.msra.mxu0 %v3082
        %v3084 = vand.u32 %v389, 4294901760
        %v3085 = vsub.f32 %v389, %v3084
        %3086 = vmatprep.subr.mxu0 %v3085
        %v3087 = vand.u32 %v388, 4294901760
        %v3088 = vsub.f32 %v388, %v3087
        %3089 = vmatpush2.msra.mxu0 %v3088
        %v3090 = vand.u32 %v321, 4294901760
        %v3091 = vsub.f32 %v321, %v3090
        %3092 = vmatprep.mubr.f32.mxu0 %v3091
        %v3093 = vand.u32 %v320, 4294901760
        %v3094 = vsub.f32 %v320, %v3093
        %3095 = vmatmul.mubr.f32.gmra.mxu0 %v3094
        %v3096 = vpop.f32.mrf.mxu0
        %v3097 = vadd.f32 %v2894, %v3096
        %v3098 = vpop.f32.mrf.mxu0
        %v3099 = vadd.f32 %v2896, %v3098
        %3100 = vdwg.mxu0
        %v3101 = vand.u32 %v385, 4294901760
        %3102 = vmatprep.subr.mxu0 %v3101
        %v3103 = vand.u32 %v384, 4294901760
        %3104 = vmatpush1.msra.mxu0 %v3103
        %v3105 = vand.u32 %v381, 4294901760
        %3106 = vmatprep.subr.mxu0 %v3105
        %v3107 = vand.u32 %v380, 4294901760
        %3108 = vmatpush1.msra.mxu0 %v3107
        %v3109 = vand.u32 %v377, 4294901760
        %3110 = vmatprep.subr.mxu0 %v3109
        %v3111 = vand.u32 %v376, 4294901760
        %3112 = vmatpush1.msra.mxu0 %v3111
        %v3113 = vand.u32 %v373, 4294901760
        %3114 = vmatprep.subr.mxu0 %v3113
        %v3115 = vand.u32 %v372, 4294901760
        %3116 = vmatpush1.msra.mxu0 %v3115
        %v3117 = vand.u32 %v369, 4294901760
        %3118 = vmatprep.subr.mxu0 %v3117
        %v3119 = vand.u32 %v368, 4294901760
        %3120 = vmatpush1.msra.mxu0 %v3119
        %v3121 = vand.u32 %v365, 4294901760
        %3122 = vmatprep.subr.mxu0 %v3121
        %v3123 = vand.u32 %v364, 4294901760
        %3124 = vmatpush1.msra.mxu0 %v3123
        %v3125 = vand.u32 %v361, 4294901760
        %3126 = vmatprep.subr.mxu0 %v3125
        %v3127 = vand.u32 %v360, 4294901760
        %3128 = vmatpush1.msra.mxu0 %v3127
        %v3129 = vand.u32 %v357, 4294901760
        %3130 = vmatprep.subr.mxu0 %v3129
        %v3131 = vand.u32 %v356, 4294901760
        %3132 = vmatpush1.msra.mxu0 %v3131
        %v3133 = vand.u32 %v353, 4294901760
        %3134 = vmatprep.subr.mxu0 %v3133
        %v3135 = vand.u32 %v352, 4294901760
        %3136 = vmatpush1.msra.mxu0 %v3135
        %v3137 = vand.u32 %v349, 4294901760
        %3138 = vmatprep.subr.mxu0 %v3137
        %v3139 = vand.u32 %v348, 4294901760
        %3140 = vmatpush1.msra.mxu0 %v3139
        %v3141 = vand.u32 %v345, 4294901760
        %3142 = vmatprep.subr.mxu0 %v3141
        %v3143 = vand.u32 %v344, 4294901760
        %3144 = vmatpush1.msra.mxu0 %v3143
        %v3145 = vand.u32 %v341, 4294901760
        %3146 = vmatprep.subr.mxu0 %v3145
        %v3147 = vand.u32 %v340, 4294901760
        %3148 = vmatpush1.msra.mxu0 %v3147
        %v3149 = vand.u32 %v337, 4294901760
        %3150 = vmatprep.subr.mxu0 %v3149
        %v3151 = vand.u32 %v336, 4294901760
        %3152 = vmatpush1.msra.mxu0 %v3151
        %v3153 = vand.u32 %v333, 4294901760
        %3154 = vmatprep.subr.mxu0 %v3153
        %v3155 = vand.u32 %v332, 4294901760
        %3156 = vmatpush1.msra.mxu0 %v3155
        %v3157 = vand.u32 %v329, 4294901760
        %3158 = vmatprep.subr.mxu0 %v3157
        %v3159 = vand.u32 %v328, 4294901760
        %3160 = vmatpush1.msra.mxu0 %v3159
        %v3161 = vand.u32 %v325, 4294901760
        %3162 = vmatprep.subr.mxu0 %v3161
        %v3163 = vand.u32 %v324, 4294901760
        %3164 = vmatpush1.msra.mxu0 %v3163
        %v3165 = vand.u32 %v449, 4294901760
        %3166 = vmatprep.subr.mxu0 %v3165
        %v3167 = vand.u32 %v448, 4294901760
        %3168 = vmatpush2.msra.mxu0 %v3167
        %v3169 = vand.u32 %v445, 4294901760
        %3170 = vmatprep.subr.mxu0 %v3169
        %v3171 = vand.u32 %v444, 4294901760
        %3172 = vmatpush2.msra.mxu0 %v3171
        %v3173 = vand.u32 %v441, 4294901760
        %3174 = vmatprep.subr.mxu0 %v3173
        %v3175 = vand.u32 %v440, 4294901760
        %3176 = vmatpush2.msra.mxu0 %v3175
        %v3177 = vand.u32 %v437, 4294901760
        %3178 = vmatprep.subr.mxu0 %v3177
        %v3179 = vand.u32 %v436, 4294901760
        %3180 = vmatpush2.msra.mxu0 %v3179
        %v3181 = vand.u32 %v433, 4294901760
        %3182 = vmatprep.subr.mxu0 %v3181
        %v3183 = vand.u32 %v432, 4294901760
        %3184 = vmatpush2.msra.mxu0 %v3183
        %v3185 = vand.u32 %v429, 4294901760
        %3186 = vmatprep.subr.mxu0 %v3185
        %v3187 = vand.u32 %v428, 4294901760
        %3188 = vmatpush2.msra.mxu0 %v3187
        %v3189 = vand.u32 %v425, 4294901760
        %3190 = vmatprep.subr.mxu0 %v3189
        %v3191 = vand.u32 %v424, 4294901760
        %3192 = vmatpush2.msra.mxu0 %v3191
        %v3193 = vand.u32 %v421, 4294901760
        %3194 = vmatprep.subr.mxu0 %v3193
        %v3195 = vand.u32 %v420, 4294901760
        %3196 = vmatpush2.msra.mxu0 %v3195
        %v3197 = vand.u32 %v417, 4294901760
        %3198 = vmatprep.subr.mxu0 %v3197
        %v3199 = vand.u32 %v416, 4294901760
        %3200 = vmatpush2.msra.mxu0 %v3199
        %v3201 = vand.u32 %v413, 4294901760
        %3202 = vmatprep.subr.mxu0 %v3201
        %v3203 = vand.u32 %v412, 4294901760
        %3204 = vmatpush2.msra.mxu0 %v3203
        %v3205 = vand.u32 %v409, 4294901760
        %3206 = vmatprep.subr.mxu0 %v3205
        %v3207 = vand.u32 %v408, 4294901760
        %3208 = vmatpush2.msra.mxu0 %v3207
        %v3209 = vand.u32 %v405, 4294901760
        %3210 = vmatprep.subr.mxu0 %v3209
        %v3211 = vand.u32 %v404, 4294901760
        %3212 = vmatpush2.msra.mxu0 %v3211
        %v3213 = vand.u32 %v401, 4294901760
        %3214 = vmatprep.subr.mxu0 %v3213
        %v3215 = vand.u32 %v400, 4294901760
        %3216 = vmatpush2.msra.mxu0 %v3215
        %v3217 = vand.u32 %v397, 4294901760
        %3218 = vmatprep.subr.mxu0 %v3217
        %v3219 = vand.u32 %v396, 4294901760
        %3220 = vmatpush2.msra.mxu0 %v3219
        %v3221 = vand.u32 %v393, 4294901760
        %3222 = vmatprep.subr.mxu0 %v3221
        %v3223 = vand.u32 %v392, 4294901760
        %3224 = vmatpush2.msra.mxu0 %v3223
        %v3225 = vand.u32 %v389, 4294901760
        %3226 = vmatprep.subr.mxu0 %v3225
        %v3227 = vand.u32 %v388, 4294901760
        %3228 = vmatpush2.msra.mxu0 %v3227
        %v3229 = vand.u32 %v321, 4294901760
        %v3230 = vsub.f32 %v321, %v3229
        %v3231 = vand.u32 %v3230, 4294901760
        %3232 = vmatprep.mubr.f32.mxu0 %v3231
        %v3233 = vand.u32 %v320, 4294901760
        %v3234 = vsub.f32 %v320, %v3233
        %v3235 = vand.u32 %v3234, 4294901760
        %3236 = vmatmul.mubr.f32.gmra.mxu0 %v3235
        %v3237 = vpop.f32.mrf.mxu0
        %v3238 = vadd.f32 %v3097, %v3237
        %v3239 = vpop.f32.mrf.mxu0
        %v3240 = vadd.f32 %v3099, %v3239
        %3241 = vdwg.mxu0
        %v3242 = vand.u32 %v385, 4294901760
        %v3243 = vsub.f32 %v385, %v3242
        %v3244 = vand.u32 %v3243, 4294901760
        %3245 = vmatprep.subr.mxu0 %v3244
        %v3246 = vand.u32 %v384, 4294901760
        %v3247 = vsub.f32 %v384, %v3246
        %v3248 = vand.u32 %v3247, 4294901760
        %3249 = vmatpush1.msra.mxu0 %v3248
        %v3250 = vand.u32 %v381, 4294901760
        %v3251 = vsub.f32 %v381, %v3250
        %v3252 = vand.u32 %v3251, 4294901760
        %3253 = vmatprep.subr.mxu0 %v3252
        %v3254 = vand.u32 %v380, 4294901760
        %v3255 = vsub.f32 %v380, %v3254
        %v3256 = vand.u32 %v3255, 4294901760
        %3257 = vmatpush1.msra.mxu0 %v3256
        %v3258 = vand.u32 %v377, 4294901760
        %v3259 = vsub.f32 %v377, %v3258
        %v3260 = vand.u32 %v3259, 4294901760
        %3261 = vmatprep.subr.mxu0 %v3260
        %v3262 = vand.u32 %v376, 4294901760
        %v3263 = vsub.f32 %v376, %v3262
        %v3264 = vand.u32 %v3263, 4294901760
        %3265 = vmatpush1.msra.mxu0 %v3264
        %v3266 = vand.u32 %v373, 4294901760
        %v3267 = vsub.f32 %v373, %v3266
        %v3268 = vand.u32 %v3267, 4294901760
        %3269 = vmatprep.subr.mxu0 %v3268
        %v3270 = vand.u32 %v372, 4294901760
        %v3271 = vsub.f32 %v372, %v3270
        %v3272 = vand.u32 %v3271, 4294901760
        %3273 = vmatpush1.msra.mxu0 %v3272
        %v3274 = vand.u32 %v369, 4294901760
        %v3275 = vsub.f32 %v369, %v3274
        %v3276 = vand.u32 %v3275, 4294901760
        %3277 = vmatprep.subr.mxu0 %v3276
        %v3278 = vand.u32 %v368, 4294901760
        %v3279 = vsub.f32 %v368, %v3278
        %v3280 = vand.u32 %v3279, 4294901760
        %3281 = vmatpush1.msra.mxu0 %v3280
        %v3282 = vand.u32 %v365, 4294901760
        %v3283 = vsub.f32 %v365, %v3282
        %v3284 = vand.u32 %v3283, 4294901760
        %3285 = vmatprep.subr.mxu0 %v3284
        %v3286 = vand.u32 %v364, 4294901760
        %v3287 = vsub.f32 %v364, %v3286
        %v3288 = vand.u32 %v3287, 4294901760
        %3289 = vmatpush1.msra.mxu0 %v3288
        %v3290 = vand.u32 %v361, 4294901760
        %v3291 = vsub.f32 %v361, %v3290
        %v3292 = vand.u32 %v3291, 4294901760
        %3293 = vmatprep.subr.mxu0 %v3292
        %v3294 = vand.u32 %v360, 4294901760
        %v3295 = vsub.f32 %v360, %v3294
        %v3296 = vand.u32 %v3295, 4294901760
        %3297 = vmatpush1.msra.mxu0 %v3296
        %v3298 = vand.u32 %v357, 4294901760
        %v3299 = vsub.f32 %v357, %v3298
        %v3300 = vand.u32 %v3299, 4294901760
        %3301 = vmatprep.subr.mxu0 %v3300
        %v3302 = vand.u32 %v356, 4294901760
        %v3303 = vsub.f32 %v356, %v3302
        %v3304 = vand.u32 %v3303, 4294901760
        %3305 = vmatpush1.msra.mxu0 %v3304
        %v3306 = vand.u32 %v353, 4294901760
        %v3307 = vsub.f32 %v353, %v3306
        %v3308 = vand.u32 %v3307, 4294901760
        %3309 = vmatprep.subr.mxu0 %v3308
        %v3310 = vand.u32 %v352, 4294901760
        %v3311 = vsub.f32 %v352, %v3310
        %v3312 = vand.u32 %v3311, 4294901760
        %3313 = vmatpush1.msra.mxu0 %v3312
        %v3314 = vand.u32 %v349, 4294901760
        %v3315 = vsub.f32 %v349, %v3314
        %v3316 = vand.u32 %v3315, 4294901760
        %3317 = vmatprep.subr.mxu0 %v3316
        %v3318 = vand.u32 %v348, 4294901760
        %v3319 = vsub.f32 %v348, %v3318
        %v3320 = vand.u32 %v3319, 4294901760
        %3321 = vmatpush1.msra.mxu0 %v3320
        %v3322 = vand.u32 %v345, 4294901760
        %v3323 = vsub.f32 %v345, %v3322
        %v3324 = vand.u32 %v3323, 4294901760
        %3325 = vmatprep.subr.mxu0 %v3324
        %v3326 = vand.u32 %v344, 4294901760
        %v3327 = vsub.f32 %v344, %v3326
        %v3328 = vand.u32 %v3327, 4294901760
        %3329 = vmatpush1.msra.mxu0 %v3328
        %v3330 = vand.u32 %v341, 4294901760
        %v3331 = vsub.f32 %v341, %v3330
        %v3332 = vand.u32 %v3331, 4294901760
        %3333 = vmatprep.subr.mxu0 %v3332
        %v3334 = vand.u32 %v340, 4294901760
        %v3335 = vsub.f32 %v340, %v3334
        %v3336 = vand.u32 %v3335, 4294901760
        %3337 = vmatpush1.msra.mxu0 %v3336
        %v3338 = vand.u32 %v337, 4294901760
        %v3339 = vsub.f32 %v337, %v3338
        %v3340 = vand.u32 %v3339, 4294901760
        %3341 = vmatprep.subr.mxu0 %v3340
        %v3342 = vand.u32 %v336, 4294901760
        %v3343 = vsub.f32 %v336, %v3342
        %v3344 = vand.u32 %v3343, 4294901760
        %3345 = vmatpush1.msra.mxu0 %v3344
        %v3346 = vand.u32 %v333, 4294901760
        %v3347 = vsub.f32 %v333, %v3346
        %v3348 = vand.u32 %v3347, 4294901760
        %3349 = vmatprep.subr.mxu0 %v3348
        %v3350 = vand.u32 %v332, 4294901760
        %v3351 = vsub.f32 %v332, %v3350
        %v3352 = vand.u32 %v3351, 4294901760
        %3353 = vmatpush1.msra.mxu0 %v3352
        %v3354 = vand.u32 %v329, 4294901760
        %v3355 = vsub.f32 %v329, %v3354
        %v3356 = vand.u32 %v3355, 4294901760
        %3357 = vmatprep.subr.mxu0 %v3356
        %v3358 = vand.u32 %v328, 4294901760
        %v3359 = vsub.f32 %v328, %v3358
        %v3360 = vand.u32 %v3359, 4294901760
        %3361 = vmatpush1.msra.mxu0 %v3360
        %v3362 = vand.u32 %v325, 4294901760
        %v3363 = vsub.f32 %v325, %v3362
        %v3364 = vand.u32 %v3363, 4294901760
        %3365 = vmatprep.subr.mxu0 %v3364
        %v3366 = vand.u32 %v324, 4294901760
        %v3367 = vsub.f32 %v324, %v3366
        %v3368 = vand.u32 %v3367, 4294901760
        %3369 = vmatpush1.msra.mxu0 %v3368
        %v3370 = vand.u32 %v449, 4294901760
        %v3371 = vsub.f32 %v449, %v3370
        %v3372 = vand.u32 %v3371, 4294901760
        %3373 = vmatprep.subr.mxu0 %v3372
        %v3374 = vand.u32 %v448, 4294901760
        %v3375 = vsub.f32 %v448, %v3374
        %v3376 = vand.u32 %v3375, 4294901760
        %3377 = vmatpush2.msra.mxu0 %v3376
        %v3378 = vand.u32 %v445, 4294901760
        %v3379 = vsub.f32 %v445, %v3378
        %v3380 = vand.u32 %v3379, 4294901760
        %3381 = vmatprep.subr.mxu0 %v3380
        %v3382 = vand.u32 %v444, 4294901760
        %v3383 = vsub.f32 %v444, %v3382
        %v3384 = vand.u32 %v3383, 4294901760
        %3385 = vmatpush2.msra.mxu0 %v3384
        %v3386 = vand.u32 %v441, 4294901760
        %v3387 = vsub.f32 %v441, %v3386
        %v3388 = vand.u32 %v3387, 4294901760
        %3389 = vmatprep.subr.mxu0 %v3388
        %v3390 = vand.u32 %v440, 4294901760
        %v3391 = vsub.f32 %v440, %v3390
        %v3392 = vand.u32 %v3391, 4294901760
        %3393 = vmatpush2.msra.mxu0 %v3392
        %v3394 = vand.u32 %v437, 4294901760
        %v3395 = vsub.f32 %v437, %v3394
        %v3396 = vand.u32 %v3395, 4294901760
        %3397 = vmatprep.subr.mxu0 %v3396
        %v3398 = vand.u32 %v436, 4294901760
        %v3399 = vsub.f32 %v436, %v3398
        %v3400 = vand.u32 %v3399, 4294901760
        %3401 = vmatpush2.msra.mxu0 %v3400
        %v3402 = vand.u32 %v433, 4294901760
        %v3403 = vsub.f32 %v433, %v3402
        %v3404 = vand.u32 %v3403, 4294901760
        %3405 = vmatprep.subr.mxu0 %v3404
        %v3406 = vand.u32 %v432, 4294901760
        %v3407 = vsub.f32 %v432, %v3406
        %v3408 = vand.u32 %v3407, 4294901760
        %3409 = vmatpush2.msra.mxu0 %v3408
        %v3410 = vand.u32 %v429, 4294901760
        %v3411 = vsub.f32 %v429, %v3410
        %v3412 = vand.u32 %v3411, 4294901760
        %3413 = vmatprep.subr.mxu0 %v3412
        %v3414 = vand.u32 %v428, 4294901760
        %v3415 = vsub.f32 %v428, %v3414
        %v3416 = vand.u32 %v3415, 4294901760
        %3417 = vmatpush2.msra.mxu0 %v3416
        %v3418 = vand.u32 %v425, 4294901760
        %v3419 = vsub.f32 %v425, %v3418
        %v3420 = vand.u32 %v3419, 4294901760
        %3421 = vmatprep.subr.mxu0 %v3420
        %v3422 = vand.u32 %v424, 4294901760
        %v3423 = vsub.f32 %v424, %v3422
        %v3424 = vand.u32 %v3423, 4294901760
        %3425 = vmatpush2.msra.mxu0 %v3424
        %v3426 = vand.u32 %v421, 4294901760
        %v3427 = vsub.f32 %v421, %v3426
        %v3428 = vand.u32 %v3427, 4294901760
        %3429 = vmatprep.subr.mxu0 %v3428
        %v3430 = vand.u32 %v420, 4294901760
        %v3431 = vsub.f32 %v420, %v3430
        %v3432 = vand.u32 %v3431, 4294901760
        %3433 = vmatpush2.msra.mxu0 %v3432
        %v3434 = vand.u32 %v417, 4294901760
        %v3435 = vsub.f32 %v417, %v3434
        %v3436 = vand.u32 %v3435, 4294901760
        %3437 = vmatprep.subr.mxu0 %v3436
        %v3438 = vand.u32 %v416, 4294901760
        %v3439 = vsub.f32 %v416, %v3438
        %v3440 = vand.u32 %v3439, 4294901760
        %3441 = vmatpush2.msra.mxu0 %v3440
        %v3442 = vand.u32 %v413, 4294901760
        %v3443 = vsub.f32 %v413, %v3442
        %v3444 = vand.u32 %v3443, 4294901760
        %3445 = vmatprep.subr.mxu0 %v3444
        %v3446 = vand.u32 %v412, 4294901760
        %v3447 = vsub.f32 %v412, %v3446
        %v3448 = vand.u32 %v3447, 4294901760
        %3449 = vmatpush2.msra.mxu0 %v3448
        %v3450 = vand.u32 %v409, 4294901760
        %v3451 = vsub.f32 %v409, %v3450
        %v3452 = vand.u32 %v3451, 4294901760
        %3453 = vmatprep.subr.mxu0 %v3452
        %v3454 = vand.u32 %v408, 4294901760
        %v3455 = vsub.f32 %v408, %v3454
        %v3456 = vand.u32 %v3455, 4294901760
        %3457 = vmatpush2.msra.mxu0 %v3456
        %v3458 = vand.u32 %v405, 4294901760
        %v3459 = vsub.f32 %v405, %v3458
        %v3460 = vand.u32 %v3459, 4294901760
        %3461 = vmatprep.subr.mxu0 %v3460
        %v3462 = vand.u32 %v404, 4294901760
        %v3463 = vsub.f32 %v404, %v3462
        %v3464 = vand.u32 %v3463, 4294901760
        %3465 = vmatpush2.msra.mxu0 %v3464
        %v3466 = vand.u32 %v401, 4294901760
        %v3467 = vsub.f32 %v401, %v3466
        %v3468 = vand.u32 %v3467, 4294901760
        %3469 = vmatprep.subr.mxu0 %v3468
        %v3470 = vand.u32 %v400, 4294901760
        %v3471 = vsub.f32 %v400, %v3470
        %v3472 = vand.u32 %v3471, 4294901760
        %3473 = vmatpush2.msra.mxu0 %v3472
        %v3474 = vand.u32 %v397, 4294901760
        %v3475 = vsub.f32 %v397, %v3474
        %v3476 = vand.u32 %v3475, 4294901760
        %3477 = vmatprep.subr.mxu0 %v3476
        %v3478 = vand.u32 %v396, 4294901760
        %v3479 = vsub.f32 %v396, %v3478
        %v3480 = vand.u32 %v3479, 4294901760
        %3481 = vmatpush2.msra.mxu0 %v3480
        %v3482 = vand.u32 %v393, 4294901760
        %v3483 = vsub.f32 %v393, %v3482
        %v3484 = vand.u32 %v3483, 4294901760
        %3485 = vmatprep.subr.mxu0 %v3484
        %v3486 = vand.u32 %v392, 4294901760
        %v3487 = vsub.f32 %v392, %v3486
        %v3488 = vand.u32 %v3487, 4294901760
        %3489 = vmatpush2.msra.mxu0 %v3488
        %v3490 = vand.u32 %v389, 4294901760
        %v3491 = vsub.f32 %v389, %v3490
        %v3492 = vand.u32 %v3491, 4294901760
        %3493 = vmatprep.subr.mxu0 %v3492
        %v3494 = vand.u32 %v388, 4294901760
        %v3495 = vsub.f32 %v388, %v3494
        %v3496 = vand.u32 %v3495, 4294901760
        %3497 = vmatpush2.msra.mxu0 %v3496
        %v3498 = vand.u32 %v321, 4294901760
        %3499 = vmatprep.mubr.f32.mxu0 %v3498
        %v3500 = vand.u32 %v320, 4294901760
        %3501 = vmatmul.mubr.f32.gmra.mxu0 %v3500
        %v3502 = vpop.f32.mrf.mxu0
        %v3503 = vadd.f32 %v3238, %v3502
        %v3504 = vpop.f32.mrf.mxu0
        %v3505 = vadd.f32 %v3240, %v3504
        %3506 = vdwg.mxu0
        %v3507 = vand.u32 %v385, 4294901760
        %3508 = vmatprep.subr.mxu0 %v3507
        %v3509 = vand.u32 %v384, 4294901760
        %3510 = vmatpush1.msra.mxu0 %v3509
        %v3511 = vand.u32 %v381, 4294901760
        %3512 = vmatprep.subr.mxu0 %v3511
        %v3513 = vand.u32 %v380, 4294901760
        %3514 = vmatpush1.msra.mxu0 %v3513
        %v3515 = vand.u32 %v377, 4294901760
        %3516 = vmatprep.subr.mxu0 %v3515
        %v3517 = vand.u32 %v376, 4294901760
        %3518 = vmatpush1.msra.mxu0 %v3517
        %v3519 = vand.u32 %v373, 4294901760
        %3520 = vmatprep.subr.mxu0 %v3519
        %v3521 = vand.u32 %v372, 4294901760
        %3522 = vmatpush1.msra.mxu0 %v3521
        %v3523 = vand.u32 %v369, 4294901760
        %3524 = vmatprep.subr.mxu0 %v3523
        %v3525 = vand.u32 %v368, 4294901760
        %3526 = vmatpush1.msra.mxu0 %v3525
        %v3527 = vand.u32 %v365, 4294901760
        %3528 = vmatprep.subr.mxu0 %v3527
        %v3529 = vand.u32 %v364, 4294901760
        %3530 = vmatpush1.msra.mxu0 %v3529
        %v3531 = vand.u32 %v361, 4294901760
        %3532 = vmatprep.subr.mxu0 %v3531
        %v3533 = vand.u32 %v360, 4294901760
        %3534 = vmatpush1.msra.mxu0 %v3533
        %v3535 = vand.u32 %v357, 4294901760
        %3536 = vmatprep.subr.mxu0 %v3535
        %v3537 = vand.u32 %v356, 4294901760
        %3538 = vmatpush1.msra.mxu0 %v3537
        %v3539 = vand.u32 %v353, 4294901760
        %3540 = vmatprep.subr.mxu0 %v3539
        %v3541 = vand.u32 %v352, 4294901760
        %3542 = vmatpush1.msra.mxu0 %v3541
        %v3543 = vand.u32 %v349, 4294901760
        %3544 = vmatprep.subr.mxu0 %v3543
        %v3545 = vand.u32 %v348, 4294901760
        %3546 = vmatpush1.msra.mxu0 %v3545
        %v3547 = vand.u32 %v345, 4294901760
        %3548 = vmatprep.subr.mxu0 %v3547
        %v3549 = vand.u32 %v344, 4294901760
        %3550 = vmatpush1.msra.mxu0 %v3549
        %v3551 = vand.u32 %v341, 4294901760
        %3552 = vmatprep.subr.mxu0 %v3551
        %v3553 = vand.u32 %v340, 4294901760
        %3554 = vmatpush1.msra.mxu0 %v3553
        %v3555 = vand.u32 %v337, 4294901760
        %3556 = vmatprep.subr.mxu0 %v3555
        %v3557 = vand.u32 %v336, 4294901760
        %3558 = vmatpush1.msra.mxu0 %v3557
        %v3559 = vand.u32 %v333, 4294901760
        %3560 = vmatprep.subr.mxu0 %v3559
        %v3561 = vand.u32 %v332, 4294901760
        %3562 = vmatpush1.msra.mxu0 %v3561
        %v3563 = vand.u32 %v329, 4294901760
        %3564 = vmatprep.subr.mxu0 %v3563
        %v3565 = vand.u32 %v328, 4294901760
        %3566 = vmatpush1.msra.mxu0 %v3565
        %v3567 = vand.u32 %v325, 4294901760
        %3568 = vmatprep.subr.mxu0 %v3567
        %v3569 = vand.u32 %v324, 4294901760
        %3570 = vmatpush1.msra.mxu0 %v3569
        %v3571 = vand.u32 %v449, 4294901760
        %3572 = vmatprep.subr.mxu0 %v3571
        %v3573 = vand.u32 %v448, 4294901760
        %3574 = vmatpush2.msra.mxu0 %v3573
        %v3575 = vand.u32 %v445, 4294901760
        %3576 = vmatprep.subr.mxu0 %v3575
        %v3577 = vand.u32 %v444, 4294901760
        %3578 = vmatpush2.msra.mxu0 %v3577
        %v3579 = vand.u32 %v441, 4294901760
        %3580 = vmatprep.subr.mxu0 %v3579
        %v3581 = vand.u32 %v440, 4294901760
        %3582 = vmatpush2.msra.mxu0 %v3581
        %v3583 = vand.u32 %v437, 4294901760
        %3584 = vmatprep.subr.mxu0 %v3583
        %v3585 = vand.u32 %v436, 4294901760
        %3586 = vmatpush2.msra.mxu0 %v3585
        %v3587 = vand.u32 %v433, 4294901760
        %3588 = vmatprep.subr.mxu0 %v3587
        %v3589 = vand.u32 %v432, 4294901760
        %3590 = vmatpush2.msra.mxu0 %v3589
        %v3591 = vand.u32 %v429, 4294901760
        %3592 = vmatprep.subr.mxu0 %v3591
        %v3593 = vand.u32 %v428, 4294901760
        %3594 = vmatpush2.msra.mxu0 %v3593
        %v3595 = vand.u32 %v425, 4294901760
        %3596 = vmatprep.subr.mxu0 %v3595
        %v3597 = vand.u32 %v424, 4294901760
        %3598 = vmatpush2.msra.mxu0 %v3597
        %v3599 = vand.u32 %v421, 4294901760
        %3600 = vmatprep.subr.mxu0 %v3599
        %v3601 = vand.u32 %v420, 4294901760
        %3602 = vmatpush2.msra.mxu0 %v3601
        %v3603 = vand.u32 %v417, 4294901760
        %3604 = vmatprep.subr.mxu0 %v3603
        %v3605 = vand.u32 %v416, 4294901760
        %3606 = vmatpush2.msra.mxu0 %v3605
        %v3607 = vand.u32 %v413, 4294901760
        %3608 = vmatprep.subr.mxu0 %v3607
        %v3609 = vand.u32 %v412, 4294901760
        %3610 = vmatpush2.msra.mxu0 %v3609
        %v3611 = vand.u32 %v409, 4294901760
        %3612 = vmatprep.subr.mxu0 %v3611
        %v3613 = vand.u32 %v408, 4294901760
        %3614 = vmatpush2.msra.mxu0 %v3613
        %v3615 = vand.u32 %v405, 4294901760
        %3616 = vmatprep.subr.mxu0 %v3615
        %v3617 = vand.u32 %v404, 4294901760
        %3618 = vmatpush2.msra.mxu0 %v3617
        %v3619 = vand.u32 %v401, 4294901760
        %3620 = vmatprep.subr.mxu0 %v3619
        %v3621 = vand.u32 %v400, 4294901760
        %3622 = vmatpush2.msra.mxu0 %v3621
        %v3623 = vand.u32 %v397, 4294901760
        %3624 = vmatprep.subr.mxu0 %v3623
        %v3625 = vand.u32 %v396, 4294901760
        %3626 = vmatpush2.msra.mxu0 %v3625
        %v3627 = vand.u32 %v393, 4294901760
        %3628 = vmatprep.subr.mxu0 %v3627
        %v3629 = vand.u32 %v392, 4294901760
        %3630 = vmatpush2.msra.mxu0 %v3629
        %v3631 = vand.u32 %v389, 4294901760
        %3632 = vmatprep.subr.mxu0 %v3631
        %v3633 = vand.u32 %v388, 4294901760
        %3634 = vmatpush2.msra.mxu0 %v3633
        %v3635 = vand.u32 %v321, 4294901760
        %3636 = vmatprep.mubr.f32.mxu0 %v3635
        %v3637 = vand.u32 %v320, 4294901760
        %3638 = vmatmul.mubr.f32.gmra.mxu0 %v3637
        %v3639 = vpop.f32.mrf.mxu0
        %v3640 = vadd.f32 %v3503, %v3639
        %v3641 = vpop.f32.mrf.mxu0
        %v3642 = vadd.f32 %v3505, %v3641
        %3643 = vdwg.mxu0
        %v3644 = vand.u32 %v513, 4294901760
        %3645 = vmatprep.subr.mxu0 %v3644
        %v3646 = vand.u32 %v512, 4294901760
        %3647 = vmatpush1.msra.mxu0 %v3646
        %v3648 = vand.u32 %v509, 4294901760
        %3649 = vmatprep.subr.mxu0 %v3648
        %v3650 = vand.u32 %v508, 4294901760
        %3651 = vmatpush1.msra.mxu0 %v3650
        %v3652 = vand.u32 %v505, 4294901760
        %3653 = vmatprep.subr.mxu0 %v3652
        %v3654 = vand.u32 %v504, 4294901760
        %3655 = vmatpush1.msra.mxu0 %v3654
        %v3656 = vand.u32 %v501, 4294901760
        %3657 = vmatprep.subr.mxu0 %v3656
        %v3658 = vand.u32 %v500, 4294901760
        %3659 = vmatpush1.msra.mxu0 %v3658
        %v3660 = vand.u32 %v497, 4294901760
        %3661 = vmatprep.subr.mxu0 %v3660
        %v3662 = vand.u32 %v496, 4294901760
        %3663 = vmatpush1.msra.mxu0 %v3662
        %v3664 = vand.u32 %v493, 4294901760
        %3665 = vmatprep.subr.mxu0 %v3664
        %v3666 = vand.u32 %v492, 4294901760
        %3667 = vmatpush1.msra.mxu0 %v3666
        %v3668 = vand.u32 %v489, 4294901760
        %3669 = vmatprep.subr.mxu0 %v3668
        %v3670 = vand.u32 %v488, 4294901760
        %3671 = vmatpush1.msra.mxu0 %v3670
        %v3672 = vand.u32 %v485, 4294901760
        %3673 = vmatprep.subr.mxu0 %v3672
        %v3674 = vand.u32 %v484, 4294901760
        %3675 = vmatpush1.msra.mxu0 %v3674
        %v3676 = vand.u32 %v481, 4294901760
        %3677 = vmatprep.subr.mxu0 %v3676
        %v3678 = vand.u32 %v480, 4294901760
        %3679 = vmatpush1.msra.mxu0 %v3678
        %v3680 = vand.u32 %v477, 4294901760
        %3681 = vmatprep.subr.mxu0 %v3680
        %v3682 = vand.u32 %v476, 4294901760
        %3683 = vmatpush1.msra.mxu0 %v3682
        %v3684 = vand.u32 %v473, 4294901760
        %3685 = vmatprep.subr.mxu0 %v3684
        %v3686 = vand.u32 %v472, 4294901760
        %3687 = vmatpush1.msra.mxu0 %v3686
        %v3688 = vand.u32 %v469, 4294901760
        %3689 = vmatprep.subr.mxu0 %v3688
        %v3690 = vand.u32 %v468, 4294901760
        %3691 = vmatpush1.msra.mxu0 %v3690
        %v3692 = vand.u32 %v465, 4294901760
        %3693 = vmatprep.subr.mxu0 %v3692
        %v3694 = vand.u32 %v464, 4294901760
        %3695 = vmatpush1.msra.mxu0 %v3694
        %v3696 = vand.u32 %v461, 4294901760
        %3697 = vmatprep.subr.mxu0 %v3696
        %v3698 = vand.u32 %v460, 4294901760
        %3699 = vmatpush1.msra.mxu0 %v3698
        %v3700 = vand.u32 %v457, 4294901760
        %3701 = vmatprep.subr.mxu0 %v3700
        %v3702 = vand.u32 %v456, 4294901760
        %3703 = vmatpush1.msra.mxu0 %v3702
        %v3704 = vand.u32 %v453, 4294901760
        %3705 = vmatprep.subr.mxu0 %v3704
        %v3706 = vand.u32 %v452, 4294901760
        %3707 = vmatpush1.msra.mxu0 %v3706
        %v3708 = vand.u32 %v577, 4294901760
        %3709 = vmatprep.subr.mxu0 %v3708
        %v3710 = vand.u32 %v576, 4294901760
        %3711 = vmatpush2.msra.mxu0 %v3710
        %v3712 = vand.u32 %v573, 4294901760
        %3713 = vmatprep.subr.mxu0 %v3712
        %v3714 = vand.u32 %v572, 4294901760
        %3715 = vmatpush2.msra.mxu0 %v3714
        %v3716 = vand.u32 %v569, 4294901760
        %3717 = vmatprep.subr.mxu0 %v3716
        %v3718 = vand.u32 %v568, 4294901760
        %3719 = vmatpush2.msra.mxu0 %v3718
        %v3720 = vand.u32 %v565, 4294901760
        %3721 = vmatprep.subr.mxu0 %v3720
        %v3722 = vand.u32 %v564, 4294901760
        %3723 = vmatpush2.msra.mxu0 %v3722
        %v3724 = vand.u32 %v561, 4294901760
        %3725 = vmatprep.subr.mxu0 %v3724
        %v3726 = vand.u32 %v560, 4294901760
        %3727 = vmatpush2.msra.mxu0 %v3726
        %v3728 = vand.u32 %v557, 4294901760
        %3729 = vmatprep.subr.mxu0 %v3728
        %v3730 = vand.u32 %v556, 4294901760
        %3731 = vmatpush2.msra.mxu0 %v3730
        %v3732 = vand.u32 %v553, 4294901760
        %3733 = vmatprep.subr.mxu0 %v3732
        %v3734 = vand.u32 %v552, 4294901760
        %3735 = vmatpush2.msra.mxu0 %v3734
        %v3736 = vand.u32 %v549, 4294901760
        %3737 = vmatprep.subr.mxu0 %v3736
        %v3738 = vand.u32 %v548, 4294901760
        %3739 = vmatpush2.msra.mxu0 %v3738
        %v3740 = vand.u32 %v545, 4294901760
        %3741 = vmatprep.subr.mxu0 %v3740
        %v3742 = vand.u32 %v544, 4294901760
        %3743 = vmatpush2.msra.mxu0 %v3742
        %v3744 = vand.u32 %v541, 4294901760
        %3745 = vmatprep.subr.mxu0 %v3744
        %v3746 = vand.u32 %v540, 4294901760
        %3747 = vmatpush2.msra.mxu0 %v3746
        %v3748 = vand.u32 %v537, 4294901760
        %3749 = vmatprep.subr.mxu0 %v3748
        %v3750 = vand.u32 %v536, 4294901760
        %3751 = vmatpush2.msra.mxu0 %v3750
        %v3752 = vand.u32 %v533, 4294901760
        %3753 = vmatprep.subr.mxu0 %v3752
        %v3754 = vand.u32 %v532, 4294901760
        %3755 = vmatpush2.msra.mxu0 %v3754
        %v3756 = vand.u32 %v529, 4294901760
        %3757 = vmatprep.subr.mxu0 %v3756
        %v3758 = vand.u32 %v528, 4294901760
        %3759 = vmatpush2.msra.mxu0 %v3758
        %v3760 = vand.u32 %v525, 4294901760
        %3761 = vmatprep.subr.mxu0 %v3760
        %v3762 = vand.u32 %v524, 4294901760
        %3763 = vmatpush2.msra.mxu0 %v3762
        %v3764 = vand.u32 %v521, 4294901760
        %3765 = vmatprep.subr.mxu0 %v3764
        %v3766 = vand.u32 %v520, 4294901760
        %3767 = vmatpush2.msra.mxu0 %v3766
        %v3768 = vand.u32 %v517, 4294901760
        %3769 = vmatprep.subr.mxu0 %v3768
        %v3770 = vand.u32 %v516, 4294901760
        %3771 = vmatpush2.msra.mxu0 %v3770
        %v3772 = vand.u32 %v323, 4294901760
        %v3773 = vsub.f32 %v323, %v3772
        %v3774 = vand.u32 %v3773, 4294901760
        %v3775 = vsub.f32 %v3773, %v3774
        %v3776 = vand.u32 %v3775, 4294901760
        %3777 = vmatprep.mubr.f32.mxu0 %v3776
        %v3778 = vand.u32 %v322, 4294901760
        %v3779 = vsub.f32 %v322, %v3778
        %v3780 = vand.u32 %v3779, 4294901760
        %v3781 = vsub.f32 %v3779, %v3780
        %v3782 = vand.u32 %v3781, 4294901760
        %3783 = vmatmul.mubr.f32.gmra.mxu0 %v3782
        %v3784 = vpop.f32.mrf.mxu0
        %v3785 = vadd.f32 %v3640, %v3784
        %v3786 = vpop.f32.mrf.mxu0
        %v3787 = vadd.f32 %v3642, %v3786
        %3788 = vdwg.mxu0
        %v3789 = vand.u32 %v513, 4294901760
        %v3790 = vsub.f32 %v513, %v3789
        %v3791 = vand.u32 %v3790, 4294901760
        %v3792 = vsub.f32 %v3790, %v3791
        %v3793 = vand.u32 %v3792, 4294901760
        %3794 = vmatprep.subr.mxu0 %v3793
        %v3795 = vand.u32 %v512, 4294901760
        %v3796 = vsub.f32 %v512, %v3795
        %v3797 = vand.u32 %v3796, 4294901760
        %v3798 = vsub.f32 %v3796, %v3797
        %v3799 = vand.u32 %v3798, 4294901760
        %3800 = vmatpush1.msra.mxu0 %v3799
        %v3801 = vand.u32 %v509, 4294901760
        %v3802 = vsub.f32 %v509, %v3801
        %v3803 = vand.u32 %v3802, 4294901760
        %v3804 = vsub.f32 %v3802, %v3803
        %v3805 = vand.u32 %v3804, 4294901760
        %3806 = vmatprep.subr.mxu0 %v3805
        %v3807 = vand.u32 %v508, 4294901760
        %v3808 = vsub.f32 %v508, %v3807
        %v3809 = vand.u32 %v3808, 4294901760
        %v3810 = vsub.f32 %v3808, %v3809
        %v3811 = vand.u32 %v3810, 4294901760
        %3812 = vmatpush1.msra.mxu0 %v3811
        %v3813 = vand.u32 %v505, 4294901760
        %v3814 = vsub.f32 %v505, %v3813
        %v3815 = vand.u32 %v3814, 4294901760
        %v3816 = vsub.f32 %v3814, %v3815
        %v3817 = vand.u32 %v3816, 4294901760
        %3818 = vmatprep.subr.mxu0 %v3817
        %v3819 = vand.u32 %v504, 4294901760
        %v3820 = vsub.f32 %v504, %v3819
        %v3821 = vand.u32 %v3820, 4294901760
        %v3822 = vsub.f32 %v3820, %v3821
        %v3823 = vand.u32 %v3822, 4294901760
        %3824 = vmatpush1.msra.mxu0 %v3823
        %v3825 = vand.u32 %v501, 4294901760
        %v3826 = vsub.f32 %v501, %v3825
        %v3827 = vand.u32 %v3826, 4294901760
        %v3828 = vsub.f32 %v3826, %v3827
        %v3829 = vand.u32 %v3828, 4294901760
        %3830 = vmatprep.subr.mxu0 %v3829
        %v3831 = vand.u32 %v500, 4294901760
        %v3832 = vsub.f32 %v500, %v3831
        %v3833 = vand.u32 %v3832, 4294901760
        %v3834 = vsub.f32 %v3832, %v3833
        %v3835 = vand.u32 %v3834, 4294901760
        %3836 = vmatpush1.msra.mxu0 %v3835
        %v3837 = vand.u32 %v497, 4294901760
        %v3838 = vsub.f32 %v497, %v3837
        %v3839 = vand.u32 %v3838, 4294901760
        %v3840 = vsub.f32 %v3838, %v3839
        %v3841 = vand.u32 %v3840, 4294901760
        %3842 = vmatprep.subr.mxu0 %v3841
        %v3843 = vand.u32 %v496, 4294901760
        %v3844 = vsub.f32 %v496, %v3843
        %v3845 = vand.u32 %v3844, 4294901760
        %v3846 = vsub.f32 %v3844, %v3845
        %v3847 = vand.u32 %v3846, 4294901760
        %3848 = vmatpush1.msra.mxu0 %v3847
        %v3849 = vand.u32 %v493, 4294901760
        %v3850 = vsub.f32 %v493, %v3849
        %v3851 = vand.u32 %v3850, 4294901760
        %v3852 = vsub.f32 %v3850, %v3851
        %v3853 = vand.u32 %v3852, 4294901760
        %3854 = vmatprep.subr.mxu0 %v3853
        %v3855 = vand.u32 %v492, 4294901760
        %v3856 = vsub.f32 %v492, %v3855
        %v3857 = vand.u32 %v3856, 4294901760
        %v3858 = vsub.f32 %v3856, %v3857
        %v3859 = vand.u32 %v3858, 4294901760
        %3860 = vmatpush1.msra.mxu0 %v3859
        %v3861 = vand.u32 %v489, 4294901760
        %v3862 = vsub.f32 %v489, %v3861
        %v3863 = vand.u32 %v3862, 4294901760
        %v3864 = vsub.f32 %v3862, %v3863
        %v3865 = vand.u32 %v3864, 4294901760
        %3866 = vmatprep.subr.mxu0 %v3865
        %v3867 = vand.u32 %v488, 4294901760
        %v3868 = vsub.f32 %v488, %v3867
        %v3869 = vand.u32 %v3868, 4294901760
        %v3870 = vsub.f32 %v3868, %v3869
        %v3871 = vand.u32 %v3870, 4294901760
        %3872 = vmatpush1.msra.mxu0 %v3871
        %v3873 = vand.u32 %v485, 4294901760
        %v3874 = vsub.f32 %v485, %v3873
        %v3875 = vand.u32 %v3874, 4294901760
        %v3876 = vsub.f32 %v3874, %v3875
        %v3877 = vand.u32 %v3876, 4294901760
        %3878 = vmatprep.subr.mxu0 %v3877
        %v3879 = vand.u32 %v484, 4294901760
        %v3880 = vsub.f32 %v484, %v3879
        %v3881 = vand.u32 %v3880, 4294901760
        %v3882 = vsub.f32 %v3880, %v3881
        %v3883 = vand.u32 %v3882, 4294901760
        %3884 = vmatpush1.msra.mxu0 %v3883
        %v3885 = vand.u32 %v481, 4294901760
        %v3886 = vsub.f32 %v481, %v3885
        %v3887 = vand.u32 %v3886, 4294901760
        %v3888 = vsub.f32 %v3886, %v3887
        %v3889 = vand.u32 %v3888, 4294901760
        %3890 = vmatprep.subr.mxu0 %v3889
        %v3891 = vand.u32 %v480, 4294901760
        %v3892 = vsub.f32 %v480, %v3891
        %v3893 = vand.u32 %v3892, 4294901760
        %v3894 = vsub.f32 %v3892, %v3893
        %v3895 = vand.u32 %v3894, 4294901760
        %3896 = vmatpush1.msra.mxu0 %v3895
        %v3897 = vand.u32 %v477, 4294901760
        %v3898 = vsub.f32 %v477, %v3897
        %v3899 = vand.u32 %v3898, 4294901760
        %v3900 = vsub.f32 %v3898, %v3899
        %v3901 = vand.u32 %v3900, 4294901760
        %3902 = vmatprep.subr.mxu0 %v3901
        %v3903 = vand.u32 %v476, 4294901760
        %v3904 = vsub.f32 %v476, %v3903
        %v3905 = vand.u32 %v3904, 4294901760
        %v3906 = vsub.f32 %v3904, %v3905
        %v3907 = vand.u32 %v3906, 4294901760
        %3908 = vmatpush1.msra.mxu0 %v3907
        %v3909 = vand.u32 %v473, 4294901760
        %v3910 = vsub.f32 %v473, %v3909
        %v3911 = vand.u32 %v3910, 4294901760
        %v3912 = vsub.f32 %v3910, %v3911
        %v3913 = vand.u32 %v3912, 4294901760
        %3914 = vmatprep.subr.mxu0 %v3913
        %v3915 = vand.u32 %v472, 4294901760
        %v3916 = vsub.f32 %v472, %v3915
        %v3917 = vand.u32 %v3916, 4294901760
        %v3918 = vsub.f32 %v3916, %v3917
        %v3919 = vand.u32 %v3918, 4294901760
        %3920 = vmatpush1.msra.mxu0 %v3919
        %v3921 = vand.u32 %v469, 4294901760
        %v3922 = vsub.f32 %v469, %v3921
        %v3923 = vand.u32 %v3922, 4294901760
        %v3924 = vsub.f32 %v3922, %v3923
        %v3925 = vand.u32 %v3924, 4294901760
        %3926 = vmatprep.subr.mxu0 %v3925
        %v3927 = vand.u32 %v468, 4294901760
        %v3928 = vsub.f32 %v468, %v3927
        %v3929 = vand.u32 %v3928, 4294901760
        %v3930 = vsub.f32 %v3928, %v3929
        %v3931 = vand.u32 %v3930, 4294901760
        %3932 = vmatpush1.msra.mxu0 %v3931
        %v3933 = vand.u32 %v465, 4294901760
        %v3934 = vsub.f32 %v465, %v3933
        %v3935 = vand.u32 %v3934, 4294901760
        %v3936 = vsub.f32 %v3934, %v3935
        %v3937 = vand.u32 %v3936, 4294901760
        %3938 = vmatprep.subr.mxu0 %v3937
        %v3939 = vand.u32 %v464, 4294901760
        %v3940 = vsub.f32 %v464, %v3939
        %v3941 = vand.u32 %v3940, 4294901760
        %v3942 = vsub.f32 %v3940, %v3941
        %v3943 = vand.u32 %v3942, 4294901760
        %3944 = vmatpush1.msra.mxu0 %v3943
        %v3945 = vand.u32 %v461, 4294901760
        %v3946 = vsub.f32 %v461, %v3945
        %v3947 = vand.u32 %v3946, 4294901760
        %v3948 = vsub.f32 %v3946, %v3947
        %v3949 = vand.u32 %v3948, 4294901760
        %3950 = vmatprep.subr.mxu0 %v3949
        %v3951 = vand.u32 %v460, 4294901760
        %v3952 = vsub.f32 %v460, %v3951
        %v3953 = vand.u32 %v3952, 4294901760
        %v3954 = vsub.f32 %v3952, %v3953
        %v3955 = vand.u32 %v3954, 4294901760
        %3956 = vmatpush1.msra.mxu0 %v3955
        %v3957 = vand.u32 %v457, 4294901760
        %v3958 = vsub.f32 %v457, %v3957
        %v3959 = vand.u32 %v3958, 4294901760
        %v3960 = vsub.f32 %v3958, %v3959
        %v3961 = vand.u32 %v3960, 4294901760
        %3962 = vmatprep.subr.mxu0 %v3961
        %v3963 = vand.u32 %v456, 4294901760
        %v3964 = vsub.f32 %v456, %v3963
        %v3965 = vand.u32 %v3964, 4294901760
        %v3966 = vsub.f32 %v3964, %v3965
        %v3967 = vand.u32 %v3966, 4294901760
        %3968 = vmatpush1.msra.mxu0 %v3967
        %v3969 = vand.u32 %v453, 4294901760
        %v3970 = vsub.f32 %v453, %v3969
        %v3971 = vand.u32 %v3970, 4294901760
        %v3972 = vsub.f32 %v3970, %v3971
        %v3973 = vand.u32 %v3972, 4294901760
        %3974 = vmatprep.subr.mxu0 %v3973
        %v3975 = vand.u32 %v452, 4294901760
        %v3976 = vsub.f32 %v452, %v3975
        %v3977 = vand.u32 %v3976, 4294901760
        %v3978 = vsub.f32 %v3976, %v3977
        %v3979 = vand.u32 %v3978, 4294901760
        %3980 = vmatpush1.msra.mxu0 %v3979
        %v3981 = vand.u32 %v577, 4294901760
        %v3982 = vsub.f32 %v577, %v3981
        %v3983 = vand.u32 %v3982, 4294901760
        %v3984 = vsub.f32 %v3982, %v3983
        %v3985 = vand.u32 %v3984, 4294901760
        %3986 = vmatprep.subr.mxu0 %v3985
        %v3987 = vand.u32 %v576, 4294901760
        %v3988 = vsub.f32 %v576, %v3987
        %v3989 = vand.u32 %v3988, 4294901760
        %v3990 = vsub.f32 %v3988, %v3989
        %v3991 = vand.u32 %v3990, 4294901760
        %3992 = vmatpush2.msra.mxu0 %v3991
        %v3993 = vand.u32 %v573, 4294901760
        %v3994 = vsub.f32 %v573, %v3993
        %v3995 = vand.u32 %v3994, 4294901760
        %v3996 = vsub.f32 %v3994, %v3995
        %v3997 = vand.u32 %v3996, 4294901760
        %3998 = vmatprep.subr.mxu0 %v3997
        %v3999 = vand.u32 %v572, 4294901760
        %v4000 = vsub.f32 %v572, %v3999
        %v4001 = vand.u32 %v4000, 4294901760
        %v4002 = vsub.f32 %v4000, %v4001
        %v4003 = vand.u32 %v4002, 4294901760
        %4004 = vmatpush2.msra.mxu0 %v4003
        %v4005 = vand.u32 %v569, 4294901760
        %v4006 = vsub.f32 %v569, %v4005
        %v4007 = vand.u32 %v4006, 4294901760
        %v4008 = vsub.f32 %v4006, %v4007
        %v4009 = vand.u32 %v4008, 4294901760
        %4010 = vmatprep.subr.mxu0 %v4009
        %v4011 = vand.u32 %v568, 4294901760
        %v4012 = vsub.f32 %v568, %v4011
        %v4013 = vand.u32 %v4012, 4294901760
        %v4014 = vsub.f32 %v4012, %v4013
        %v4015 = vand.u32 %v4014, 4294901760
        %4016 = vmatpush2.msra.mxu0 %v4015
        %v4017 = vand.u32 %v565, 4294901760
        %v4018 = vsub.f32 %v565, %v4017
        %v4019 = vand.u32 %v4018, 4294901760
        %v4020 = vsub.f32 %v4018, %v4019
        %v4021 = vand.u32 %v4020, 4294901760
        %4022 = vmatprep.subr.mxu0 %v4021
        %v4023 = vand.u32 %v564, 4294901760
        %v4024 = vsub.f32 %v564, %v4023
        %v4025 = vand.u32 %v4024, 4294901760
        %v4026 = vsub.f32 %v4024, %v4025
        %v4027 = vand.u32 %v4026, 4294901760
        %4028 = vmatpush2.msra.mxu0 %v4027
        %v4029 = vand.u32 %v561, 4294901760
        %v4030 = vsub.f32 %v561, %v4029
        %v4031 = vand.u32 %v4030, 4294901760
        %v4032 = vsub.f32 %v4030, %v4031
        %v4033 = vand.u32 %v4032, 4294901760
        %4034 = vmatprep.subr.mxu0 %v4033
        %v4035 = vand.u32 %v560, 4294901760
        %v4036 = vsub.f32 %v560, %v4035
        %v4037 = vand.u32 %v4036, 4294901760
        %v4038 = vsub.f32 %v4036, %v4037
        %v4039 = vand.u32 %v4038, 4294901760
        %4040 = vmatpush2.msra.mxu0 %v4039
        %v4041 = vand.u32 %v557, 4294901760
        %v4042 = vsub.f32 %v557, %v4041
        %v4043 = vand.u32 %v4042, 4294901760
        %v4044 = vsub.f32 %v4042, %v4043
        %v4045 = vand.u32 %v4044, 4294901760
        %4046 = vmatprep.subr.mxu0 %v4045
        %v4047 = vand.u32 %v556, 4294901760
        %v4048 = vsub.f32 %v556, %v4047
        %v4049 = vand.u32 %v4048, 4294901760
        %v4050 = vsub.f32 %v4048, %v4049
        %v4051 = vand.u32 %v4050, 4294901760
        %4052 = vmatpush2.msra.mxu0 %v4051
        %v4053 = vand.u32 %v553, 4294901760
        %v4054 = vsub.f32 %v553, %v4053
        %v4055 = vand.u32 %v4054, 4294901760
        %v4056 = vsub.f32 %v4054, %v4055
        %v4057 = vand.u32 %v4056, 4294901760
        %4058 = vmatprep.subr.mxu0 %v4057
        %v4059 = vand.u32 %v552, 4294901760
        %v4060 = vsub.f32 %v552, %v4059
        %v4061 = vand.u32 %v4060, 4294901760
        %v4062 = vsub.f32 %v4060, %v4061
        %v4063 = vand.u32 %v4062, 4294901760
        %4064 = vmatpush2.msra.mxu0 %v4063
        %v4065 = vand.u32 %v549, 4294901760
        %v4066 = vsub.f32 %v549, %v4065
        %v4067 = vand.u32 %v4066, 4294901760
        %v4068 = vsub.f32 %v4066, %v4067
        %v4069 = vand.u32 %v4068, 4294901760
        %4070 = vmatprep.subr.mxu0 %v4069
        %v4071 = vand.u32 %v548, 4294901760
        %v4072 = vsub.f32 %v548, %v4071
        %v4073 = vand.u32 %v4072, 4294901760
        %v4074 = vsub.f32 %v4072, %v4073
        %v4075 = vand.u32 %v4074, 4294901760
        %4076 = vmatpush2.msra.mxu0 %v4075
        %v4077 = vand.u32 %v545, 4294901760
        %v4078 = vsub.f32 %v545, %v4077
        %v4079 = vand.u32 %v4078, 4294901760
        %v4080 = vsub.f32 %v4078, %v4079
        %v4081 = vand.u32 %v4080, 4294901760
        %4082 = vmatprep.subr.mxu0 %v4081
        %v4083 = vand.u32 %v544, 4294901760
        %v4084 = vsub.f32 %v544, %v4083
        %v4085 = vand.u32 %v4084, 4294901760
        %v4086 = vsub.f32 %v4084, %v4085
        %v4087 = vand.u32 %v4086, 4294901760
        %4088 = vmatpush2.msra.mxu0 %v4087
        %v4089 = vand.u32 %v541, 4294901760
        %v4090 = vsub.f32 %v541, %v4089
        %v4091 = vand.u32 %v4090, 4294901760
        %v4092 = vsub.f32 %v4090, %v4091
        %v4093 = vand.u32 %v4092, 4294901760
        %4094 = vmatprep.subr.mxu0 %v4093
        %v4095 = vand.u32 %v540, 4294901760
        %v4096 = vsub.f32 %v540, %v4095
        %v4097 = vand.u32 %v4096, 4294901760
        %v4098 = vsub.f32 %v4096, %v4097
        %v4099 = vand.u32 %v4098, 4294901760
        %4100 = vmatpush2.msra.mxu0 %v4099
        %v4101 = vand.u32 %v537, 4294901760
        %v4102 = vsub.f32 %v537, %v4101
        %v4103 = vand.u32 %v4102, 4294901760
        %v4104 = vsub.f32 %v4102, %v4103
        %v4105 = vand.u32 %v4104, 4294901760
        %4106 = vmatprep.subr.mxu0 %v4105
        %v4107 = vand.u32 %v536, 4294901760
        %v4108 = vsub.f32 %v536, %v4107
        %v4109 = vand.u32 %v4108, 4294901760
        %v4110 = vsub.f32 %v4108, %v4109
        %v4111 = vand.u32 %v4110, 4294901760
        %4112 = vmatpush2.msra.mxu0 %v4111
        %v4113 = vand.u32 %v533, 4294901760
        %v4114 = vsub.f32 %v533, %v4113
        %v4115 = vand.u32 %v4114, 4294901760
        %v4116 = vsub.f32 %v4114, %v4115
        %v4117 = vand.u32 %v4116, 4294901760
        %4118 = vmatprep.subr.mxu0 %v4117
        %v4119 = vand.u32 %v532, 4294901760
        %v4120 = vsub.f32 %v532, %v4119
        %v4121 = vand.u32 %v4120, 4294901760
        %v4122 = vsub.f32 %v4120, %v4121
        %v4123 = vand.u32 %v4122, 4294901760
        %4124 = vmatpush2.msra.mxu0 %v4123
        %v4125 = vand.u32 %v529, 4294901760
        %v4126 = vsub.f32 %v529, %v4125
        %v4127 = vand.u32 %v4126, 4294901760
        %v4128 = vsub.f32 %v4126, %v4127
        %v4129 = vand.u32 %v4128, 4294901760
        %4130 = vmatprep.subr.mxu0 %v4129
        %v4131 = vand.u32 %v528, 4294901760
        %v4132 = vsub.f32 %v528, %v4131
        %v4133 = vand.u32 %v4132, 4294901760
        %v4134 = vsub.f32 %v4132, %v4133
        %v4135 = vand.u32 %v4134, 4294901760
        %4136 = vmatpush2.msra.mxu0 %v4135
        %v4137 = vand.u32 %v525, 4294901760
        %v4138 = vsub.f32 %v525, %v4137
        %v4139 = vand.u32 %v4138, 4294901760
        %v4140 = vsub.f32 %v4138, %v4139
        %v4141 = vand.u32 %v4140, 4294901760
        %4142 = vmatprep.subr.mxu0 %v4141
        %v4143 = vand.u32 %v524, 4294901760
        %v4144 = vsub.f32 %v524, %v4143
        %v4145 = vand.u32 %v4144, 4294901760
        %v4146 = vsub.f32 %v4144, %v4145
        %v4147 = vand.u32 %v4146, 4294901760
        %4148 = vmatpush2.msra.mxu0 %v4147
        %v4149 = vand.u32 %v521, 4294901760
        %v4150 = vsub.f32 %v521, %v4149
        %v4151 = vand.u32 %v4150, 4294901760
        %v4152 = vsub.f32 %v4150, %v4151
        %v4153 = vand.u32 %v4152, 4294901760
        %4154 = vmatprep.subr.mxu0 %v4153
        %v4155 = vand.u32 %v520, 4294901760
        %v4156 = vsub.f32 %v520, %v4155
        %v4157 = vand.u32 %v4156, 4294901760
        %v4158 = vsub.f32 %v4156, %v4157
        %v4159 = vand.u32 %v4158, 4294901760
        %4160 = vmatpush2.msra.mxu0 %v4159
        %v4161 = vand.u32 %v517, 4294901760
        %v4162 = vsub.f32 %v517, %v4161
        %v4163 = vand.u32 %v4162, 4294901760
        %v4164 = vsub.f32 %v4162, %v4163
        %v4165 = vand.u32 %v4164, 4294901760
        %4166 = vmatprep.subr.mxu0 %v4165
        %v4167 = vand.u32 %v516, 4294901760
        %v4168 = vsub.f32 %v516, %v4167
        %v4169 = vand.u32 %v4168, 4294901760
        %v4170 = vsub.f32 %v4168, %v4169
        %v4171 = vand.u32 %v4170, 4294901760
        %4172 = vmatpush2.msra.mxu0 %v4171
        %v4173 = vand.u32 %v323, 4294901760
        %4174 = vmatprep.mubr.f32.mxu0 %v4173
        %v4175 = vand.u32 %v322, 4294901760
        %4176 = vmatmul.mubr.f32.gmra.mxu0 %v4175
        %v4177 = vpop.f32.mrf.mxu0
        %v4178 = vadd.f32 %v3785, %v4177
        %v4179 = vpop.f32.mrf.mxu0
        %v4180 = vadd.f32 %v3787, %v4179
        %4181 = vdwg.mxu0
        %v4182 = vand.u32 %v513, 4294901760
        %v4183 = vsub.f32 %v513, %v4182
        %4184 = vmatprep.subr.mxu0 %v4183
        %v4185 = vand.u32 %v512, 4294901760
        %v4186 = vsub.f32 %v512, %v4185
        %4187 = vmatpush1.msra.mxu0 %v4186
        %v4188 = vand.u32 %v509, 4294901760
        %v4189 = vsub.f32 %v509, %v4188
        %4190 = vmatprep.subr.mxu0 %v4189
        %v4191 = vand.u32 %v508, 4294901760
        %v4192 = vsub.f32 %v508, %v4191
        %4193 = vmatpush1.msra.mxu0 %v4192
        %v4194 = vand.u32 %v505, 4294901760
        %v4195 = vsub.f32 %v505, %v4194
        %4196 = vmatprep.subr.mxu0 %v4195
        %v4197 = vand.u32 %v504, 4294901760
        %v4198 = vsub.f32 %v504, %v4197
        %4199 = vmatpush1.msra.mxu0 %v4198
        %v4200 = vand.u32 %v501, 4294901760
        %v4201 = vsub.f32 %v501, %v4200
        %4202 = vmatprep.subr.mxu0 %v4201
        %v4203 = vand.u32 %v500, 4294901760
        %v4204 = vsub.f32 %v500, %v4203
        %4205 = vmatpush1.msra.mxu0 %v4204
        %v4206 = vand.u32 %v497, 4294901760
        %v4207 = vsub.f32 %v497, %v4206
        %4208 = vmatprep.subr.mxu0 %v4207
        %v4209 = vand.u32 %v496, 4294901760
        %v4210 = vsub.f32 %v496, %v4209
        %4211 = vmatpush1.msra.mxu0 %v4210
        %v4212 = vand.u32 %v493, 4294901760
        %v4213 = vsub.f32 %v493, %v4212
        %4214 = vmatprep.subr.mxu0 %v4213
        %v4215 = vand.u32 %v492, 4294901760
        %v4216 = vsub.f32 %v492, %v4215
        %4217 = vmatpush1.msra.mxu0 %v4216
        %v4218 = vand.u32 %v489, 4294901760
        %v4219 = vsub.f32 %v489, %v4218
        %4220 = vmatprep.subr.mxu0 %v4219
        %v4221 = vand.u32 %v488, 4294901760
        %v4222 = vsub.f32 %v488, %v4221
        %4223 = vmatpush1.msra.mxu0 %v4222
        %v4224 = vand.u32 %v485, 4294901760
        %v4225 = vsub.f32 %v485, %v4224
        %4226 = vmatprep.subr.mxu0 %v4225
        %v4227 = vand.u32 %v484, 4294901760
        %v4228 = vsub.f32 %v484, %v4227
        %4229 = vmatpush1.msra.mxu0 %v4228
        %v4230 = vand.u32 %v481, 4294901760
        %v4231 = vsub.f32 %v481, %v4230
        %4232 = vmatprep.subr.mxu0 %v4231
        %v4233 = vand.u32 %v480, 4294901760
        %v4234 = vsub.f32 %v480, %v4233
        %4235 = vmatpush1.msra.mxu0 %v4234
        %v4236 = vand.u32 %v477, 4294901760
        %v4237 = vsub.f32 %v477, %v4236
        %4238 = vmatprep.subr.mxu0 %v4237
        %v4239 = vand.u32 %v476, 4294901760
        %v4240 = vsub.f32 %v476, %v4239
        %4241 = vmatpush1.msra.mxu0 %v4240
        %v4242 = vand.u32 %v473, 4294901760
        %v4243 = vsub.f32 %v473, %v4242
        %4244 = vmatprep.subr.mxu0 %v4243
        %v4245 = vand.u32 %v472, 4294901760
        %v4246 = vsub.f32 %v472, %v4245
        %4247 = vmatpush1.msra.mxu0 %v4246
        %v4248 = vand.u32 %v469, 4294901760
        %v4249 = vsub.f32 %v469, %v4248
        %4250 = vmatprep.subr.mxu0 %v4249
        %v4251 = vand.u32 %v468, 4294901760
        %v4252 = vsub.f32 %v468, %v4251
        %4253 = vmatpush1.msra.mxu0 %v4252
        %v4254 = vand.u32 %v465, 4294901760
        %v4255 = vsub.f32 %v465, %v4254
        %4256 = vmatprep.subr.mxu0 %v4255
        %v4257 = vand.u32 %v464, 4294901760
        %v4258 = vsub.f32 %v464, %v4257
        %4259 = vmatpush1.msra.mxu0 %v4258
        %v4260 = vand.u32 %v461, 4294901760
        %v4261 = vsub.f32 %v461, %v4260
        %4262 = vmatprep.subr.mxu0 %v4261
        %v4263 = vand.u32 %v460, 4294901760
        %v4264 = vsub.f32 %v460, %v4263
        %4265 = vmatpush1.msra.mxu0 %v4264
        %v4266 = vand.u32 %v457, 4294901760
        %v4267 = vsub.f32 %v457, %v4266
        %4268 = vmatprep.subr.mxu0 %v4267
        %v4269 = vand.u32 %v456, 4294901760
        %v4270 = vsub.f32 %v456, %v4269
        %4271 = vmatpush1.msra.mxu0 %v4270
        %v4272 = vand.u32 %v453, 4294901760
        %v4273 = vsub.f32 %v453, %v4272
        %4274 = vmatprep.subr.mxu0 %v4273
        %v4275 = vand.u32 %v452, 4294901760
        %v4276 = vsub.f32 %v452, %v4275
        %4277 = vmatpush1.msra.mxu0 %v4276
        %v4278 = vand.u32 %v577, 4294901760
        %v4279 = vsub.f32 %v577, %v4278
        %4280 = vmatprep.subr.mxu0 %v4279
        %v4281 = vand.u32 %v576, 4294901760
        %v4282 = vsub.f32 %v576, %v4281
        %4283 = vmatpush2.msra.mxu0 %v4282
        %v4284 = vand.u32 %v573, 4294901760
        %v4285 = vsub.f32 %v573, %v4284
        %4286 = vmatprep.subr.mxu0 %v4285
        %v4287 = vand.u32 %v572, 4294901760
        %v4288 = vsub.f32 %v572, %v4287
        %4289 = vmatpush2.msra.mxu0 %v4288
        %v4290 = vand.u32 %v569, 4294901760
        %v4291 = vsub.f32 %v569, %v4290
        %4292 = vmatprep.subr.mxu0 %v4291
        %v4293 = vand.u32 %v568, 4294901760
        %v4294 = vsub.f32 %v568, %v4293
        %4295 = vmatpush2.msra.mxu0 %v4294
        %v4296 = vand.u32 %v565, 4294901760
        %v4297 = vsub.f32 %v565, %v4296
        %4298 = vmatprep.subr.mxu0 %v4297
        %v4299 = vand.u32 %v564, 4294901760
        %v4300 = vsub.f32 %v564, %v4299
        %4301 = vmatpush2.msra.mxu0 %v4300
        %v4302 = vand.u32 %v561, 4294901760
        %v4303 = vsub.f32 %v561, %v4302
        %4304 = vmatprep.subr.mxu0 %v4303
        %v4305 = vand.u32 %v560, 4294901760
        %v4306 = vsub.f32 %v560, %v4305
        %4307 = vmatpush2.msra.mxu0 %v4306
        %v4308 = vand.u32 %v557, 4294901760
        %v4309 = vsub.f32 %v557, %v4308
        %4310 = vmatprep.subr.mxu0 %v4309
        %v4311 = vand.u32 %v556, 4294901760
        %v4312 = vsub.f32 %v556, %v4311
        %4313 = vmatpush2.msra.mxu0 %v4312
        %v4314 = vand.u32 %v553, 4294901760
        %v4315 = vsub.f32 %v553, %v4314
        %4316 = vmatprep.subr.mxu0 %v4315
        %v4317 = vand.u32 %v552, 4294901760
        %v4318 = vsub.f32 %v552, %v4317
        %4319 = vmatpush2.msra.mxu0 %v4318
        %v4320 = vand.u32 %v549, 4294901760
        %v4321 = vsub.f32 %v549, %v4320
        %4322 = vmatprep.subr.mxu0 %v4321
        %v4323 = vand.u32 %v548, 4294901760
        %v4324 = vsub.f32 %v548, %v4323
        %4325 = vmatpush2.msra.mxu0 %v4324
        %v4326 = vand.u32 %v545, 4294901760
        %v4327 = vsub.f32 %v545, %v4326
        %4328 = vmatprep.subr.mxu0 %v4327
        %v4329 = vand.u32 %v544, 4294901760
        %v4330 = vsub.f32 %v544, %v4329
        %4331 = vmatpush2.msra.mxu0 %v4330
        %v4332 = vand.u32 %v541, 4294901760
        %v4333 = vsub.f32 %v541, %v4332
        %4334 = vmatprep.subr.mxu0 %v4333
        %v4335 = vand.u32 %v540, 4294901760
        %v4336 = vsub.f32 %v540, %v4335
        %4337 = vmatpush2.msra.mxu0 %v4336
        %v4338 = vand.u32 %v537, 4294901760
        %v4339 = vsub.f32 %v537, %v4338
        %4340 = vmatprep.subr.mxu0 %v4339
        %v4341 = vand.u32 %v536, 4294901760
        %v4342 = vsub.f32 %v536, %v4341
        %4343 = vmatpush2.msra.mxu0 %v4342
        %v4344 = vand.u32 %v533, 4294901760
        %v4345 = vsub.f32 %v533, %v4344
        %4346 = vmatprep.subr.mxu0 %v4345
        %v4347 = vand.u32 %v532, 4294901760
        %v4348 = vsub.f32 %v532, %v4347
        %4349 = vmatpush2.msra.mxu0 %v4348
        %v4350 = vand.u32 %v529, 4294901760
        %v4351 = vsub.f32 %v529, %v4350
        %4352 = vmatprep.subr.mxu0 %v4351
        %v4353 = vand.u32 %v528, 4294901760
        %v4354 = vsub.f32 %v528, %v4353
        %4355 = vmatpush2.msra.mxu0 %v4354
        %v4356 = vand.u32 %v525, 4294901760
        %v4357 = vsub.f32 %v525, %v4356
        %4358 = vmatprep.subr.mxu0 %v4357
        %v4359 = vand.u32 %v524, 4294901760
        %v4360 = vsub.f32 %v524, %v4359
        %4361 = vmatpush2.msra.mxu0 %v4360
        %v4362 = vand.u32 %v521, 4294901760
        %v4363 = vsub.f32 %v521, %v4362
        %4364 = vmatprep.subr.mxu0 %v4363
        %v4365 = vand.u32 %v520, 4294901760
        %v4366 = vsub.f32 %v520, %v4365
        %4367 = vmatpush2.msra.mxu0 %v4366
        %v4368 = vand.u32 %v517, 4294901760
        %v4369 = vsub.f32 %v517, %v4368
        %4370 = vmatprep.subr.mxu0 %v4369
        %v4371 = vand.u32 %v516, 4294901760
        %v4372 = vsub.f32 %v516, %v4371
        %4373 = vmatpush2.msra.mxu0 %v4372
        %v4374 = vand.u32 %v323, 4294901760
        %v4375 = vsub.f32 %v323, %v4374
        %4376 = vmatprep.mubr.f32.mxu0 %v4375
        %v4377 = vand.u32 %v322, 4294901760
        %v4378 = vsub.f32 %v322, %v4377
        %4379 = vmatmul.mubr.f32.gmra.mxu0 %v4378
        %v4380 = vpop.f32.mrf.mxu0
        %v4381 = vadd.f32 %v4178, %v4380
        %v4382 = vpop.f32.mrf.mxu0
        %v4383 = vadd.f32 %v4180, %v4382
        %4384 = vdwg.mxu0
        %v4385 = vand.u32 %v513, 4294901760
        %4386 = vmatprep.subr.mxu0 %v4385
        %v4387 = vand.u32 %v512, 4294901760
        %4388 = vmatpush1.msra.mxu0 %v4387
        %v4389 = vand.u32 %v509, 4294901760
        %4390 = vmatprep.subr.mxu0 %v4389
        %v4391 = vand.u32 %v508, 4294901760
        %4392 = vmatpush1.msra.mxu0 %v4391
        %v4393 = vand.u32 %v505, 4294901760
        %4394 = vmatprep.subr.mxu0 %v4393
        %v4395 = vand.u32 %v504, 4294901760
        %4396 = vmatpush1.msra.mxu0 %v4395
        %v4397 = vand.u32 %v501, 4294901760
        %4398 = vmatprep.subr.mxu0 %v4397
        %v4399 = vand.u32 %v500, 4294901760
        %4400 = vmatpush1.msra.mxu0 %v4399
        %v4401 = vand.u32 %v497, 4294901760
        %4402 = vmatprep.subr.mxu0 %v4401
        %v4403 = vand.u32 %v496, 4294901760
        %4404 = vmatpush1.msra.mxu0 %v4403
        %v4405 = vand.u32 %v493, 4294901760
        %4406 = vmatprep.subr.mxu0 %v4405
        %v4407 = vand.u32 %v492, 4294901760
        %4408 = vmatpush1.msra.mxu0 %v4407
        %v4409 = vand.u32 %v489, 4294901760
        %4410 = vmatprep.subr.mxu0 %v4409
        %v4411 = vand.u32 %v488, 4294901760
        %4412 = vmatpush1.msra.mxu0 %v4411
        %v4413 = vand.u32 %v485, 4294901760
        %4414 = vmatprep.subr.mxu0 %v4413
        %v4415 = vand.u32 %v484, 4294901760
        %4416 = vmatpush1.msra.mxu0 %v4415
        %v4417 = vand.u32 %v481, 4294901760
        %4418 = vmatprep.subr.mxu0 %v4417
        %v4419 = vand.u32 %v480, 4294901760
        %4420 = vmatpush1.msra.mxu0 %v4419
        %v4421 = vand.u32 %v477, 4294901760
        %4422 = vmatprep.subr.mxu0 %v4421
        %v4423 = vand.u32 %v476, 4294901760
        %4424 = vmatpush1.msra.mxu0 %v4423
        %v4425 = vand.u32 %v473, 4294901760
        %4426 = vmatprep.subr.mxu0 %v4425
        %v4427 = vand.u32 %v472, 4294901760
        %4428 = vmatpush1.msra.mxu0 %v4427
        %v4429 = vand.u32 %v469, 4294901760
        %4430 = vmatprep.subr.mxu0 %v4429
        %v4431 = vand.u32 %v468, 4294901760
        %4432 = vmatpush1.msra.mxu0 %v4431
        %v4433 = vand.u32 %v465, 4294901760
        %4434 = vmatprep.subr.mxu0 %v4433
        %v4435 = vand.u32 %v464, 4294901760
        %4436 = vmatpush1.msra.mxu0 %v4435
        %v4437 = vand.u32 %v461, 4294901760
        %4438 = vmatprep.subr.mxu0 %v4437
        %v4439 = vand.u32 %v460, 4294901760
        %4440 = vmatpush1.msra.mxu0 %v4439
        %v4441 = vand.u32 %v457, 4294901760
        %4442 = vmatprep.subr.mxu0 %v4441
        %v4443 = vand.u32 %v456, 4294901760
        %4444 = vmatpush1.msra.mxu0 %v4443
        %v4445 = vand.u32 %v453, 4294901760
        %4446 = vmatprep.subr.mxu0 %v4445
        %v4447 = vand.u32 %v452, 4294901760
        %4448 = vmatpush1.msra.mxu0 %v4447
        %v4449 = vand.u32 %v577, 4294901760
        %4450 = vmatprep.subr.mxu0 %v4449
        %v4451 = vand.u32 %v576, 4294901760
        %4452 = vmatpush2.msra.mxu0 %v4451
        %v4453 = vand.u32 %v573, 4294901760
        %4454 = vmatprep.subr.mxu0 %v4453
        %v4455 = vand.u32 %v572, 4294901760
        %4456 = vmatpush2.msra.mxu0 %v4455
        %v4457 = vand.u32 %v569, 4294901760
        %4458 = vmatprep.subr.mxu0 %v4457
        %v4459 = vand.u32 %v568, 4294901760
        %4460 = vmatpush2.msra.mxu0 %v4459
        %v4461 = vand.u32 %v565, 4294901760
        %4462 = vmatprep.subr.mxu0 %v4461
        %v4463 = vand.u32 %v564, 4294901760
        %4464 = vmatpush2.msra.mxu0 %v4463
        %v4465 = vand.u32 %v561, 4294901760
        %4466 = vmatprep.subr.mxu0 %v4465
        %v4467 = vand.u32 %v560, 4294901760
        %4468 = vmatpush2.msra.mxu0 %v4467
        %v4469 = vand.u32 %v557, 4294901760
        %4470 = vmatprep.subr.mxu0 %v4469
        %v4471 = vand.u32 %v556, 4294901760
        %4472 = vmatpush2.msra.mxu0 %v4471
        %v4473 = vand.u32 %v553, 4294901760
        %4474 = vmatprep.subr.mxu0 %v4473
        %v4475 = vand.u32 %v552, 4294901760
        %4476 = vmatpush2.msra.mxu0 %v4475
        %v4477 = vand.u32 %v549, 4294901760
        %4478 = vmatprep.subr.mxu0 %v4477
        %v4479 = vand.u32 %v548, 4294901760
        %4480 = vmatpush2.msra.mxu0 %v4479
        %v4481 = vand.u32 %v545, 4294901760
        %4482 = vmatprep.subr.mxu0 %v4481
        %v4483 = vand.u32 %v544, 4294901760
        %4484 = vmatpush2.msra.mxu0 %v4483
        %v4485 = vand.u32 %v541, 4294901760
        %4486 = vmatprep.subr.mxu0 %v4485
        %v4487 = vand.u32 %v540, 4294901760
        %4488 = vmatpush2.msra.mxu0 %v4487
        %v4489 = vand.u32 %v537, 4294901760
        %4490 = vmatprep.subr.mxu0 %v4489
        %v4491 = vand.u32 %v536, 4294901760
        %4492 = vmatpush2.msra.mxu0 %v4491
        %v4493 = vand.u32 %v533, 4294901760
        %4494 = vmatprep.subr.mxu0 %v4493
        %v4495 = vand.u32 %v532, 4294901760
        %4496 = vmatpush2.msra.mxu0 %v4495
        %v4497 = vand.u32 %v529, 4294901760
        %4498 = vmatprep.subr.mxu0 %v4497
        %v4499 = vand.u32 %v528, 4294901760
        %4500 = vmatpush2.msra.mxu0 %v4499
        %v4501 = vand.u32 %v525, 4294901760
        %4502 = vmatprep.subr.mxu0 %v4501
        %v4503 = vand.u32 %v524, 4294901760
        %4504 = vmatpush2.msra.mxu0 %v4503
        %v4505 = vand.u32 %v521, 4294901760
        %4506 = vmatprep.subr.mxu0 %v4505
        %v4507 = vand.u32 %v520, 4294901760
        %4508 = vmatpush2.msra.mxu0 %v4507
        %v4509 = vand.u32 %v517, 4294901760
        %4510 = vmatprep.subr.mxu0 %v4509
        %v4511 = vand.u32 %v516, 4294901760
        %4512 = vmatpush2.msra.mxu0 %v4511
        %v4513 = vand.u32 %v323, 4294901760
        %v4514 = vsub.f32 %v323, %v4513
        %v4515 = vand.u32 %v4514, 4294901760
        %4516 = vmatprep.mubr.f32.mxu0 %v4515
        %v4517 = vand.u32 %v322, 4294901760
        %v4518 = vsub.f32 %v322, %v4517
        %v4519 = vand.u32 %v4518, 4294901760
        %4520 = vmatmul.mubr.f32.gmra.mxu0 %v4519
        %v4521 = vpop.f32.mrf.mxu0
        %v4522 = vadd.f32 %v4381, %v4521
        %v4523 = vpop.f32.mrf.mxu0
        %v4524 = vadd.f32 %v4383, %v4523
        %4525 = vdwg.mxu0
        %v4526 = vand.u32 %v513, 4294901760
        %v4527 = vsub.f32 %v513, %v4526
        %v4528 = vand.u32 %v4527, 4294901760
        %4529 = vmatprep.subr.mxu0 %v4528
        %v4530 = vand.u32 %v512, 4294901760
        %v4531 = vsub.f32 %v512, %v4530
        %v4532 = vand.u32 %v4531, 4294901760
        %4533 = vmatpush1.msra.mxu0 %v4532
        %v4534 = vand.u32 %v509, 4294901760
        %v4535 = vsub.f32 %v509, %v4534
        %v4536 = vand.u32 %v4535, 4294901760
        %4537 = vmatprep.subr.mxu0 %v4536
        %v4538 = vand.u32 %v508, 4294901760
        %v4539 = vsub.f32 %v508, %v4538
        %v4540 = vand.u32 %v4539, 4294901760
        %4541 = vmatpush1.msra.mxu0 %v4540
        %v4542 = vand.u32 %v505, 4294901760
        %v4543 = vsub.f32 %v505, %v4542
        %v4544 = vand.u32 %v4543, 4294901760
        %4545 = vmatprep.subr.mxu0 %v4544
        %v4546 = vand.u32 %v504, 4294901760
        %v4547 = vsub.f32 %v504, %v4546
        %v4548 = vand.u32 %v4547, 4294901760
        %4549 = vmatpush1.msra.mxu0 %v4548
        %v4550 = vand.u32 %v501, 4294901760
        %v4551 = vsub.f32 %v501, %v4550
        %v4552 = vand.u32 %v4551, 4294901760
        %4553 = vmatprep.subr.mxu0 %v4552
        %v4554 = vand.u32 %v500, 4294901760
        %v4555 = vsub.f32 %v500, %v4554
        %v4556 = vand.u32 %v4555, 4294901760
        %4557 = vmatpush1.msra.mxu0 %v4556
        %v4558 = vand.u32 %v497, 4294901760
        %v4559 = vsub.f32 %v497, %v4558
        %v4560 = vand.u32 %v4559, 4294901760
        %4561 = vmatprep.subr.mxu0 %v4560
        %v4562 = vand.u32 %v496, 4294901760
        %v4563 = vsub.f32 %v496, %v4562
        %v4564 = vand.u32 %v4563, 4294901760
        %4565 = vmatpush1.msra.mxu0 %v4564
        %v4566 = vand.u32 %v493, 4294901760
        %v4567 = vsub.f32 %v493, %v4566
        %v4568 = vand.u32 %v4567, 4294901760
        %4569 = vmatprep.subr.mxu0 %v4568
        %v4570 = vand.u32 %v492, 4294901760
        %v4571 = vsub.f32 %v492, %v4570
        %v4572 = vand.u32 %v4571, 4294901760
        %4573 = vmatpush1.msra.mxu0 %v4572
        %v4574 = vand.u32 %v489, 4294901760
        %v4575 = vsub.f32 %v489, %v4574
        %v4576 = vand.u32 %v4575, 4294901760
        %4577 = vmatprep.subr.mxu0 %v4576
        %v4578 = vand.u32 %v488, 4294901760
        %v4579 = vsub.f32 %v488, %v4578
        %v4580 = vand.u32 %v4579, 4294901760
        %4581 = vmatpush1.msra.mxu0 %v4580
        %v4582 = vand.u32 %v485, 4294901760
        %v4583 = vsub.f32 %v485, %v4582
        %v4584 = vand.u32 %v4583, 4294901760
        %4585 = vmatprep.subr.mxu0 %v4584
        %v4586 = vand.u32 %v484, 4294901760
        %v4587 = vsub.f32 %v484, %v4586
        %v4588 = vand.u32 %v4587, 4294901760
        %4589 = vmatpush1.msra.mxu0 %v4588
        %v4590 = vand.u32 %v481, 4294901760
        %v4591 = vsub.f32 %v481, %v4590
        %v4592 = vand.u32 %v4591, 4294901760
        %4593 = vmatprep.subr.mxu0 %v4592
        %v4594 = vand.u32 %v480, 4294901760
        %v4595 = vsub.f32 %v480, %v4594
        %v4596 = vand.u32 %v4595, 4294901760
        %4597 = vmatpush1.msra.mxu0 %v4596
        %v4598 = vand.u32 %v477, 4294901760
        %v4599 = vsub.f32 %v477, %v4598
        %v4600 = vand.u32 %v4599, 4294901760
        %4601 = vmatprep.subr.mxu0 %v4600
        %v4602 = vand.u32 %v476, 4294901760
        %v4603 = vsub.f32 %v476, %v4602
        %v4604 = vand.u32 %v4603, 4294901760
        %4605 = vmatpush1.msra.mxu0 %v4604
        %v4606 = vand.u32 %v473, 4294901760
        %v4607 = vsub.f32 %v473, %v4606
        %v4608 = vand.u32 %v4607, 4294901760
        %4609 = vmatprep.subr.mxu0 %v4608
        %v4610 = vand.u32 %v472, 4294901760
        %v4611 = vsub.f32 %v472, %v4610
        %v4612 = vand.u32 %v4611, 4294901760
        %4613 = vmatpush1.msra.mxu0 %v4612
        %v4614 = vand.u32 %v469, 4294901760
        %v4615 = vsub.f32 %v469, %v4614
        %v4616 = vand.u32 %v4615, 4294901760
        %4617 = vmatprep.subr.mxu0 %v4616
        %v4618 = vand.u32 %v468, 4294901760
        %v4619 = vsub.f32 %v468, %v4618
        %v4620 = vand.u32 %v4619, 4294901760
        %4621 = vmatpush1.msra.mxu0 %v4620
        %v4622 = vand.u32 %v465, 4294901760
        %v4623 = vsub.f32 %v465, %v4622
        %v4624 = vand.u32 %v4623, 4294901760
        %4625 = vmatprep.subr.mxu0 %v4624
        %v4626 = vand.u32 %v464, 4294901760
        %v4627 = vsub.f32 %v464, %v4626
        %v4628 = vand.u32 %v4627, 4294901760
        %4629 = vmatpush1.msra.mxu0 %v4628
        %v4630 = vand.u32 %v461, 4294901760
        %v4631 = vsub.f32 %v461, %v4630
        %v4632 = vand.u32 %v4631, 4294901760
        %4633 = vmatprep.subr.mxu0 %v4632
        %v4634 = vand.u32 %v460, 4294901760
        %v4635 = vsub.f32 %v460, %v4634
        %v4636 = vand.u32 %v4635, 4294901760
        %4637 = vmatpush1.msra.mxu0 %v4636
        %v4638 = vand.u32 %v457, 4294901760
        %v4639 = vsub.f32 %v457, %v4638
        %v4640 = vand.u32 %v4639, 4294901760
        %4641 = vmatprep.subr.mxu0 %v4640
        %v4642 = vand.u32 %v456, 4294901760
        %v4643 = vsub.f32 %v456, %v4642
        %v4644 = vand.u32 %v4643, 4294901760
        %4645 = vmatpush1.msra.mxu0 %v4644
        %v4646 = vand.u32 %v453, 4294901760
        %v4647 = vsub.f32 %v453, %v4646
        %v4648 = vand.u32 %v4647, 4294901760
        %4649 = vmatprep.subr.mxu0 %v4648
        %v4650 = vand.u32 %v452, 4294901760
        %v4651 = vsub.f32 %v452, %v4650
        %v4652 = vand.u32 %v4651, 4294901760
        %4653 = vmatpush1.msra.mxu0 %v4652
        %v4654 = vand.u32 %v577, 4294901760
        %v4655 = vsub.f32 %v577, %v4654
        %v4656 = vand.u32 %v4655, 4294901760
        %4657 = vmatprep.subr.mxu0 %v4656
        %v4658 = vand.u32 %v576, 4294901760
        %v4659 = vsub.f32 %v576, %v4658
        %v4660 = vand.u32 %v4659, 4294901760
        %4661 = vmatpush2.msra.mxu0 %v4660
        %v4662 = vand.u32 %v573, 4294901760
        %v4663 = vsub.f32 %v573, %v4662
        %v4664 = vand.u32 %v4663, 4294901760
        %4665 = vmatprep.subr.mxu0 %v4664
        %v4666 = vand.u32 %v572, 4294901760
        %v4667 = vsub.f32 %v572, %v4666
        %v4668 = vand.u32 %v4667, 4294901760
        %4669 = vmatpush2.msra.mxu0 %v4668
        %v4670 = vand.u32 %v569, 4294901760
        %v4671 = vsub.f32 %v569, %v4670
        %v4672 = vand.u32 %v4671, 4294901760
        %4673 = vmatprep.subr.mxu0 %v4672
        %v4674 = vand.u32 %v568, 4294901760
        %v4675 = vsub.f32 %v568, %v4674
        %v4676 = vand.u32 %v4675, 4294901760
        %4677 = vmatpush2.msra.mxu0 %v4676
        %v4678 = vand.u32 %v565, 4294901760
        %v4679 = vsub.f32 %v565, %v4678
        %v4680 = vand.u32 %v4679, 4294901760
        %4681 = vmatprep.subr.mxu0 %v4680
        %v4682 = vand.u32 %v564, 4294901760
        %v4683 = vsub.f32 %v564, %v4682
        %v4684 = vand.u32 %v4683, 4294901760
        %4685 = vmatpush2.msra.mxu0 %v4684
        %v4686 = vand.u32 %v561, 4294901760
        %v4687 = vsub.f32 %v561, %v4686
        %v4688 = vand.u32 %v4687, 4294901760
        %4689 = vmatprep.subr.mxu0 %v4688
        %v4690 = vand.u32 %v560, 4294901760
        %v4691 = vsub.f32 %v560, %v4690
        %v4692 = vand.u32 %v4691, 4294901760
        %4693 = vmatpush2.msra.mxu0 %v4692
        %v4694 = vand.u32 %v557, 4294901760
        %v4695 = vsub.f32 %v557, %v4694
        %v4696 = vand.u32 %v4695, 4294901760
        %4697 = vmatprep.subr.mxu0 %v4696
        %v4698 = vand.u32 %v556, 4294901760
        %v4699 = vsub.f32 %v556, %v4698
        %v4700 = vand.u32 %v4699, 4294901760
        %4701 = vmatpush2.msra.mxu0 %v4700
        %v4702 = vand.u32 %v553, 4294901760
        %v4703 = vsub.f32 %v553, %v4702
        %v4704 = vand.u32 %v4703, 4294901760
        %4705 = vmatprep.subr.mxu0 %v4704
        %v4706 = vand.u32 %v552, 4294901760
        %v4707 = vsub.f32 %v552, %v4706
        %v4708 = vand.u32 %v4707, 4294901760
        %4709 = vmatpush2.msra.mxu0 %v4708
        %v4710 = vand.u32 %v549, 4294901760
        %v4711 = vsub.f32 %v549, %v4710
        %v4712 = vand.u32 %v4711, 4294901760
        %4713 = vmatprep.subr.mxu0 %v4712
        %v4714 = vand.u32 %v548, 4294901760
        %v4715 = vsub.f32 %v548, %v4714
        %v4716 = vand.u32 %v4715, 4294901760
        %4717 = vmatpush2.msra.mxu0 %v4716
        %v4718 = vand.u32 %v545, 4294901760
        %v4719 = vsub.f32 %v545, %v4718
        %v4720 = vand.u32 %v4719, 4294901760
        %4721 = vmatprep.subr.mxu0 %v4720
        %v4722 = vand.u32 %v544, 4294901760
        %v4723 = vsub.f32 %v544, %v4722
        %v4724 = vand.u32 %v4723, 4294901760
        %4725 = vmatpush2.msra.mxu0 %v4724
        %v4726 = vand.u32 %v541, 4294901760
        %v4727 = vsub.f32 %v541, %v4726
        %v4728 = vand.u32 %v4727, 4294901760
        %4729 = vmatprep.subr.mxu0 %v4728
        %v4730 = vand.u32 %v540, 4294901760
        %v4731 = vsub.f32 %v540, %v4730
        %v4732 = vand.u32 %v4731, 4294901760
        %4733 = vmatpush2.msra.mxu0 %v4732
        %v4734 = vand.u32 %v537, 4294901760
        %v4735 = vsub.f32 %v537, %v4734
        %v4736 = vand.u32 %v4735, 4294901760
        %4737 = vmatprep.subr.mxu0 %v4736
        %v4738 = vand.u32 %v536, 4294901760
        %v4739 = vsub.f32 %v536, %v4738
        %v4740 = vand.u32 %v4739, 4294901760
        %4741 = vmatpush2.msra.mxu0 %v4740
        %v4742 = vand.u32 %v533, 4294901760
        %v4743 = vsub.f32 %v533, %v4742
        %v4744 = vand.u32 %v4743, 4294901760
        %4745 = vmatprep.subr.mxu0 %v4744
        %v4746 = vand.u32 %v532, 4294901760
        %v4747 = vsub.f32 %v532, %v4746
        %v4748 = vand.u32 %v4747, 4294901760
        %4749 = vmatpush2.msra.mxu0 %v4748
        %v4750 = vand.u32 %v529, 4294901760
        %v4751 = vsub.f32 %v529, %v4750
        %v4752 = vand.u32 %v4751, 4294901760
        %4753 = vmatprep.subr.mxu0 %v4752
        %v4754 = vand.u32 %v528, 4294901760
        %v4755 = vsub.f32 %v528, %v4754
        %v4756 = vand.u32 %v4755, 4294901760
        %4757 = vmatpush2.msra.mxu0 %v4756
        %v4758 = vand.u32 %v525, 4294901760
        %v4759 = vsub.f32 %v525, %v4758
        %v4760 = vand.u32 %v4759, 4294901760
        %4761 = vmatprep.subr.mxu0 %v4760
        %v4762 = vand.u32 %v524, 4294901760
        %v4763 = vsub.f32 %v524, %v4762
        %v4764 = vand.u32 %v4763, 4294901760
        %4765 = vmatpush2.msra.mxu0 %v4764
        %v4766 = vand.u32 %v521, 4294901760
        %v4767 = vsub.f32 %v521, %v4766
        %v4768 = vand.u32 %v4767, 4294901760
        %4769 = vmatprep.subr.mxu0 %v4768
        %v4770 = vand.u32 %v520, 4294901760
        %v4771 = vsub.f32 %v520, %v4770
        %v4772 = vand.u32 %v4771, 4294901760
        %4773 = vmatpush2.msra.mxu0 %v4772
        %v4774 = vand.u32 %v517, 4294901760
        %v4775 = vsub.f32 %v517, %v4774
        %v4776 = vand.u32 %v4775, 4294901760
        %4777 = vmatprep.subr.mxu0 %v4776
        %v4778 = vand.u32 %v516, 4294901760
        %v4779 = vsub.f32 %v516, %v4778
        %v4780 = vand.u32 %v4779, 4294901760
        %4781 = vmatpush2.msra.mxu0 %v4780
        %v4782 = vand.u32 %v323, 4294901760
        %4783 = vmatprep.mubr.f32.mxu0 %v4782
        %v4784 = vand.u32 %v322, 4294901760
        %4785 = vmatmul.mubr.f32.gmra.mxu0 %v4784
        %v4786 = vpop.f32.mrf.mxu0
        %v4787 = vadd.f32 %v4522, %v4786
        %v4788 = vpop.f32.mrf.mxu0
        %v4789 = vadd.f32 %v4524, %v4788
        %4790 = vdwg.mxu0
        %v4791 = vand.u32 %v513, 4294901760
        %4792 = vmatprep.subr.mxu0 %v4791
        %v4793 = vand.u32 %v512, 4294901760
        %4794 = vmatpush1.msra.mxu0 %v4793
        %v4795 = vand.u32 %v509, 4294901760
        %4796 = vmatprep.subr.mxu0 %v4795
        %v4797 = vand.u32 %v508, 4294901760
        %4798 = vmatpush1.msra.mxu0 %v4797
        %v4799 = vand.u32 %v505, 4294901760
        %4800 = vmatprep.subr.mxu0 %v4799
        %v4801 = vand.u32 %v504, 4294901760
        %4802 = vmatpush1.msra.mxu0 %v4801
        %v4803 = vand.u32 %v501, 4294901760
        %4804 = vmatprep.subr.mxu0 %v4803
        %v4805 = vand.u32 %v500, 4294901760
        %4806 = vmatpush1.msra.mxu0 %v4805
        %v4807 = vand.u32 %v497, 4294901760
        %4808 = vmatprep.subr.mxu0 %v4807
        %v4809 = vand.u32 %v496, 4294901760
        %4810 = vmatpush1.msra.mxu0 %v4809
        %v4811 = vand.u32 %v493, 4294901760
        %4812 = vmatprep.subr.mxu0 %v4811
        %v4813 = vand.u32 %v492, 4294901760
        %4814 = vmatpush1.msra.mxu0 %v4813
        %v4815 = vand.u32 %v489, 4294901760
        %4816 = vmatprep.subr.mxu0 %v4815
        %v4817 = vand.u32 %v488, 4294901760
        %4818 = vmatpush1.msra.mxu0 %v4817
        %v4819 = vand.u32 %v485, 4294901760
        %4820 = vmatprep.subr.mxu0 %v4819
        %v4821 = vand.u32 %v484, 4294901760
        %4822 = vmatpush1.msra.mxu0 %v4821
        %v4823 = vand.u32 %v481, 4294901760
        %4824 = vmatprep.subr.mxu0 %v4823
        %v4825 = vand.u32 %v480, 4294901760
        %4826 = vmatpush1.msra.mxu0 %v4825
        %v4827 = vand.u32 %v477, 4294901760
        %4828 = vmatprep.subr.mxu0 %v4827
        %v4829 = vand.u32 %v476, 4294901760
        %4830 = vmatpush1.msra.mxu0 %v4829
        %v4831 = vand.u32 %v473, 4294901760
        %4832 = vmatprep.subr.mxu0 %v4831
        %v4833 = vand.u32 %v472, 4294901760
        %4834 = vmatpush1.msra.mxu0 %v4833
        %v4835 = vand.u32 %v469, 4294901760
        %4836 = vmatprep.subr.mxu0 %v4835
        %v4837 = vand.u32 %v468, 4294901760
        %4838 = vmatpush1.msra.mxu0 %v4837
        %v4839 = vand.u32 %v465, 4294901760
        %4840 = vmatprep.subr.mxu0 %v4839
        %v4841 = vand.u32 %v464, 4294901760
        %4842 = vmatpush1.msra.mxu0 %v4841
        %v4843 = vand.u32 %v461, 4294901760
        %4844 = vmatprep.subr.mxu0 %v4843
        %v4845 = vand.u32 %v460, 4294901760
        %4846 = vmatpush1.msra.mxu0 %v4845
        %v4847 = vand.u32 %v457, 4294901760
        %4848 = vmatprep.subr.mxu0 %v4847
        %v4849 = vand.u32 %v456, 4294901760
        %4850 = vmatpush1.msra.mxu0 %v4849
        %v4851 = vand.u32 %v453, 4294901760
        %4852 = vmatprep.subr.mxu0 %v4851
        %v4853 = vand.u32 %v452, 4294901760
        %4854 = vmatpush1.msra.mxu0 %v4853
        %v4855 = vand.u32 %v577, 4294901760
        %4856 = vmatprep.subr.mxu0 %v4855
        %v4857 = vand.u32 %v576, 4294901760
        %4858 = vmatpush2.msra.mxu0 %v4857
        %v4859 = vand.u32 %v573, 4294901760
        %4860 = vmatprep.subr.mxu0 %v4859
        %v4861 = vand.u32 %v572, 4294901760
        %4862 = vmatpush2.msra.mxu0 %v4861
        %v4863 = vand.u32 %v569, 4294901760
        %4864 = vmatprep.subr.mxu0 %v4863
        %v4865 = vand.u32 %v568, 4294901760
        %4866 = vmatpush2.msra.mxu0 %v4865
        %v4867 = vand.u32 %v565, 4294901760
        %4868 = vmatprep.subr.mxu0 %v4867
        %v4869 = vand.u32 %v564, 4294901760
        %4870 = vmatpush2.msra.mxu0 %v4869
        %v4871 = vand.u32 %v561, 4294901760
        %4872 = vmatprep.subr.mxu0 %v4871
        %v4873 = vand.u32 %v560, 4294901760
        %4874 = vmatpush2.msra.mxu0 %v4873
        %v4875 = vand.u32 %v557, 4294901760
        %4876 = vmatprep.subr.mxu0 %v4875
        %v4877 = vand.u32 %v556, 4294901760
        %4878 = vmatpush2.msra.mxu0 %v4877
        %v4879 = vand.u32 %v553, 4294901760
        %4880 = vmatprep.subr.mxu0 %v4879
        %v4881 = vand.u32 %v552, 4294901760
        %4882 = vmatpush2.msra.mxu0 %v4881
        %v4883 = vand.u32 %v549, 4294901760
        %4884 = vmatprep.subr.mxu0 %v4883
        %v4885 = vand.u32 %v548, 4294901760
        %4886 = vmatpush2.msra.mxu0 %v4885
        %v4887 = vand.u32 %v545, 4294901760
        %4888 = vmatprep.subr.mxu0 %v4887
        %v4889 = vand.u32 %v544, 4294901760
        %4890 = vmatpush2.msra.mxu0 %v4889
        %v4891 = vand.u32 %v541, 4294901760
        %4892 = vmatprep.subr.mxu0 %v4891
        %v4893 = vand.u32 %v540, 4294901760
        %4894 = vmatpush2.msra.mxu0 %v4893
        %v4895 = vand.u32 %v537, 4294901760
        %4896 = vmatprep.subr.mxu0 %v4895
        %v4897 = vand.u32 %v536, 4294901760
        %4898 = vmatpush2.msra.mxu0 %v4897
        %v4899 = vand.u32 %v533, 4294901760
        %4900 = vmatprep.subr.mxu0 %v4899
        %v4901 = vand.u32 %v532, 4294901760
        %4902 = vmatpush2.msra.mxu0 %v4901
        %v4903 = vand.u32 %v529, 4294901760
        %4904 = vmatprep.subr.mxu0 %v4903
        %v4905 = vand.u32 %v528, 4294901760
        %4906 = vmatpush2.msra.mxu0 %v4905
        %v4907 = vand.u32 %v525, 4294901760
        %4908 = vmatprep.subr.mxu0 %v4907
        %v4909 = vand.u32 %v524, 4294901760
        %4910 = vmatpush2.msra.mxu0 %v4909
        %v4911 = vand.u32 %v521, 4294901760
        %4912 = vmatprep.subr.mxu0 %v4911
        %v4913 = vand.u32 %v520, 4294901760
        %4914 = vmatpush2.msra.mxu0 %v4913
        %v4915 = vand.u32 %v517, 4294901760
        %4916 = vmatprep.subr.mxu0 %v4915
        %v4917 = vand.u32 %v516, 4294901760
        %4918 = vmatpush2.msra.mxu0 %v4917
        %v4919 = vand.u32 %v323, 4294901760
        %4920 = vmatprep.mubr.f32.mxu0 %v4919
        %v4921 = vand.u32 %v322, 4294901760
        %4922 = vmatmul.mubr.f32.gmra.mxu0 %v4921
        %v4923 = vpop.f32.mrf.mxu0
        %v4924 = vadd.f32 %v4787, %v4923
        %v4925 = vpop.f32.mrf.mxu0
        %v4926 = vadd.f32 %v4789, %v4925
        %4927 = vdwg.mxu0
        %v4928 = vand.u32 %v387, 4294901760
        %4929 = vmatprep.subr.mxu0 %v4928
        %v4930 = vand.u32 %v386, 4294901760
        %4931 = vmatpush1.msra.mxu0 %v4930
        %v4932 = vand.u32 %v383, 4294901760
        %4933 = vmatprep.subr.mxu0 %v4932
        %v4934 = vand.u32 %v382, 4294901760
        %4935 = vmatpush1.msra.mxu0 %v4934
        %v4936 = vand.u32 %v379, 4294901760
        %4937 = vmatprep.subr.mxu0 %v4936
        %v4938 = vand.u32 %v378, 4294901760
        %4939 = vmatpush1.msra.mxu0 %v4938
        %v4940 = vand.u32 %v375, 4294901760
        %4941 = vmatprep.subr.mxu0 %v4940
        %v4942 = vand.u32 %v374, 4294901760
        %4943 = vmatpush1.msra.mxu0 %v4942
        %v4944 = vand.u32 %v371, 4294901760
        %4945 = vmatprep.subr.mxu0 %v4944
        %v4946 = vand.u32 %v370, 4294901760
        %4947 = vmatpush1.msra.mxu0 %v4946
        %v4948 = vand.u32 %v367, 4294901760
        %4949 = vmatprep.subr.mxu0 %v4948
        %v4950 = vand.u32 %v366, 4294901760
        %4951 = vmatpush1.msra.mxu0 %v4950
        %v4952 = vand.u32 %v363, 4294901760
        %4953 = vmatprep.subr.mxu0 %v4952
        %v4954 = vand.u32 %v362, 4294901760
        %4955 = vmatpush1.msra.mxu0 %v4954
        %v4956 = vand.u32 %v359, 4294901760
        %4957 = vmatprep.subr.mxu0 %v4956
        %v4958 = vand.u32 %v358, 4294901760
        %4959 = vmatpush1.msra.mxu0 %v4958
        %v4960 = vand.u32 %v355, 4294901760
        %4961 = vmatprep.subr.mxu0 %v4960
        %v4962 = vand.u32 %v354, 4294901760
        %4963 = vmatpush1.msra.mxu0 %v4962
        %v4964 = vand.u32 %v351, 4294901760
        %4965 = vmatprep.subr.mxu0 %v4964
        %v4966 = vand.u32 %v350, 4294901760
        %4967 = vmatpush1.msra.mxu0 %v4966
        %v4968 = vand.u32 %v347, 4294901760
        %4969 = vmatprep.subr.mxu0 %v4968
        %v4970 = vand.u32 %v346, 4294901760
        %4971 = vmatpush1.msra.mxu0 %v4970
        %v4972 = vand.u32 %v343, 4294901760
        %4973 = vmatprep.subr.mxu0 %v4972
        %v4974 = vand.u32 %v342, 4294901760
        %4975 = vmatpush1.msra.mxu0 %v4974
        %v4976 = vand.u32 %v339, 4294901760
        %4977 = vmatprep.subr.mxu0 %v4976
        %v4978 = vand.u32 %v338, 4294901760
        %4979 = vmatpush1.msra.mxu0 %v4978
        %v4980 = vand.u32 %v335, 4294901760
        %4981 = vmatprep.subr.mxu0 %v4980
        %v4982 = vand.u32 %v334, 4294901760
        %4983 = vmatpush1.msra.mxu0 %v4982
        %v4984 = vand.u32 %v331, 4294901760
        %4985 = vmatprep.subr.mxu0 %v4984
        %v4986 = vand.u32 %v330, 4294901760
        %4987 = vmatpush1.msra.mxu0 %v4986
        %v4988 = vand.u32 %v327, 4294901760
        %4989 = vmatprep.subr.mxu0 %v4988
        %v4990 = vand.u32 %v326, 4294901760
        %4991 = vmatpush1.msra.mxu0 %v4990
        %v4992 = vand.u32 %v451, 4294901760
        %4993 = vmatprep.subr.mxu0 %v4992
        %v4994 = vand.u32 %v450, 4294901760
        %4995 = vmatpush2.msra.mxu0 %v4994
        %v4996 = vand.u32 %v447, 4294901760
        %4997 = vmatprep.subr.mxu0 %v4996
        %v4998 = vand.u32 %v446, 4294901760
        %4999 = vmatpush2.msra.mxu0 %v4998
        %v5000 = vand.u32 %v443, 4294901760
        %5001 = vmatprep.subr.mxu0 %v5000
        %v5002 = vand.u32 %v442, 4294901760
        %5003 = vmatpush2.msra.mxu0 %v5002
        %v5004 = vand.u32 %v439, 4294901760
        %5005 = vmatprep.subr.mxu0 %v5004
        %v5006 = vand.u32 %v438, 4294901760
        %5007 = vmatpush2.msra.mxu0 %v5006
        %v5008 = vand.u32 %v435, 4294901760
        %5009 = vmatprep.subr.mxu0 %v5008
        %v5010 = vand.u32 %v434, 4294901760
        %5011 = vmatpush2.msra.mxu0 %v5010
        %v5012 = vand.u32 %v431, 4294901760
        %5013 = vmatprep.subr.mxu0 %v5012
        %v5014 = vand.u32 %v430, 4294901760
        %5015 = vmatpush2.msra.mxu0 %v5014
        %v5016 = vand.u32 %v427, 4294901760
        %5017 = vmatprep.subr.mxu0 %v5016
        %v5018 = vand.u32 %v426, 4294901760
        %5019 = vmatpush2.msra.mxu0 %v5018
        %v5020 = vand.u32 %v423, 4294901760
        %5021 = vmatprep.subr.mxu0 %v5020
        %v5022 = vand.u32 %v422, 4294901760
        %5023 = vmatpush2.msra.mxu0 %v5022
        %v5024 = vand.u32 %v419, 4294901760
        %5025 = vmatprep.subr.mxu0 %v5024
        %v5026 = vand.u32 %v418, 4294901760
        %5027 = vmatpush2.msra.mxu0 %v5026
        %v5028 = vand.u32 %v415, 4294901760
        %5029 = vmatprep.subr.mxu0 %v5028
        %v5030 = vand.u32 %v414, 4294901760
        %5031 = vmatpush2.msra.mxu0 %v5030
        %v5032 = vand.u32 %v411, 4294901760
        %5033 = vmatprep.subr.mxu0 %v5032
        %v5034 = vand.u32 %v410, 4294901760
        %5035 = vmatpush2.msra.mxu0 %v5034
        %v5036 = vand.u32 %v407, 4294901760
        %5037 = vmatprep.subr.mxu0 %v5036
        %v5038 = vand.u32 %v406, 4294901760
        %5039 = vmatpush2.msra.mxu0 %v5038
        %v5040 = vand.u32 %v403, 4294901760
        %5041 = vmatprep.subr.mxu0 %v5040
        %v5042 = vand.u32 %v402, 4294901760
        %5043 = vmatpush2.msra.mxu0 %v5042
        %v5044 = vand.u32 %v399, 4294901760
        %5045 = vmatprep.subr.mxu0 %v5044
        %v5046 = vand.u32 %v398, 4294901760
        %5047 = vmatpush2.msra.mxu0 %v5046
        %v5048 = vand.u32 %v395, 4294901760
        %5049 = vmatprep.subr.mxu0 %v5048
        %v5050 = vand.u32 %v394, 4294901760
        %5051 = vmatpush2.msra.mxu0 %v5050
        %v5052 = vand.u32 %v391, 4294901760
        %5053 = vmatprep.subr.mxu0 %v5052
        %v5054 = vand.u32 %v390, 4294901760
        %5055 = vmatpush2.msra.mxu0 %v5054
        %v5056 = vand.u32 %v321, 4294901760
        %v5057 = vsub.f32 %v321, %v5056
        %v5058 = vand.u32 %v5057, 4294901760
        %v5059 = vsub.f32 %v5057, %v5058
        %v5060 = vand.u32 %v5059, 4294901760
        %5061 = vmatprep.mubr.f32.mxu0 %v5060
        %v5062 = vand.u32 %v320, 4294901760
        %v5063 = vsub.f32 %v320, %v5062
        %v5064 = vand.u32 %v5063, 4294901760
        %v5065 = vsub.f32 %v5063, %v5064
        %v5066 = vand.u32 %v5065, 4294901760
        %5067 = vmatmul.mubr.f32.gmra.mxu0 %v5066
        %v5068 = vpop.f32.mrf.mxu0
        %v5069 = vadd.f32 %v2356, %v5068
        %v5070 = vpop.f32.mrf.mxu0
        %v5071 = vadd.f32 %v2358, %v5070
        %5072 = vdwg.mxu0
        %v5073 = vand.u32 %v387, 4294901760
        %v5074 = vsub.f32 %v387, %v5073
        %v5075 = vand.u32 %v5074, 4294901760
        %v5076 = vsub.f32 %v5074, %v5075
        %v5077 = vand.u32 %v5076, 4294901760
        %5078 = vmatprep.subr.mxu0 %v5077
        %v5079 = vand.u32 %v386, 4294901760
        %v5080 = vsub.f32 %v386, %v5079
        %v5081 = vand.u32 %v5080, 4294901760
        %v5082 = vsub.f32 %v5080, %v5081
        %v5083 = vand.u32 %v5082, 4294901760
        %5084 = vmatpush1.msra.mxu0 %v5083
        %v5085 = vand.u32 %v383, 4294901760
        %v5086 = vsub.f32 %v383, %v5085
        %v5087 = vand.u32 %v5086, 4294901760
        %v5088 = vsub.f32 %v5086, %v5087
        %v5089 = vand.u32 %v5088, 4294901760
        %5090 = vmatprep.subr.mxu0 %v5089
        %v5091 = vand.u32 %v382, 4294901760
        %v5092 = vsub.f32 %v382, %v5091
        %v5093 = vand.u32 %v5092, 4294901760
        %v5094 = vsub.f32 %v5092, %v5093
        %v5095 = vand.u32 %v5094, 4294901760
        %5096 = vmatpush1.msra.mxu0 %v5095
        %v5097 = vand.u32 %v379, 4294901760
        %v5098 = vsub.f32 %v379, %v5097
        %v5099 = vand.u32 %v5098, 4294901760
        %v5100 = vsub.f32 %v5098, %v5099
        %v5101 = vand.u32 %v5100, 4294901760
        %5102 = vmatprep.subr.mxu0 %v5101
        %v5103 = vand.u32 %v378, 4294901760
        %v5104 = vsub.f32 %v378, %v5103
        %v5105 = vand.u32 %v5104, 4294901760
        %v5106 = vsub.f32 %v5104, %v5105
        %v5107 = vand.u32 %v5106, 4294901760
        %5108 = vmatpush1.msra.mxu0 %v5107
        %v5109 = vand.u32 %v375, 4294901760
        %v5110 = vsub.f32 %v375, %v5109
        %v5111 = vand.u32 %v5110, 4294901760
        %v5112 = vsub.f32 %v5110, %v5111
        %v5113 = vand.u32 %v5112, 4294901760
        %5114 = vmatprep.subr.mxu0 %v5113
        %v5115 = vand.u32 %v374, 4294901760
        %v5116 = vsub.f32 %v374, %v5115
        %v5117 = vand.u32 %v5116, 4294901760
        %v5118 = vsub.f32 %v5116, %v5117
        %v5119 = vand.u32 %v5118, 4294901760
        %5120 = vmatpush1.msra.mxu0 %v5119
        %v5121 = vand.u32 %v371, 4294901760
        %v5122 = vsub.f32 %v371, %v5121
        %v5123 = vand.u32 %v5122, 4294901760
        %v5124 = vsub.f32 %v5122, %v5123
        %v5125 = vand.u32 %v5124, 4294901760
        %5126 = vmatprep.subr.mxu0 %v5125
        %v5127 = vand.u32 %v370, 4294901760
        %v5128 = vsub.f32 %v370, %v5127
        %v5129 = vand.u32 %v5128, 4294901760
        %v5130 = vsub.f32 %v5128, %v5129
        %v5131 = vand.u32 %v5130, 4294901760
        %5132 = vmatpush1.msra.mxu0 %v5131
        %v5133 = vand.u32 %v367, 4294901760
        %v5134 = vsub.f32 %v367, %v5133
        %v5135 = vand.u32 %v5134, 4294901760
        %v5136 = vsub.f32 %v5134, %v5135
        %v5137 = vand.u32 %v5136, 4294901760
        %5138 = vmatprep.subr.mxu0 %v5137
        %v5139 = vand.u32 %v366, 4294901760
        %v5140 = vsub.f32 %v366, %v5139
        %v5141 = vand.u32 %v5140, 4294901760
        %v5142 = vsub.f32 %v5140, %v5141
        %v5143 = vand.u32 %v5142, 4294901760
        %5144 = vmatpush1.msra.mxu0 %v5143
        %v5145 = vand.u32 %v363, 4294901760
        %v5146 = vsub.f32 %v363, %v5145
        %v5147 = vand.u32 %v5146, 4294901760
        %v5148 = vsub.f32 %v5146, %v5147
        %v5149 = vand.u32 %v5148, 4294901760
        %5150 = vmatprep.subr.mxu0 %v5149
        %v5151 = vand.u32 %v362, 4294901760
        %v5152 = vsub.f32 %v362, %v5151
        %v5153 = vand.u32 %v5152, 4294901760
        %v5154 = vsub.f32 %v5152, %v5153
        %v5155 = vand.u32 %v5154, 4294901760
        %5156 = vmatpush1.msra.mxu0 %v5155
        %v5157 = vand.u32 %v359, 4294901760
        %v5158 = vsub.f32 %v359, %v5157
        %v5159 = vand.u32 %v5158, 4294901760
        %v5160 = vsub.f32 %v5158, %v5159
        %v5161 = vand.u32 %v5160, 4294901760
        %5162 = vmatprep.subr.mxu0 %v5161
        %v5163 = vand.u32 %v358, 4294901760
        %v5164 = vsub.f32 %v358, %v5163
        %v5165 = vand.u32 %v5164, 4294901760
        %v5166 = vsub.f32 %v5164, %v5165
        %v5167 = vand.u32 %v5166, 4294901760
        %5168 = vmatpush1.msra.mxu0 %v5167
        %v5169 = vand.u32 %v355, 4294901760
        %v5170 = vsub.f32 %v355, %v5169
        %v5171 = vand.u32 %v5170, 4294901760
        %v5172 = vsub.f32 %v5170, %v5171
        %v5173 = vand.u32 %v5172, 4294901760
        %5174 = vmatprep.subr.mxu0 %v5173
        %v5175 = vand.u32 %v354, 4294901760
        %v5176 = vsub.f32 %v354, %v5175
        %v5177 = vand.u32 %v5176, 4294901760
        %v5178 = vsub.f32 %v5176, %v5177
        %v5179 = vand.u32 %v5178, 4294901760
        %5180 = vmatpush1.msra.mxu0 %v5179
        %v5181 = vand.u32 %v351, 4294901760
        %v5182 = vsub.f32 %v351, %v5181
        %v5183 = vand.u32 %v5182, 4294901760
        %v5184 = vsub.f32 %v5182, %v5183
        %v5185 = vand.u32 %v5184, 4294901760
        %5186 = vmatprep.subr.mxu0 %v5185
        %v5187 = vand.u32 %v350, 4294901760
        %v5188 = vsub.f32 %v350, %v5187
        %v5189 = vand.u32 %v5188, 4294901760
        %v5190 = vsub.f32 %v5188, %v5189
        %v5191 = vand.u32 %v5190, 4294901760
        %5192 = vmatpush1.msra.mxu0 %v5191
        %v5193 = vand.u32 %v347, 4294901760
        %v5194 = vsub.f32 %v347, %v5193
        %v5195 = vand.u32 %v5194, 4294901760
        %v5196 = vsub.f32 %v5194, %v5195
        %v5197 = vand.u32 %v5196, 4294901760
        %5198 = vmatprep.subr.mxu0 %v5197
        %v5199 = vand.u32 %v346, 4294901760
        %v5200 = vsub.f32 %v346, %v5199
        %v5201 = vand.u32 %v5200, 4294901760
        %v5202 = vsub.f32 %v5200, %v5201
        %v5203 = vand.u32 %v5202, 4294901760
        %5204 = vmatpush1.msra.mxu0 %v5203
        %v5205 = vand.u32 %v343, 4294901760
        %v5206 = vsub.f32 %v343, %v5205
        %v5207 = vand.u32 %v5206, 4294901760
        %v5208 = vsub.f32 %v5206, %v5207
        %v5209 = vand.u32 %v5208, 4294901760
        %5210 = vmatprep.subr.mxu0 %v5209
        %v5211 = vand.u32 %v342, 4294901760
        %v5212 = vsub.f32 %v342, %v5211
        %v5213 = vand.u32 %v5212, 4294901760
        %v5214 = vsub.f32 %v5212, %v5213
        %v5215 = vand.u32 %v5214, 4294901760
        %5216 = vmatpush1.msra.mxu0 %v5215
        %v5217 = vand.u32 %v339, 4294901760
        %v5218 = vsub.f32 %v339, %v5217
        %v5219 = vand.u32 %v5218, 4294901760
        %v5220 = vsub.f32 %v5218, %v5219
        %v5221 = vand.u32 %v5220, 4294901760
        %5222 = vmatprep.subr.mxu0 %v5221
        %v5223 = vand.u32 %v338, 4294901760
        %v5224 = vsub.f32 %v338, %v5223
        %v5225 = vand.u32 %v5224, 4294901760
        %v5226 = vsub.f32 %v5224, %v5225
        %v5227 = vand.u32 %v5226, 4294901760
        %5228 = vmatpush1.msra.mxu0 %v5227
        %v5229 = vand.u32 %v335, 4294901760
        %v5230 = vsub.f32 %v335, %v5229
        %v5231 = vand.u32 %v5230, 4294901760
        %v5232 = vsub.f32 %v5230, %v5231
        %v5233 = vand.u32 %v5232, 4294901760
        %5234 = vmatprep.subr.mxu0 %v5233
        %v5235 = vand.u32 %v334, 4294901760
        %v5236 = vsub.f32 %v334, %v5235
        %v5237 = vand.u32 %v5236, 4294901760
        %v5238 = vsub.f32 %v5236, %v5237
        %v5239 = vand.u32 %v5238, 4294901760
        %5240 = vmatpush1.msra.mxu0 %v5239
        %v5241 = vand.u32 %v331, 4294901760
        %v5242 = vsub.f32 %v331, %v5241
        %v5243 = vand.u32 %v5242, 4294901760
        %v5244 = vsub.f32 %v5242, %v5243
        %v5245 = vand.u32 %v5244, 4294901760
        %5246 = vmatprep.subr.mxu0 %v5245
        %v5247 = vand.u32 %v330, 4294901760
        %v5248 = vsub.f32 %v330, %v5247
        %v5249 = vand.u32 %v5248, 4294901760
        %v5250 = vsub.f32 %v5248, %v5249
        %v5251 = vand.u32 %v5250, 4294901760
        %5252 = vmatpush1.msra.mxu0 %v5251
        %v5253 = vand.u32 %v327, 4294901760
        %v5254 = vsub.f32 %v327, %v5253
        %v5255 = vand.u32 %v5254, 4294901760
        %v5256 = vsub.f32 %v5254, %v5255
        %v5257 = vand.u32 %v5256, 4294901760
        %5258 = vmatprep.subr.mxu0 %v5257
        %v5259 = vand.u32 %v326, 4294901760
        %v5260 = vsub.f32 %v326, %v5259
        %v5261 = vand.u32 %v5260, 4294901760
        %v5262 = vsub.f32 %v5260, %v5261
        %v5263 = vand.u32 %v5262, 4294901760
        %5264 = vmatpush1.msra.mxu0 %v5263
        %v5265 = vand.u32 %v451, 4294901760
        %v5266 = vsub.f32 %v451, %v5265
        %v5267 = vand.u32 %v5266, 4294901760
        %v5268 = vsub.f32 %v5266, %v5267
        %v5269 = vand.u32 %v5268, 4294901760
        %5270 = vmatprep.subr.mxu0 %v5269
        %v5271 = vand.u32 %v450, 4294901760
        %v5272 = vsub.f32 %v450, %v5271
        %v5273 = vand.u32 %v5272, 4294901760
        %v5274 = vsub.f32 %v5272, %v5273
        %v5275 = vand.u32 %v5274, 4294901760
        %5276 = vmatpush2.msra.mxu0 %v5275
        %v5277 = vand.u32 %v447, 4294901760
        %v5278 = vsub.f32 %v447, %v5277
        %v5279 = vand.u32 %v5278, 4294901760
        %v5280 = vsub.f32 %v5278, %v5279
        %v5281 = vand.u32 %v5280, 4294901760
        %5282 = vmatprep.subr.mxu0 %v5281
        %v5283 = vand.u32 %v446, 4294901760
        %v5284 = vsub.f32 %v446, %v5283
        %v5285 = vand.u32 %v5284, 4294901760
        %v5286 = vsub.f32 %v5284, %v5285
        %v5287 = vand.u32 %v5286, 4294901760
        %5288 = vmatpush2.msra.mxu0 %v5287
        %v5289 = vand.u32 %v443, 4294901760
        %v5290 = vsub.f32 %v443, %v5289
        %v5291 = vand.u32 %v5290, 4294901760
        %v5292 = vsub.f32 %v5290, %v5291
        %v5293 = vand.u32 %v5292, 4294901760
        %5294 = vmatprep.subr.mxu0 %v5293
        %v5295 = vand.u32 %v442, 4294901760
        %v5296 = vsub.f32 %v442, %v5295
        %v5297 = vand.u32 %v5296, 4294901760
        %v5298 = vsub.f32 %v5296, %v5297
        %v5299 = vand.u32 %v5298, 4294901760
        %5300 = vmatpush2.msra.mxu0 %v5299
        %v5301 = vand.u32 %v439, 4294901760
        %v5302 = vsub.f32 %v439, %v5301
        %v5303 = vand.u32 %v5302, 4294901760
        %v5304 = vsub.f32 %v5302, %v5303
        %v5305 = vand.u32 %v5304, 4294901760
        %5306 = vmatprep.subr.mxu0 %v5305
        %v5307 = vand.u32 %v438, 4294901760
        %v5308 = vsub.f32 %v438, %v5307
        %v5309 = vand.u32 %v5308, 4294901760
        %v5310 = vsub.f32 %v5308, %v5309
        %v5311 = vand.u32 %v5310, 4294901760
        %5312 = vmatpush2.msra.mxu0 %v5311
        %v5313 = vand.u32 %v435, 4294901760
        %v5314 = vsub.f32 %v435, %v5313
        %v5315 = vand.u32 %v5314, 4294901760
        %v5316 = vsub.f32 %v5314, %v5315
        %v5317 = vand.u32 %v5316, 4294901760
        %5318 = vmatprep.subr.mxu0 %v5317
        %v5319 = vand.u32 %v434, 4294901760
        %v5320 = vsub.f32 %v434, %v5319
        %v5321 = vand.u32 %v5320, 4294901760
        %v5322 = vsub.f32 %v5320, %v5321
        %v5323 = vand.u32 %v5322, 4294901760
        %5324 = vmatpush2.msra.mxu0 %v5323
        %v5325 = vand.u32 %v431, 4294901760
        %v5326 = vsub.f32 %v431, %v5325
        %v5327 = vand.u32 %v5326, 4294901760
        %v5328 = vsub.f32 %v5326, %v5327
        %v5329 = vand.u32 %v5328, 4294901760
        %5330 = vmatprep.subr.mxu0 %v5329
        %v5331 = vand.u32 %v430, 4294901760
        %v5332 = vsub.f32 %v430, %v5331
        %v5333 = vand.u32 %v5332, 4294901760
        %v5334 = vsub.f32 %v5332, %v5333
        %v5335 = vand.u32 %v5334, 4294901760
        %5336 = vmatpush2.msra.mxu0 %v5335
        %v5337 = vand.u32 %v427, 4294901760
        %v5338 = vsub.f32 %v427, %v5337
        %v5339 = vand.u32 %v5338, 4294901760
        %v5340 = vsub.f32 %v5338, %v5339
        %v5341 = vand.u32 %v5340, 4294901760
        %5342 = vmatprep.subr.mxu0 %v5341
        %v5343 = vand.u32 %v426, 4294901760
        %v5344 = vsub.f32 %v426, %v5343
        %v5345 = vand.u32 %v5344, 4294901760
        %v5346 = vsub.f32 %v5344, %v5345
        %v5347 = vand.u32 %v5346, 4294901760
        %5348 = vmatpush2.msra.mxu0 %v5347
        %v5349 = vand.u32 %v423, 4294901760
        %v5350 = vsub.f32 %v423, %v5349
        %v5351 = vand.u32 %v5350, 4294901760
        %v5352 = vsub.f32 %v5350, %v5351
        %v5353 = vand.u32 %v5352, 4294901760
        %5354 = vmatprep.subr.mxu0 %v5353
        %v5355 = vand.u32 %v422, 4294901760
        %v5356 = vsub.f32 %v422, %v5355
        %v5357 = vand.u32 %v5356, 4294901760
        %v5358 = vsub.f32 %v5356, %v5357
        %v5359 = vand.u32 %v5358, 4294901760
        %5360 = vmatpush2.msra.mxu0 %v5359
        %v5361 = vand.u32 %v419, 4294901760
        %v5362 = vsub.f32 %v419, %v5361
        %v5363 = vand.u32 %v5362, 4294901760
        %v5364 = vsub.f32 %v5362, %v5363
        %v5365 = vand.u32 %v5364, 4294901760
        %5366 = vmatprep.subr.mxu0 %v5365
        %v5367 = vand.u32 %v418, 4294901760
        %v5368 = vsub.f32 %v418, %v5367
        %v5369 = vand.u32 %v5368, 4294901760
        %v5370 = vsub.f32 %v5368, %v5369
        %v5371 = vand.u32 %v5370, 4294901760
        %5372 = vmatpush2.msra.mxu0 %v5371
        %v5373 = vand.u32 %v415, 4294901760
        %v5374 = vsub.f32 %v415, %v5373
        %v5375 = vand.u32 %v5374, 4294901760
        %v5376 = vsub.f32 %v5374, %v5375
        %v5377 = vand.u32 %v5376, 4294901760
        %5378 = vmatprep.subr.mxu0 %v5377
        %v5379 = vand.u32 %v414, 4294901760
        %v5380 = vsub.f32 %v414, %v5379
        %v5381 = vand.u32 %v5380, 4294901760
        %v5382 = vsub.f32 %v5380, %v5381
        %v5383 = vand.u32 %v5382, 4294901760
        %5384 = vmatpush2.msra.mxu0 %v5383
        %v5385 = vand.u32 %v411, 4294901760
        %v5386 = vsub.f32 %v411, %v5385
        %v5387 = vand.u32 %v5386, 4294901760
        %v5388 = vsub.f32 %v5386, %v5387
        %v5389 = vand.u32 %v5388, 4294901760
        %5390 = vmatprep.subr.mxu0 %v5389
        %v5391 = vand.u32 %v410, 4294901760
        %v5392 = vsub.f32 %v410, %v5391
        %v5393 = vand.u32 %v5392, 4294901760
        %v5394 = vsub.f32 %v5392, %v5393
        %v5395 = vand.u32 %v5394, 4294901760
        %5396 = vmatpush2.msra.mxu0 %v5395
        %v5397 = vand.u32 %v407, 4294901760
        %v5398 = vsub.f32 %v407, %v5397
        %v5399 = vand.u32 %v5398, 4294901760
        %v5400 = vsub.f32 %v5398, %v5399
        %v5401 = vand.u32 %v5400, 4294901760
        %5402 = vmatprep.subr.mxu0 %v5401
        %v5403 = vand.u32 %v406, 4294901760
        %v5404 = vsub.f32 %v406, %v5403
        %v5405 = vand.u32 %v5404, 4294901760
        %v5406 = vsub.f32 %v5404, %v5405
        %v5407 = vand.u32 %v5406, 4294901760
        %5408 = vmatpush2.msra.mxu0 %v5407
        %v5409 = vand.u32 %v403, 4294901760
        %v5410 = vsub.f32 %v403, %v5409
        %v5411 = vand.u32 %v5410, 4294901760
        %v5412 = vsub.f32 %v5410, %v5411
        %v5413 = vand.u32 %v5412, 4294901760
        %5414 = vmatprep.subr.mxu0 %v5413
        %v5415 = vand.u32 %v402, 4294901760
        %v5416 = vsub.f32 %v402, %v5415
        %v5417 = vand.u32 %v5416, 4294901760
        %v5418 = vsub.f32 %v5416, %v5417
        %v5419 = vand.u32 %v5418, 4294901760
        %5420 = vmatpush2.msra.mxu0 %v5419
        %v5421 = vand.u32 %v399, 4294901760
        %v5422 = vsub.f32 %v399, %v5421
        %v5423 = vand.u32 %v5422, 4294901760
        %v5424 = vsub.f32 %v5422, %v5423
        %v5425 = vand.u32 %v5424, 4294901760
        %5426 = vmatprep.subr.mxu0 %v5425
        %v5427 = vand.u32 %v398, 4294901760
        %v5428 = vsub.f32 %v398, %v5427
        %v5429 = vand.u32 %v5428, 4294901760
        %v5430 = vsub.f32 %v5428, %v5429
        %v5431 = vand.u32 %v5430, 4294901760
        %5432 = vmatpush2.msra.mxu0 %v5431
        %v5433 = vand.u32 %v395, 4294901760
        %v5434 = vsub.f32 %v395, %v5433
        %v5435 = vand.u32 %v5434, 4294901760
        %v5436 = vsub.f32 %v5434, %v5435
        %v5437 = vand.u32 %v5436, 4294901760
        %5438 = vmatprep.subr.mxu0 %v5437
        %v5439 = vand.u32 %v394, 4294901760
        %v5440 = vsub.f32 %v394, %v5439
        %v5441 = vand.u32 %v5440, 4294901760
        %v5442 = vsub.f32 %v5440, %v5441
        %v5443 = vand.u32 %v5442, 4294901760
        %5444 = vmatpush2.msra.mxu0 %v5443
        %v5445 = vand.u32 %v391, 4294901760
        %v5446 = vsub.f32 %v391, %v5445
        %v5447 = vand.u32 %v5446, 4294901760
        %v5448 = vsub.f32 %v5446, %v5447
        %v5449 = vand.u32 %v5448, 4294901760
        %5450 = vmatprep.subr.mxu0 %v5449
        %v5451 = vand.u32 %v390, 4294901760
        %v5452 = vsub.f32 %v390, %v5451
        %v5453 = vand.u32 %v5452, 4294901760
        %v5454 = vsub.f32 %v5452, %v5453
        %v5455 = vand.u32 %v5454, 4294901760
        %5456 = vmatpush2.msra.mxu0 %v5455
        %v5457 = vand.u32 %v321, 4294901760
        %5458 = vmatprep.mubr.f32.mxu0 %v5457
        %v5459 = vand.u32 %v320, 4294901760
        %5460 = vmatmul.mubr.f32.gmra.mxu0 %v5459
        %v5461 = vpop.f32.mrf.mxu0
        %v5462 = vadd.f32 %v5069, %v5461
        %v5463 = vpop.f32.mrf.mxu0
        %v5464 = vadd.f32 %v5071, %v5463
        %5465 = vdwg.mxu0
        %v5466 = vand.u32 %v387, 4294901760
        %v5467 = vsub.f32 %v387, %v5466
        %5468 = vmatprep.subr.mxu0 %v5467
        %v5469 = vand.u32 %v386, 4294901760
        %v5470 = vsub.f32 %v386, %v5469
        %5471 = vmatpush1.msra.mxu0 %v5470
        %v5472 = vand.u32 %v383, 4294901760
        %v5473 = vsub.f32 %v383, %v5472
        %5474 = vmatprep.subr.mxu0 %v5473
        %v5475 = vand.u32 %v382, 4294901760
        %v5476 = vsub.f32 %v382, %v5475
        %5477 = vmatpush1.msra.mxu0 %v5476
        %v5478 = vand.u32 %v379, 4294901760
        %v5479 = vsub.f32 %v379, %v5478
        %5480 = vmatprep.subr.mxu0 %v5479
        %v5481 = vand.u32 %v378, 4294901760
        %v5482 = vsub.f32 %v378, %v5481
        %5483 = vmatpush1.msra.mxu0 %v5482
        %v5484 = vand.u32 %v375, 4294901760
        %v5485 = vsub.f32 %v375, %v5484
        %5486 = vmatprep.subr.mxu0 %v5485
        %v5487 = vand.u32 %v374, 4294901760
        %v5488 = vsub.f32 %v374, %v5487
        %5489 = vmatpush1.msra.mxu0 %v5488
        %v5490 = vand.u32 %v371, 4294901760
        %v5491 = vsub.f32 %v371, %v5490
        %5492 = vmatprep.subr.mxu0 %v5491
        %v5493 = vand.u32 %v370, 4294901760
        %v5494 = vsub.f32 %v370, %v5493
        %5495 = vmatpush1.msra.mxu0 %v5494
        %v5496 = vand.u32 %v367, 4294901760
        %v5497 = vsub.f32 %v367, %v5496
        %5498 = vmatprep.subr.mxu0 %v5497
        %v5499 = vand.u32 %v366, 4294901760
        %v5500 = vsub.f32 %v366, %v5499
        %5501 = vmatpush1.msra.mxu0 %v5500
        %v5502 = vand.u32 %v363, 4294901760
        %v5503 = vsub.f32 %v363, %v5502
        %5504 = vmatprep.subr.mxu0 %v5503
        %v5505 = vand.u32 %v362, 4294901760
        %v5506 = vsub.f32 %v362, %v5505
        %5507 = vmatpush1.msra.mxu0 %v5506
        %v5508 = vand.u32 %v359, 4294901760
        %v5509 = vsub.f32 %v359, %v5508
        %5510 = vmatprep.subr.mxu0 %v5509
        %v5511 = vand.u32 %v358, 4294901760
        %v5512 = vsub.f32 %v358, %v5511
        %5513 = vmatpush1.msra.mxu0 %v5512
        %v5514 = vand.u32 %v355, 4294901760
        %v5515 = vsub.f32 %v355, %v5514
        %5516 = vmatprep.subr.mxu0 %v5515
        %v5517 = vand.u32 %v354, 4294901760
        %v5518 = vsub.f32 %v354, %v5517
        %5519 = vmatpush1.msra.mxu0 %v5518
        %v5520 = vand.u32 %v351, 4294901760
        %v5521 = vsub.f32 %v351, %v5520
        %5522 = vmatprep.subr.mxu0 %v5521
        %v5523 = vand.u32 %v350, 4294901760
        %v5524 = vsub.f32 %v350, %v5523
        %5525 = vmatpush1.msra.mxu0 %v5524
        %v5526 = vand.u32 %v347, 4294901760
        %v5527 = vsub.f32 %v347, %v5526
        %5528 = vmatprep.subr.mxu0 %v5527
        %v5529 = vand.u32 %v346, 4294901760
        %v5530 = vsub.f32 %v346, %v5529
        %5531 = vmatpush1.msra.mxu0 %v5530
        %v5532 = vand.u32 %v343, 4294901760
        %v5533 = vsub.f32 %v343, %v5532
        %5534 = vmatprep.subr.mxu0 %v5533
        %v5535 = vand.u32 %v342, 4294901760
        %v5536 = vsub.f32 %v342, %v5535
        %5537 = vmatpush1.msra.mxu0 %v5536
        %v5538 = vand.u32 %v339, 4294901760
        %v5539 = vsub.f32 %v339, %v5538
        %5540 = vmatprep.subr.mxu0 %v5539
        %v5541 = vand.u32 %v338, 4294901760
        %v5542 = vsub.f32 %v338, %v5541
        %5543 = vmatpush1.msra.mxu0 %v5542
        %v5544 = vand.u32 %v335, 4294901760
        %v5545 = vsub.f32 %v335, %v5544
        %5546 = vmatprep.subr.mxu0 %v5545
        %v5547 = vand.u32 %v334, 4294901760
        %v5548 = vsub.f32 %v334, %v5547
        %5549 = vmatpush1.msra.mxu0 %v5548
        %v5550 = vand.u32 %v331, 4294901760
        %v5551 = vsub.f32 %v331, %v5550
        %5552 = vmatprep.subr.mxu0 %v5551
        %v5553 = vand.u32 %v330, 4294901760
        %v5554 = vsub.f32 %v330, %v5553
        %5555 = vmatpush1.msra.mxu0 %v5554
        %v5556 = vand.u32 %v327, 4294901760
        %v5557 = vsub.f32 %v327, %v5556
        %5558 = vmatprep.subr.mxu0 %v5557
        %v5559 = vand.u32 %v326, 4294901760
        %v5560 = vsub.f32 %v326, %v5559
        %5561 = vmatpush1.msra.mxu0 %v5560
        %v5562 = vand.u32 %v451, 4294901760
        %v5563 = vsub.f32 %v451, %v5562
        %5564 = vmatprep.subr.mxu0 %v5563
        %v5565 = vand.u32 %v450, 4294901760
        %v5566 = vsub.f32 %v450, %v5565
        %5567 = vmatpush2.msra.mxu0 %v5566
        %v5568 = vand.u32 %v447, 4294901760
        %v5569 = vsub.f32 %v447, %v5568
        %5570 = vmatprep.subr.mxu0 %v5569
        %v5571 = vand.u32 %v446, 4294901760
        %v5572 = vsub.f32 %v446, %v5571
        %5573 = vmatpush2.msra.mxu0 %v5572
        %v5574 = vand.u32 %v443, 4294901760
        %v5575 = vsub.f32 %v443, %v5574
        %5576 = vmatprep.subr.mxu0 %v5575
        %v5577 = vand.u32 %v442, 4294901760
        %v5578 = vsub.f32 %v442, %v5577
        %5579 = vmatpush2.msra.mxu0 %v5578
        %v5580 = vand.u32 %v439, 4294901760
        %v5581 = vsub.f32 %v439, %v5580
        %5582 = vmatprep.subr.mxu0 %v5581
        %v5583 = vand.u32 %v438, 4294901760
        %v5584 = vsub.f32 %v438, %v5583
        %5585 = vmatpush2.msra.mxu0 %v5584
        %v5586 = vand.u32 %v435, 4294901760
        %v5587 = vsub.f32 %v435, %v5586
        %5588 = vmatprep.subr.mxu0 %v5587
        %v5589 = vand.u32 %v434, 4294901760
        %v5590 = vsub.f32 %v434, %v5589
        %5591 = vmatpush2.msra.mxu0 %v5590
        %v5592 = vand.u32 %v431, 4294901760
        %v5593 = vsub.f32 %v431, %v5592
        %5594 = vmatprep.subr.mxu0 %v5593
        %v5595 = vand.u32 %v430, 4294901760
        %v5596 = vsub.f32 %v430, %v5595
        %5597 = vmatpush2.msra.mxu0 %v5596
        %v5598 = vand.u32 %v427, 4294901760
        %v5599 = vsub.f32 %v427, %v5598
        %5600 = vmatprep.subr.mxu0 %v5599
        %v5601 = vand.u32 %v426, 4294901760
        %v5602 = vsub.f32 %v426, %v5601
        %5603 = vmatpush2.msra.mxu0 %v5602
        %v5604 = vand.u32 %v423, 4294901760
        %v5605 = vsub.f32 %v423, %v5604
        %5606 = vmatprep.subr.mxu0 %v5605
        %v5607 = vand.u32 %v422, 4294901760
        %v5608 = vsub.f32 %v422, %v5607
        %5609 = vmatpush2.msra.mxu0 %v5608
        %v5610 = vand.u32 %v419, 4294901760
        %v5611 = vsub.f32 %v419, %v5610
        %5612 = vmatprep.subr.mxu0 %v5611
        %v5613 = vand.u32 %v418, 4294901760
        %v5614 = vsub.f32 %v418, %v5613
        %5615 = vmatpush2.msra.mxu0 %v5614
        %v5616 = vand.u32 %v415, 4294901760
        %v5617 = vsub.f32 %v415, %v5616
        %5618 = vmatprep.subr.mxu0 %v5617
        %v5619 = vand.u32 %v414, 4294901760
        %v5620 = vsub.f32 %v414, %v5619
        %5621 = vmatpush2.msra.mxu0 %v5620
        %v5622 = vand.u32 %v411, 4294901760
        %v5623 = vsub.f32 %v411, %v5622
        %5624 = vmatprep.subr.mxu0 %v5623
        %v5625 = vand.u32 %v410, 4294901760
        %v5626 = vsub.f32 %v410, %v5625
        %5627 = vmatpush2.msra.mxu0 %v5626
        %v5628 = vand.u32 %v407, 4294901760
        %v5629 = vsub.f32 %v407, %v5628
        %5630 = vmatprep.subr.mxu0 %v5629
        %v5631 = vand.u32 %v406, 4294901760
        %v5632 = vsub.f32 %v406, %v5631
        %5633 = vmatpush2.msra.mxu0 %v5632
        %v5634 = vand.u32 %v403, 4294901760
        %v5635 = vsub.f32 %v403, %v5634
        %5636 = vmatprep.subr.mxu0 %v5635
        %v5637 = vand.u32 %v402, 4294901760
        %v5638 = vsub.f32 %v402, %v5637
        %5639 = vmatpush2.msra.mxu0 %v5638
        %v5640 = vand.u32 %v399, 4294901760
        %v5641 = vsub.f32 %v399, %v5640
        %5642 = vmatprep.subr.mxu0 %v5641
        %v5643 = vand.u32 %v398, 4294901760
        %v5644 = vsub.f32 %v398, %v5643
        %5645 = vmatpush2.msra.mxu0 %v5644
        %v5646 = vand.u32 %v395, 4294901760
        %v5647 = vsub.f32 %v395, %v5646
        %5648 = vmatprep.subr.mxu0 %v5647
        %v5649 = vand.u32 %v394, 4294901760
        %v5650 = vsub.f32 %v394, %v5649
        %5651 = vmatpush2.msra.mxu0 %v5650
        %v5652 = vand.u32 %v391, 4294901760
        %v5653 = vsub.f32 %v391, %v5652
        %5654 = vmatprep.subr.mxu0 %v5653
        %v5655 = vand.u32 %v390, 4294901760
        %v5656 = vsub.f32 %v390, %v5655
        %5657 = vmatpush2.msra.mxu0 %v5656
        %v5658 = vand.u32 %v321, 4294901760
        %v5659 = vsub.f32 %v321, %v5658
        %5660 = vmatprep.mubr.f32.mxu0 %v5659
        %v5661 = vand.u32 %v320, 4294901760
        %v5662 = vsub.f32 %v320, %v5661
        %5663 = vmatmul.mubr.f32.gmra.mxu0 %v5662
        %v5664 = vpop.f32.mrf.mxu0
        %v5665 = vadd.f32 %v5462, %v5664
        %v5666 = vpop.f32.mrf.mxu0
        %v5667 = vadd.f32 %v5464, %v5666
        %5668 = vdwg.mxu0
        %v5669 = vand.u32 %v387, 4294901760
        %5670 = vmatprep.subr.mxu0 %v5669
        %v5671 = vand.u32 %v386, 4294901760
        %5672 = vmatpush1.msra.mxu0 %v5671
        %v5673 = vand.u32 %v383, 4294901760
        %5674 = vmatprep.subr.mxu0 %v5673
        %v5675 = vand.u32 %v382, 4294901760
        %5676 = vmatpush1.msra.mxu0 %v5675
        %v5677 = vand.u32 %v379, 4294901760
        %5678 = vmatprep.subr.mxu0 %v5677
        %v5679 = vand.u32 %v378, 4294901760
        %5680 = vmatpush1.msra.mxu0 %v5679
        %v5681 = vand.u32 %v375, 4294901760
        %5682 = vmatprep.subr.mxu0 %v5681
        %v5683 = vand.u32 %v374, 4294901760
        %5684 = vmatpush1.msra.mxu0 %v5683
        %v5685 = vand.u32 %v371, 4294901760
        %5686 = vmatprep.subr.mxu0 %v5685
        %v5687 = vand.u32 %v370, 4294901760
        %5688 = vmatpush1.msra.mxu0 %v5687
        %v5689 = vand.u32 %v367, 4294901760
        %5690 = vmatprep.subr.mxu0 %v5689
        %v5691 = vand.u32 %v366, 4294901760
        %5692 = vmatpush1.msra.mxu0 %v5691
        %v5693 = vand.u32 %v363, 4294901760
        %5694 = vmatprep.subr.mxu0 %v5693
        %v5695 = vand.u32 %v362, 4294901760
        %5696 = vmatpush1.msra.mxu0 %v5695
        %v5697 = vand.u32 %v359, 4294901760
        %5698 = vmatprep.subr.mxu0 %v5697
        %v5699 = vand.u32 %v358, 4294901760
        %5700 = vmatpush1.msra.mxu0 %v5699
        %v5701 = vand.u32 %v355, 4294901760
        %5702 = vmatprep.subr.mxu0 %v5701
        %v5703 = vand.u32 %v354, 4294901760
        %5704 = vmatpush1.msra.mxu0 %v5703
        %v5705 = vand.u32 %v351, 4294901760
        %5706 = vmatprep.subr.mxu0 %v5705
        %v5707 = vand.u32 %v350, 4294901760
        %5708 = vmatpush1.msra.mxu0 %v5707
        %v5709 = vand.u32 %v347, 4294901760
        %5710 = vmatprep.subr.mxu0 %v5709
        %v5711 = vand.u32 %v346, 4294901760
        %5712 = vmatpush1.msra.mxu0 %v5711
        %v5713 = vand.u32 %v343, 4294901760
        %5714 = vmatprep.subr.mxu0 %v5713
        %v5715 = vand.u32 %v342, 4294901760
        %5716 = vmatpush1.msra.mxu0 %v5715
        %v5717 = vand.u32 %v339, 4294901760
        %5718 = vmatprep.subr.mxu0 %v5717
        %v5719 = vand.u32 %v338, 4294901760
        %5720 = vmatpush1.msra.mxu0 %v5719
        %v5721 = vand.u32 %v335, 4294901760
        %5722 = vmatprep.subr.mxu0 %v5721
        %v5723 = vand.u32 %v334, 4294901760
        %5724 = vmatpush1.msra.mxu0 %v5723
        %v5725 = vand.u32 %v331, 4294901760
        %5726 = vmatprep.subr.mxu0 %v5725
        %v5727 = vand.u32 %v330, 4294901760
        %5728 = vmatpush1.msra.mxu0 %v5727
        %v5729 = vand.u32 %v327, 4294901760
        %5730 = vmatprep.subr.mxu0 %v5729
        %v5731 = vand.u32 %v326, 4294901760
        %5732 = vmatpush1.msra.mxu0 %v5731
        %v5733 = vand.u32 %v451, 4294901760
        %5734 = vmatprep.subr.mxu0 %v5733
        %v5735 = vand.u32 %v450, 4294901760
        %5736 = vmatpush2.msra.mxu0 %v5735
        %v5737 = vand.u32 %v447, 4294901760
        %5738 = vmatprep.subr.mxu0 %v5737
        %v5739 = vand.u32 %v446, 4294901760
        %5740 = vmatpush2.msra.mxu0 %v5739
        %v5741 = vand.u32 %v443, 4294901760
        %5742 = vmatprep.subr.mxu0 %v5741
        %v5743 = vand.u32 %v442, 4294901760
        %5744 = vmatpush2.msra.mxu0 %v5743
        %v5745 = vand.u32 %v439, 4294901760
        %5746 = vmatprep.subr.mxu0 %v5745
        %v5747 = vand.u32 %v438, 4294901760
        %5748 = vmatpush2.msra.mxu0 %v5747
        %v5749 = vand.u32 %v435, 4294901760
        %5750 = vmatprep.subr.mxu0 %v5749
        %v5751 = vand.u32 %v434, 4294901760
        %5752 = vmatpush2.msra.mxu0 %v5751
        %v5753 = vand.u32 %v431, 4294901760
        %5754 = vmatprep.subr.mxu0 %v5753
        %v5755 = vand.u32 %v430, 4294901760
        %5756 = vmatpush2.msra.mxu0 %v5755
        %v5757 = vand.u32 %v427, 4294901760
        %5758 = vmatprep.subr.mxu0 %v5757
        %v5759 = vand.u32 %v426, 4294901760
        %5760 = vmatpush2.msra.mxu0 %v5759
        %v5761 = vand.u32 %v423, 4294901760
        %5762 = vmatprep.subr.mxu0 %v5761
        %v5763 = vand.u32 %v422, 4294901760
        %5764 = vmatpush2.msra.mxu0 %v5763
        %v5765 = vand.u32 %v419, 4294901760
        %5766 = vmatprep.subr.mxu0 %v5765
        %v5767 = vand.u32 %v418, 4294901760
        %5768 = vmatpush2.msra.mxu0 %v5767
        %v5769 = vand.u32 %v415, 4294901760
        %5770 = vmatprep.subr.mxu0 %v5769
        %v5771 = vand.u32 %v414, 4294901760
        %5772 = vmatpush2.msra.mxu0 %v5771
        %v5773 = vand.u32 %v411, 4294901760
        %5774 = vmatprep.subr.mxu0 %v5773
        %v5775 = vand.u32 %v410, 4294901760
        %5776 = vmatpush2.msra.mxu0 %v5775
        %v5777 = vand.u32 %v407, 4294901760
        %5778 = vmatprep.subr.mxu0 %v5777
        %v5779 = vand.u32 %v406, 4294901760
        %5780 = vmatpush2.msra.mxu0 %v5779
        %v5781 = vand.u32 %v403, 4294901760
        %5782 = vmatprep.subr.mxu0 %v5781
        %v5783 = vand.u32 %v402, 4294901760
        %5784 = vmatpush2.msra.mxu0 %v5783
        %v5785 = vand.u32 %v399, 4294901760
        %5786 = vmatprep.subr.mxu0 %v5785
        %v5787 = vand.u32 %v398, 4294901760
        %5788 = vmatpush2.msra.mxu0 %v5787
        %v5789 = vand.u32 %v395, 4294901760
        %5790 = vmatprep.subr.mxu0 %v5789
        %v5791 = vand.u32 %v394, 4294901760
        %5792 = vmatpush2.msra.mxu0 %v5791
        %v5793 = vand.u32 %v391, 4294901760
        %5794 = vmatprep.subr.mxu0 %v5793
        %v5795 = vand.u32 %v390, 4294901760
        %5796 = vmatpush2.msra.mxu0 %v5795
        %v5797 = vand.u32 %v321, 4294901760
        %v5798 = vsub.f32 %v321, %v5797
        %v5799 = vand.u32 %v5798, 4294901760
        %5800 = vmatprep.mubr.f32.mxu0 %v5799
        %v5801 = vand.u32 %v320, 4294901760
        %v5802 = vsub.f32 %v320, %v5801
        %v5803 = vand.u32 %v5802, 4294901760
        %5804 = vmatmul.mubr.f32.gmra.mxu0 %v5803
        %v5805 = vpop.f32.mrf.mxu0
        %v5806 = vadd.f32 %v5665, %v5805
        %v5807 = vpop.f32.mrf.mxu0
        %v5808 = vadd.f32 %v5667, %v5807
        %5809 = vdwg.mxu0
        %v5810 = vand.u32 %v387, 4294901760
        %v5811 = vsub.f32 %v387, %v5810
        %v5812 = vand.u32 %v5811, 4294901760
        %5813 = vmatprep.subr.mxu0 %v5812
        %v5814 = vand.u32 %v386, 4294901760
        %v5815 = vsub.f32 %v386, %v5814
        %v5816 = vand.u32 %v5815, 4294901760
        %5817 = vmatpush1.msra.mxu0 %v5816
        %v5818 = vand.u32 %v383, 4294901760
        %v5819 = vsub.f32 %v383, %v5818
        %v5820 = vand.u32 %v5819, 4294901760
        %5821 = vmatprep.subr.mxu0 %v5820
        %v5822 = vand.u32 %v382, 4294901760
        %v5823 = vsub.f32 %v382, %v5822
        %v5824 = vand.u32 %v5823, 4294901760
        %5825 = vmatpush1.msra.mxu0 %v5824
        %v5826 = vand.u32 %v379, 4294901760
        %v5827 = vsub.f32 %v379, %v5826
        %v5828 = vand.u32 %v5827, 4294901760
        %5829 = vmatprep.subr.mxu0 %v5828
        %v5830 = vand.u32 %v378, 4294901760
        %v5831 = vsub.f32 %v378, %v5830
        %v5832 = vand.u32 %v5831, 4294901760
        %5833 = vmatpush1.msra.mxu0 %v5832
        %v5834 = vand.u32 %v375, 4294901760
        %v5835 = vsub.f32 %v375, %v5834
        %v5836 = vand.u32 %v5835, 4294901760
        %5837 = vmatprep.subr.mxu0 %v5836
        %v5838 = vand.u32 %v374, 4294901760
        %v5839 = vsub.f32 %v374, %v5838
        %v5840 = vand.u32 %v5839, 4294901760
        %5841 = vmatpush1.msra.mxu0 %v5840
        %v5842 = vand.u32 %v371, 4294901760
        %v5843 = vsub.f32 %v371, %v5842
        %v5844 = vand.u32 %v5843, 4294901760
        %5845 = vmatprep.subr.mxu0 %v5844
        %v5846 = vand.u32 %v370, 4294901760
        %v5847 = vsub.f32 %v370, %v5846
        %v5848 = vand.u32 %v5847, 4294901760
        %5849 = vmatpush1.msra.mxu0 %v5848
        %v5850 = vand.u32 %v367, 4294901760
        %v5851 = vsub.f32 %v367, %v5850
        %v5852 = vand.u32 %v5851, 4294901760
        %5853 = vmatprep.subr.mxu0 %v5852
        %v5854 = vand.u32 %v366, 4294901760
        %v5855 = vsub.f32 %v366, %v5854
        %v5856 = vand.u32 %v5855, 4294901760
        %5857 = vmatpush1.msra.mxu0 %v5856
        %v5858 = vand.u32 %v363, 4294901760
        %v5859 = vsub.f32 %v363, %v5858
        %v5860 = vand.u32 %v5859, 4294901760
        %5861 = vmatprep.subr.mxu0 %v5860
        %v5862 = vand.u32 %v362, 4294901760
        %v5863 = vsub.f32 %v362, %v5862
        %v5864 = vand.u32 %v5863, 4294901760
        %5865 = vmatpush1.msra.mxu0 %v5864
        %v5866 = vand.u32 %v359, 4294901760
        %v5867 = vsub.f32 %v359, %v5866
        %v5868 = vand.u32 %v5867, 4294901760
        %5869 = vmatprep.subr.mxu0 %v5868
        %v5870 = vand.u32 %v358, 4294901760
        %v5871 = vsub.f32 %v358, %v5870
        %v5872 = vand.u32 %v5871, 4294901760
        %5873 = vmatpush1.msra.mxu0 %v5872
        %v5874 = vand.u32 %v355, 4294901760
        %v5875 = vsub.f32 %v355, %v5874
        %v5876 = vand.u32 %v5875, 4294901760
        %5877 = vmatprep.subr.mxu0 %v5876
        %v5878 = vand.u32 %v354, 4294901760
        %v5879 = vsub.f32 %v354, %v5878
        %v5880 = vand.u32 %v5879, 4294901760
        %5881 = vmatpush1.msra.mxu0 %v5880
        %v5882 = vand.u32 %v351, 4294901760
        %v5883 = vsub.f32 %v351, %v5882
        %v5884 = vand.u32 %v5883, 4294901760
        %5885 = vmatprep.subr.mxu0 %v5884
        %v5886 = vand.u32 %v350, 4294901760
        %v5887 = vsub.f32 %v350, %v5886
        %v5888 = vand.u32 %v5887, 4294901760
        %5889 = vmatpush1.msra.mxu0 %v5888
        %v5890 = vand.u32 %v347, 4294901760
        %v5891 = vsub.f32 %v347, %v5890
        %v5892 = vand.u32 %v5891, 4294901760
        %5893 = vmatprep.subr.mxu0 %v5892
        %v5894 = vand.u32 %v346, 4294901760
        %v5895 = vsub.f32 %v346, %v5894
        %v5896 = vand.u32 %v5895, 4294901760
        %5897 = vmatpush1.msra.mxu0 %v5896
        %v5898 = vand.u32 %v343, 4294901760
        %v5899 = vsub.f32 %v343, %v5898
        %v5900 = vand.u32 %v5899, 4294901760
        %5901 = vmatprep.subr.mxu0 %v5900
        %v5902 = vand.u32 %v342, 4294901760
        %v5903 = vsub.f32 %v342, %v5902
        %v5904 = vand.u32 %v5903, 4294901760
        %5905 = vmatpush1.msra.mxu0 %v5904
        %v5906 = vand.u32 %v339, 4294901760
        %v5907 = vsub.f32 %v339, %v5906
        %v5908 = vand.u32 %v5907, 4294901760
        %5909 = vmatprep.subr.mxu0 %v5908
        %v5910 = vand.u32 %v338, 4294901760
        %v5911 = vsub.f32 %v338, %v5910
        %v5912 = vand.u32 %v5911, 4294901760
        %5913 = vmatpush1.msra.mxu0 %v5912
        %v5914 = vand.u32 %v335, 4294901760
        %v5915 = vsub.f32 %v335, %v5914
        %v5916 = vand.u32 %v5915, 4294901760
        %5917 = vmatprep.subr.mxu0 %v5916
        %v5918 = vand.u32 %v334, 4294901760
        %v5919 = vsub.f32 %v334, %v5918
        %v5920 = vand.u32 %v5919, 4294901760
        %5921 = vmatpush1.msra.mxu0 %v5920
        %v5922 = vand.u32 %v331, 4294901760
        %v5923 = vsub.f32 %v331, %v5922
        %v5924 = vand.u32 %v5923, 4294901760
        %5925 = vmatprep.subr.mxu0 %v5924
        %v5926 = vand.u32 %v330, 4294901760
        %v5927 = vsub.f32 %v330, %v5926
        %v5928 = vand.u32 %v5927, 4294901760
        %5929 = vmatpush1.msra.mxu0 %v5928
        %v5930 = vand.u32 %v327, 4294901760
        %v5931 = vsub.f32 %v327, %v5930
        %v5932 = vand.u32 %v5931, 4294901760
        %5933 = vmatprep.subr.mxu0 %v5932
        %v5934 = vand.u32 %v326, 4294901760
        %v5935 = vsub.f32 %v326, %v5934
        %v5936 = vand.u32 %v5935, 4294901760
        %5937 = vmatpush1.msra.mxu0 %v5936
        %v5938 = vand.u32 %v451, 4294901760
        %v5939 = vsub.f32 %v451, %v5938
        %v5940 = vand.u32 %v5939, 4294901760
        %5941 = vmatprep.subr.mxu0 %v5940
        %v5942 = vand.u32 %v450, 4294901760
        %v5943 = vsub.f32 %v450, %v5942
        %v5944 = vand.u32 %v5943, 4294901760
        %5945 = vmatpush2.msra.mxu0 %v5944
        %v5946 = vand.u32 %v447, 4294901760
        %v5947 = vsub.f32 %v447, %v5946
        %v5948 = vand.u32 %v5947, 4294901760
        %5949 = vmatprep.subr.mxu0 %v5948
        %v5950 = vand.u32 %v446, 4294901760
        %v5951 = vsub.f32 %v446, %v5950
        %v5952 = vand.u32 %v5951, 4294901760
        %5953 = vmatpush2.msra.mxu0 %v5952
        %v5954 = vand.u32 %v443, 4294901760
        %v5955 = vsub.f32 %v443, %v5954
        %v5956 = vand.u32 %v5955, 4294901760
        %5957 = vmatprep.subr.mxu0 %v5956
        %v5958 = vand.u32 %v442, 4294901760
        %v5959 = vsub.f32 %v442, %v5958
        %v5960 = vand.u32 %v5959, 4294901760
        %5961 = vmatpush2.msra.mxu0 %v5960
        %v5962 = vand.u32 %v439, 4294901760
        %v5963 = vsub.f32 %v439, %v5962
        %v5964 = vand.u32 %v5963, 4294901760
        %5965 = vmatprep.subr.mxu0 %v5964
        %v5966 = vand.u32 %v438, 4294901760
        %v5967 = vsub.f32 %v438, %v5966
        %v5968 = vand.u32 %v5967, 4294901760
        %5969 = vmatpush2.msra.mxu0 %v5968
        %v5970 = vand.u32 %v435, 4294901760
        %v5971 = vsub.f32 %v435, %v5970
        %v5972 = vand.u32 %v5971, 4294901760
        %5973 = vmatprep.subr.mxu0 %v5972
        %v5974 = vand.u32 %v434, 4294901760
        %v5975 = vsub.f32 %v434, %v5974
        %v5976 = vand.u32 %v5975, 4294901760
        %5977 = vmatpush2.msra.mxu0 %v5976
        %v5978 = vand.u32 %v431, 4294901760
        %v5979 = vsub.f32 %v431, %v5978
        %v5980 = vand.u32 %v5979, 4294901760
        %5981 = vmatprep.subr.mxu0 %v5980
        %v5982 = vand.u32 %v430, 4294901760
        %v5983 = vsub.f32 %v430, %v5982
        %v5984 = vand.u32 %v5983, 4294901760
        %5985 = vmatpush2.msra.mxu0 %v5984
        %v5986 = vand.u32 %v427, 4294901760
        %v5987 = vsub.f32 %v427, %v5986
        %v5988 = vand.u32 %v5987, 4294901760
        %5989 = vmatprep.subr.mxu0 %v5988
        %v5990 = vand.u32 %v426, 4294901760
        %v5991 = vsub.f32 %v426, %v5990
        %v5992 = vand.u32 %v5991, 4294901760
        %5993 = vmatpush2.msra.mxu0 %v5992
        %v5994 = vand.u32 %v423, 4294901760
        %v5995 = vsub.f32 %v423, %v5994
        %v5996 = vand.u32 %v5995, 4294901760
        %5997 = vmatprep.subr.mxu0 %v5996
        %v5998 = vand.u32 %v422, 4294901760
        %v5999 = vsub.f32 %v422, %v5998
        %v6000 = vand.u32 %v5999, 4294901760
        %6001 = vmatpush2.msra.mxu0 %v6000
        %v6002 = vand.u32 %v419, 4294901760
        %v6003 = vsub.f32 %v419, %v6002
        %v6004 = vand.u32 %v6003, 4294901760
        %6005 = vmatprep.subr.mxu0 %v6004
        %v6006 = vand.u32 %v418, 4294901760
        %v6007 = vsub.f32 %v418, %v6006
        %v6008 = vand.u32 %v6007, 4294901760
        %6009 = vmatpush2.msra.mxu0 %v6008
        %v6010 = vand.u32 %v415, 4294901760
        %v6011 = vsub.f32 %v415, %v6010
        %v6012 = vand.u32 %v6011, 4294901760
        %6013 = vmatprep.subr.mxu0 %v6012
        %v6014 = vand.u32 %v414, 4294901760
        %v6015 = vsub.f32 %v414, %v6014
        %v6016 = vand.u32 %v6015, 4294901760
        %6017 = vmatpush2.msra.mxu0 %v6016
        %v6018 = vand.u32 %v411, 4294901760
        %v6019 = vsub.f32 %v411, %v6018
        %v6020 = vand.u32 %v6019, 4294901760
        %6021 = vmatprep.subr.mxu0 %v6020
        %v6022 = vand.u32 %v410, 4294901760
        %v6023 = vsub.f32 %v410, %v6022
        %v6024 = vand.u32 %v6023, 4294901760
        %6025 = vmatpush2.msra.mxu0 %v6024
        %v6026 = vand.u32 %v407, 4294901760
        %v6027 = vsub.f32 %v407, %v6026
        %v6028 = vand.u32 %v6027, 4294901760
        %6029 = vmatprep.subr.mxu0 %v6028
        %v6030 = vand.u32 %v406, 4294901760
        %v6031 = vsub.f32 %v406, %v6030
        %v6032 = vand.u32 %v6031, 4294901760
        %6033 = vmatpush2.msra.mxu0 %v6032
        %v6034 = vand.u32 %v403, 4294901760
        %v6035 = vsub.f32 %v403, %v6034
        %v6036 = vand.u32 %v6035, 4294901760
        %6037 = vmatprep.subr.mxu0 %v6036
        %v6038 = vand.u32 %v402, 4294901760
        %v6039 = vsub.f32 %v402, %v6038
        %v6040 = vand.u32 %v6039, 4294901760
        %6041 = vmatpush2.msra.mxu0 %v6040
        %v6042 = vand.u32 %v399, 4294901760
        %v6043 = vsub.f32 %v399, %v6042
        %v6044 = vand.u32 %v6043, 4294901760
        %6045 = vmatprep.subr.mxu0 %v6044
        %v6046 = vand.u32 %v398, 4294901760
        %v6047 = vsub.f32 %v398, %v6046
        %v6048 = vand.u32 %v6047, 4294901760
        %6049 = vmatpush2.msra.mxu0 %v6048
        %v6050 = vand.u32 %v395, 4294901760
        %v6051 = vsub.f32 %v395, %v6050
        %v6052 = vand.u32 %v6051, 4294901760
        %6053 = vmatprep.subr.mxu0 %v6052
        %v6054 = vand.u32 %v394, 4294901760
        %v6055 = vsub.f32 %v394, %v6054
        %v6056 = vand.u32 %v6055, 4294901760
        %6057 = vmatpush2.msra.mxu0 %v6056
        %v6058 = vand.u32 %v391, 4294901760
        %v6059 = vsub.f32 %v391, %v6058
        %v6060 = vand.u32 %v6059, 4294901760
        %6061 = vmatprep.subr.mxu0 %v6060
        %v6062 = vand.u32 %v390, 4294901760
        %v6063 = vsub.f32 %v390, %v6062
        %v6064 = vand.u32 %v6063, 4294901760
        %6065 = vmatpush2.msra.mxu0 %v6064
        %v6066 = vand.u32 %v321, 4294901760
        %6067 = vmatprep.mubr.f32.mxu0 %v6066
        %v6068 = vand.u32 %v320, 4294901760
        %6069 = vmatmul.mubr.f32.gmra.mxu0 %v6068
        %v6070 = vpop.f32.mrf.mxu0
        %v6071 = vadd.f32 %v5806, %v6070
        %v6072 = vpop.f32.mrf.mxu0
        %v6073 = vadd.f32 %v5808, %v6072
        %6074 = vdwg.mxu0
        %v6075 = vand.u32 %v387, 4294901760
        %6076 = vmatprep.subr.mxu0 %v6075
        %v6077 = vand.u32 %v386, 4294901760
        %6078 = vmatpush1.msra.mxu0 %v6077
        %v6079 = vand.u32 %v383, 4294901760
        %6080 = vmatprep.subr.mxu0 %v6079
        %v6081 = vand.u32 %v382, 4294901760
        %6082 = vmatpush1.msra.mxu0 %v6081
        %v6083 = vand.u32 %v379, 4294901760
        %6084 = vmatprep.subr.mxu0 %v6083
        %v6085 = vand.u32 %v378, 4294901760
        %6086 = vmatpush1.msra.mxu0 %v6085
        %v6087 = vand.u32 %v375, 4294901760
        %6088 = vmatprep.subr.mxu0 %v6087
        %v6089 = vand.u32 %v374, 4294901760
        %6090 = vmatpush1.msra.mxu0 %v6089
        %v6091 = vand.u32 %v371, 4294901760
        %6092 = vmatprep.subr.mxu0 %v6091
        %v6093 = vand.u32 %v370, 4294901760
        %6094 = vmatpush1.msra.mxu0 %v6093
        %v6095 = vand.u32 %v367, 4294901760
        %6096 = vmatprep.subr.mxu0 %v6095
        %v6097 = vand.u32 %v366, 4294901760
        %6098 = vmatpush1.msra.mxu0 %v6097
        %v6099 = vand.u32 %v363, 4294901760
        %6100 = vmatprep.subr.mxu0 %v6099
        %v6101 = vand.u32 %v362, 4294901760
        %6102 = vmatpush1.msra.mxu0 %v6101
        %v6103 = vand.u32 %v359, 4294901760
        %6104 = vmatprep.subr.mxu0 %v6103
        %v6105 = vand.u32 %v358, 4294901760
        %6106 = vmatpush1.msra.mxu0 %v6105
        %v6107 = vand.u32 %v355, 4294901760
        %6108 = vmatprep.subr.mxu0 %v6107
        %v6109 = vand.u32 %v354, 4294901760
        %6110 = vmatpush1.msra.mxu0 %v6109
        %v6111 = vand.u32 %v351, 4294901760
        %6112 = vmatprep.subr.mxu0 %v6111
        %v6113 = vand.u32 %v350, 4294901760
        %6114 = vmatpush1.msra.mxu0 %v6113
        %v6115 = vand.u32 %v347, 4294901760
        %6116 = vmatprep.subr.mxu0 %v6115
        %v6117 = vand.u32 %v346, 4294901760
        %6118 = vmatpush1.msra.mxu0 %v6117
        %v6119 = vand.u32 %v343, 4294901760
        %6120 = vmatprep.subr.mxu0 %v6119
        %v6121 = vand.u32 %v342, 4294901760
        %6122 = vmatpush1.msra.mxu0 %v6121
        %v6123 = vand.u32 %v339, 4294901760
        %6124 = vmatprep.subr.mxu0 %v6123
        %v6125 = vand.u32 %v338, 4294901760
        %6126 = vmatpush1.msra.mxu0 %v6125
        %v6127 = vand.u32 %v335, 4294901760
        %6128 = vmatprep.subr.mxu0 %v6127
        %v6129 = vand.u32 %v334, 4294901760
        %6130 = vmatpush1.msra.mxu0 %v6129
        %v6131 = vand.u32 %v331, 4294901760
        %6132 = vmatprep.subr.mxu0 %v6131
        %v6133 = vand.u32 %v330, 4294901760
        %6134 = vmatpush1.msra.mxu0 %v6133
        %v6135 = vand.u32 %v327, 4294901760
        %6136 = vmatprep.subr.mxu0 %v6135
        %v6137 = vand.u32 %v326, 4294901760
        %6138 = vmatpush1.msra.mxu0 %v6137
        %v6139 = vand.u32 %v451, 4294901760
        %6140 = vmatprep.subr.mxu0 %v6139
        %v6141 = vand.u32 %v450, 4294901760
        %6142 = vmatpush2.msra.mxu0 %v6141
        %v6143 = vand.u32 %v447, 4294901760
        %6144 = vmatprep.subr.mxu0 %v6143
        %v6145 = vand.u32 %v446, 4294901760
        %6146 = vmatpush2.msra.mxu0 %v6145
        %v6147 = vand.u32 %v443, 4294901760
        %6148 = vmatprep.subr.mxu0 %v6147
        %v6149 = vand.u32 %v442, 4294901760
        %6150 = vmatpush2.msra.mxu0 %v6149
        %v6151 = vand.u32 %v439, 4294901760
        %6152 = vmatprep.subr.mxu0 %v6151
        %v6153 = vand.u32 %v438, 4294901760
        %6154 = vmatpush2.msra.mxu0 %v6153
        %v6155 = vand.u32 %v435, 4294901760
        %6156 = vmatprep.subr.mxu0 %v6155
        %v6157 = vand.u32 %v434, 4294901760
        %6158 = vmatpush2.msra.mxu0 %v6157
        %v6159 = vand.u32 %v431, 4294901760
        %6160 = vmatprep.subr.mxu0 %v6159
        %v6161 = vand.u32 %v430, 4294901760
        %6162 = vmatpush2.msra.mxu0 %v6161
        %v6163 = vand.u32 %v427, 4294901760
        %6164 = vmatprep.subr.mxu0 %v6163
        %v6165 = vand.u32 %v426, 4294901760
        %6166 = vmatpush2.msra.mxu0 %v6165
        %v6167 = vand.u32 %v423, 4294901760
        %6168 = vmatprep.subr.mxu0 %v6167
        %v6169 = vand.u32 %v422, 4294901760
        %6170 = vmatpush2.msra.mxu0 %v6169
        %v6171 = vand.u32 %v419, 4294901760
        %6172 = vmatprep.subr.mxu0 %v6171
        %v6173 = vand.u32 %v418, 4294901760
        %6174 = vmatpush2.msra.mxu0 %v6173
        %v6175 = vand.u32 %v415, 4294901760
        %6176 = vmatprep.subr.mxu0 %v6175
        %v6177 = vand.u32 %v414, 4294901760
        %6178 = vmatpush2.msra.mxu0 %v6177
        %v6179 = vand.u32 %v411, 4294901760
        %6180 = vmatprep.subr.mxu0 %v6179
        %v6181 = vand.u32 %v410, 4294901760
        %6182 = vmatpush2.msra.mxu0 %v6181
        %v6183 = vand.u32 %v407, 4294901760
        %6184 = vmatprep.subr.mxu0 %v6183
        %v6185 = vand.u32 %v406, 4294901760
        %6186 = vmatpush2.msra.mxu0 %v6185
        %v6187 = vand.u32 %v403, 4294901760
        %6188 = vmatprep.subr.mxu0 %v6187
        %v6189 = vand.u32 %v402, 4294901760
        %6190 = vmatpush2.msra.mxu0 %v6189
        %v6191 = vand.u32 %v399, 4294901760
        %6192 = vmatprep.subr.mxu0 %v6191
        %v6193 = vand.u32 %v398, 4294901760
        %6194 = vmatpush2.msra.mxu0 %v6193
        %v6195 = vand.u32 %v395, 4294901760
        %6196 = vmatprep.subr.mxu0 %v6195
        %v6197 = vand.u32 %v394, 4294901760
        %6198 = vmatpush2.msra.mxu0 %v6197
        %v6199 = vand.u32 %v391, 4294901760
        %6200 = vmatprep.subr.mxu0 %v6199
        %v6201 = vand.u32 %v390, 4294901760
        %6202 = vmatpush2.msra.mxu0 %v6201
        %v6203 = vand.u32 %v321, 4294901760
        %6204 = vmatprep.mubr.f32.mxu0 %v6203
        %v6205 = vand.u32 %v320, 4294901760
        %6206 = vmatmul.mubr.f32.gmra.mxu0 %v6205
        %v6207 = vpop.f32.mrf.mxu0
        %v6208 = vadd.f32 %v6071, %v6207
        %v6209 = vpop.f32.mrf.mxu0
        %v6210 = vadd.f32 %v6073, %v6209
        %6211 = vdwg.mxu0
        %v6212 = vand.u32 %v515, 4294901760
        %6213 = vmatprep.subr.mxu0 %v6212
        %v6214 = vand.u32 %v514, 4294901760
        %6215 = vmatpush1.msra.mxu0 %v6214
        %v6216 = vand.u32 %v511, 4294901760
        %6217 = vmatprep.subr.mxu0 %v6216
        %v6218 = vand.u32 %v510, 4294901760
        %6219 = vmatpush1.msra.mxu0 %v6218
        %v6220 = vand.u32 %v507, 4294901760
        %6221 = vmatprep.subr.mxu0 %v6220
        %v6222 = vand.u32 %v506, 4294901760
        %6223 = vmatpush1.msra.mxu0 %v6222
        %v6224 = vand.u32 %v503, 4294901760
        %6225 = vmatprep.subr.mxu0 %v6224
        %v6226 = vand.u32 %v502, 4294901760
        %6227 = vmatpush1.msra.mxu0 %v6226
        %v6228 = vand.u32 %v499, 4294901760
        %6229 = vmatprep.subr.mxu0 %v6228
        %v6230 = vand.u32 %v498, 4294901760
        %6231 = vmatpush1.msra.mxu0 %v6230
        %v6232 = vand.u32 %v495, 4294901760
        %6233 = vmatprep.subr.mxu0 %v6232
        %v6234 = vand.u32 %v494, 4294901760
        %6235 = vmatpush1.msra.mxu0 %v6234
        %v6236 = vand.u32 %v491, 4294901760
        %6237 = vmatprep.subr.mxu0 %v6236
        %v6238 = vand.u32 %v490, 4294901760
        %6239 = vmatpush1.msra.mxu0 %v6238
        %v6240 = vand.u32 %v487, 4294901760
        %6241 = vmatprep.subr.mxu0 %v6240
        %v6242 = vand.u32 %v486, 4294901760
        %6243 = vmatpush1.msra.mxu0 %v6242
        %v6244 = vand.u32 %v483, 4294901760
        %6245 = vmatprep.subr.mxu0 %v6244
        %v6246 = vand.u32 %v482, 4294901760
        %6247 = vmatpush1.msra.mxu0 %v6246
        %v6248 = vand.u32 %v479, 4294901760
        %6249 = vmatprep.subr.mxu0 %v6248
        %v6250 = vand.u32 %v478, 4294901760
        %6251 = vmatpush1.msra.mxu0 %v6250
        %v6252 = vand.u32 %v475, 4294901760
        %6253 = vmatprep.subr.mxu0 %v6252
        %v6254 = vand.u32 %v474, 4294901760
        %6255 = vmatpush1.msra.mxu0 %v6254
        %v6256 = vand.u32 %v471, 4294901760
        %6257 = vmatprep.subr.mxu0 %v6256
        %v6258 = vand.u32 %v470, 4294901760
        %6259 = vmatpush1.msra.mxu0 %v6258
        %v6260 = vand.u32 %v467, 4294901760
        %6261 = vmatprep.subr.mxu0 %v6260
        %v6262 = vand.u32 %v466, 4294901760
        %6263 = vmatpush1.msra.mxu0 %v6262
        %v6264 = vand.u32 %v463, 4294901760
        %6265 = vmatprep.subr.mxu0 %v6264
        %v6266 = vand.u32 %v462, 4294901760
        %6267 = vmatpush1.msra.mxu0 %v6266
        %v6268 = vand.u32 %v459, 4294901760
        %6269 = vmatprep.subr.mxu0 %v6268
        %v6270 = vand.u32 %v458, 4294901760
        %6271 = vmatpush1.msra.mxu0 %v6270
        %v6272 = vand.u32 %v455, 4294901760
        %6273 = vmatprep.subr.mxu0 %v6272
        %v6274 = vand.u32 %v454, 4294901760
        %6275 = vmatpush1.msra.mxu0 %v6274
        %v6276 = vand.u32 %v579, 4294901760
        %6277 = vmatprep.subr.mxu0 %v6276
        %v6278 = vand.u32 %v578, 4294901760
        %6279 = vmatpush2.msra.mxu0 %v6278
        %v6280 = vand.u32 %v575, 4294901760
        %6281 = vmatprep.subr.mxu0 %v6280
        %v6282 = vand.u32 %v574, 4294901760
        %6283 = vmatpush2.msra.mxu0 %v6282
        %v6284 = vand.u32 %v571, 4294901760
        %6285 = vmatprep.subr.mxu0 %v6284
        %v6286 = vand.u32 %v570, 4294901760
        %6287 = vmatpush2.msra.mxu0 %v6286
        %v6288 = vand.u32 %v567, 4294901760
        %6289 = vmatprep.subr.mxu0 %v6288
        %v6290 = vand.u32 %v566, 4294901760
        %6291 = vmatpush2.msra.mxu0 %v6290
        %v6292 = vand.u32 %v563, 4294901760
        %6293 = vmatprep.subr.mxu0 %v6292
        %v6294 = vand.u32 %v562, 4294901760
        %6295 = vmatpush2.msra.mxu0 %v6294
        %v6296 = vand.u32 %v559, 4294901760
        %6297 = vmatprep.subr.mxu0 %v6296
        %v6298 = vand.u32 %v558, 4294901760
        %6299 = vmatpush2.msra.mxu0 %v6298
        %v6300 = vand.u32 %v555, 4294901760
        %6301 = vmatprep.subr.mxu0 %v6300
        %v6302 = vand.u32 %v554, 4294901760
        %6303 = vmatpush2.msra.mxu0 %v6302
        %v6304 = vand.u32 %v551, 4294901760
        %6305 = vmatprep.subr.mxu0 %v6304
        %v6306 = vand.u32 %v550, 4294901760
        %6307 = vmatpush2.msra.mxu0 %v6306
        %v6308 = vand.u32 %v547, 4294901760
        %6309 = vmatprep.subr.mxu0 %v6308
        %v6310 = vand.u32 %v546, 4294901760
        %6311 = vmatpush2.msra.mxu0 %v6310
        %v6312 = vand.u32 %v543, 4294901760
        %6313 = vmatprep.subr.mxu0 %v6312
        %v6314 = vand.u32 %v542, 4294901760
        %6315 = vmatpush2.msra.mxu0 %v6314
        %v6316 = vand.u32 %v539, 4294901760
        %6317 = vmatprep.subr.mxu0 %v6316
        %v6318 = vand.u32 %v538, 4294901760
        %6319 = vmatpush2.msra.mxu0 %v6318
        %v6320 = vand.u32 %v535, 4294901760
        %6321 = vmatprep.subr.mxu0 %v6320
        %v6322 = vand.u32 %v534, 4294901760
        %6323 = vmatpush2.msra.mxu0 %v6322
        %v6324 = vand.u32 %v531, 4294901760
        %6325 = vmatprep.subr.mxu0 %v6324
        %v6326 = vand.u32 %v530, 4294901760
        %6327 = vmatpush2.msra.mxu0 %v6326
        %v6328 = vand.u32 %v527, 4294901760
        %6329 = vmatprep.subr.mxu0 %v6328
        %v6330 = vand.u32 %v526, 4294901760
        %6331 = vmatpush2.msra.mxu0 %v6330
        %v6332 = vand.u32 %v523, 4294901760
        %6333 = vmatprep.subr.mxu0 %v6332
        %v6334 = vand.u32 %v522, 4294901760
        %6335 = vmatpush2.msra.mxu0 %v6334
        %v6336 = vand.u32 %v519, 4294901760
        %6337 = vmatprep.subr.mxu0 %v6336
        %v6338 = vand.u32 %v518, 4294901760
        %6339 = vmatpush2.msra.mxu0 %v6338
        %v6340 = vand.u32 %v323, 4294901760
        %v6341 = vsub.f32 %v323, %v6340
        %v6342 = vand.u32 %v6341, 4294901760
        %v6343 = vsub.f32 %v6341, %v6342
        %v6344 = vand.u32 %v6343, 4294901760
        %6345 = vmatprep.mubr.f32.mxu0 %v6344
        %v6346 = vand.u32 %v322, 4294901760
        %v6347 = vsub.f32 %v322, %v6346
        %v6348 = vand.u32 %v6347, 4294901760
        %v6349 = vsub.f32 %v6347, %v6348
        %v6350 = vand.u32 %v6349, 4294901760
        %6351 = vmatmul.mubr.f32.gmra.mxu0 %v6350
        %v6352 = vpop.f32.mrf.mxu0
        %v6353 = vadd.f32 %v6208, %v6352
        %v6354 = vpop.f32.mrf.mxu0
        %v6355 = vadd.f32 %v6210, %v6354
        %6356 = vdwg.mxu0
        %v6357 = vand.u32 %v515, 4294901760
        %v6358 = vsub.f32 %v515, %v6357
        %v6359 = vand.u32 %v6358, 4294901760
        %v6360 = vsub.f32 %v6358, %v6359
        %v6361 = vand.u32 %v6360, 4294901760
        %6362 = vmatprep.subr.mxu0 %v6361
        %v6363 = vand.u32 %v514, 4294901760
        %v6364 = vsub.f32 %v514, %v6363
        %v6365 = vand.u32 %v6364, 4294901760
        %v6366 = vsub.f32 %v6364, %v6365
        %v6367 = vand.u32 %v6366, 4294901760
        %6368 = vmatpush1.msra.mxu0 %v6367
        %v6369 = vand.u32 %v511, 4294901760
        %v6370 = vsub.f32 %v511, %v6369
        %v6371 = vand.u32 %v6370, 4294901760
        %v6372 = vsub.f32 %v6370, %v6371
        %v6373 = vand.u32 %v6372, 4294901760
        %6374 = vmatprep.subr.mxu0 %v6373
        %v6375 = vand.u32 %v510, 4294901760
        %v6376 = vsub.f32 %v510, %v6375
        %v6377 = vand.u32 %v6376, 4294901760
        %v6378 = vsub.f32 %v6376, %v6377
        %v6379 = vand.u32 %v6378, 4294901760
        %6380 = vmatpush1.msra.mxu0 %v6379
        %v6381 = vand.u32 %v507, 4294901760
        %v6382 = vsub.f32 %v507, %v6381
        %v6383 = vand.u32 %v6382, 4294901760
        %v6384 = vsub.f32 %v6382, %v6383
        %v6385 = vand.u32 %v6384, 4294901760
        %6386 = vmatprep.subr.mxu0 %v6385
        %v6387 = vand.u32 %v506, 4294901760
        %v6388 = vsub.f32 %v506, %v6387
        %v6389 = vand.u32 %v6388, 4294901760
        %v6390 = vsub.f32 %v6388, %v6389
        %v6391 = vand.u32 %v6390, 4294901760
        %6392 = vmatpush1.msra.mxu0 %v6391
        %v6393 = vand.u32 %v503, 4294901760
        %v6394 = vsub.f32 %v503, %v6393
        %v6395 = vand.u32 %v6394, 4294901760
        %v6396 = vsub.f32 %v6394, %v6395
        %v6397 = vand.u32 %v6396, 4294901760
        %6398 = vmatprep.subr.mxu0 %v6397
        %v6399 = vand.u32 %v502, 4294901760
        %v6400 = vsub.f32 %v502, %v6399
        %v6401 = vand.u32 %v6400, 4294901760
        %v6402 = vsub.f32 %v6400, %v6401
        %v6403 = vand.u32 %v6402, 4294901760
        %6404 = vmatpush1.msra.mxu0 %v6403
        %v6405 = vand.u32 %v499, 4294901760
        %v6406 = vsub.f32 %v499, %v6405
        %v6407 = vand.u32 %v6406, 4294901760
        %v6408 = vsub.f32 %v6406, %v6407
        %v6409 = vand.u32 %v6408, 4294901760
        %6410 = vmatprep.subr.mxu0 %v6409
        %v6411 = vand.u32 %v498, 4294901760
        %v6412 = vsub.f32 %v498, %v6411
        %v6413 = vand.u32 %v6412, 4294901760
        %v6414 = vsub.f32 %v6412, %v6413
        %v6415 = vand.u32 %v6414, 4294901760
        %6416 = vmatpush1.msra.mxu0 %v6415
        %v6417 = vand.u32 %v495, 4294901760
        %v6418 = vsub.f32 %v495, %v6417
        %v6419 = vand.u32 %v6418, 4294901760
        %v6420 = vsub.f32 %v6418, %v6419
        %v6421 = vand.u32 %v6420, 4294901760
        %6422 = vmatprep.subr.mxu0 %v6421
        %v6423 = vand.u32 %v494, 4294901760
        %v6424 = vsub.f32 %v494, %v6423
        %v6425 = vand.u32 %v6424, 4294901760
        %v6426 = vsub.f32 %v6424, %v6425
        %v6427 = vand.u32 %v6426, 4294901760
        %6428 = vmatpush1.msra.mxu0 %v6427
        %v6429 = vand.u32 %v491, 4294901760
        %v6430 = vsub.f32 %v491, %v6429
        %v6431 = vand.u32 %v6430, 4294901760
        %v6432 = vsub.f32 %v6430, %v6431
        %v6433 = vand.u32 %v6432, 4294901760
        %6434 = vmatprep.subr.mxu0 %v6433
        %v6435 = vand.u32 %v490, 4294901760
        %v6436 = vsub.f32 %v490, %v6435
        %v6437 = vand.u32 %v6436, 4294901760
        %v6438 = vsub.f32 %v6436, %v6437
        %v6439 = vand.u32 %v6438, 4294901760
        %6440 = vmatpush1.msra.mxu0 %v6439
        %v6441 = vand.u32 %v487, 4294901760
        %v6442 = vsub.f32 %v487, %v6441
        %v6443 = vand.u32 %v6442, 4294901760
        %v6444 = vsub.f32 %v6442, %v6443
        %v6445 = vand.u32 %v6444, 4294901760
        %6446 = vmatprep.subr.mxu0 %v6445
        %v6447 = vand.u32 %v486, 4294901760
        %v6448 = vsub.f32 %v486, %v6447
        %v6449 = vand.u32 %v6448, 4294901760
        %v6450 = vsub.f32 %v6448, %v6449
        %v6451 = vand.u32 %v6450, 4294901760
        %6452 = vmatpush1.msra.mxu0 %v6451
        %v6453 = vand.u32 %v483, 4294901760
        %v6454 = vsub.f32 %v483, %v6453
        %v6455 = vand.u32 %v6454, 4294901760
        %v6456 = vsub.f32 %v6454, %v6455
        %v6457 = vand.u32 %v6456, 4294901760
        %6458 = vmatprep.subr.mxu0 %v6457
        %v6459 = vand.u32 %v482, 4294901760
        %v6460 = vsub.f32 %v482, %v6459
        %v6461 = vand.u32 %v6460, 4294901760
        %v6462 = vsub.f32 %v6460, %v6461
        %v6463 = vand.u32 %v6462, 4294901760
        %6464 = vmatpush1.msra.mxu0 %v6463
        %v6465 = vand.u32 %v479, 4294901760
        %v6466 = vsub.f32 %v479, %v6465
        %v6467 = vand.u32 %v6466, 4294901760
        %v6468 = vsub.f32 %v6466, %v6467
        %v6469 = vand.u32 %v6468, 4294901760
        %6470 = vmatprep.subr.mxu0 %v6469
        %v6471 = vand.u32 %v478, 4294901760
        %v6472 = vsub.f32 %v478, %v6471
        %v6473 = vand.u32 %v6472, 4294901760
        %v6474 = vsub.f32 %v6472, %v6473
        %v6475 = vand.u32 %v6474, 4294901760
        %6476 = vmatpush1.msra.mxu0 %v6475
        %v6477 = vand.u32 %v475, 4294901760
        %v6478 = vsub.f32 %v475, %v6477
        %v6479 = vand.u32 %v6478, 4294901760
        %v6480 = vsub.f32 %v6478, %v6479
        %v6481 = vand.u32 %v6480, 4294901760
        %6482 = vmatprep.subr.mxu0 %v6481
        %v6483 = vand.u32 %v474, 4294901760
        %v6484 = vsub.f32 %v474, %v6483
        %v6485 = vand.u32 %v6484, 4294901760
        %v6486 = vsub.f32 %v6484, %v6485
        %v6487 = vand.u32 %v6486, 4294901760
        %6488 = vmatpush1.msra.mxu0 %v6487
        %v6489 = vand.u32 %v471, 4294901760
        %v6490 = vsub.f32 %v471, %v6489
        %v6491 = vand.u32 %v6490, 4294901760
        %v6492 = vsub.f32 %v6490, %v6491
        %v6493 = vand.u32 %v6492, 4294901760
        %6494 = vmatprep.subr.mxu0 %v6493
        %v6495 = vand.u32 %v470, 4294901760
        %v6496 = vsub.f32 %v470, %v6495
        %v6497 = vand.u32 %v6496, 4294901760
        %v6498 = vsub.f32 %v6496, %v6497
        %v6499 = vand.u32 %v6498, 4294901760
        %6500 = vmatpush1.msra.mxu0 %v6499
        %v6501 = vand.u32 %v467, 4294901760
        %v6502 = vsub.f32 %v467, %v6501
        %v6503 = vand.u32 %v6502, 4294901760
        %v6504 = vsub.f32 %v6502, %v6503
        %v6505 = vand.u32 %v6504, 4294901760
        %6506 = vmatprep.subr.mxu0 %v6505
        %v6507 = vand.u32 %v466, 4294901760
        %v6508 = vsub.f32 %v466, %v6507
        %v6509 = vand.u32 %v6508, 4294901760
        %v6510 = vsub.f32 %v6508, %v6509
        %v6511 = vand.u32 %v6510, 4294901760
        %6512 = vmatpush1.msra.mxu0 %v6511
        %v6513 = vand.u32 %v463, 4294901760
        %v6514 = vsub.f32 %v463, %v6513
        %v6515 = vand.u32 %v6514, 4294901760
        %v6516 = vsub.f32 %v6514, %v6515
        %v6517 = vand.u32 %v6516, 4294901760
        %6518 = vmatprep.subr.mxu0 %v6517
        %v6519 = vand.u32 %v462, 4294901760
        %v6520 = vsub.f32 %v462, %v6519
        %v6521 = vand.u32 %v6520, 4294901760
        %v6522 = vsub.f32 %v6520, %v6521
        %v6523 = vand.u32 %v6522, 4294901760
        %6524 = vmatpush1.msra.mxu0 %v6523
        %v6525 = vand.u32 %v459, 4294901760
        %v6526 = vsub.f32 %v459, %v6525
        %v6527 = vand.u32 %v6526, 4294901760
        %v6528 = vsub.f32 %v6526, %v6527
        %v6529 = vand.u32 %v6528, 4294901760
        %6530 = vmatprep.subr.mxu0 %v6529
        %v6531 = vand.u32 %v458, 4294901760
        %v6532 = vsub.f32 %v458, %v6531
        %v6533 = vand.u32 %v6532, 4294901760
        %v6534 = vsub.f32 %v6532, %v6533
        %v6535 = vand.u32 %v6534, 4294901760
        %6536 = vmatpush1.msra.mxu0 %v6535
        %v6537 = vand.u32 %v455, 4294901760
        %v6538 = vsub.f32 %v455, %v6537
        %v6539 = vand.u32 %v6538, 4294901760
        %v6540 = vsub.f32 %v6538, %v6539
        %v6541 = vand.u32 %v6540, 4294901760
        %6542 = vmatprep.subr.mxu0 %v6541
        %v6543 = vand.u32 %v454, 4294901760
        %v6544 = vsub.f32 %v454, %v6543
        %v6545 = vand.u32 %v6544, 4294901760
        %v6546 = vsub.f32 %v6544, %v6545
        %v6547 = vand.u32 %v6546, 4294901760
        %6548 = vmatpush1.msra.mxu0 %v6547
        %v6549 = vand.u32 %v579, 4294901760
        %v6550 = vsub.f32 %v579, %v6549
        %v6551 = vand.u32 %v6550, 4294901760
        %v6552 = vsub.f32 %v6550, %v6551
        %v6553 = vand.u32 %v6552, 4294901760
        %6554 = vmatprep.subr.mxu0 %v6553
        %v6555 = vand.u32 %v578, 4294901760
        %v6556 = vsub.f32 %v578, %v6555
        %v6557 = vand.u32 %v6556, 4294901760
        %v6558 = vsub.f32 %v6556, %v6557
        %v6559 = vand.u32 %v6558, 4294901760
        %6560 = vmatpush2.msra.mxu0 %v6559
        %v6561 = vand.u32 %v575, 4294901760
        %v6562 = vsub.f32 %v575, %v6561
        %v6563 = vand.u32 %v6562, 4294901760
        %v6564 = vsub.f32 %v6562, %v6563
        %v6565 = vand.u32 %v6564, 4294901760
        %6566 = vmatprep.subr.mxu0 %v6565
        %v6567 = vand.u32 %v574, 4294901760
        %v6568 = vsub.f32 %v574, %v6567
        %v6569 = vand.u32 %v6568, 4294901760
        %v6570 = vsub.f32 %v6568, %v6569
        %v6571 = vand.u32 %v6570, 4294901760
        %6572 = vmatpush2.msra.mxu0 %v6571
        %v6573 = vand.u32 %v571, 4294901760
        %v6574 = vsub.f32 %v571, %v6573
        %v6575 = vand.u32 %v6574, 4294901760
        %v6576 = vsub.f32 %v6574, %v6575
        %v6577 = vand.u32 %v6576, 4294901760
        %6578 = vmatprep.subr.mxu0 %v6577
        %v6579 = vand.u32 %v570, 4294901760
        %v6580 = vsub.f32 %v570, %v6579
        %v6581 = vand.u32 %v6580, 4294901760
        %v6582 = vsub.f32 %v6580, %v6581
        %v6583 = vand.u32 %v6582, 4294901760
        %6584 = vmatpush2.msra.mxu0 %v6583
        %v6585 = vand.u32 %v567, 4294901760
        %v6586 = vsub.f32 %v567, %v6585
        %v6587 = vand.u32 %v6586, 4294901760
        %v6588 = vsub.f32 %v6586, %v6587
        %v6589 = vand.u32 %v6588, 4294901760
        %6590 = vmatprep.subr.mxu0 %v6589
        %v6591 = vand.u32 %v566, 4294901760
        %v6592 = vsub.f32 %v566, %v6591
        %v6593 = vand.u32 %v6592, 4294901760
        %v6594 = vsub.f32 %v6592, %v6593
        %v6595 = vand.u32 %v6594, 4294901760
        %6596 = vmatpush2.msra.mxu0 %v6595
        %v6597 = vand.u32 %v563, 4294901760
        %v6598 = vsub.f32 %v563, %v6597
        %v6599 = vand.u32 %v6598, 4294901760
        %v6600 = vsub.f32 %v6598, %v6599
        %v6601 = vand.u32 %v6600, 4294901760
        %6602 = vmatprep.subr.mxu0 %v6601
        %v6603 = vand.u32 %v562, 4294901760
        %v6604 = vsub.f32 %v562, %v6603
        %v6605 = vand.u32 %v6604, 4294901760
        %v6606 = vsub.f32 %v6604, %v6605
        %v6607 = vand.u32 %v6606, 4294901760
        %6608 = vmatpush2.msra.mxu0 %v6607
        %v6609 = vand.u32 %v559, 4294901760
        %v6610 = vsub.f32 %v559, %v6609
        %v6611 = vand.u32 %v6610, 4294901760
        %v6612 = vsub.f32 %v6610, %v6611
        %v6613 = vand.u32 %v6612, 4294901760
        %6614 = vmatprep.subr.mxu0 %v6613
        %v6615 = vand.u32 %v558, 4294901760
        %v6616 = vsub.f32 %v558, %v6615
        %v6617 = vand.u32 %v6616, 4294901760
        %v6618 = vsub.f32 %v6616, %v6617
        %v6619 = vand.u32 %v6618, 4294901760
        %6620 = vmatpush2.msra.mxu0 %v6619
        %v6621 = vand.u32 %v555, 4294901760
        %v6622 = vsub.f32 %v555, %v6621
        %v6623 = vand.u32 %v6622, 4294901760
        %v6624 = vsub.f32 %v6622, %v6623
        %v6625 = vand.u32 %v6624, 4294901760
        %6626 = vmatprep.subr.mxu0 %v6625
        %v6627 = vand.u32 %v554, 4294901760
        %v6628 = vsub.f32 %v554, %v6627
        %v6629 = vand.u32 %v6628, 4294901760
        %v6630 = vsub.f32 %v6628, %v6629
        %v6631 = vand.u32 %v6630, 4294901760
        %6632 = vmatpush2.msra.mxu0 %v6631
        %v6633 = vand.u32 %v551, 4294901760
        %v6634 = vsub.f32 %v551, %v6633
        %v6635 = vand.u32 %v6634, 4294901760
        %v6636 = vsub.f32 %v6634, %v6635
        %v6637 = vand.u32 %v6636, 4294901760
        %6638 = vmatprep.subr.mxu0 %v6637
        %v6639 = vand.u32 %v550, 4294901760
        %v6640 = vsub.f32 %v550, %v6639
        %v6641 = vand.u32 %v6640, 4294901760
        %v6642 = vsub.f32 %v6640, %v6641
        %v6643 = vand.u32 %v6642, 4294901760
        %6644 = vmatpush2.msra.mxu0 %v6643
        %v6645 = vand.u32 %v547, 4294901760
        %v6646 = vsub.f32 %v547, %v6645
        %v6647 = vand.u32 %v6646, 4294901760
        %v6648 = vsub.f32 %v6646, %v6647
        %v6649 = vand.u32 %v6648, 4294901760
        %6650 = vmatprep.subr.mxu0 %v6649
        %v6651 = vand.u32 %v546, 4294901760
        %v6652 = vsub.f32 %v546, %v6651
        %v6653 = vand.u32 %v6652, 4294901760
        %v6654 = vsub.f32 %v6652, %v6653
        %v6655 = vand.u32 %v6654, 4294901760
        %6656 = vmatpush2.msra.mxu0 %v6655
        %v6657 = vand.u32 %v543, 4294901760
        %v6658 = vsub.f32 %v543, %v6657
        %v6659 = vand.u32 %v6658, 4294901760
        %v6660 = vsub.f32 %v6658, %v6659
        %v6661 = vand.u32 %v6660, 4294901760
        %6662 = vmatprep.subr.mxu0 %v6661
        %v6663 = vand.u32 %v542, 4294901760
        %v6664 = vsub.f32 %v542, %v6663
        %v6665 = vand.u32 %v6664, 4294901760
        %v6666 = vsub.f32 %v6664, %v6665
        %v6667 = vand.u32 %v6666, 4294901760
        %6668 = vmatpush2.msra.mxu0 %v6667
        %v6669 = vand.u32 %v539, 4294901760
        %v6670 = vsub.f32 %v539, %v6669
        %v6671 = vand.u32 %v6670, 4294901760
        %v6672 = vsub.f32 %v6670, %v6671
        %v6673 = vand.u32 %v6672, 4294901760
        %6674 = vmatprep.subr.mxu0 %v6673
        %v6675 = vand.u32 %v538, 4294901760
        %v6676 = vsub.f32 %v538, %v6675
        %v6677 = vand.u32 %v6676, 4294901760
        %v6678 = vsub.f32 %v6676, %v6677
        %v6679 = vand.u32 %v6678, 4294901760
        %6680 = vmatpush2.msra.mxu0 %v6679
        %v6681 = vand.u32 %v535, 4294901760
        %v6682 = vsub.f32 %v535, %v6681
        %v6683 = vand.u32 %v6682, 4294901760
        %v6684 = vsub.f32 %v6682, %v6683
        %v6685 = vand.u32 %v6684, 4294901760
        %6686 = vmatprep.subr.mxu0 %v6685
        %v6687 = vand.u32 %v534, 4294901760
        %v6688 = vsub.f32 %v534, %v6687
        %v6689 = vand.u32 %v6688, 4294901760
        %v6690 = vsub.f32 %v6688, %v6689
        %v6691 = vand.u32 %v6690, 4294901760
        %6692 = vmatpush2.msra.mxu0 %v6691
        %v6693 = vand.u32 %v531, 4294901760
        %v6694 = vsub.f32 %v531, %v6693
        %v6695 = vand.u32 %v6694, 4294901760
        %v6696 = vsub.f32 %v6694, %v6695
        %v6697 = vand.u32 %v6696, 4294901760
        %6698 = vmatprep.subr.mxu0 %v6697
        %v6699 = vand.u32 %v530, 4294901760
        %v6700 = vsub.f32 %v530, %v6699
        %v6701 = vand.u32 %v6700, 4294901760
        %v6702 = vsub.f32 %v6700, %v6701
        %v6703 = vand.u32 %v6702, 4294901760
        %6704 = vmatpush2.msra.mxu0 %v6703
        %v6705 = vand.u32 %v527, 4294901760
        %v6706 = vsub.f32 %v527, %v6705
        %v6707 = vand.u32 %v6706, 4294901760
        %v6708 = vsub.f32 %v6706, %v6707
        %v6709 = vand.u32 %v6708, 4294901760
        %6710 = vmatprep.subr.mxu0 %v6709
        %v6711 = vand.u32 %v526, 4294901760
        %v6712 = vsub.f32 %v526, %v6711
        %v6713 = vand.u32 %v6712, 4294901760
        %v6714 = vsub.f32 %v6712, %v6713
        %v6715 = vand.u32 %v6714, 4294901760
        %6716 = vmatpush2.msra.mxu0 %v6715
        %v6717 = vand.u32 %v523, 4294901760
        %v6718 = vsub.f32 %v523, %v6717
        %v6719 = vand.u32 %v6718, 4294901760
        %v6720 = vsub.f32 %v6718, %v6719
        %v6721 = vand.u32 %v6720, 4294901760
        %6722 = vmatprep.subr.mxu0 %v6721
        %v6723 = vand.u32 %v522, 4294901760
        %v6724 = vsub.f32 %v522, %v6723
        %v6725 = vand.u32 %v6724, 4294901760
        %v6726 = vsub.f32 %v6724, %v6725
        %v6727 = vand.u32 %v6726, 4294901760
        %6728 = vmatpush2.msra.mxu0 %v6727
        %v6729 = vand.u32 %v519, 4294901760
        %v6730 = vsub.f32 %v519, %v6729
        %v6731 = vand.u32 %v6730, 4294901760
        %v6732 = vsub.f32 %v6730, %v6731
        %v6733 = vand.u32 %v6732, 4294901760
        %6734 = vmatprep.subr.mxu0 %v6733
        %v6735 = vand.u32 %v518, 4294901760
        %v6736 = vsub.f32 %v518, %v6735
        %v6737 = vand.u32 %v6736, 4294901760
        %v6738 = vsub.f32 %v6736, %v6737
        %v6739 = vand.u32 %v6738, 4294901760
        %6740 = vmatpush2.msra.mxu0 %v6739
        %v6741 = vand.u32 %v323, 4294901760
        %6742 = vmatprep.mubr.f32.mxu0 %v6741
        %v6743 = vand.u32 %v322, 4294901760
        %6744 = vmatmul.mubr.f32.gmra.mxu0 %v6743
        %v6745 = vpop.f32.mrf.mxu0
        %v6746 = vadd.f32 %v6353, %v6745
        %v6747 = vpop.f32.mrf.mxu0
        %v6748 = vadd.f32 %v6355, %v6747
        %6749 = vdwg.mxu0
        %v6750 = vand.u32 %v515, 4294901760
        %v6751 = vsub.f32 %v515, %v6750
        %6752 = vmatprep.subr.mxu0 %v6751
        %v6753 = vand.u32 %v514, 4294901760
        %v6754 = vsub.f32 %v514, %v6753
        %6755 = vmatpush1.msra.mxu0 %v6754
        %v6756 = vand.u32 %v511, 4294901760
        %v6757 = vsub.f32 %v511, %v6756
        %6758 = vmatprep.subr.mxu0 %v6757
        %v6759 = vand.u32 %v510, 4294901760
        %v6760 = vsub.f32 %v510, %v6759
        %6761 = vmatpush1.msra.mxu0 %v6760
        %v6762 = vand.u32 %v507, 4294901760
        %v6763 = vsub.f32 %v507, %v6762
        %6764 = vmatprep.subr.mxu0 %v6763
        %v6765 = vand.u32 %v506, 4294901760
        %v6766 = vsub.f32 %v506, %v6765
        %6767 = vmatpush1.msra.mxu0 %v6766
        %v6768 = vand.u32 %v503, 4294901760
        %v6769 = vsub.f32 %v503, %v6768
        %6770 = vmatprep.subr.mxu0 %v6769
        %v6771 = vand.u32 %v502, 4294901760
        %v6772 = vsub.f32 %v502, %v6771
        %6773 = vmatpush1.msra.mxu0 %v6772
        %v6774 = vand.u32 %v499, 4294901760
        %v6775 = vsub.f32 %v499, %v6774
        %6776 = vmatprep.subr.mxu0 %v6775
        %v6777 = vand.u32 %v498, 4294901760
        %v6778 = vsub.f32 %v498, %v6777
        %6779 = vmatpush1.msra.mxu0 %v6778
        %v6780 = vand.u32 %v495, 4294901760
        %v6781 = vsub.f32 %v495, %v6780
        %6782 = vmatprep.subr.mxu0 %v6781
        %v6783 = vand.u32 %v494, 4294901760
        %v6784 = vsub.f32 %v494, %v6783
        %6785 = vmatpush1.msra.mxu0 %v6784
        %v6786 = vand.u32 %v491, 4294901760
        %v6787 = vsub.f32 %v491, %v6786
        %6788 = vmatprep.subr.mxu0 %v6787
        %v6789 = vand.u32 %v490, 4294901760
        %v6790 = vsub.f32 %v490, %v6789
        %6791 = vmatpush1.msra.mxu0 %v6790
        %v6792 = vand.u32 %v487, 4294901760
        %v6793 = vsub.f32 %v487, %v6792
        %6794 = vmatprep.subr.mxu0 %v6793
        %v6795 = vand.u32 %v486, 4294901760
        %v6796 = vsub.f32 %v486, %v6795
        %6797 = vmatpush1.msra.mxu0 %v6796
        %v6798 = vand.u32 %v483, 4294901760
        %v6799 = vsub.f32 %v483, %v6798
        %6800 = vmatprep.subr.mxu0 %v6799
        %v6801 = vand.u32 %v482, 4294901760
        %v6802 = vsub.f32 %v482, %v6801
        %6803 = vmatpush1.msra.mxu0 %v6802
        %v6804 = vand.u32 %v479, 4294901760
        %v6805 = vsub.f32 %v479, %v6804
        %6806 = vmatprep.subr.mxu0 %v6805
        %v6807 = vand.u32 %v478, 4294901760
        %v6808 = vsub.f32 %v478, %v6807
        %6809 = vmatpush1.msra.mxu0 %v6808
        %v6810 = vand.u32 %v475, 4294901760
        %v6811 = vsub.f32 %v475, %v6810
        %6812 = vmatprep.subr.mxu0 %v6811
        %v6813 = vand.u32 %v474, 4294901760
        %v6814 = vsub.f32 %v474, %v6813
        %6815 = vmatpush1.msra.mxu0 %v6814
        %v6816 = vand.u32 %v471, 4294901760
        %v6817 = vsub.f32 %v471, %v6816
        %6818 = vmatprep.subr.mxu0 %v6817
        %v6819 = vand.u32 %v470, 4294901760
        %v6820 = vsub.f32 %v470, %v6819
        %6821 = vmatpush1.msra.mxu0 %v6820
        %v6822 = vand.u32 %v467, 4294901760
        %v6823 = vsub.f32 %v467, %v6822
        %6824 = vmatprep.subr.mxu0 %v6823
        %v6825 = vand.u32 %v466, 4294901760
        %v6826 = vsub.f32 %v466, %v6825
        %6827 = vmatpush1.msra.mxu0 %v6826
        %v6828 = vand.u32 %v463, 4294901760
        %v6829 = vsub.f32 %v463, %v6828
        %6830 = vmatprep.subr.mxu0 %v6829
        %v6831 = vand.u32 %v462, 4294901760
        %v6832 = vsub.f32 %v462, %v6831
        %6833 = vmatpush1.msra.mxu0 %v6832
        %v6834 = vand.u32 %v459, 4294901760
        %v6835 = vsub.f32 %v459, %v6834
        %6836 = vmatprep.subr.mxu0 %v6835
        %v6837 = vand.u32 %v458, 4294901760
        %v6838 = vsub.f32 %v458, %v6837
        %6839 = vmatpush1.msra.mxu0 %v6838
        %v6840 = vand.u32 %v455, 4294901760
        %v6841 = vsub.f32 %v455, %v6840
        %6842 = vmatprep.subr.mxu0 %v6841
        %v6843 = vand.u32 %v454, 4294901760
        %v6844 = vsub.f32 %v454, %v6843
        %6845 = vmatpush1.msra.mxu0 %v6844
        %v6846 = vand.u32 %v579, 4294901760
        %v6847 = vsub.f32 %v579, %v6846
        %6848 = vmatprep.subr.mxu0 %v6847
        %v6849 = vand.u32 %v578, 4294901760
        %v6850 = vsub.f32 %v578, %v6849
        %6851 = vmatpush2.msra.mxu0 %v6850
        %v6852 = vand.u32 %v575, 4294901760
        %v6853 = vsub.f32 %v575, %v6852
        %6854 = vmatprep.subr.mxu0 %v6853
        %v6855 = vand.u32 %v574, 4294901760
        %v6856 = vsub.f32 %v574, %v6855
        %6857 = vmatpush2.msra.mxu0 %v6856
        %v6858 = vand.u32 %v571, 4294901760
        %v6859 = vsub.f32 %v571, %v6858
        %6860 = vmatprep.subr.mxu0 %v6859
        %v6861 = vand.u32 %v570, 4294901760
        %v6862 = vsub.f32 %v570, %v6861
        %6863 = vmatpush2.msra.mxu0 %v6862
        %v6864 = vand.u32 %v567, 4294901760
        %v6865 = vsub.f32 %v567, %v6864
        %6866 = vmatprep.subr.mxu0 %v6865
        %v6867 = vand.u32 %v566, 4294901760
        %v6868 = vsub.f32 %v566, %v6867
        %6869 = vmatpush2.msra.mxu0 %v6868
        %v6870 = vand.u32 %v563, 4294901760
        %v6871 = vsub.f32 %v563, %v6870
        %6872 = vmatprep.subr.mxu0 %v6871
        %v6873 = vand.u32 %v562, 4294901760
        %v6874 = vsub.f32 %v562, %v6873
        %6875 = vmatpush2.msra.mxu0 %v6874
        %v6876 = vand.u32 %v559, 4294901760
        %v6877 = vsub.f32 %v559, %v6876
        %6878 = vmatprep.subr.mxu0 %v6877
        %v6879 = vand.u32 %v558, 4294901760
        %v6880 = vsub.f32 %v558, %v6879
        %6881 = vmatpush2.msra.mxu0 %v6880
        %v6882 = vand.u32 %v555, 4294901760
        %v6883 = vsub.f32 %v555, %v6882
        %6884 = vmatprep.subr.mxu0 %v6883
        %v6885 = vand.u32 %v554, 4294901760
        %v6886 = vsub.f32 %v554, %v6885
        %6887 = vmatpush2.msra.mxu0 %v6886
        %v6888 = vand.u32 %v551, 4294901760
        %v6889 = vsub.f32 %v551, %v6888
        %6890 = vmatprep.subr.mxu0 %v6889
        %v6891 = vand.u32 %v550, 4294901760
        %v6892 = vsub.f32 %v550, %v6891
        %6893 = vmatpush2.msra.mxu0 %v6892
        %v6894 = vand.u32 %v547, 4294901760
        %v6895 = vsub.f32 %v547, %v6894
        %6896 = vmatprep.subr.mxu0 %v6895
        %v6897 = vand.u32 %v546, 4294901760
        %v6898 = vsub.f32 %v546, %v6897
        %6899 = vmatpush2.msra.mxu0 %v6898
        %v6900 = vand.u32 %v543, 4294901760
        %v6901 = vsub.f32 %v543, %v6900
        %6902 = vmatprep.subr.mxu0 %v6901
        %v6903 = vand.u32 %v542, 4294901760
        %v6904 = vsub.f32 %v542, %v6903
        %6905 = vmatpush2.msra.mxu0 %v6904
        %v6906 = vand.u32 %v539, 4294901760
        %v6907 = vsub.f32 %v539, %v6906
        %6908 = vmatprep.subr.mxu0 %v6907
        %v6909 = vand.u32 %v538, 4294901760
        %v6910 = vsub.f32 %v538, %v6909
        %6911 = vmatpush2.msra.mxu0 %v6910
        %v6912 = vand.u32 %v535, 4294901760
        %v6913 = vsub.f32 %v535, %v6912
        %6914 = vmatprep.subr.mxu0 %v6913
        %v6915 = vand.u32 %v534, 4294901760
        %v6916 = vsub.f32 %v534, %v6915
        %6917 = vmatpush2.msra.mxu0 %v6916
        %v6918 = vand.u32 %v531, 4294901760
        %v6919 = vsub.f32 %v531, %v6918
        %6920 = vmatprep.subr.mxu0 %v6919
        %v6921 = vand.u32 %v530, 4294901760
        %v6922 = vsub.f32 %v530, %v6921
        %6923 = vmatpush2.msra.mxu0 %v6922
        %v6924 = vand.u32 %v527, 4294901760
        %v6925 = vsub.f32 %v527, %v6924
        %6926 = vmatprep.subr.mxu0 %v6925
        %v6927 = vand.u32 %v526, 4294901760
        %v6928 = vsub.f32 %v526, %v6927
        %6929 = vmatpush2.msra.mxu0 %v6928
        %v6930 = vand.u32 %v523, 4294901760
        %v6931 = vsub.f32 %v523, %v6930
        %6932 = vmatprep.subr.mxu0 %v6931
        %v6933 = vand.u32 %v522, 4294901760
        %v6934 = vsub.f32 %v522, %v6933
        %6935 = vmatpush2.msra.mxu0 %v6934
        %v6936 = vand.u32 %v519, 4294901760
        %v6937 = vsub.f32 %v519, %v6936
        %6938 = vmatprep.subr.mxu0 %v6937
        %v6939 = vand.u32 %v518, 4294901760
        %v6940 = vsub.f32 %v518, %v6939
        %6941 = vmatpush2.msra.mxu0 %v6940
        %v6942 = vand.u32 %v323, 4294901760
        %v6943 = vsub.f32 %v323, %v6942
        %6944 = vmatprep.mubr.f32.mxu0 %v6943
        %v6945 = vand.u32 %v322, 4294901760
        %v6946 = vsub.f32 %v322, %v6945
        %6947 = vmatmul.mubr.f32.gmra.mxu0 %v6946
        %v6948 = vpop.f32.mrf.mxu0
        %v6949 = vadd.f32 %v6746, %v6948
        %v6950 = vpop.f32.mrf.mxu0
        %v6951 = vadd.f32 %v6748, %v6950
        %6952 = vdwg.mxu0
        %v6953 = vand.u32 %v515, 4294901760
        %6954 = vmatprep.subr.mxu0 %v6953
        %v6955 = vand.u32 %v514, 4294901760
        %6956 = vmatpush1.msra.mxu0 %v6955
        %v6957 = vand.u32 %v511, 4294901760
        %6958 = vmatprep.subr.mxu0 %v6957
        %v6959 = vand.u32 %v510, 4294901760
        %6960 = vmatpush1.msra.mxu0 %v6959
        %v6961 = vand.u32 %v507, 4294901760
        %6962 = vmatprep.subr.mxu0 %v6961
        %v6963 = vand.u32 %v506, 4294901760
        %6964 = vmatpush1.msra.mxu0 %v6963
        %v6965 = vand.u32 %v503, 4294901760
        %6966 = vmatprep.subr.mxu0 %v6965
        %v6967 = vand.u32 %v502, 4294901760
        %6968 = vmatpush1.msra.mxu0 %v6967
        %v6969 = vand.u32 %v499, 4294901760
        %6970 = vmatprep.subr.mxu0 %v6969
        %v6971 = vand.u32 %v498, 4294901760
        %6972 = vmatpush1.msra.mxu0 %v6971
        %v6973 = vand.u32 %v495, 4294901760
        %6974 = vmatprep.subr.mxu0 %v6973
        %v6975 = vand.u32 %v494, 4294901760
        %6976 = vmatpush1.msra.mxu0 %v6975
        %v6977 = vand.u32 %v491, 4294901760
        %6978 = vmatprep.subr.mxu0 %v6977
        %v6979 = vand.u32 %v490, 4294901760
        %6980 = vmatpush1.msra.mxu0 %v6979
        %v6981 = vand.u32 %v487, 4294901760
        %6982 = vmatprep.subr.mxu0 %v6981
        %v6983 = vand.u32 %v486, 4294901760
        %6984 = vmatpush1.msra.mxu0 %v6983
        %v6985 = vand.u32 %v483, 4294901760
        %6986 = vmatprep.subr.mxu0 %v6985
        %v6987 = vand.u32 %v482, 4294901760
        %6988 = vmatpush1.msra.mxu0 %v6987
        %v6989 = vand.u32 %v479, 4294901760
        %6990 = vmatprep.subr.mxu0 %v6989
        %v6991 = vand.u32 %v478, 4294901760
        %6992 = vmatpush1.msra.mxu0 %v6991
        %v6993 = vand.u32 %v475, 4294901760
        %6994 = vmatprep.subr.mxu0 %v6993
        %v6995 = vand.u32 %v474, 4294901760
        %6996 = vmatpush1.msra.mxu0 %v6995
        %v6997 = vand.u32 %v471, 4294901760
        %6998 = vmatprep.subr.mxu0 %v6997
        %v6999 = vand.u32 %v470, 4294901760
        %7000 = vmatpush1.msra.mxu0 %v6999
        %v7001 = vand.u32 %v467, 4294901760
        %7002 = vmatprep.subr.mxu0 %v7001
        %v7003 = vand.u32 %v466, 4294901760
        %7004 = vmatpush1.msra.mxu0 %v7003
        %v7005 = vand.u32 %v463, 4294901760
        %7006 = vmatprep.subr.mxu0 %v7005
        %v7007 = vand.u32 %v462, 4294901760
        %7008 = vmatpush1.msra.mxu0 %v7007
        %v7009 = vand.u32 %v459, 4294901760
        %7010 = vmatprep.subr.mxu0 %v7009
        %v7011 = vand.u32 %v458, 4294901760
        %7012 = vmatpush1.msra.mxu0 %v7011
        %v7013 = vand.u32 %v455, 4294901760
        %7014 = vmatprep.subr.mxu0 %v7013
        %v7015 = vand.u32 %v454, 4294901760
        %7016 = vmatpush1.msra.mxu0 %v7015
        %v7017 = vand.u32 %v579, 4294901760
        %7018 = vmatprep.subr.mxu0 %v7017
        %v7019 = vand.u32 %v578, 4294901760
        %7020 = vmatpush2.msra.mxu0 %v7019
        %v7021 = vand.u32 %v575, 4294901760
        %7022 = vmatprep.subr.mxu0 %v7021
        %v7023 = vand.u32 %v574, 4294901760
        %7024 = vmatpush2.msra.mxu0 %v7023
        %v7025 = vand.u32 %v571, 4294901760
        %7026 = vmatprep.subr.mxu0 %v7025
        %v7027 = vand.u32 %v570, 4294901760
        %7028 = vmatpush2.msra.mxu0 %v7027
        %v7029 = vand.u32 %v567, 4294901760
        %7030 = vmatprep.subr.mxu0 %v7029
        %v7031 = vand.u32 %v566, 4294901760
        %7032 = vmatpush2.msra.mxu0 %v7031
        %v7033 = vand.u32 %v563, 4294901760
        %7034 = vmatprep.subr.mxu0 %v7033
        %v7035 = vand.u32 %v562, 4294901760
        %7036 = vmatpush2.msra.mxu0 %v7035
        %v7037 = vand.u32 %v559, 4294901760
        %7038 = vmatprep.subr.mxu0 %v7037
        %v7039 = vand.u32 %v558, 4294901760
        %7040 = vmatpush2.msra.mxu0 %v7039
        %v7041 = vand.u32 %v555, 4294901760
        %7042 = vmatprep.subr.mxu0 %v7041
        %v7043 = vand.u32 %v554, 4294901760
        %7044 = vmatpush2.msra.mxu0 %v7043
        %v7045 = vand.u32 %v551, 4294901760
        %7046 = vmatprep.subr.mxu0 %v7045
        %v7047 = vand.u32 %v550, 4294901760
        %7048 = vmatpush2.msra.mxu0 %v7047
        %v7049 = vand.u32 %v547, 4294901760
        %7050 = vmatprep.subr.mxu0 %v7049
        %v7051 = vand.u32 %v546, 4294901760
        %7052 = vmatpush2.msra.mxu0 %v7051
        %v7053 = vand.u32 %v543, 4294901760
        %7054 = vmatprep.subr.mxu0 %v7053
        %v7055 = vand.u32 %v542, 4294901760
        %7056 = vmatpush2.msra.mxu0 %v7055
        %v7057 = vand.u32 %v539, 4294901760
        %7058 = vmatprep.subr.mxu0 %v7057
        %v7059 = vand.u32 %v538, 4294901760
        %7060 = vmatpush2.msra.mxu0 %v7059
        %v7061 = vand.u32 %v535, 4294901760
        %7062 = vmatprep.subr.mxu0 %v7061
        %v7063 = vand.u32 %v534, 4294901760
        %7064 = vmatpush2.msra.mxu0 %v7063
        %v7065 = vand.u32 %v531, 4294901760
        %7066 = vmatprep.subr.mxu0 %v7065
        %v7067 = vand.u32 %v530, 4294901760
        %7068 = vmatpush2.msra.mxu0 %v7067
        %v7069 = vand.u32 %v527, 4294901760
        %7070 = vmatprep.subr.mxu0 %v7069
        %v7071 = vand.u32 %v526, 4294901760
        %7072 = vmatpush2.msra.mxu0 %v7071
        %v7073 = vand.u32 %v523, 4294901760
        %7074 = vmatprep.subr.mxu0 %v7073
        %v7075 = vand.u32 %v522, 4294901760
        %7076 = vmatpush2.msra.mxu0 %v7075
        %v7077 = vand.u32 %v519, 4294901760
        %7078 = vmatprep.subr.mxu0 %v7077
        %v7079 = vand.u32 %v518, 4294901760
        %7080 = vmatpush2.msra.mxu0 %v7079
        %v7081 = vand.u32 %v323, 4294901760
        %v7082 = vsub.f32 %v323, %v7081
        %v7083 = vand.u32 %v7082, 4294901760
        %7084 = vmatprep.mubr.f32.mxu0 %v7083
        %v7085 = vand.u32 %v322, 4294901760
        %v7086 = vsub.f32 %v322, %v7085
        %v7087 = vand.u32 %v7086, 4294901760
        %7088 = vmatmul.mubr.f32.gmra.mxu0 %v7087
        %v7089 = vpop.f32.mrf.mxu0
        %v7090 = vadd.f32 %v6949, %v7089
        %v7091 = vpop.f32.mrf.mxu0
        %v7092 = vadd.f32 %v6951, %v7091
        %7093 = vdwg.mxu0
        %v7094 = vand.u32 %v515, 4294901760
        %v7095 = vsub.f32 %v515, %v7094
        %v7096 = vand.u32 %v7095, 4294901760
        %7097 = vmatprep.subr.mxu0 %v7096
        %v7098 = vand.u32 %v514, 4294901760
        %v7099 = vsub.f32 %v514, %v7098
        %v7100 = vand.u32 %v7099, 4294901760
        %7101 = vmatpush1.msra.mxu0 %v7100
        %v7102 = vand.u32 %v511, 4294901760
        %v7103 = vsub.f32 %v511, %v7102
        %v7104 = vand.u32 %v7103, 4294901760
        %7105 = vmatprep.subr.mxu0 %v7104
        %v7106 = vand.u32 %v510, 4294901760
        %v7107 = vsub.f32 %v510, %v7106
        %v7108 = vand.u32 %v7107, 4294901760
        %7109 = vmatpush1.msra.mxu0 %v7108
        %v7110 = vand.u32 %v507, 4294901760
        %v7111 = vsub.f32 %v507, %v7110
        %v7112 = vand.u32 %v7111, 4294901760
        %7113 = vmatprep.subr.mxu0 %v7112
        %v7114 = vand.u32 %v506, 4294901760
        %v7115 = vsub.f32 %v506, %v7114
        %v7116 = vand.u32 %v7115, 4294901760
        %7117 = vmatpush1.msra.mxu0 %v7116
        %v7118 = vand.u32 %v503, 4294901760
        %v7119 = vsub.f32 %v503, %v7118
        %v7120 = vand.u32 %v7119, 4294901760
        %7121 = vmatprep.subr.mxu0 %v7120
        %v7122 = vand.u32 %v502, 4294901760
        %v7123 = vsub.f32 %v502, %v7122
        %v7124 = vand.u32 %v7123, 4294901760
        %7125 = vmatpush1.msra.mxu0 %v7124
        %v7126 = vand.u32 %v499, 4294901760
        %v7127 = vsub.f32 %v499, %v7126
        %v7128 = vand.u32 %v7127, 4294901760
        %7129 = vmatprep.subr.mxu0 %v7128
        %v7130 = vand.u32 %v498, 4294901760
        %v7131 = vsub.f32 %v498, %v7130
        %v7132 = vand.u32 %v7131, 4294901760
        %7133 = vmatpush1.msra.mxu0 %v7132
        %v7134 = vand.u32 %v495, 4294901760
        %v7135 = vsub.f32 %v495, %v7134
        %v7136 = vand.u32 %v7135, 4294901760
        %7137 = vmatprep.subr.mxu0 %v7136
        %v7138 = vand.u32 %v494, 4294901760
        %v7139 = vsub.f32 %v494, %v7138
        %v7140 = vand.u32 %v7139, 4294901760
        %7141 = vmatpush1.msra.mxu0 %v7140
        %v7142 = vand.u32 %v491, 4294901760
        %v7143 = vsub.f32 %v491, %v7142
        %v7144 = vand.u32 %v7143, 4294901760
        %7145 = vmatprep.subr.mxu0 %v7144
        %v7146 = vand.u32 %v490, 4294901760
        %v7147 = vsub.f32 %v490, %v7146
        %v7148 = vand.u32 %v7147, 4294901760
        %7149 = vmatpush1.msra.mxu0 %v7148
        %v7150 = vand.u32 %v487, 4294901760
        %v7151 = vsub.f32 %v487, %v7150
        %v7152 = vand.u32 %v7151, 4294901760
        %7153 = vmatprep.subr.mxu0 %v7152
        %v7154 = vand.u32 %v486, 4294901760
        %v7155 = vsub.f32 %v486, %v7154
        %v7156 = vand.u32 %v7155, 4294901760
        %7157 = vmatpush1.msra.mxu0 %v7156
        %v7158 = vand.u32 %v483, 4294901760
        %v7159 = vsub.f32 %v483, %v7158
        %v7160 = vand.u32 %v7159, 4294901760
        %7161 = vmatprep.subr.mxu0 %v7160
        %v7162 = vand.u32 %v482, 4294901760
        %v7163 = vsub.f32 %v482, %v7162
        %v7164 = vand.u32 %v7163, 4294901760
        %7165 = vmatpush1.msra.mxu0 %v7164
        %v7166 = vand.u32 %v479, 4294901760
        %v7167 = vsub.f32 %v479, %v7166
        %v7168 = vand.u32 %v7167, 4294901760
        %7169 = vmatprep.subr.mxu0 %v7168
        %v7170 = vand.u32 %v478, 4294901760
        %v7171 = vsub.f32 %v478, %v7170
        %v7172 = vand.u32 %v7171, 4294901760
        %7173 = vmatpush1.msra.mxu0 %v7172
        %v7174 = vand.u32 %v475, 4294901760
        %v7175 = vsub.f32 %v475, %v7174
        %v7176 = vand.u32 %v7175, 4294901760
        %7177 = vmatprep.subr.mxu0 %v7176
        %v7178 = vand.u32 %v474, 4294901760
        %v7179 = vsub.f32 %v474, %v7178
        %v7180 = vand.u32 %v7179, 4294901760
        %7181 = vmatpush1.msra.mxu0 %v7180
        %v7182 = vand.u32 %v471, 4294901760
        %v7183 = vsub.f32 %v471, %v7182
        %v7184 = vand.u32 %v7183, 4294901760
        %7185 = vmatprep.subr.mxu0 %v7184
        %v7186 = vand.u32 %v470, 4294901760
        %v7187 = vsub.f32 %v470, %v7186
        %v7188 = vand.u32 %v7187, 4294901760
        %7189 = vmatpush1.msra.mxu0 %v7188
        %v7190 = vand.u32 %v467, 4294901760
        %v7191 = vsub.f32 %v467, %v7190
        %v7192 = vand.u32 %v7191, 4294901760
        %7193 = vmatprep.subr.mxu0 %v7192
        %v7194 = vand.u32 %v466, 4294901760
        %v7195 = vsub.f32 %v466, %v7194
        %v7196 = vand.u32 %v7195, 4294901760
        %7197 = vmatpush1.msra.mxu0 %v7196
        %v7198 = vand.u32 %v463, 4294901760
        %v7199 = vsub.f32 %v463, %v7198
        %v7200 = vand.u32 %v7199, 4294901760
        %7201 = vmatprep.subr.mxu0 %v7200
        %v7202 = vand.u32 %v462, 4294901760
        %v7203 = vsub.f32 %v462, %v7202
        %v7204 = vand.u32 %v7203, 4294901760
        %7205 = vmatpush1.msra.mxu0 %v7204
        %v7206 = vand.u32 %v459, 4294901760
        %v7207 = vsub.f32 %v459, %v7206
        %v7208 = vand.u32 %v7207, 4294901760
        %7209 = vmatprep.subr.mxu0 %v7208
        %v7210 = vand.u32 %v458, 4294901760
        %v7211 = vsub.f32 %v458, %v7210
        %v7212 = vand.u32 %v7211, 4294901760
        %7213 = vmatpush1.msra.mxu0 %v7212
        %v7214 = vand.u32 %v455, 4294901760
        %v7215 = vsub.f32 %v455, %v7214
        %v7216 = vand.u32 %v7215, 4294901760
        %7217 = vmatprep.subr.mxu0 %v7216
        %v7218 = vand.u32 %v454, 4294901760
        %v7219 = vsub.f32 %v454, %v7218
        %v7220 = vand.u32 %v7219, 4294901760
        %7221 = vmatpush1.msra.mxu0 %v7220
        %v7222 = vand.u32 %v579, 4294901760
        %v7223 = vsub.f32 %v579, %v7222
        %v7224 = vand.u32 %v7223, 4294901760
        %7225 = vmatprep.subr.mxu0 %v7224
        %v7226 = vand.u32 %v578, 4294901760
        %v7227 = vsub.f32 %v578, %v7226
        %v7228 = vand.u32 %v7227, 4294901760
        %7229 = vmatpush2.msra.mxu0 %v7228
        %v7230 = vand.u32 %v575, 4294901760
        %v7231 = vsub.f32 %v575, %v7230
        %v7232 = vand.u32 %v7231, 4294901760
        %7233 = vmatprep.subr.mxu0 %v7232
        %v7234 = vand.u32 %v574, 4294901760
        %v7235 = vsub.f32 %v574, %v7234
        %v7236 = vand.u32 %v7235, 4294901760
        %7237 = vmatpush2.msra.mxu0 %v7236
        %v7238 = vand.u32 %v571, 4294901760
        %v7239 = vsub.f32 %v571, %v7238
        %v7240 = vand.u32 %v7239, 4294901760
        %7241 = vmatprep.subr.mxu0 %v7240
        %v7242 = vand.u32 %v570, 4294901760
        %v7243 = vsub.f32 %v570, %v7242
        %v7244 = vand.u32 %v7243, 4294901760
        %7245 = vmatpush2.msra.mxu0 %v7244
        %v7246 = vand.u32 %v567, 4294901760
        %v7247 = vsub.f32 %v567, %v7246
        %v7248 = vand.u32 %v7247, 4294901760
        %7249 = vmatprep.subr.mxu0 %v7248
        %v7250 = vand.u32 %v566, 4294901760
        %v7251 = vsub.f32 %v566, %v7250
        %v7252 = vand.u32 %v7251, 4294901760
        %7253 = vmatpush2.msra.mxu0 %v7252
        %v7254 = vand.u32 %v563, 4294901760
        %v7255 = vsub.f32 %v563, %v7254
        %v7256 = vand.u32 %v7255, 4294901760
        %7257 = vmatprep.subr.mxu0 %v7256
        %v7258 = vand.u32 %v562, 4294901760
        %v7259 = vsub.f32 %v562, %v7258
        %v7260 = vand.u32 %v7259, 4294901760
        %7261 = vmatpush2.msra.mxu0 %v7260
        %v7262 = vand.u32 %v559, 4294901760
        %v7263 = vsub.f32 %v559, %v7262
        %v7264 = vand.u32 %v7263, 4294901760
        %7265 = vmatprep.subr.mxu0 %v7264
        %v7266 = vand.u32 %v558, 4294901760
        %v7267 = vsub.f32 %v558, %v7266
        %v7268 = vand.u32 %v7267, 4294901760
        %7269 = vmatpush2.msra.mxu0 %v7268
        %v7270 = vand.u32 %v555, 4294901760
        %v7271 = vsub.f32 %v555, %v7270
        %v7272 = vand.u32 %v7271, 4294901760
        %7273 = vmatprep.subr.mxu0 %v7272
        %v7274 = vand.u32 %v554, 4294901760
        %v7275 = vsub.f32 %v554, %v7274
        %v7276 = vand.u32 %v7275, 4294901760
        %7277 = vmatpush2.msra.mxu0 %v7276
        %v7278 = vand.u32 %v551, 4294901760
        %v7279 = vsub.f32 %v551, %v7278
        %v7280 = vand.u32 %v7279, 4294901760
        %7281 = vmatprep.subr.mxu0 %v7280
        %v7282 = vand.u32 %v550, 4294901760
        %v7283 = vsub.f32 %v550, %v7282
        %v7284 = vand.u32 %v7283, 4294901760
        %7285 = vmatpush2.msra.mxu0 %v7284
        %v7286 = vand.u32 %v547, 4294901760
        %v7287 = vsub.f32 %v547, %v7286
        %v7288 = vand.u32 %v7287, 4294901760
        %7289 = vmatprep.subr.mxu0 %v7288
        %v7290 = vand.u32 %v546, 4294901760
        %v7291 = vsub.f32 %v546, %v7290
        %v7292 = vand.u32 %v7291, 4294901760
        %7293 = vmatpush2.msra.mxu0 %v7292
        %v7294 = vand.u32 %v543, 4294901760
        %v7295 = vsub.f32 %v543, %v7294
        %v7296 = vand.u32 %v7295, 4294901760
        %7297 = vmatprep.subr.mxu0 %v7296
        %v7298 = vand.u32 %v542, 4294901760
        %v7299 = vsub.f32 %v542, %v7298
        %v7300 = vand.u32 %v7299, 4294901760
        %7301 = vmatpush2.msra.mxu0 %v7300
        %v7302 = vand.u32 %v539, 4294901760
        %v7303 = vsub.f32 %v539, %v7302
        %v7304 = vand.u32 %v7303, 4294901760
        %7305 = vmatprep.subr.mxu0 %v7304
        %v7306 = vand.u32 %v538, 4294901760
        %v7307 = vsub.f32 %v538, %v7306
        %v7308 = vand.u32 %v7307, 4294901760
        %7309 = vmatpush2.msra.mxu0 %v7308
        %v7310 = vand.u32 %v535, 4294901760
        %v7311 = vsub.f32 %v535, %v7310
        %v7312 = vand.u32 %v7311, 4294901760
        %7313 = vmatprep.subr.mxu0 %v7312
        %v7314 = vand.u32 %v534, 4294901760
        %v7315 = vsub.f32 %v534, %v7314
        %v7316 = vand.u32 %v7315, 4294901760
        %7317 = vmatpush2.msra.mxu0 %v7316
        %v7318 = vand.u32 %v531, 4294901760
        %v7319 = vsub.f32 %v531, %v7318
        %v7320 = vand.u32 %v7319, 4294901760
        %7321 = vmatprep.subr.mxu0 %v7320
        %v7322 = vand.u32 %v530, 4294901760
        %v7323 = vsub.f32 %v530, %v7322
        %v7324 = vand.u32 %v7323, 4294901760
        %7325 = vmatpush2.msra.mxu0 %v7324
        %v7326 = vand.u32 %v527, 4294901760
        %v7327 = vsub.f32 %v527, %v7326
        %v7328 = vand.u32 %v7327, 4294901760
        %7329 = vmatprep.subr.mxu0 %v7328
        %v7330 = vand.u32 %v526, 4294901760
        %v7331 = vsub.f32 %v526, %v7330
        %v7332 = vand.u32 %v7331, 4294901760
        %7333 = vmatpush2.msra.mxu0 %v7332
        %v7334 = vand.u32 %v523, 4294901760
        %v7335 = vsub.f32 %v523, %v7334
        %v7336 = vand.u32 %v7335, 4294901760
        %7337 = vmatprep.subr.mxu0 %v7336
        %v7338 = vand.u32 %v522, 4294901760
        %v7339 = vsub.f32 %v522, %v7338
        %v7340 = vand.u32 %v7339, 4294901760
        %7341 = vmatpush2.msra.mxu0 %v7340
        %v7342 = vand.u32 %v519, 4294901760
        %v7343 = vsub.f32 %v519, %v7342
        %v7344 = vand.u32 %v7343, 4294901760
        %7345 = vmatprep.subr.mxu0 %v7344
        %v7346 = vand.u32 %v518, 4294901760
        %v7347 = vsub.f32 %v518, %v7346
        %v7348 = vand.u32 %v7347, 4294901760
        %7349 = vmatpush2.msra.mxu0 %v7348
        %v7350 = vand.u32 %v323, 4294901760
        %7351 = vmatprep.mubr.f32.mxu0 %v7350
        %v7352 = vand.u32 %v322, 4294901760
        %7353 = vmatmul.mubr.f32.gmra.mxu0 %v7352
        %v7354 = vpop.f32.mrf.mxu0
        %v7355 = vadd.f32 %v7090, %v7354
        %v7356 = vpop.f32.mrf.mxu0
        %v7357 = vadd.f32 %v7092, %v7356
        %7358 = vdwg.mxu0
        %v7359 = vand.u32 %v515, 4294901760
        %7360 = vmatprep.subr.mxu0 %v7359
        %v7361 = vand.u32 %v514, 4294901760
        %7362 = vmatpush1.msra.mxu0 %v7361
        %v7363 = vand.u32 %v511, 4294901760
        %7364 = vmatprep.subr.mxu0 %v7363
        %v7365 = vand.u32 %v510, 4294901760
        %7366 = vmatpush1.msra.mxu0 %v7365
        %v7367 = vand.u32 %v507, 4294901760
        %7368 = vmatprep.subr.mxu0 %v7367
        %v7369 = vand.u32 %v506, 4294901760
        %7370 = vmatpush1.msra.mxu0 %v7369
        %v7371 = vand.u32 %v503, 4294901760
        %7372 = vmatprep.subr.mxu0 %v7371
        %v7373 = vand.u32 %v502, 4294901760
        %7374 = vmatpush1.msra.mxu0 %v7373
        %v7375 = vand.u32 %v499, 4294901760
        %7376 = vmatprep.subr.mxu0 %v7375
        %v7377 = vand.u32 %v498, 4294901760
        %7378 = vmatpush1.msra.mxu0 %v7377
        %v7379 = vand.u32 %v495, 4294901760
        %7380 = vmatprep.subr.mxu0 %v7379
        %v7381 = vand.u32 %v494, 4294901760
        %7382 = vmatpush1.msra.mxu0 %v7381
        %v7383 = vand.u32 %v491, 4294901760
        %7384 = vmatprep.subr.mxu0 %v7383
        %v7385 = vand.u32 %v490, 4294901760
        %7386 = vmatpush1.msra.mxu0 %v7385
        %v7387 = vand.u32 %v487, 4294901760
        %7388 = vmatprep.subr.mxu0 %v7387
        %v7389 = vand.u32 %v486, 4294901760
        %7390 = vmatpush1.msra.mxu0 %v7389
        %v7391 = vand.u32 %v483, 4294901760
        %7392 = vmatprep.subr.mxu0 %v7391
        %v7393 = vand.u32 %v482, 4294901760
        %7394 = vmatpush1.msra.mxu0 %v7393
        %v7395 = vand.u32 %v479, 4294901760
        %7396 = vmatprep.subr.mxu0 %v7395
        %v7397 = vand.u32 %v478, 4294901760
        %7398 = vmatpush1.msra.mxu0 %v7397
        %v7399 = vand.u32 %v475, 4294901760
        %7400 = vmatprep.subr.mxu0 %v7399
        %v7401 = vand.u32 %v474, 4294901760
        %7402 = vmatpush1.msra.mxu0 %v7401
        %v7403 = vand.u32 %v471, 4294901760
        %7404 = vmatprep.subr.mxu0 %v7403
        %v7405 = vand.u32 %v470, 4294901760
        %7406 = vmatpush1.msra.mxu0 %v7405
        %v7407 = vand.u32 %v467, 4294901760
        %7408 = vmatprep.subr.mxu0 %v7407
        %v7409 = vand.u32 %v466, 4294901760
        %7410 = vmatpush1.msra.mxu0 %v7409
        %v7411 = vand.u32 %v463, 4294901760
        %7412 = vmatprep.subr.mxu0 %v7411
        %v7413 = vand.u32 %v462, 4294901760
        %7414 = vmatpush1.msra.mxu0 %v7413
        %v7415 = vand.u32 %v459, 4294901760
        %7416 = vmatprep.subr.mxu0 %v7415
        %v7417 = vand.u32 %v458, 4294901760
        %7418 = vmatpush1.msra.mxu0 %v7417
        %v7419 = vand.u32 %v455, 4294901760
        %7420 = vmatprep.subr.mxu0 %v7419
        %v7421 = vand.u32 %v454, 4294901760
        %7422 = vmatpush1.msra.mxu0 %v7421
        %v7423 = vand.u32 %v579, 4294901760
        %7424 = vmatprep.subr.mxu0 %v7423
        %v7425 = vand.u32 %v578, 4294901760
        %7426 = vmatpush2.msra.mxu0 %v7425
        %v7427 = vand.u32 %v575, 4294901760
        %7428 = vmatprep.subr.mxu0 %v7427
        %v7429 = vand.u32 %v574, 4294901760
        %7430 = vmatpush2.msra.mxu0 %v7429
        %v7431 = vand.u32 %v571, 4294901760
        %7432 = vmatprep.subr.mxu0 %v7431
        %v7433 = vand.u32 %v570, 4294901760
        %7434 = vmatpush2.msra.mxu0 %v7433
        %v7435 = vand.u32 %v567, 4294901760
        %7436 = vmatprep.subr.mxu0 %v7435
        %v7437 = vand.u32 %v566, 4294901760
        %7438 = vmatpush2.msra.mxu0 %v7437
        %v7439 = vand.u32 %v563, 4294901760
        %7440 = vmatprep.subr.mxu0 %v7439
        %v7441 = vand.u32 %v562, 4294901760
        %7442 = vmatpush2.msra.mxu0 %v7441
        %v7443 = vand.u32 %v559, 4294901760
        %7444 = vmatprep.subr.mxu0 %v7443
        %v7445 = vand.u32 %v558, 4294901760
        %7446 = vmatpush2.msra.mxu0 %v7445
        %v7447 = vand.u32 %v555, 4294901760
        %7448 = vmatprep.subr.mxu0 %v7447
        %v7449 = vand.u32 %v554, 4294901760
        %7450 = vmatpush2.msra.mxu0 %v7449
        %v7451 = vand.u32 %v551, 4294901760
        %7452 = vmatprep.subr.mxu0 %v7451
        %v7453 = vand.u32 %v550, 4294901760
        %7454 = vmatpush2.msra.mxu0 %v7453
        %v7455 = vand.u32 %v547, 4294901760
        %7456 = vmatprep.subr.mxu0 %v7455
        %v7457 = vand.u32 %v546, 4294901760
        %7458 = vmatpush2.msra.mxu0 %v7457
        %v7459 = vand.u32 %v543, 4294901760
        %7460 = vmatprep.subr.mxu0 %v7459
        %v7461 = vand.u32 %v542, 4294901760
        %7462 = vmatpush2.msra.mxu0 %v7461
        %v7463 = vand.u32 %v539, 4294901760
        %7464 = vmatprep.subr.mxu0 %v7463
        %v7465 = vand.u32 %v538, 4294901760
        %7466 = vmatpush2.msra.mxu0 %v7465
        %v7467 = vand.u32 %v535, 4294901760
        %7468 = vmatprep.subr.mxu0 %v7467
        %v7469 = vand.u32 %v534, 4294901760
        %7470 = vmatpush2.msra.mxu0 %v7469
        %v7471 = vand.u32 %v531, 4294901760
        %7472 = vmatprep.subr.mxu0 %v7471
        %v7473 = vand.u32 %v530, 4294901760
        %7474 = vmatpush2.msra.mxu0 %v7473
        %v7475 = vand.u32 %v527, 4294901760
        %7476 = vmatprep.subr.mxu0 %v7475
        %v7477 = vand.u32 %v526, 4294901760
        %7478 = vmatpush2.msra.mxu0 %v7477
        %v7479 = vand.u32 %v523, 4294901760
        %7480 = vmatprep.subr.mxu0 %v7479
        %v7481 = vand.u32 %v522, 4294901760
        %7482 = vmatpush2.msra.mxu0 %v7481
        %v7483 = vand.u32 %v519, 4294901760
        %7484 = vmatprep.subr.mxu0 %v7483
        %v7485 = vand.u32 %v518, 4294901760
        %7486 = vmatpush2.msra.mxu0 %v7485
        %v7487 = vand.u32 %v323, 4294901760
        %7488 = vmatprep.mubr.f32.mxu0 %v7487
        %v7489 = vand.u32 %v322, 4294901760
        %7490 = vmatmul.mubr.f32.gmra.mxu0 %v7489
        %v7491 = vpop.f32.mrf.mxu0
        %v7492 = vadd.f32 %v7355, %v7491
        %v7493 = vpop.f32.mrf.mxu0
        %v7494 = vadd.f32 %v7357, %v7493
        %7495 = vdwg.mxu0
        %7496 = vst [vmem:[%s313] sm:$0xff] %v4924
        %7497 = vst [vmem:[%s313 + $0x8] sm:$0xff] %v4926
        %7498 = vst [vmem:[%s313 + $0x10] sm:$0xff] %v7492
        %7499 = vst [vmem:[%s313 + $0x18] sm:$0xff] %v7494
        %s7500 = sand.u32 %s153, 1
        %s7501 = scalar_lea.sflag [#allocation4], %s7500
        %s7502 = sand.u32 %s153, 1
        %s7503 = smul.addr %s7502, 32
        %s7504 = scalar_lea.vmem [#allocation10], %s7503
        // Predicated region
        $region53: #{tpu_custom_call.1} parent=35 // pred_check
          %p7505 = pneg %p163
        $region54: #{tpu_custom_call.1} parent=35 // pred_check_branch
          %7507 = sbr.rel (%p7505) target = $region56
        $region55: #{tpu_custom_call.1} parent=35 // pred_region
          %s7508 = smul.u32 4, %s30
          %s7510 = ssub.s32 512, 512
          %7511 = vsyncadd %s7501, %s7510
          %s7512 = smul.addr %s29, 8
          %s7513 = sadd.s32 %s7508, %s7512
          %s7514 = smul.addr %s7513, 128
          %s7515 = scalar_lea.hbm %s4, %s7514
          %s7517 = sshll.u32 %s7504, 4
          %s7518 = int_to_ptr.vmem [resolvable:$true] %s7517
          %7520 = dma.vmem_to_hbm [thread:$0]  %s7518, 512, %s7515, %s7501
        $region56: #{tpu_custom_call.1} parent=35 // pred_fallthru
          _
      $region36: #{tpu_custom_call.1} parent=5 // pred_fallthru
        _
      %p7521 = scmp.le.s32.totalorder 2, %s20
      // Predicated region
      $region57: #{tpu_custom_call.1} parent=5 // pred_check
        %p7522 = pneg %p7521
      $region58: #{tpu_custom_call.1} parent=5 // pred_check_branch
        %7524 = sbr.rel (%p7522) target = $region60
      $region59: #{tpu_custom_call.1} parent=5 // pred_region
        %s7525 = ssub.s32 %s20, 2
        // Predicated region
        $region61: #{tpu_custom_call.1} parent=59 // pred_check
          %p7526 = pneg %p169
        $region62: #{tpu_custom_call.1} parent=59 // pred_check_branch
          %7528 = sbr.rel (%p7526) target = $region64
        $region63: #{tpu_custom_call.1} parent=59 // pred_region
          %s7529 = sand.u32 %s154, 1
          %s7530 = scalar_lea.sflag [#allocation4], %s7529
          %s7531 = sand.u32 %s154, 1
          %s7532 = smul.addr %s7531, 32
          %s7533 = scalar_lea.vmem [#allocation10], %s7532
          %7534 = dma.done %s7530, 512
        $region64: #{tpu_custom_call.1} parent=59 // pred_fallthru
          _
      $region60: #{tpu_custom_call.1} parent=5 // pred_fallthru
        _
    $region6: #{tpu_custom_call.1} parent=1 // loop_footer
      %s24 = sadd.s32 1, %s20
    $region7: #{tpu_custom_call.1} parent=1 // loop_footer_branch
      %19 = sbr.rel target = $region3
    $region8: #{tpu_custom_call.1} parent=1 // loop_exit
      _
    %7535 = vsyncpa [#allocation3], 1
    %s7536 = scalar_lea.sflag [#allocation3], 1
    %7537 = vsyncpa %s7536, 1
    %7538 = vsyncpa [#allocation6], 1
    %s7539 = scalar_lea.sflag [#allocation6], 1
    %7540 = vsyncpa %s7539, 1
    %7541 = vsyncpa [#allocation9], 1
    %7542 = vsyncpa [#allocation4], 1
    %s7543 = scalar_lea.sflag [#allocation4], 1
    %7544 = vsyncpa %s7543, 1

</llo_original>
